<compile_context>
chip_gen: v6e
topology: v6e:2x2x1
jax: 0.10.0
libtpu: 0.0.40
codegen_flags: <defaults>
</compile_context>

<pallas_src>
import jax
import jax.numpy as jnp
from jax.experimental import pallas as pl
from jax.experimental.pallas import tpu as pltpu

BN_EPS = 1e-5
LANE = 128
VMEM_LIMIT = 32 * 1024 * 1024


def _round_up(x, m):
    return (x + m - 1) // m * m


def _pick_row_blocks(rows, max_blocks=8):
    """Largest block count nb<=max_blocks with rows % nb == 0 and (rows//nb) % 8 == 0."""
    for nb in range(max_blocks, 0, -1):
        if rows % nb == 0 and (rows // nb) % 8 == 0:
            return nb
    return 1


# ---------------------------------------------------------------------------
# Pallas kernels
# ---------------------------------------------------------------------------
def _latent_bn_relu_kernel(z_ref, w_ref, g_ref, b_ref, o_ref):
    # Layer 1: out rows = z (broadcast along lanes) * per-row weight rows,
    # then fused BatchNorm (batch stats) + ReLU. Everything f32, output bf16.
    acc = z_ref[...] * w_ref[...]                         # (R, C) f32
    rows = acc.shape[0]
    s = jnp.sum(acc, axis=0, keepdims=True)
    ss = jnp.sum(acc * acc, axis=0, keepdims=True)
    mean = s / rows
    var = jnp.maximum(ss / rows - mean * mean, 0.0)
    scale = g_ref[...] * jax.lax.rsqrt(var + BN_EPS)
    bias = b_ref[...] - mean * scale
    o_ref[...] = jnp.maximum(acc * scale + bias, 0.0).astype(o_ref.dtype)


def _gemm_bn_relu_kernel(a_ref, b_ref, g_ref, bt_ref, o_ref, acc_ref, stat_ref):
    # Row-blocked GEMM with a one-pass BatchNorm(batch stats)+ReLU epilogue.
    # a: (TR, K) bf16 row block, b: (K, C) bf16 (resident), o: (R, C) bf16 (resident),
    # acc: (R, C) f32 scratch, stat: (2, C) f32 scratch (sum / sum-of-squares).
    i = pl.program_id(0)
    nb = pl.num_programs(0)
    tr = a_ref.shape[0]

    @pl.when(i == 0)
    def _():
        stat_ref[...] = jnp.zeros_like(stat_ref)

    part = jnp.dot(a_ref[...], b_ref[...], preferred_element_type=jnp.float32)
    row0 = pl.multiple_of(i * tr, 8)
    acc_ref[pl.ds(row0, tr), :] = part
    stat_ref[0:1, :] += jnp.sum(part, axis=0, keepdims=True)
    stat_ref[1:2, :] += jnp.sum(part * part, axis=0, keepdims=True)

    @pl.when(i == nb - 1)
    def _():
        rows = acc_ref.shape[0]
        mean = stat_ref[0:1, :] / rows
        var = jnp.maximum(stat_ref[1:2, :] / rows - mean * mean, 0.0)
        scale = g_ref[...] * jax.lax.rsqrt(var + BN_EPS)
        bias = bt_ref[...] - mean * scale
        o_ref[...] = jnp.maximum(acc_ref[...] * scale + bias, 0.0).astype(o_ref.dtype)


def _gemm_tanh_kernel(a_ref, b_ref, o_ref):
    o_ref[...] = jnp.tanh(
        jnp.dot(a_ref[...], b_ref[...], preferred_element_type=jnp.float32))


# ---------------------------------------------------------------------------
# pallas_call wrappers
# ---------------------------------------------------------------------------
def _latent_layer(zb, w_rep, gamma, beta):
    R, C = w_rep.shape
    return pl.pallas_call(
        _latent_bn_relu_kernel,
        out_shape=jax.ShapeDtypeStruct((R, C), jnp.bfloat16),
        grid=(1,),
        in_specs=[pl.BlockSpec((R, 1), lambda i: (0, 0)),
                  pl.BlockSpec((R, C), lambda i: (0, 0)),
                  pl.BlockSpec((1, C), lambda i: (0, 0)),
                  pl.BlockSpec((1, C), lambda i: (0, 0))],
        out_specs=pl.BlockSpec((R, C), lambda i: (0, 0)),
        compiler_params=pltpu.CompilerParams(
            dimension_semantics=("arbitrary",),
            vmem_limit_bytes=VMEM_LIMIT),
    )(zb, w_rep, gamma, beta)


def _gemm_bn_relu(a, b, gamma, beta):
    R, K = a.shape
    C = b.shape[1]
    nb = _pick_row_blocks(R)
    tr = R // nb
    return pl.pallas_call(
        _gemm_bn_relu_kernel,
        out_shape=jax.ShapeDtypeStruct((R, C), jnp.bfloat16),
        grid=(nb,),
        in_specs=[pl.BlockSpec((tr, K), lambda i: (i, 0)),
                  pl.BlockSpec((K, C), lambda i: (0, 0)),
                  pl.BlockSpec((1, C), lambda i: (0, 0)),
                  pl.BlockSpec((1, C), lambda i: (0, 0))],
        out_specs=pl.BlockSpec((R, C), lambda i: (0, 0)),
        scratch_shapes=[pltpu.VMEM((R, C), jnp.float32),
                        pltpu.VMEM((2, C), jnp.float32)],
        compiler_params=pltpu.CompilerParams(
            dimension_semantics=("arbitrary",),
            vmem_limit_bytes=VMEM_LIMIT),
    )(a, b, gamma, beta)


def _gemm_tanh(a, b):
    R, K = a.shape
    C = b.shape[1]
    nb = _pick_row_blocks(R)
    tr = R // nb
    return pl.pallas_call(
        _gemm_tanh_kernel,
        out_shape=jax.ShapeDtypeStruct((R, C), jnp.float32),
        grid=(nb,),
        in_specs=[pl.BlockSpec((tr, K), lambda i: (i, 0)),
                  pl.BlockSpec((K, C), lambda i: (0, 0))],
        out_specs=pl.BlockSpec((tr, C), lambda i: (i, 0)),
        compiler_params=pltpu.CompilerParams(
            dimension_semantics=("parallel",),
            vmem_limit_bytes=VMEM_LIMIT),
    )(a, b)


# ---------------------------------------------------------------------------
# XLA glue: zero-dilation + zero-padding + im2col patch extraction (bf16).
# ---------------------------------------------------------------------------
def _dilate_pad_im2col(x_nhwc, k, stride, pad):
    N, H, W, C = x_nhwc.shape
    pp = k - 1 - pad
    Hd, Wd = (H - 1) * stride + 1, (W - 1) * stride + 1
    Hp, Wp = Hd + 2 * pp, Wd + 2 * pp
    xp = jnp.zeros((N, Hp, Wp, C), x_nhwc.dtype)
    xp = xp.at[:, pp:pp + Hd:stride, pp:pp + Wd:stride, :].set(x_nhwc)
    Ho, Wo = Hp - k + 1, Wp - k + 1
    patches = jnp.stack(
        [xp[:, i:i + Ho, j:j + Wo, :] for i in range(k) for j in range(k)], axis=3)
    return patches.reshape(N * Ho * Wo, k * k * C), Ho, Wo


# ---------------------------------------------------------------------------
# One-time parameter packing (hoisted out of the forward pass)
# ---------------------------------------------------------------------------
def prepare_params(params):
    def pack_convT(w, cout_pad):
        cin, cout, k, _ = w.shape
        wm = jnp.transpose(w[:, :, ::-1, ::-1], (2, 3, 0, 1)).reshape(k * k * cin, cout)
        wm = jnp.pad(wm, ((0, 0), (0, cout_pad - cout)))
        return wm.astype(jnp.bfloat16)

    def pack_bn(g, b, cout_pad):
        c = g.shape[0]
        gp = jnp.pad(g.astype(jnp.float32), (0, cout_pad - c), constant_values=1.0)
        bp = jnp.pad(b.astype(jnp.float32), (0, cout_pad - c))
        return gp.reshape(1, cout_pad), bp.reshape(1, cout_pad)

    # Layer 1 (1x1 input, stride 1, pad 0): out[n,co,i,j] = z[n,0] * w1[0,co,i,j]
    w1 = params["w1"]                                             # (1, 256, 7, 7)
    w1_mat = jnp.transpose(w1[0], (1, 2, 0)).reshape(49, 256).astype(jnp.float32)

    g1, b1 = pack_bn(params["g1"], params["b1"], 256)
    g2, b2 = pack_bn(params["g2"], params["b2"], 128)
    g3, b3 = pack_bn(params["g3"], params["b3"], _round_up(64, LANE))

    packed = {
        "w1_mat": w1_mat,                                         # (49, 256)  f32
        "w2_mat": pack_convT(params["w2"], 128),                  # (4096, 128) bf16
        "w3_mat": pack_convT(params["w3"], _round_up(64, LANE)),  # (2048, 128) bf16
        "w4_mat": pack_convT(params["w4"], _round_up(1, LANE)),   # (576, 128)  bf16
        "g1": g1, "b1": b1, "g2": g2, "b2": b2, "g3": g3, "b3": b3,
    }
    return jax.tree_util.tree_map(jnp.asarray, packed)


# ---------------------------------------------------------------------------
# Generator forward (Pallas) and pure-JAX reference
# ---------------------------------------------------------------------------
@jax.jit
def generator_forward(z_nchw, packed):
    N = z_nchw.shape[0]
    assert z_nchw.shape[1] == 1, "outer-product layer-1 special case assumes latent_dim == 1"

    # Layer 1: ConvT(1->256, k7, s1, p0) on a 1x1 latent == outer product + BN + ReLU.
    z = z_nchw.reshape(N, 1).astype(jnp.float32)                   # (N, 1)
    zb = jnp.repeat(z, 49, axis=0)                                 # (N*49, 1)
    w_rep = jnp.tile(packed["w1_mat"], (N, 1))                     # (N*49, 256)
    x = _latent_layer(zb, w_rep, packed["g1"], packed["b1"])       # (N*49, 256) bf16
    x = x.reshape(N, 7, 7, 256)

    # Layer 2: ConvT(256->128, k4, s2, p1) + BN + ReLU.
    a, Ho, Wo = _dilate_pad_im2col(x, 4, 2, 1)                     # (N*14*14, 4096) bf16
    x = _gemm_bn_relu(a, packed["w2_mat"], packed["g2"], packed["b2"])
    x = x.reshape(N, Ho, Wo, 128)

    # Layer 3: ConvT(128->64, k4, s2, p1) + BN + ReLU.
    a, Ho, Wo = _dilate_pad_im2col(x, 4, 2, 1)                     # (N*28*28, 2048) bf16
    x = _gemm_bn_relu(a, packed["w3_mat"], packed["g3"], packed["b3"])
    x = x[:, :64].reshape(N, Ho, Wo, 64)

    # Layer 4: ConvT(64->1, k3, s1, p1) + Tanh.
    a, Ho, Wo = _dilate_pad_im2col(x, 3, 1, 1)                     # (N*28*28, 576) bf16
    y = _gemm_tanh(a, packed["w4_mat"])                            # (N*28*28, 128) f32
    y = y[:, :1].reshape(N, Ho, Wo, 1)
    return jnp.transpose(y, (0, 3, 1, 2))                          # (N, 1, 28, 28)


def reference_forward(x, params):
    def convT(x, w, s, p):
        k = w.shape[2]
        rhs = jnp.transpose(w[:, :, ::-1, ::-1], (1, 0, 2, 3))     # OIHW
        return jax.lax.conv_general_dilated(
            x, rhs, window_strides=(1, 1),
            padding=[(k - 1 - p, k - 1 - p)] * 2,
            lhs_dilation=(s, s),
            dimension_numbers=("NCHW", "OIHW", "NCHW"),
            precision=jax.lax.Precision.HIGHEST)

    def bn_relu(x, g, b):
        mean = x.mean(axis=(0, 2, 3), keepdims=True)
        var = ((x - mean) ** 2).mean(axis=(0, 2, 3), keepdims=True)
        y = (x - mean) / jnp.sqrt(var + BN_EPS)
        y = y * g.reshape(1, -1, 1, 1) + b.reshape(1, -1, 1, 1)
        return jnp.maximum(y, 0.0)

    x = bn_relu(convT(x, params["w1"], 1, 0), params["g1"], params["b1"])
    x = bn_relu(convT(x, params["w2"], 2, 1), params["g2"], params["b2"])
    x = bn_relu(convT(x, params["w3"], 2, 1), params["g3"], params["b3"])
    return jnp.tanh(convT(x, params["w4"], 1, 1))


def init_params(key, latent_dim=1):
    ks = jax.random.split(key, 4)
    scale = 0.05
    return {
        # nn.ConvTranspose2d weight layout: (C_in, C_out, kH, kW), bias=False
        "w1": jax.random.normal(ks[0], (latent_dim, 256, 7, 7), jnp.float32) * scale,
        "w2": jax.random.normal(ks[1], (256, 128, 4, 4), jnp.float32) * scale,
        "w3": jax.random.normal(ks[2], (128, 64, 4, 4), jnp.float32) * scale,
        "w4": jax.random.normal(ks[3], (64, 1, 3, 3), jnp.float32) * scale,
        # BatchNorm2d affine params (PyTorch defaults: gamma=1, beta=0).
        # NOTE: forward uses batch statistics (training-mode BN), matching the module default.
        "g1": jnp.ones((256,), jnp.float32), "b1": jnp.zeros((256,), jnp.float32),
        "g2": jnp.ones((128,), jnp.float32), "b2": jnp.zeros((128,), jnp.float32),
        "g3": jnp.ones((64,), jnp.float32), "b3": jnp.zeros((64,), jnp.float32),
    }


if __name__ == "__main__":
    key = jax.random.PRNGKey(0)
    k_p, k_z = jax.random.split(key)
    latent_dim = 1
    batch = 2
    params = init_params(k_p, latent_dim)
    packed = prepare_params(params)          # one-time weight packing (not per forward)
    z = jax.random.normal(k_z, (batch, latent_dim, 1, 1), jnp.float32)   # NCHW latent

    out = jax.block_until_ready(generator_forward(z, packed))
    assert out.shape == (batch, 1, 28, 28), out.shape

    ref = jax.block_until_ready(reference_forward(z, params))
    max_diff = float(jnp.max(jnp.abs(out - ref)))
    # Layers 2-4 use bf16 GEMM operands / bf16 inter-layer activations (f32 accumulate
    # and f32 BN epilogue) vs an all-f32 HIGHEST reference -> loose absolute tolerance.
    assert max_diff < 1e-1, f"mismatch vs reference: {max_diff}"

    print("KERNEL_OK")
</pallas_src>

<mosaic_0001>
module attributes {stable_mosaic.version = 11 : i64} {
  func.func @_latent_bn_relu_kernel(%arg0: i32, %arg1: memref<98x1xf32, #tpu.memory_space<vmem>>, %arg2: memref<98x256xf32, #tpu.memory_space<vmem>>, %arg3: memref<1x256xf32, #tpu.memory_space<vmem>>, %arg4: memref<1x256xf32, #tpu.memory_space<vmem>>, %arg5: memref<98x256xbf16, #tpu.memory_space<vmem>>) attributes {dimension_semantics = [#tpu.dimension_semantics<arbitrary>], iteration_bounds = array<i64: 1>, scalar_prefetch = 0 : i64, scratch_operands = 0 : i64, tpu.core_type = #tpu.core_type<tc>, window_params = [{pipeline_mode = #tpu.pipeline_mode<synchronous>, transform_indices = @transform_0, window_bounds = array<i64: 98, 1>}, {pipeline_mode = #tpu.pipeline_mode<synchronous>, transform_indices = @transform_1, window_bounds = array<i64: 98, 256>}, {pipeline_mode = #tpu.pipeline_mode<synchronous>, transform_indices = @transform_2, window_bounds = array<i64: 1, 256>}, {pipeline_mode = #tpu.pipeline_mode<synchronous>, transform_indices = @transform_3, window_bounds = array<i64: 1, 256>}, {pipeline_mode = #tpu.pipeline_mode<synchronous>, transform_indices = @transform_4, window_bounds = array<i64: 98, 256>}]} {
    %c0 = arith.constant 0 : index
    %c0_0 = arith.constant 0 : index
    %0 = vector.load %arg1[%c0, %c0_0] : memref<98x1xf32, #tpu.memory_space<vmem>>, vector<98x1xf32>
    %c0_1 = arith.constant 0 : index
    %c0_2 = arith.constant 0 : index
    %1 = vector.load %arg2[%c0_1, %c0_2] : memref<98x256xf32, #tpu.memory_space<vmem>>, vector<98x256xf32>
    %2 = vector.broadcast %0 : vector<98x1xf32> to vector<98x256xf32>
    %3 = arith.mulf %2, %1 : vector<98x256xf32>
    %cst = arith.constant dense<0.000000e+00> : vector<256xf32>
    %4 = vector.multi_reduction <add>, %3, %cst [0] : vector<98x256xf32> to vector<256xf32>
    %5 = vector.shape_cast %4 : vector<256xf32> to vector<1x256xf32>
    %6 = arith.mulf %3, %3 : vector<98x256xf32>
    %cst_3 = arith.constant dense<0.000000e+00> : vector<256xf32>
    %7 = vector.multi_reduction <add>, %6, %cst_3 [0] : vector<98x256xf32> to vector<256xf32>
    %8 = vector.shape_cast %7 : vector<256xf32> to vector<1x256xf32>
    %cst_4 = arith.constant 9.800000e+01 : f32
    %9 = vector.broadcast %cst_4 : f32 to vector<1x256xf32>
    %10 = arith.divf %5, %9 : vector<1x256xf32>
    %cst_5 = arith.constant 9.800000e+01 : f32
    %11 = vector.broadcast %cst_5 : f32 to vector<1x256xf32>
    %12 = arith.divf %8, %11 : vector<1x256xf32>
    %13 = arith.mulf %10, %10 : vector<1x256xf32>
    %14 = arith.subf %12, %13 : vector<1x256xf32>
    %cst_6 = arith.constant 0.000000e+00 : f32
    %15 = vector.broadcast %cst_6 : f32 to vector<1x256xf32>
    %16 = arith.maximumf %14, %15 : vector<1x256xf32>
    %c0_7 = arith.constant 0 : index
    %c0_8 = arith.constant 0 : index
    %17 = vector.load %arg3[%c0_7, %c0_8] : memref<1x256xf32, #tpu.memory_space<vmem>>, vector<1x256xf32>
    %cst_9 = arith.constant 9.99999974E-6 : f32
    %18 = vector.broadcast %cst_9 : f32 to vector<1x256xf32>
    %19 = arith.addf %16, %18 : vector<1x256xf32>
    %20 = math.rsqrt %19 : vector<1x256xf32>
    %21 = arith.mulf %17, %20 : vector<1x256xf32>
    %c0_10 = arith.constant 0 : index
    %c0_11 = arith.constant 0 : index
    %22 = vector.load %arg4[%c0_10, %c0_11] : memref<1x256xf32, #tpu.memory_space<vmem>>, vector<1x256xf32>
    %23 = arith.mulf %10, %21 : vector<1x256xf32>
    %24 = arith.subf %22, %23 : vector<1x256xf32>
    %25 = vector.broadcast %21 : vector<1x256xf32> to vector<98x256xf32>
    %26 = arith.mulf %3, %25 : vector<98x256xf32>
    %27 = vector.broadcast %24 : vector<1x256xf32> to vector<98x256xf32>
    %28 = arith.addf %26, %27 : vector<98x256xf32>
    %cst_12 = arith.constant 0.000000e+00 : f32
    %29 = vector.broadcast %cst_12 : f32 to vector<98x256xf32>
    %30 = arith.maximumf %28, %29 : vector<98x256xf32>
    %31 = arith.truncf %30 : vector<98x256xf32> to vector<98x256xbf16>
    %c0_13 = arith.constant 0 : index
    %c0_14 = arith.constant 0 : index
    %32 = vector.load %arg5[%c0_13, %c0_14] : memref<98x256xbf16, #tpu.memory_space<vmem>>, vector<98x256xbf16>
    tpu.vector_store %arg5[%c0_13, %c0_14], %31 {strides = array<i32>} : memref<98x256xbf16, #tpu.memory_space<vmem>>, vector<98x256xbf16>,
    return
  }
  func.func @transform_0(%arg0: i32) -> (i32, i32) {
    %c0_i32 = arith.constant 0 : i32
    %c0_i32_0 = arith.constant 0 : i32
    %c0_i32_1 = arith.constant 0 : i32
    return %c0_i32, %c0_i32_0 : i32, i32
  }
  func.func @transform_1(%arg0: i32) -> (i32, i32) {
    %c0_i32 = arith.constant 0 : i32
    %c0_i32_0 = arith.constant 0 : i32
    %c0_i32_1 = arith.constant 0 : i32
    return %c0_i32, %c0_i32_0 : i32, i32
  }
  func.func @transform_2(%arg0: i32) -> (i32, i32) {
    %c0_i32 = arith.constant 0 : i32
    %c0_i32_0 = arith.constant 0 : i32
    %c0_i32_1 = arith.constant 0 : i32
    return %c0_i32, %c0_i32_0 : i32, i32
  }
  func.func @transform_3(%arg0: i32) -> (i32, i32) {
    %c0_i32 = arith.constant 0 : i32
    %c0_i32_0 = arith.constant 0 : i32
    %c0_i32_1 = arith.constant 0 : i32
    return %c0_i32, %c0_i32_0 : i32, i32
  }
  func.func @transform_4(%arg0: i32) -> (i32, i32) {
    %c0_i32 = arith.constant 0 : i32
    %c0_i32_0 = arith.constant 0 : i32
    %c0_i32_1 = arith.constant 0 : i32
    return %c0_i32, %c0_i32_0 : i32, i32
  }
}

module attributes {stable_mosaic.version = 11 : i64} {
  func.func @_gemm_bn_relu_kernel(%arg0: i32, %arg1: memref<56x4096xbf16, #tpu.memory_space<vmem>>, %arg2: memref<4096x128xbf16, #tpu.memory_space<vmem>>, %arg3: memref<1x128xf32, #tpu.memory_space<vmem>>, %arg4: memref<1x128xf32, #tpu.memory_space<vmem>>, %arg5: memref<392x128xbf16, #tpu.memory_space<vmem>>, %arg6: memref<392x128xf32, #tpu.memory_space<vmem>>, %arg7: memref<2x128xf32, #tpu.memory_space<vmem>>) attributes {dimension_semantics = [#tpu.dimension_semantics<arbitrary>], iteration_bounds = array<i64: 7>, scalar_prefetch = 0 : i64, scratch_operands = 2 : i64, tpu.core_type = #tpu.core_type<tc>, window_params = [{transform_indices = @transform_0, window_bounds = array<i64: 56, 4096>}, {pipeline_mode = #tpu.pipeline_mode<synchronous>, transform_indices = @transform_1, window_bounds = array<i64: 4096, 128>}, {pipeline_mode = #tpu.pipeline_mode<synchronous>, transform_indices = @transform_2, window_bounds = array<i64: 1, 128>}, {pipeline_mode = #tpu.pipeline_mode<synchronous>, transform_indices = @transform_3, window_bounds = array<i64: 1, 128>}, {pipeline_mode = #tpu.pipeline_mode<synchronous>, transform_indices = @transform_4, window_bounds = array<i64: 392, 128>}]} {
    %c0_i32 = arith.constant 0 : i32
    %0 = arith.cmpi eq, %arg0, %c0_i32 : i32
    %1 = arith.extui %0 : i1 to i32
    %c0_i32_0 = arith.constant 0 : i32
    %2 = arith.cmpi ne, %1, %c0_i32_0 : i32
    scf.if %2 {
      %cst_15 = arith.constant 0.000000e+00 : f32
      %24 = vector.broadcast %cst_15 : f32 to vector<2x128xf32>
      %c0_16 = arith.constant 0 : index
      %c0_17 = arith.constant 0 : index
      %25 = vector.load %arg7[%c0_16, %c0_17] : memref<2x128xf32, #tpu.memory_space<vmem>>, vector<2x128xf32>
      tpu.vector_store %arg7[%c0_16, %c0_17], %24 {strides = array<i32>} : memref<2x128xf32, #tpu.memory_space<vmem>>, vector<2x128xf32>,
    } else {
    }
    %c0 = arith.constant 0 : index
    %c0_1 = arith.constant 0 : index
    %3 = vector.load %arg1[%c0, %c0_1] : memref<56x4096xbf16, #tpu.memory_space<vmem>>, vector<56x4096xbf16>
    %c0_2 = arith.constant 0 : index
    %c0_3 = arith.constant 0 : index
    %4 = vector.load %arg2[%c0_2, %c0_3] : memref<4096x128xbf16, #tpu.memory_space<vmem>>, vector<4096x128xbf16>
    %cst = arith.constant dense<0.000000e+00> : vector<56x128xf32>
    %5 = tpu.matmul %3, %4, %cst {dimension_numbers = #tpu.dot_dimension_numbers<[1], [0], [0], [1], [0, 0, 1, 1], [], []>} : vector<56x4096xbf16>, vector<4096x128xbf16>, vector<56x128xf32> -> vector<56x128xf32>
    %c56_i32 = arith.constant 56 : i32
    %6 = arith.muli %arg0, %c56_i32 : i32
    %7 = tpu.assume_multiple %6, 8 : i32
    %8 = arith.index_cast %7 : i32 to index
    %c0_4 = arith.constant 0 : index
    %9 = vector.load %arg6[%8, %c0_4] : memref<392x128xf32, #tpu.memory_space<vmem>>, vector<56x128xf32>
    tpu.vector_store %arg6[%8, %c0_4], %5 {strides = array<i32>} : memref<392x128xf32, #tpu.memory_space<vmem>>, vector<56x128xf32>,
    %c0_5 = arith.constant 0 : index
    %c0_6 = arith.constant 0 : index
    %10 = vector.load %arg7[%c0_5, %c0_6] : memref<2x128xf32, #tpu.memory_space<vmem>>, vector<1x128xf32>
    %cst_7 = arith.constant dense<0.000000e+00> : vector<128xf32>
    %11 = vector.multi_reduction <add>, %5, %cst_7 [0] : vector<56x128xf32> to vector<128xf32>
    %12 = vector.shape_cast %11 : vector<128xf32> to vector<1x128xf32>
    %13 = arith.addf %10, %12 : vector<1x128xf32>
    %c0_8 = arith.constant 0 : index
    %c0_9 = arith.constant 0 : index
    %14 = vector.load %arg7[%c0_8, %c0_9] : memref<2x128xf32, #tpu.memory_space<vmem>>, vector<1x128xf32>
    tpu.vector_store %arg7[%c0_8, %c0_9], %13 {strides = array<i32>} : memref<2x128xf32, #tpu.memory_space<vmem>>, vector<1x128xf32>,
    %c1 = arith.constant 1 : index
    %c0_10 = arith.constant 0 : index
    %15 = vector.load %arg7[%c1, %c0_10] : memref<2x128xf32, #tpu.memory_space<vmem>>, vector<1x128xf32>
    %16 = arith.mulf %5, %5 : vector<56x128xf32>
    %cst_11 = arith.constant dense<0.000000e+00> : vector<128xf32>
    %17 = vector.multi_reduction <add>, %16, %cst_11 [0] : vector<56x128xf32> to vector<128xf32>
    %18 = vector.shape_cast %17 : vector<128xf32> to vector<1x128xf32>
    %19 = arith.addf %15, %18 : vector<1x128xf32>
    %c1_12 = arith.constant 1 : index
    %c0_13 = arith.constant 0 : index
    %20 = vector.load %arg7[%c1_12, %c0_13] : memref<2x128xf32, #tpu.memory_space<vmem>>, vector<1x128xf32>
    tpu.vector_store %arg7[%c1_12, %c0_13], %19 {strides = array<i32>} : memref<2x128xf32, #tpu.memory_space<vmem>>, vector<1x128xf32>,
    %c6_i32 = arith.constant 6 : i32
    %21 = arith.cmpi eq, %arg0, %c6_i32 : i32
    %22 = arith.extui %21 : i1 to i32
    %c0_i32_14 = arith.constant 0 : i32
    %23 = arith.cmpi ne, %22, %c0_i32_14 : i32
    scf.if %23 {
      %c0_15 = arith.constant 0 : index
      %c0_16 = arith.constant 0 : index
      %24 = vector.load %arg7[%c0_15, %c0_16] : memref<2x128xf32, #tpu.memory_space<vmem>>, vector<1x128xf32>
      %cst_17 = arith.constant 3.920000e+02 : f32
      %25 = vector.broadcast %cst_17 : f32 to vector<1x128xf32>
      %26 = arith.divf %24, %25 : vector<1x128xf32>
      %c1_18 = arith.constant 1 : index
      %c0_19 = arith.constant 0 : index
      %27 = vector.load %arg7[%c1_18, %c0_19] : memref<2x128xf32, #tpu.memory_space<vmem>>, vector<1x128xf32>
      %cst_20 = arith.constant 3.920000e+02 : f32
      %28 = vector.broadcast %cst_20 : f32 to vector<1x128xf32>
      %29 = arith.divf %27, %28 : vector<1x128xf32>
      %30 = arith.mulf %26, %26 : vector<1x128xf32>
      %31 = arith.subf %29, %30 : vector<1x128xf32>
      %cst_21 = arith.constant 0.000000e+00 : f32
      %32 = vector.broadcast %cst_21 : f32 to vector<1x128xf32>
      %33 = arith.maximumf %31, %32 : vector<1x128xf32>
      %c0_22 = arith.constant 0 : index
      %c0_23 = arith.constant 0 : index
      %34 = vector.load %arg3[%c0_22, %c0_23] : memref<1x128xf32, #tpu.memory_space<vmem>>, vector<1x128xf32>
      %cst_24 = arith.constant 9.99999974E-6 : f32
      %35 = vector.broadcast %cst_24 : f32 to vector<1x128xf32>
      %36 = arith.addf %33, %35 : vector<1x128xf32>
      %37 = math.rsqrt %36 : vector<1x128xf32>
      %38 = arith.mulf %34, %37 : vector<1x128xf32>
      %c0_25 = arith.constant 0 : index
      %c0_26 = arith.constant 0 : index
      %39 = vector.load %arg4[%c0_25, %c0_26] : memref<1x128xf32, #tpu.memory_space<vmem>>, vector<1x128xf32>
      %40 = arith.mulf %26, %38 : vector<1x128xf32>
      %41 = arith.subf %39, %40 : vector<1x128xf32>
      %c0_27 = arith.constant 0 : index
      %c0_28 = arith.constant 0 : index
      %42 = vector.load %arg6[%c0_27, %c0_28] : memref<392x128xf32, #tpu.memory_space<vmem>>, vector<392x128xf32>
      %43 = vector.broadcast %38 : vector<1x128xf32> to vector<392x128xf32>
      %44 = arith.mulf %42, %43 : vector<392x128xf32>
      %45 = vector.broadcast %41 : vector<1x128xf32> to vector<392x128xf32>
      %46 = arith.addf %44, %45 : vector<392x128xf32>
      %cst_29 = arith.constant 0.000000e+00 : f32
      %47 = vector.broadcast %cst_29 : f32 to vector<392x128xf32>
      %48 = arith.maximumf %46, %47 : vector<392x128xf32>
      %49 = arith.truncf %48 : vector<392x128xf32> to vector<392x128xbf16>
      %c0_30 = arith.constant 0 : index
      %c0_31 = arith.constant 0 : index
      %50 = vector.load %arg5[%c0_30, %c0_31] : memref<392x128xbf16, #tpu.memory_space<vmem>>, vector<392x128xbf16>
      tpu.vector_store %arg5[%c0_30, %c0_31], %49 {strides = array<i32>} : memref<392x128xbf16, #tpu.memory_space<vmem>>, vector<392x128xbf16>,
    } else {
    }
    return
  }
  func.func @transform_0(%arg0: i32) -> (i32, i32) {
    %c0_i32 = arith.constant 0 : i32
    %c0_i32_0 = arith.constant 0 : i32
    return %arg0, %c0_i32 : i32, i32
  }
  func.func @transform_1(%arg0: i32) -> (i32, i32) {
    %c0_i32 = arith.constant 0 : i32
    %c0_i32_0 = arith.constant 0 : i32
    %c0_i32_1 = arith.constant 0 : i32
    return %c0_i32, %c0_i32_0 : i32, i32
  }
  func.func @transform_2(%arg0: i32) -> (i32, i32) {
    %c0_i32 = arith.constant 0 : i32
    %c0_i32_0 = arith.constant 0 : i32
    %c0_i32_1 = arith.constant 0 : i32
    return %c0_i32, %c0_i32_0 : i32, i32
  }
  func.func @transform_3(%arg0: i32) -> (i32, i32) {
    %c0_i32 = arith.constant 0 : i32
    %c0_i32_0 = arith.constant 0 : i32
    %c0_i32_1 = arith.constant 0 : i32
    return %c0_i32, %c0_i32_0 : i32, i32
  }
  func.func @transform_4(%arg0: i32) -> (i32, i32) {
    %c0_i32 = arith.constant 0 : i32
    %c0_i32_0 = arith.constant 0 : i32
    %c0_i32_1 = arith.constant 0 : i32
    return %c0_i32, %c0_i32_0 : i32, i32
  }
}

module attributes {stable_mosaic.version = 11 : i64} {
  func.func @_gemm_bn_relu_kernel(%arg0: i32, %arg1: memref<224x2048xbf16, #tpu.memory_space<vmem>>, %arg2: memref<2048x128xbf16, #tpu.memory_space<vmem>>, %arg3: memref<1x128xf32, #tpu.memory_space<vmem>>, %arg4: memref<1x128xf32, #tpu.memory_space<vmem>>, %arg5: memref<1568x128xbf16, #tpu.memory_space<vmem>>, %arg6: memref<1568x128xf32, #tpu.memory_space<vmem>>, %arg7: memref<2x128xf32, #tpu.memory_space<vmem>>) attributes {dimension_semantics = [#tpu.dimension_semantics<arbitrary>], iteration_bounds = array<i64: 7>, scalar_prefetch = 0 : i64, scratch_operands = 2 : i64, tpu.core_type = #tpu.core_type<tc>, window_params = [{transform_indices = @transform_0, window_bounds = array<i64: 224, 2048>}, {pipeline_mode = #tpu.pipeline_mode<synchronous>, transform_indices = @transform_1, window_bounds = array<i64: 2048, 128>}, {pipeline_mode = #tpu.pipeline_mode<synchronous>, transform_indices = @transform_2, window_bounds = array<i64: 1, 128>}, {pipeline_mode = #tpu.pipeline_mode<synchronous>, transform_indices = @transform_3, window_bounds = array<i64: 1, 128>}, {pipeline_mode = #tpu.pipeline_mode<synchronous>, transform_indices = @transform_4, window_bounds = array<i64: 1568, 128>}]} {
    %c0_i32 = arith.constant 0 : i32
    %0 = arith.cmpi eq, %arg0, %c0_i32 : i32
    %1 = arith.extui %0 : i1 to i32
    %c0_i32_0 = arith.constant 0 : i32
    %2 = arith.cmpi ne, %1, %c0_i32_0 : i32
    scf.if %2 {
      %cst_15 = arith.constant 0.000000e+00 : f32
      %24 = vector.broadcast %cst_15 : f32 to vector<2x128xf32>
      %c0_16 = arith.constant 0 : index
      %c0_17 = arith.constant 0 : index
      %25 = vector.load %arg7[%c0_16, %c0_17] : memref<2x128xf32, #tpu.memory_space<vmem>>, vector<2x128xf32>
      tpu.vector_store %arg7[%c0_16, %c0_17], %24 {strides = array<i32>} : memref<2x128xf32, #tpu.memory_space<vmem>>, vector<2x128xf32>,
    } else {
    }
    %c0 = arith.constant 0 : index
    %c0_1 = arith.constant 0 : index
    %3 = vector.load %arg1[%c0, %c0_1] : memref<224x2048xbf16, #tpu.memory_space<vmem>>, vector<224x2048xbf16>
    %c0_2 = arith.constant 0 : index
    %c0_3 = arith.constant 0 : index
    %4 = vector.load %arg2[%c0_2, %c0_3] : memref<2048x128xbf16, #tpu.memory_space<vmem>>, vector<2048x128xbf16>
    %cst = arith.constant dense<0.000000e+00> : vector<224x128xf32>
    %5 = tpu.matmul %3, %4, %cst {dimension_numbers = #tpu.dot_dimension_numbers<[1], [0], [0], [1], [0, 0, 1, 1], [], []>} : vector<224x2048xbf16>, vector<2048x128xbf16>, vector<224x128xf32> -> vector<224x128xf32>
    %c224_i32 = arith.constant 224 : i32
    %6 = arith.muli %arg0, %c224_i32 : i32
    %7 = tpu.assume_multiple %6, 8 : i32
    %8 = arith.index_cast %7 : i32 to index
    %c0_4 = arith.constant 0 : index
    %9 = vector.load %arg6[%8, %c0_4] : memref<1568x128xf32, #tpu.memory_space<vmem>>, vector<224x128xf32>
    tpu.vector_store %arg6[%8, %c0_4], %5 {strides = array<i32>} : memref<1568x128xf32, #tpu.memory_space<vmem>>, vector<224x128xf32>,
    %c0_5 = arith.constant 0 : index
    %c0_6 = arith.constant 0 : index
    %10 = vector.load %arg7[%c0_5, %c0_6] : memref<2x128xf32, #tpu.memory_space<vmem>>, vector<1x128xf32>
    %cst_7 = arith.constant dense<0.000000e+00> : vector<128xf32>
    %11 = vector.multi_reduction <add>, %5, %cst_7 [0] : vector<224x128xf32> to vector<128xf32>
    %12 = vector.shape_cast %11 : vector<128xf32> to vector<1x128xf32>
    %13 = arith.addf %10, %12 : vector<1x128xf32>
    %c0_8 = arith.constant 0 : index
    %c0_9 = arith.constant 0 : index
    %14 = vector.load %arg7[%c0_8, %c0_9] : memref<2x128xf32, #tpu.memory_space<vmem>>, vector<1x128xf32>
    tpu.vector_store %arg7[%c0_8, %c0_9], %13 {strides = array<i32>} : memref<2x128xf32, #tpu.memory_space<vmem>>, vector<1x128xf32>,
    %c1 = arith.constant 1 : index
    %c0_10 = arith.constant 0 : index
    %15 = vector.load %arg7[%c1, %c0_10] : memref<2x128xf32, #tpu.memory_space<vmem>>, vector<1x128xf32>
    %16 = arith.mulf %5, %5 : vector<224x128xf32>
    %cst_11 = arith.constant dense<0.000000e+00> : vector<128xf32>
    %17 = vector.multi_reduction <add>, %16, %cst_11 [0] : vector<224x128xf32> to vector<128xf32>
    %18 = vector.shape_cast %17 : vector<128xf32> to vector<1x128xf32>
    %19 = arith.addf %15, %18 : vector<1x128xf32>
    %c1_12 = arith.constant 1 : index
    %c0_13 = arith.constant 0 : index
    %20 = vector.load %arg7[%c1_12, %c0_13] : memref<2x128xf32, #tpu.memory_space<vmem>>, vector<1x128xf32>
    tpu.vector_store %arg7[%c1_12, %c0_13], %19 {strides = array<i32>} : memref<2x128xf32, #tpu.memory_space<vmem>>, vector<1x128xf32>,
    %c6_i32 = arith.constant 6 : i32
    %21 = arith.cmpi eq, %arg0, %c6_i32 : i32
    %22 = arith.extui %21 : i1 to i32
    %c0_i32_14 = arith.constant 0 : i32
    %23 = arith.cmpi ne, %22, %c0_i32_14 : i32
    scf.if %23 {
      %c0_15 = arith.constant 0 : index
      %c0_16 = arith.constant 0 : index
      %24 = vector.load %arg7[%c0_15, %c0_16] : memref<2x128xf32, #tpu.memory_space<vmem>>, vector<1x128xf32>
      %cst_17 = arith.constant 1.568000e+03 : f32
      %25 = vector.broadcast %cst_17 : f32 to vector<1x128xf32>
      %26 = arith.divf %24, %25 : vector<1x128xf32>
      %c1_18 = arith.constant 1 : index
      %c0_19 = arith.constant 0 : index
      %27 = vector.load %arg7[%c1_18, %c0_19] : memref<2x128xf32, #tpu.memory_space<vmem>>, vector<1x128xf32>
      %cst_20 = arith.constant 1.568000e+03 : f32
      %28 = vector.broadcast %cst_20 : f32 to vector<1x128xf32>
      %29 = arith.divf %27, %28 : vector<1x128xf32>
      %30 = arith.mulf %26, %26 : vector<1x128xf32>
      %31 = arith.subf %29, %30 : vector<1x128xf32>
      %cst_21 = arith.constant 0.000000e+00 : f32
      %32 = vector.broadcast %cst_21 : f32 to vector<1x128xf32>
      %33 = arith.maximumf %31, %32 : vector<1x128xf32>
      %c0_22 = arith.constant 0 : index
      %c0_23 = arith.constant 0 : index
      %34 = vector.load %arg3[%c0_22, %c0_23] : memref<1x128xf32, #tpu.memory_space<vmem>>, vector<1x128xf32>
      %cst_24 = arith.constant 9.99999974E-6 : f32
      %35 = vector.broadcast %cst_24 : f32 to vector<1x128xf32>
      %36 = arith.addf %33, %35 : vector<1x128xf32>
      %37 = math.rsqrt %36 : vector<1x128xf32>
      %38 = arith.mulf %34, %37 : vector<1x128xf32>
      %c0_25 = arith.constant 0 : index
      %c0_26 = arith.constant 0 : index
      %39 = vector.load %arg4[%c0_25, %c0_26] : memref<1x128xf32, #tpu.memory_space<vmem>>, vector<1x128xf32>
      %40 = arith.mulf %26, %38 : vector<1x128xf32>
      %41 = arith.subf %39, %40 : vector<1x128xf32>
      %c0_27 = arith.constant 0 : index
      %c0_28 = arith.constant 0 : index
      %42 = vector.load %arg6[%c0_27, %c0_28] : memref<1568x128xf32, #tpu.memory_space<vmem>>, vector<1568x128xf32>
      %43 = vector.broadcast %38 : vector<1x128xf32> to vector<1568x128xf32>
      %44 = arith.mulf %42, %43 : vector<1568x128xf32>
      %45 = vector.broadcast %41 : vector<1x128xf32> to vector<1568x128xf32>
      %46 = arith.addf %44, %45 : vector<1568x128xf32>
      %cst_29 = arith.constant 0.000000e+00 : f32
      %47 = vector.broadcast %cst_29 : f32 to vector<1568x128xf32>
      %48 = arith.maximumf %46, %47 : vector<1568x128xf32>
      %49 = arith.truncf %48 : vector<1568x128xf32> to vector<1568x128xbf16>
      %c0_30 = arith.constant 0 : index
      %c0_31 = arith.constant 0 : index
      %50 = vector.load %arg5[%c0_30, %c0_31] : memref<1568x128xbf16, #tpu.memory_space<vmem>>, vector<1568x128xbf16>
      tpu.vector_store %arg5[%c0_30, %c0_31], %49 {strides = array<i32>} : memref<1568x128xbf16, #tpu.memory_space<vmem>>, vector<1568x128xbf16>,
    } else {
    }
    return
  }
  func.func @transform_0(%arg0: i32) -> (i32, i32) {
    %c0_i32 = arith.constant 0 : i32
    %c0_i32_0 = arith.constant 0 : i32
    return %arg0, %c0_i32 : i32, i32
  }
  func.func @transform_1(%arg0: i32) -> (i32, i32) {
    %c0_i32 = arith.constant 0 : i32
    %c0_i32_0 = arith.constant 0 : i32
    %c0_i32_1 = arith.constant 0 : i32
    return %c0_i32, %c0_i32_0 : i32, i32
  }
  func.func @transform_2(%arg0: i32) -> (i32, i32) {
    %c0_i32 = arith.constant 0 : i32
    %c0_i32_0 = arith.constant 0 : i32
    %c0_i32_1 = arith.constant 0 : i32
    return %c0_i32, %c0_i32_0 : i32, i32
  }
  func.func @transform_3(%arg0: i32) -> (i32, i32) {
    %c0_i32 = arith.constant 0 : i32
    %c0_i32_0 = arith.constant 0 : i32
    %c0_i32_1 = arith.constant 0 : i32
    return %c0_i32, %c0_i32_0 : i32, i32
  }
  func.func @transform_4(%arg0: i32) -> (i32, i32) {
    %c0_i32 = arith.constant 0 : i32
    %c0_i32_0 = arith.constant 0 : i32
    %c0_i32_1 = arith.constant 0 : i32
    return %c0_i32, %c0_i32_0 : i32, i32
  }
}

module attributes {stable_mosaic.version = 11 : i64} {
  func.func @_gemm_tanh_kernel(%arg0: i32, %arg1: memref<224x576xbf16, #tpu.memory_space<vmem>>, %arg2: memref<576x128xbf16, #tpu.memory_space<vmem>>, %arg3: memref<224x128xf32, #tpu.memory_space<vmem>>) attributes {dimension_semantics = [#tpu.dimension_semantics<parallel>], iteration_bounds = array<i64: 7>, scalar_prefetch = 0 : i64, scratch_operands = 0 : i64, tpu.core_type = #tpu.core_type<tc>, window_params = [{transform_indices = @transform_0, window_bounds = array<i64: 224, 576>}, {pipeline_mode = #tpu.pipeline_mode<synchronous>, transform_indices = @transform_1, window_bounds = array<i64: 576, 128>}, {transform_indices = @transform_2, window_bounds = array<i64: 224, 128>}]} {
    %c0 = arith.constant 0 : index
    %c0_0 = arith.constant 0 : index
    %0 = vector.load %arg1[%c0, %c0_0] : memref<224x576xbf16, #tpu.memory_space<vmem>>, vector<224x576xbf16>
    %c0_1 = arith.constant 0 : index
    %c0_2 = arith.constant 0 : index
    %1 = vector.load %arg2[%c0_1, %c0_2] : memref<576x128xbf16, #tpu.memory_space<vmem>>, vector<576x128xbf16>
    %cst = arith.constant dense<0.000000e+00> : vector<224x128xf32>
    %2 = tpu.matmul %0, %1, %cst {dimension_numbers = #tpu.dot_dimension_numbers<[1], [0], [0], [1], [0, 0, 1, 1], [], []>} : vector<224x576xbf16>, vector<576x128xbf16>, vector<224x128xf32> -> vector<224x128xf32>
    %3 = math.tanh %2 : vector<224x128xf32>
    %c0_3 = arith.constant 0 : index
    %c0_4 = arith.constant 0 : index
    %4 = vector.load %arg3[%c0_3, %c0_4] : memref<224x128xf32, #tpu.memory_space<vmem>>, vector<224x128xf32>
    tpu.vector_store %arg3[%c0_3, %c0_4], %3 {strides = array<i32>} : memref<224x128xf32, #tpu.memory_space<vmem>>, vector<224x128xf32>,
    return
  }
  func.func @transform_0(%arg0: i32) -> (i32, i32) {
    %c0_i32 = arith.constant 0 : i32
    %c0_i32_0 = arith.constant 0 : i32
    return %arg0, %c0_i32 : i32, i32
  }
  func.func @transform_1(%arg0: i32) -> (i32, i32) {
    %c0_i32 = arith.constant 0 : i32
    %c0_i32_0 = arith.constant 0 : i32
    %c0_i32_1 = arith.constant 0 : i32
    return %c0_i32, %c0_i32_0 : i32, i32
  }
  func.func @transform_2(%arg0: i32) -> (i32, i32) {
    %c0_i32 = arith.constant 0 : i32
    %c0_i32_0 = arith.constant 0 : i32
    return %arg0, %c0_i32 : i32, i32
  }
}

</mosaic_0001>

<llo_original>
// kernel: tile.9
$region0: #{tile.9}
  %s0 = inlined_call_operand.vmem [shape: f32[2,49,256], index: 0, kind: input, shape index: {}]
  %s1 = inlined_call_operand.vmem [shape: f32[98,256], index: 1, kind: output, shape index: {}]
  %v2 = vld [vmem:[%s0] sm:$0xff]
  %3 = vst [vmem:[%s1] sm:$0xff] %v2
  %s4 = scalar_lea.vmem %s0, 8
  %v5 = vld [vmem:[%s4] sm:$0xff]
  %s6 = scalar_lea.vmem %s1, 8
  %7 = vst [vmem:[%s6] sm:$0xff] %v5
  %s8 = scalar_lea.vmem %s0, 16
  %v9 = vld [vmem:[%s8] sm:$0xff]
  %s10 = scalar_lea.vmem %s1, 16
  %11 = vst [vmem:[%s10] sm:$0xff] %v9
  %s12 = scalar_lea.vmem %s0, 24
  %v13 = vld [vmem:[%s12] sm:$0xff]
  %s14 = scalar_lea.vmem %s1, 24
  %15 = vst [vmem:[%s14] sm:$0xff] %v13
  %s16 = scalar_lea.vmem %s0, 32
  %v17 = vld [vmem:[%s16] sm:$0xff]
  %s18 = scalar_lea.vmem %s1, 32
  %19 = vst [vmem:[%s18] sm:$0xff] %v17
  %s20 = scalar_lea.vmem %s0, 40
  %v21 = vld [vmem:[%s20] sm:$0xff]
  %s22 = scalar_lea.vmem %s1, 40
  %23 = vst [vmem:[%s22] sm:$0xff] %v21
  %s24 = scalar_lea.vmem %s0, 48
  %v25 = vld [vmem:[%s24] sm:$0xff]
  %s26 = scalar_lea.vmem %s1, 48
  %27 = vst [vmem:[%s26] sm:$0xff] %v25
  %s28 = scalar_lea.vmem %s0, 56
  %v29 = vld [vmem:[%s28] sm:$0xff]
  %s30 = scalar_lea.vmem %s1, 56
  %31 = vst [vmem:[%s30] sm:$0xff] %v29
  %s32 = scalar_lea.vmem %s0, 64
  %v33 = vld [vmem:[%s32] sm:$0xff]
  %s34 = scalar_lea.vmem %s1, 64
  %35 = vst [vmem:[%s34] sm:$0xff] %v33
  %s36 = scalar_lea.vmem %s0, 72
  %v37 = vld [vmem:[%s36] sm:$0xff]
  %s38 = scalar_lea.vmem %s1, 72
  %39 = vst [vmem:[%s38] sm:$0xff] %v37
  %s40 = scalar_lea.vmem %s0, 80
  %v41 = vld [vmem:[%s40] sm:$0xff]
  %s42 = scalar_lea.vmem %s1, 80
  %43 = vst [vmem:[%s42] sm:$0xff] %v41
  %s44 = scalar_lea.vmem %s0, 88
  %v45 = vld [vmem:[%s44] sm:$0xff]
  %s46 = scalar_lea.vmem %s1, 88
  %47 = vst [vmem:[%s46] sm:$0xff] %v45
  %s48 = scalar_lea.vmem %s0, 96
  %v49 = vld [vmem:[%s48] ss:$8 sm:$0x7]
  %s50 = scalar_lea.vmem %s1, 96
  %51 = vst [vmem:[%s50] ss:$8 sm:$0x3] %v49
  %s52 = scalar_lea.vmem %s1, 95
  %53 = vst [vmem:[%s52] sm:$0x4] %v49
  %s54 = scalar_lea.vmem %s0, 113
  %v55 = vld [vmem:[%s54] sm:$0xff]
  %s56 = scalar_lea.vmem %s1, 98
  %57 = vst [vmem:[%s56] sm:$0x3f] %v55
  %s58 = scalar_lea.vmem %s1, 154
  %59 = vst [vmem:[%s58] ss:$-7 sm:$0xc0] %v55
  %s60 = scalar_lea.vmem %s0, 121
  %v61 = vld [vmem:[%s60] sm:$0xff]
  %s62 = scalar_lea.vmem %s1, 106
  %63 = vst [vmem:[%s62] sm:$0x3f] %v61
  %s64 = scalar_lea.vmem %s1, 162
  %65 = vst [vmem:[%s64] ss:$-7 sm:$0xc0] %v61
  %s66 = scalar_lea.vmem %s0, 129
  %v67 = vld [vmem:[%s66] sm:$0xff]
  %s68 = scalar_lea.vmem %s1, 114
  %69 = vst [vmem:[%s68] sm:$0x3f] %v67
  %s70 = scalar_lea.vmem %s1, 170
  %71 = vst [vmem:[%s70] ss:$-7 sm:$0xc0] %v67
  %s72 = scalar_lea.vmem %s0, 137
  %v73 = vld [vmem:[%s72] sm:$0xff]
  %s74 = scalar_lea.vmem %s1, 122
  %75 = vst [vmem:[%s74] sm:$0x3f] %v73
  %s76 = scalar_lea.vmem %s1, 178
  %77 = vst [vmem:[%s76] ss:$-7 sm:$0xc0] %v73
  %s78 = scalar_lea.vmem %s0, 145
  %v79 = vld [vmem:[%s78] sm:$0xff]
  %s80 = scalar_lea.vmem %s1, 130
  %81 = vst [vmem:[%s80] sm:$0x3f] %v79
  %s82 = scalar_lea.vmem %s1, 186
  %83 = vst [vmem:[%s82] ss:$-7 sm:$0xc0] %v79
  %s84 = scalar_lea.vmem %s0, 153
  %v85 = vld [vmem:[%s84] sm:$0xff]
  %s86 = scalar_lea.vmem %s1, 138
  %87 = vst [vmem:[%s86] sm:$0x3f] %v85
  %s88 = scalar_lea.vmem %s1, 194
  %89 = vst [vmem:[%s88] ss:$-7 sm:$0xc0] %v85
  %s90 = scalar_lea.vmem %s0, 161
  %v91 = vld [vmem:[%s90] sm:$0xff]
  %s92 = scalar_lea.vmem %s1, 146
  %93 = vst [vmem:[%s92] sm:$0x3f] %v91
  %s94 = scalar_lea.vmem %s1, 202
  %95 = vst [vmem:[%s94] ss:$-7 sm:$0xc0] %v91
  %s96 = scalar_lea.vmem %s0, 169
  %v97 = vld [vmem:[%s96] sm:$0xff]
  %s98 = scalar_lea.vmem %s1, 154
  %99 = vst [vmem:[%s98] sm:$0x3f] %v97
  %s100 = scalar_lea.vmem %s1, 210
  %101 = vst [vmem:[%s100] ss:$-7 sm:$0xc0] %v97
  %s102 = scalar_lea.vmem %s0, 177
  %v103 = vld [vmem:[%s102] sm:$0xff]
  %s104 = scalar_lea.vmem %s1, 162
  %105 = vst [vmem:[%s104] sm:$0x3f] %v103
  %s106 = scalar_lea.vmem %s1, 218
  %107 = vst [vmem:[%s106] ss:$-7 sm:$0xc0] %v103
  %s108 = scalar_lea.vmem %s0, 185
  %v109 = vld [vmem:[%s108] sm:$0xff]
  %s110 = scalar_lea.vmem %s1, 170
  %111 = vst [vmem:[%s110] sm:$0x3f] %v109
  %s112 = scalar_lea.vmem %s1, 226
  %113 = vst [vmem:[%s112] ss:$-7 sm:$0xc0] %v109
  %s114 = scalar_lea.vmem %s0, 193
  %v115 = vld [vmem:[%s114] sm:$0xff]
  %s116 = scalar_lea.vmem %s1, 178
  %117 = vst [vmem:[%s116] sm:$0x3f] %v115
  %s118 = scalar_lea.vmem %s1, 234
  %119 = vst [vmem:[%s118] ss:$-7 sm:$0xc0] %v115
  %s120 = scalar_lea.vmem %s0, 201
  %v121 = vld [vmem:[%s120] sm:$0xff]
  %s122 = scalar_lea.vmem %s1, 186
  %123 = vst [vmem:[%s122] sm:$0x3f] %v121
  %s124 = scalar_lea.vmem %s1, 242
  %125 = vst [vmem:[%s124] ss:$-7 sm:$0xc0] %v121
  %s126 = scalar_lea.vmem %s0, 216
  %v127 = vld [vmem:[%s126] sm:$0x1]
  %s128 = scalar_lea.vmem %s1, 201
  %129 = vst [vmem:[%s128] sm:$0x1] %v127

// kernel: generator_forward.4
$region0: #{generator_forward.4}
  #allocation0 [shape = 'u32[]', space=smem, size = 0x4, offset = 0x4, fixed_abs, tag = 'smem constant byte address 0x4 - core index']
  #allocation1 [shape = 'u32[144,128]{1,0:T(1,128)}', space=vmem, size = 0x12000, scoped, tag = 'internal scratch']
  %s0 = inlined_call_operand.vmem [shape: f32[98,1], index: 0, kind: input, shape index: {}]
  %s1 = inlined_call_operand.vmem [shape: f32[98,256], index: 1, kind: input, shape index: {}]
  %s2 = inlined_call_operand.hbm [shape: f32[1,256], index: 2, kind: input, shape index: {}]
  %s3 = inlined_call_operand.hbm [shape: f32[1,256], index: 3, kind: input, shape index: {}]
  %s4 = inlined_call_operand.vmem [shape: bf16[98,256], index: 4, kind: output, shape index: {}]
  %s5 = sld [smem:[#allocation0]]
  $region34: #{generator_forward.4} parent=0
    _
  %s7 = ssub.s32 1, %s5
  %s8 = scalar_select 0, %s7, %s5
  $region1: #{generator_forward.4} parent=0
    #allocation2 [shape = 'u8[1024]{0}', space=vmem, size = 0x400, scoped, tag = 'input window, operand 2, single buffered']
    #allocation3 [shape = 's32[1]{0}', space=sflag, size = 0x4, scoped, tag = 'scoped memory for generator_forward.4']
    #allocation4 [shape = 'u8[1024]{0}', space=vmem, size = 0x400, scoped, tag = 'input window, operand 3, single buffered']
    #allocation5 [shape = 's32[1]{0}', space=sflag, size = 0x4, scoped, tag = 'scoped memory for generator_forward.4']
    %9 = vsyncpa [#allocation3], 0
    %10 = vsyncpa [#allocation5], 0
    // Predicated region
    $region2: #{generator_forward.4} parent=1 // pred_check
      _
    $region3: #{generator_forward.4} parent=1 // pred_check_branch
      %12 = sbr.rel (0) target = $region5
    $region4: #{generator_forward.4} parent=1 // pred_region
      _
    $region5: #{generator_forward.4} parent=1 // pred_fallthru
      _
    // Predicated region
    $region6: #{generator_forward.4} parent=1 // pred_check
      _
    $region7: #{generator_forward.4} parent=1 // pred_check_branch
      %14 = sbr.rel (0) target = $region9
    $region8: #{generator_forward.4} parent=1 // pred_region
      _
    $region9: #{generator_forward.4} parent=1 // pred_fallthru
      _
    // Predicated region
    $region10: #{generator_forward.4} parent=1 // pred_check
      _
    $region11: #{generator_forward.4} parent=1 // pred_check_branch
      %16 = sbr.rel (0) target = $region13
    $region12: #{generator_forward.4} parent=1 // pred_region
      %s18 = ssub.s32 32, 32
      %19 = vsyncadd [#allocation3], %s18
      %s21 = sshll.u32 [#allocation2], 4
      %s22 = int_to_ptr.vmem [resolvable:$true] %s21
      %24 = dma.hbm_to_vmem [thread:$0]  %s2, 32, %s22, [#allocation3]
    $region13: #{generator_forward.4} parent=1 // pred_fallthru
      _
    // Predicated region
    $region14: #{generator_forward.4} parent=1 // pred_check
      _
    $region15: #{generator_forward.4} parent=1 // pred_check_branch
      %26 = sbr.rel (0) target = $region17
    $region16: #{generator_forward.4} parent=1 // pred_region
      %s28 = ssub.s32 32, 32
      %29 = vsyncadd [#allocation5], %s28
      %s31 = sshll.u32 [#allocation4], 4
      %s32 = int_to_ptr.vmem [resolvable:$true] %s31
      %34 = dma.hbm_to_vmem [thread:$0]  %s3, 32, %s32, [#allocation5]
    $region17: #{generator_forward.4} parent=1 // pred_fallthru
      _
    // Predicated region
    $region18: #{generator_forward.4} parent=1 // pred_check
      _
    $region19: #{generator_forward.4} parent=1 // pred_check_branch
      %36 = sbr.rel (0) target = $region21
    $region20: #{generator_forward.4} parent=1 // pred_region
      %37 = dma.done [#allocation3], 32
    $region21: #{generator_forward.4} parent=1 // pred_fallthru
      _
    // Predicated region
    $region22: #{generator_forward.4} parent=1 // pred_check
      _
    $region23: #{generator_forward.4} parent=1 // pred_check_branch
      %39 = sbr.rel (0) target = $region25
    $region24: #{generator_forward.4} parent=1 // pred_region
      %40 = dma.done [#allocation5], 32
    $region25: #{generator_forward.4} parent=1 // pred_fallthru
      _
    %v41 = vld [vmem:[%s0] sm:$0xff]
    %v42 = vld [vmem:[%s0 + $0x8] sm:$0xff]
    %v43 = vld [vmem:[%s0 + $0x10] sm:$0xff]
    %v44 = vld [vmem:[%s0 + $0x18] sm:$0xff]
    %v45 = vld [vmem:[%s0 + $0x20] sm:$0xff]
    %v46 = vld [vmem:[%s0 + $0x28] sm:$0xff]
    %v47 = vld [vmem:[%s0 + $0x30] sm:$0xff]
    %v48 = vld [vmem:[%s0 + $0x38] sm:$0xff]
    %v49 = vld [vmem:[%s0 + $0x40] sm:$0xff]
    %v50 = vld [vmem:[%s0 + $0x48] sm:$0xff]
    %v51 = vld [vmem:[%s0 + $0x50] sm:$0xff]
    %v52 = vld [vmem:[%s0 + $0x58] sm:$0xff]
    %v53 = vld [vmem:[%s0 + $0x60] sm:$0x3]
    %v54 = vld [vmem:[%s1] sm:$0xff]
    %v55 = vld [vmem:[%s1 + $0x8] sm:$0xff]
    %v56 = vld [vmem:[%s1 + $0x10] sm:$0xff]
    %v57 = vld [vmem:[%s1 + $0x18] sm:$0xff]
    %v58 = vld [vmem:[%s1 + $0x20] sm:$0xff]
    %v59 = vld [vmem:[%s1 + $0x28] sm:$0xff]
    %v60 = vld [vmem:[%s1 + $0x30] sm:$0xff]
    %v61 = vld [vmem:[%s1 + $0x38] sm:$0xff]
    %v62 = vld [vmem:[%s1 + $0x40] sm:$0xff]
    %v63 = vld [vmem:[%s1 + $0x48] sm:$0xff]
    %v64 = vld [vmem:[%s1 + $0x50] sm:$0xff]
    %v65 = vld [vmem:[%s1 + $0x58] sm:$0xff]
    %v66 = vld [vmem:[%s1 + $0x60] sm:$0xff]
    %v67 = vld [vmem:[%s1 + $0x68] sm:$0xff]
    %v68 = vld [vmem:[%s1 + $0x70] sm:$0xff]
    %v69 = vld [vmem:[%s1 + $0x78] sm:$0xff]
    %v70 = vld [vmem:[%s1 + $0x80] sm:$0xff]
    %v71 = vld [vmem:[%s1 + $0x88] sm:$0xff]
    %v72 = vld [vmem:[%s1 + $0x90] sm:$0xff]
    %v73 = vld [vmem:[%s1 + $0x98] sm:$0xff]
    %v74 = vld [vmem:[%s1 + $0xa0] sm:$0xff]
    %v75 = vld [vmem:[%s1 + $0xa8] sm:$0xff]
    %v76 = vld [vmem:[%s1 + $0xb0] sm:$0xff]
    %v77 = vld [vmem:[%s1 + $0xb8] sm:$0xff]
    %v78 = vld [vmem:[%s1 + $0xc0] sm:$0x3]
    %v79 = vld [vmem:[%s1 + $0xc8] sm:$0x3]
    %81 = vset.pattern.permute.xlu0 0
    %82 = vperm.xlu0 %81, %v41
    %v83 = vpop.permute.xlu0 %82
    %86 = vset.pattern.permute.xlu0 0
    %87 = vperm.xlu0 %86, %v42
    %v88 = vpop.permute.xlu0 %87
    %91 = vset.pattern.permute.xlu0 0
    %92 = vperm.xlu0 %91, %v43
    %v93 = vpop.permute.xlu0 %92
    %96 = vset.pattern.permute.xlu0 0
    %97 = vperm.xlu0 %96, %v44
    %v98 = vpop.permute.xlu0 %97
    %101 = vset.pattern.permute.xlu0 0
    %102 = vperm.xlu0 %101, %v45
    %v103 = vpop.permute.xlu0 %102
    %106 = vset.pattern.permute.xlu0 0
    %107 = vperm.xlu0 %106, %v46
    %v108 = vpop.permute.xlu0 %107
    %111 = vset.pattern.permute.xlu0 0
    %112 = vperm.xlu0 %111, %v47
    %v113 = vpop.permute.xlu0 %112
    %116 = vset.pattern.permute.xlu0 0
    %117 = vperm.xlu0 %116, %v48
    %v118 = vpop.permute.xlu0 %117
    %121 = vset.pattern.permute.xlu0 0
    %122 = vperm.xlu0 %121, %v49
    %v123 = vpop.permute.xlu0 %122
    %126 = vset.pattern.permute.xlu0 0
    %127 = vperm.xlu0 %126, %v50
    %v128 = vpop.permute.xlu0 %127
    %131 = vset.pattern.permute.xlu0 0
    %132 = vperm.xlu0 %131, %v51
    %v133 = vpop.permute.xlu0 %132
    %136 = vset.pattern.permute.xlu0 0
    %137 = vperm.xlu0 %136, %v52
    %v138 = vpop.permute.xlu0 %137
    %141 = vset.pattern.permute.xlu0 0
    %142 = vperm.xlu0 %141, %v53
    %v143 = vpop.permute.xlu0 %142
    %v145 = vmul.f32 %v83, %v54
    %v146 = vmul.f32 %v83, %v55
    %v147 = vmul.f32 %v88, %v56
    %v148 = vmul.f32 %v88, %v57
    %v149 = vmul.f32 %v93, %v58
    %v150 = vmul.f32 %v93, %v59
    %v151 = vmul.f32 %v98, %v60
    %v152 = vmul.f32 %v98, %v61
    %v153 = vmul.f32 %v103, %v62
    %v154 = vmul.f32 %v103, %v63
    %v155 = vmul.f32 %v108, %v64
    %v156 = vmul.f32 %v108, %v65
    %v157 = vmul.f32 %v113, %v66
    %v158 = vmul.f32 %v113, %v67
    %v159 = vmul.f32 %v118, %v68
    %v160 = vmul.f32 %v118, %v69
    %v161 = vmul.f32 %v123, %v70
    %v162 = vmul.f32 %v123, %v71
    %v163 = vmul.f32 %v128, %v72
    %v164 = vmul.f32 %v128, %v73
    %v165 = vmul.f32 %v133, %v74
    %v166 = vmul.f32 %v133, %v75
    %v167 = vmul.f32 %v138, %v76
    %v168 = vmul.f32 %v138, %v77
    %v169 = vmul.f32 %v143, %v78
    %v170 = vmul.f32 %v143, %v79
    %v171 = vadd.f32 %v145, %v147
    %v172 = vadd.f32 %v171, %v149
    %v173 = vadd.f32 %v172, %v151
    %v174 = vadd.f32 %v173, %v153
    %v175 = vadd.f32 %v174, %v155
    %v176 = vadd.f32 %v175, %v157
    %v177 = vadd.f32 %v176, %v159
    %v178 = vadd.f32 %v177, %v161
    %v179 = vadd.f32 %v178, %v163
    %v180 = vadd.f32 %v179, %v165
    %v181 = vadd.f32 %v180, %v167
    %vm182 = vcmask 1041408
    %v183 = vsel %vm182, %v169, 0.0
    %v184 = vadd.f32 %v181, %v183
    %v185 = vrot.slane %v184, 4
    %v186 = vadd.f32 %v184, %v185
    %v187 = vrot.slane %v186, 2
    %v188 = vadd.f32 %v186, %v187
    %v189 = vrot.slane %v188, 1
    %v190 = vadd.f32 %v188, %v189
    %v191 = vadd.f32 %v146, %v148
    %v192 = vadd.f32 %v191, %v150
    %v193 = vadd.f32 %v192, %v152
    %v194 = vadd.f32 %v193, %v154
    %v195 = vadd.f32 %v194, %v156
    %v196 = vadd.f32 %v195, %v158
    %v197 = vadd.f32 %v196, %v160
    %v198 = vadd.f32 %v197, %v162
    %v199 = vadd.f32 %v198, %v164
    %v200 = vadd.f32 %v199, %v166
    %v201 = vadd.f32 %v200, %v168
    %v202 = vsel %vm182, %v170, 0.0
    %v203 = vadd.f32 %v201, %v202
    %v204 = vrot.slane %v203, 4
    %v205 = vadd.f32 %v203, %v204
    %v206 = vrot.slane %v205, 2
    %v207 = vadd.f32 %v205, %v206
    %v208 = vrot.slane %v207, 1
    %v209 = vadd.f32 %v207, %v208
    %v210 = vmul.f32 %v145, %v145
    %v211 = vmul.f32 %v146, %v146
    %v212 = vmul.f32 %v147, %v147
    %v213 = vmul.f32 %v148, %v148
    %v214 = vmul.f32 %v149, %v149
    %v215 = vmul.f32 %v150, %v150
    %v216 = vmul.f32 %v151, %v151
    %v217 = vmul.f32 %v152, %v152
    %v218 = vmul.f32 %v153, %v153
    %v219 = vmul.f32 %v154, %v154
    %v220 = vmul.f32 %v155, %v155
    %v221 = vmul.f32 %v156, %v156
    %v222 = vmul.f32 %v157, %v157
    %v223 = vmul.f32 %v158, %v158
    %v224 = vmul.f32 %v159, %v159
    %v225 = vmul.f32 %v160, %v160
    %v226 = vmul.f32 %v161, %v161
    %v227 = vmul.f32 %v162, %v162
    %v228 = vmul.f32 %v163, %v163
    %v229 = vmul.f32 %v164, %v164
    %v230 = vmul.f32 %v165, %v165
    %v231 = vmul.f32 %v166, %v166
    %v232 = vmul.f32 %v167, %v167
    %v233 = vmul.f32 %v168, %v168
    %v234 = vmul.f32 %v169, %v169
    %v235 = vmul.f32 %v170, %v170
    %v236 = vadd.f32 %v210, %v212
    %v237 = vadd.f32 %v236, %v214
    %v238 = vadd.f32 %v237, %v216
    %v239 = vadd.f32 %v238, %v218
    %v240 = vadd.f32 %v239, %v220
    %v241 = vadd.f32 %v240, %v222
    %v242 = vadd.f32 %v241, %v224
    %v243 = vadd.f32 %v242, %v226
    %v244 = vadd.f32 %v243, %v228
    %v245 = vadd.f32 %v244, %v230
    %v246 = vadd.f32 %v245, %v232
    %v247 = vsel %vm182, %v234, 0.0
    %v248 = vadd.f32 %v246, %v247
    %v249 = vrot.slane %v248, 4
    %v250 = vadd.f32 %v248, %v249
    %v251 = vrot.slane %v250, 2
    %v252 = vadd.f32 %v250, %v251
    %v253 = vrot.slane %v252, 1
    %v254 = vadd.f32 %v252, %v253
    %v255 = vadd.f32 %v211, %v213
    %v256 = vadd.f32 %v255, %v215
    %v257 = vadd.f32 %v256, %v217
    %v258 = vadd.f32 %v257, %v219
    %v259 = vadd.f32 %v258, %v221
    %v260 = vadd.f32 %v259, %v223
    %v261 = vadd.f32 %v260, %v225
    %v262 = vadd.f32 %v261, %v227
    %v263 = vadd.f32 %v262, %v229
    %v264 = vadd.f32 %v263, %v231
    %v265 = vadd.f32 %v264, %v233
    %v266 = vsel %vm182, %v235, 0.0
    %v267 = vadd.f32 %v265, %v266
    %v268 = vrot.slane %v267, 4
    %v269 = vadd.f32 %v267, %v268
    %v270 = vrot.slane %v269, 2
    %v271 = vadd.f32 %v269, %v270
    %v272 = vrot.slane %v271, 1
    %v273 = vadd.f32 %v271, %v272
    %v274 = vrcp.pop 98.0
    %v275 = vmul.f32 %v190, %v274
    %v276 = vmul.f32 %v209, %v274
    %v277 = vmul.f32 %v254, %v274
    %v278 = vmul.f32 %v273, %v274
    %v279 = vmul.f32 %v275, %v275
    %v280 = vmul.f32 %v276, %v276
    %v281 = vsub.f32 %v277, %v279
    %v282 = vsub.f32 %v278, %v280
    %v283 = vmax.f32 %v281, 0.0
    %v284 = vmax.f32 %v282, 0.0
    %v285 = vld [vmem:[#allocation2] sm:$0x3]
    %v286 = vadd.f32 %v283, 1e-05
    %v287 = vadd.f32 %v284, 1e-05
    %v288 = vrsqrt.pop %v286
    %v289 = vrsqrt.pop %v287
    %v292 = vcombine.low %v288, %v289
    %v294 = vunpack.c.l.s4 1966171168
    %v295 = vunpack.c.0.s8 %v294
    %v296 = vlaneseq
    %v297 = vshrl.u32 %v296, 7
    %v298 = vsub.s32 %v295, %v297
    %v299 = vrot.slane %v292, %v298
    %v301 = vunpack.c.l.s4 1966171168
    %v302 = vunpack.c.0.s8 %v301
    %v303 = vlaneseq
    %v304 = vshrl.u32 %v303, 7
    %v305 = vsub.s32 %v302, %v304
    %v306 = vrot.slane %v299, %v305
    %v308 = vmul.f32 %v285, %v306
    %v309 = vld [vmem:[#allocation4] sm:$0x3]
    %v311 = vlaneseq
    %v312 = vshrl.u32 %v311, 7
    %v313 = vsub.s32 0, %v312
    %v314 = vrot.slane %v308, %v313
    %v315 = vlaneseq
    %v316 = vshrl.u32 %v315, 7
    %v317 = vsub.s32 1, %v316
    %v318 = vrot.slane %v308, %v317
    %v321 = vmul.f32 %v275, %v314
    %v322 = vmul.f32 %v276, %v318
    %v325 = vcombine.low %v321, %v322
    %v327 = vunpack.c.l.s4 1966171168
    %v328 = vunpack.c.0.s8 %v327
    %v329 = vlaneseq
    %v330 = vshrl.u32 %v329, 7
    %v331 = vsub.s32 %v328, %v330
    %v332 = vrot.slane %v325, %v331
    %v334 = vunpack.c.l.s4 1966171168
    %v335 = vunpack.c.0.s8 %v334
    %v336 = vlaneseq
    %v337 = vshrl.u32 %v336, 7
    %v338 = vsub.s32 %v335, %v337
    %v339 = vrot.slane %v332, %v338
    %v341 = vsub.f32 %v309, %v339
    %v342 = vmul.f32 %v145, %v314
    %v343 = vmul.f32 %v146, %v318
    %v344 = vmul.f32 %v147, %v314
    %v345 = vmul.f32 %v148, %v318
    %v346 = vmul.f32 %v149, %v314
    %v347 = vmul.f32 %v150, %v318
    %v348 = vmul.f32 %v151, %v314
    %v349 = vmul.f32 %v152, %v318
    %v350 = vmul.f32 %v153, %v314
    %v351 = vmul.f32 %v154, %v318
    %v352 = vmul.f32 %v155, %v314
    %v353 = vmul.f32 %v156, %v318
    %v354 = vmul.f32 %v157, %v314
    %v355 = vmul.f32 %v158, %v318
    %v356 = vmul.f32 %v159, %v314
    %v357 = vmul.f32 %v160, %v318
    %v358 = vmul.f32 %v161, %v314
    %v359 = vmul.f32 %v162, %v318
    %v360 = vmul.f32 %v163, %v314
    %v361 = vmul.f32 %v164, %v318
    %v362 = vmul.f32 %v165, %v314
    %v363 = vmul.f32 %v166, %v318
    %v364 = vmul.f32 %v167, %v314
    %v365 = vmul.f32 %v168, %v318
    %v366 = vmul.f32 %v169, %v314
    %v367 = vmul.f32 %v170, %v318
    %v369 = vlaneseq
    %v370 = vshrl.u32 %v369, 7
    %v371 = vsub.s32 0, %v370
    %v372 = vrot.slane %v341, %v371
    %v373 = vlaneseq
    %v374 = vshrl.u32 %v373, 7
    %v375 = vsub.s32 1, %v374
    %v376 = vrot.slane %v341, %v375
    %v379 = vadd.f32 %v342, %v372
    %v380 = vadd.f32 %v343, %v376
    %v381 = vadd.f32 %v344, %v372
    %v382 = vadd.f32 %v345, %v376
    %v383 = vadd.f32 %v346, %v372
    %v384 = vadd.f32 %v347, %v376
    %v385 = vadd.f32 %v348, %v372
    %v386 = vadd.f32 %v349, %v376
    %v387 = vadd.f32 %v350, %v372
    %v388 = vadd.f32 %v351, %v376
    %v389 = vadd.f32 %v352, %v372
    %v390 = vadd.f32 %v353, %v376
    %v391 = vadd.f32 %v354, %v372
    %v392 = vadd.f32 %v355, %v376
    %v393 = vadd.f32 %v356, %v372
    %v394 = vadd.f32 %v357, %v376
    %v395 = vadd.f32 %v358, %v372
    %v396 = vadd.f32 %v359, %v376
    %v397 = vadd.f32 %v360, %v372
    %v398 = vadd.f32 %v361, %v376
    %v399 = vadd.f32 %v362, %v372
    %v400 = vadd.f32 %v363, %v376
    %v401 = vadd.f32 %v364, %v372
    %v402 = vadd.f32 %v365, %v376
    %v403 = vadd.f32 %v366, %v372
    %v404 = vadd.f32 %v367, %v376
    %v405 = vmax.f32 %v379, 0.0
    %v406 = vmax.f32 %v380, 0.0
    %v407 = vmax.f32 %v381, 0.0
    %v408 = vmax.f32 %v382, 0.0
    %v409 = vmax.f32 %v383, 0.0
    %v410 = vmax.f32 %v384, 0.0
    %v411 = vmax.f32 %v385, 0.0
    %v412 = vmax.f32 %v386, 0.0
    %v413 = vmax.f32 %v387, 0.0
    %v414 = vmax.f32 %v388, 0.0
    %v415 = vmax.f32 %v389, 0.0
    %v416 = vmax.f32 %v390, 0.0
    %v417 = vmax.f32 %v391, 0.0
    %v418 = vmax.f32 %v392, 0.0
    %v419 = vmax.f32 %v393, 0.0
    %v420 = vmax.f32 %v394, 0.0
    %v421 = vmax.f32 %v395, 0.0
    %v422 = vmax.f32 %v396, 0.0
    %v423 = vmax.f32 %v397, 0.0
    %v424 = vmax.f32 %v398, 0.0
    %v425 = vmax.f32 %v399, 0.0
    %v426 = vmax.f32 %v400, 0.0
    %v427 = vmax.f32 %v401, 0.0
    %v428 = vmax.f32 %v402, 0.0
    %v429 = vmax.f32 %v403, 0.0
    %v430 = vmax.f32 %v404, 0.0
    %v431 = vpack.c.bf16 %v407, %v405
    %v432 = vpack.c.bf16 %v408, %v406
    %v433 = vpack.c.bf16 %v411, %v409
    %v434 = vpack.c.bf16 %v412, %v410
    %v435 = vpack.c.bf16 %v415, %v413
    %v436 = vpack.c.bf16 %v416, %v414
    %v437 = vpack.c.bf16 %v419, %v417
    %v438 = vpack.c.bf16 %v420, %v418
    %v439 = vpack.c.bf16 %v423, %v421
    %v440 = vpack.c.bf16 %v424, %v422
    %v441 = vpack.c.bf16 %v427, %v425
    %v442 = vpack.c.bf16 %v428, %v426
    %v443 = vpack.c.bf16 %v429, %v429
    %v444 = vpack.c.bf16 %v430, %v430
    %v459 = vunpack.c.l.b16 %v431
    %v460 = vunpack.c.l.b16 %v432
    %v461 = vunpack.c.h.b16 %v431
    %v462 = vunpack.c.h.b16 %v432
    %v463 = vunpack.c.l.b16 %v433
    %v464 = vunpack.c.l.b16 %v434
    %v465 = vunpack.c.h.b16 %v433
    %v466 = vunpack.c.h.b16 %v434
    %v467 = vunpack.c.l.b16 %v435
    %v468 = vunpack.c.l.b16 %v436
    %v469 = vunpack.c.h.b16 %v435
    %v470 = vunpack.c.h.b16 %v436
    %v471 = vunpack.c.l.b16 %v437
    %v472 = vunpack.c.l.b16 %v438
    %v473 = vunpack.c.h.b16 %v437
    %v474 = vunpack.c.h.b16 %v438
    %v475 = vunpack.c.l.b16 %v439
    %v476 = vunpack.c.l.b16 %v440
    %v477 = vunpack.c.h.b16 %v439
    %v478 = vunpack.c.h.b16 %v440
    %v479 = vunpack.c.l.b16 %v441
    %v480 = vunpack.c.l.b16 %v442
    %v481 = vunpack.c.h.b16 %v441
    %v482 = vunpack.c.h.b16 %v442
    %v483 = vunpack.c.l.b16 %v443
    %v484 = vunpack.c.l.b16 %v444
    %v485 = vpack.c.b16 %v460, %v459
    %v486 = vpack.c.b16 %v462, %v461
    %v487 = vpack.c.b16 %v464, %v463
    %v488 = vpack.c.b16 %v466, %v465
    %v489 = vpack.c.b16 %v468, %v467
    %v490 = vpack.c.b16 %v470, %v469
    %v491 = vpack.c.b16 %v472, %v471
    %v492 = vpack.c.b16 %v474, %v473
    %v493 = vpack.c.b16 %v476, %v475
    %v494 = vpack.c.b16 %v478, %v477
    %v495 = vpack.c.b16 %v480, %v479
    %v496 = vpack.c.b16 %v482, %v481
    %v497 = vpack.c.b16 %v484, %v483
    %511 = vst [vmem:[%s4] sm:$0xff] %v485
    %512 = vst [vmem:[%s4 + $0x8] sm:$0xff] %v486
    %513 = vst [vmem:[%s4 + $0x10] sm:$0xff] %v487
    %514 = vst [vmem:[%s4 + $0x18] sm:$0xff] %v488
    %515 = vst [vmem:[%s4 + $0x20] sm:$0xff] %v489
    %516 = vst [vmem:[%s4 + $0x28] sm:$0xff] %v490
    %517 = vst [vmem:[%s4 + $0x30] sm:$0xff] %v491
    %518 = vst [vmem:[%s4 + $0x38] sm:$0xff] %v492
    %519 = vst [vmem:[%s4 + $0x40] sm:$0xff] %v493
    %520 = vst [vmem:[%s4 + $0x48] sm:$0xff] %v494
    %521 = vst [vmem:[%s4 + $0x50] sm:$0xff] %v495
    %522 = vst [vmem:[%s4 + $0x58] sm:$0xff] %v496
    %523 = vst [vmem:[%s4 + $0x60] sm:$0x11] %v497
    // Predicated region
    $region26: #{generator_forward.4} parent=1 // pred_check
      _
    $region27: #{generator_forward.4} parent=1 // pred_check_branch
      %525 = sbr.rel (0) target = $region29
    $region28: #{generator_forward.4} parent=1 // pred_region
      _
    $region29: #{generator_forward.4} parent=1 // pred_fallthru
      _
    // Predicated region
    $region30: #{generator_forward.4} parent=1 // pred_check
      _
    $region31: #{generator_forward.4} parent=1 // pred_check_branch
      %527 = sbr.rel (0) target = $region33
    $region32: #{generator_forward.4} parent=1 // pred_region
      _
    $region33: #{generator_forward.4} parent=1 // pred_fallthru
      _
    %528 = vsyncpa [#allocation3], 1
    %529 = vsyncpa [#allocation5], 1

// kernel: generator_forward.5
$region0: #{generator_forward.5}
  #allocation0 [shape = 'u32[]', space=smem, size = 0x4, offset = 0x4, fixed_abs, tag = 'smem constant byte address 0x4 - core index']
  #allocation1 [shape = 'u32[144,128]{1,0:T(1,128)}', space=vmem, size = 0x12000, scoped, tag = 'internal scratch']
  #allocation2 [shape = 'f32[392,128]{1,0:T(8,128)}', space=vmem, size = 0x31000, scoped, tag = 'scratch operand']
  #allocation3 [shape = 'f32[2,128]{1,0:T(2,128)}', space=vmem, size = 0x400, scoped, tag = 'scratch operand']
  %s0 = inlined_call_operand.vmem [shape: bf16[392,4096], index: 0, kind: input, shape index: {}]
  %s1 = inlined_call_operand.vmem [shape: bf16[4096,128], index: 1, kind: input, shape index: {}]
  %s2 = inlined_call_operand.vmem [shape: f32[1,128], index: 2, kind: input, shape index: {}]
  %s3 = inlined_call_operand.vmem [shape: f32[1,128], index: 3, kind: input, shape index: {}]
  %s4 = inlined_call_operand.vmem [shape: bf16[392,128], index: 4, kind: output, shape index: {}]
  %s5 = sld [smem:[#allocation0]]
  $region57: #{generator_forward.5} parent=0
    _
  %s7 = ssub.s32 1, %s5
  %s8 = scalar_select 0, %s7, %s5
  loop: start=0, step=1, limit=9
  $region2: #{generator_forward.5} parent=0 // loop_pre_header
    _
  $region3: #{generator_forward.5} parent=0 // loop_header
    %s10 = sphi 0, %s14
    %p11 = scmp.ge.s32.totalorder %s10, 9
    %s20 = sphi 0, %s22
    %s23 = sphi 0, %s20
    %s24 = sphi 0, %s23
    %s40 = sphi 0, %s24
    %s44 = sphi 0, %s44
    %s46 = sphi 0, %s44
    %s47 = sphi 0, %s46
    %s61 = sphi 0, %s47
    %s65 = sphi 0, %s65
    %s67 = sphi 0, %s65
    %s68 = sphi 0, %s67
    %s82 = sphi 0, %s68
    %s86 = sphi 0, %s86
    %s88 = sphi 0, %s86
    %s89 = sphi 0, %s88
    %s103 = sphi 0, %s89
    %s107 = sphi 0, %s107
    %s109 = sphi 0, %s107
    %s110 = sphi 0, %s109
    %s124 = sphi 0, %s110
  $region4: #{generator_forward.5} parent=0 // loop_header_branch
    %13 = sbr.rel (%p11) target = $region8
  $region5: #{generator_forward.5} parent=0 // loop_body
    %s15 = ssub.s32 %s10, 1
    %s16 = ssub.s32 %s10, 2
    %s17 = sadd.s32 %s10, 1
    %s18 = ssub.s32 %s10, %s17
    %p19 = scmp.eq.s32.totalorder %s18, 0
    %s21 = sadd.s32 %s20, 1
    %s22 = scalar_select %p19, %s20, %s21
    %p25 = pneg %p19
    %p26 = scmp.eq.s32.totalorder %s10, 6
    %p27 = por %p25, %p26
    %p28 = scmp.ne.s32.totalorder %s20, %s23
    %p29 = scmp.eq.s32.totalorder %s10, 0
    %p30 = por %p28, %p29
    %p31 = scmp.ne.s32.totalorder %s20, %s23
    %p32 = scmp.eq.s32.totalorder %s15, 6
    %p33 = por %p31, %p32
    %p34 = scmp.ne.s32.totalorder %s23, %s24
    %p35 = scmp.eq.s32.totalorder %s15, 0
    %p36 = por %p34, %p35
    %p37 = scmp.ne.s32.totalorder %s23, %s24
    %p38 = scmp.eq.s32.totalorder %s16, 6
    %p39 = por %p37, %p38
    %p41 = scmp.ne.s32.totalorder %s24, %s40
    %p42 = scmp.eq.s32.totalorder %s16, 0
    %p43 = por %p41, %p42
    %s45 = sadd.s32 %s44, 1
    %p48 = scmp.eq.s32.totalorder %s10, 6
    %p49 = scmp.ne.s32.totalorder %s44, %s46
    %p50 = scmp.eq.s32.totalorder %s10, 0
    %p51 = por %p49, %p50
    %p52 = scmp.ne.s32.totalorder %s44, %s46
    %p53 = scmp.eq.s32.totalorder %s15, 6
    %p54 = por %p52, %p53
    %p55 = scmp.ne.s32.totalorder %s46, %s47
    %p56 = scmp.eq.s32.totalorder %s15, 0
    %p57 = por %p55, %p56
    %p58 = scmp.ne.s32.totalorder %s46, %s47
    %p59 = scmp.eq.s32.totalorder %s16, 6
    %p60 = por %p58, %p59
    %p62 = scmp.ne.s32.totalorder %s47, %s61
    %p63 = scmp.eq.s32.totalorder %s16, 0
    %p64 = por %p62, %p63
    %s66 = sadd.s32 %s65, 1
    %p69 = scmp.eq.s32.totalorder %s10, 6
    %p70 = scmp.ne.s32.totalorder %s65, %s67
    %p71 = scmp.eq.s32.totalorder %s10, 0
    %p72 = por %p70, %p71
    %p73 = scmp.ne.s32.totalorder %s65, %s67
    %p74 = scmp.eq.s32.totalorder %s15, 6
    %p75 = por %p73, %p74
    %p76 = scmp.ne.s32.totalorder %s67, %s68
    %p77 = scmp.eq.s32.totalorder %s15, 0
    %p78 = por %p76, %p77
    %p79 = scmp.ne.s32.totalorder %s67, %s68
    %p80 = scmp.eq.s32.totalorder %s16, 6
    %p81 = por %p79, %p80
    %p83 = scmp.ne.s32.totalorder %s68, %s82
    %p84 = scmp.eq.s32.totalorder %s16, 0
    %p85 = por %p83, %p84
    %s87 = sadd.s32 %s86, 1
    %p90 = scmp.eq.s32.totalorder %s10, 6
    %p91 = scmp.ne.s32.totalorder %s86, %s88
    %p92 = scmp.eq.s32.totalorder %s10, 0
    %p93 = por %p91, %p92
    %p94 = scmp.ne.s32.totalorder %s86, %s88
    %p95 = scmp.eq.s32.totalorder %s15, 6
    %p96 = por %p94, %p95
    %p97 = scmp.ne.s32.totalorder %s88, %s89
    %p98 = scmp.eq.s32.totalorder %s15, 0
    %p99 = por %p97, %p98
    %p100 = scmp.ne.s32.totalorder %s88, %s89
    %p101 = scmp.eq.s32.totalorder %s16, 6
    %p102 = por %p100, %p101
    %p104 = scmp.ne.s32.totalorder %s89, %s103
    %p105 = scmp.eq.s32.totalorder %s16, 0
    %p106 = por %p104, %p105
    %s108 = sadd.s32 %s107, 1
    %p111 = scmp.eq.s32.totalorder %s10, 6
    %p112 = scmp.ne.s32.totalorder %s107, %s109
    %p113 = scmp.eq.s32.totalorder %s10, 0
    %p114 = por %p112, %p113
    %p115 = scmp.ne.s32.totalorder %s107, %s109
    %p116 = scmp.eq.s32.totalorder %s15, 6
    %p117 = por %p115, %p116
    %p118 = scmp.ne.s32.totalorder %s109, %s110
    %p119 = scmp.eq.s32.totalorder %s15, 0
    %p120 = por %p118, %p119
    %p121 = scmp.ne.s32.totalorder %s109, %s110
    %p122 = scmp.eq.s32.totalorder %s16, 6
    %p123 = por %p121, %p122
    %p125 = scmp.ne.s32.totalorder %s110, %s124
    %p126 = scmp.eq.s32.totalorder %s16, 0
    %p127 = por %p125, %p126
    %p128 = scmp.le.s32.totalorder 1, %s10
    %p129 = scmp.lt.s32.totalorder %s10, 8
    %p130 = pnand %p128, %p129
    %p131 = pneg %p130
    // Predicated region
    $region9: #{generator_forward.5} parent=5 // pred_check
      _
    $region10: #{generator_forward.5} parent=5 // pred_check_branch
      %133 = sbr.rel (%p130) target = $region12
    $region11: #{generator_forward.5} parent=5 // pred_region
      %s134 = ssub.s32 %s10, 1
      // Predicated region
      $region13: #{generator_forward.5} parent=11 // pred_check
        %p135 = pneg %p57
      $region14: #{generator_forward.5} parent=11 // pred_check_branch
        %137 = sbr.rel (%p135) target = $region16
      $region15: #{generator_forward.5} parent=11 // pred_region
        _
      $region16: #{generator_forward.5} parent=11 // pred_fallthru
        _
      // Predicated region
      $region17: #{generator_forward.5} parent=11 // pred_check
        %p138 = pneg %p78
      $region18: #{generator_forward.5} parent=11 // pred_check_branch
        %140 = sbr.rel (%p138) target = $region20
      $region19: #{generator_forward.5} parent=11 // pred_region
        _
      $region20: #{generator_forward.5} parent=11 // pred_fallthru
        _
      // Predicated region
      $region21: #{generator_forward.5} parent=11 // pred_check
        %p141 = pneg %p99
      $region22: #{generator_forward.5} parent=11 // pred_check_branch
        %143 = sbr.rel (%p141) target = $region24
      $region23: #{generator_forward.5} parent=11 // pred_region
        _
      $region24: #{generator_forward.5} parent=11 // pred_fallthru
        _
    $region12: #{generator_forward.5} parent=5 // pred_fallthru
      _
    %p144 = scmp.lt.s32.totalorder %s10, 7
    // Predicated region
    $region25: #{generator_forward.5} parent=5 // pred_check
      %p145 = pneg %p144
    $region26: #{generator_forward.5} parent=5 // pred_check_branch
      %147 = sbr.rel (%p145) target = $region28
    $region27: #{generator_forward.5} parent=5 // pred_region
      // Predicated region
      $region29: #{generator_forward.5} parent=27 // pred_check
        %p148 = pneg %p30
      $region30: #{generator_forward.5} parent=27 // pred_check_branch
        %150 = sbr.rel (%p148) target = $region32
      $region31: #{generator_forward.5} parent=27 // pred_region
        %s151 = smul.u32 7, %s10
        %p152 = scmp.lt.s32.totalorder %s151, 48
        %s153 = scalar_select %p152, %s151, 48
        %s154 = smul.addr %s153, 32
        %s155 = smul.addr %s154, 4
        %s156 = scalar_lea.vmem %s0, %s155
        %s157 = smul.u32 7, %s10
      $region32: #{generator_forward.5} parent=27 // pred_fallthru
        _
    $region28: #{generator_forward.5} parent=5 // pred_fallthru
      _
    %p158 = scmp.le.s32.totalorder 1, %s10
    %p159 = scmp.lt.s32.totalorder %s10, 8
    %p160 = pnand %p158, %p159
    %p161 = pneg %p160
    // Predicated region
    $region33: #{generator_forward.5} parent=5 // pred_check
      _
    $region34: #{generator_forward.5} parent=5 // pred_check_branch
      %163 = sbr.rel (%p160) target = $region36
    $region35: #{generator_forward.5} parent=5 // pred_region
      %s164 = ssub.s32 %s10, 1
      %s165 = smul.u32 7, %s15
      %p166 = scmp.lt.s32.totalorder %s165, 48
      %s167 = scalar_select %p166, %s165, 48
      %s168 = smul.addr %s167, 32
      %s169 = smul.addr %s168, 4
      %s170 = scalar_lea.vmem %s0, %s169
      %p171 = pneg %p36
      %p172 = pneg %p33
      %p173 = pneg %p57
      %p174 = pneg %p54
      %p175 = pneg %p78
      %p176 = pneg %p75
      %p177 = pneg %p99
      %p178 = pneg %p96
      %p179 = pneg %p120
      %p180 = pneg %p117
      %s181 = smul.u32 7, %s15
      %p182 = scmp.lt.s32.totalorder %s181, 48
      %s183 = scalar_select %p182, %s181, 48
      %s184 = smul.addr %s183, 32
      %s185 = smul.addr %s184, 4
      %s186 = scalar_lea.vmem %s0, %s185
      %s187 = smul.u32 7, %s15
      %p189 = scmp.eq.s32.totalorder %s15, 0
      // Predicated region
      $region37: #{generator_forward.5} parent=35 // pred_check
        %p190 = pneg %p189
      $region38: #{generator_forward.5} parent=35 // pred_check_branch
        %192 = sbr.rel (%p190) target = $region40
      $region39: #{generator_forward.5} parent=35 // pred_region
        %193 = vst [vmem:[#allocation3] sm:$0x3] 0.0
      $region40: #{generator_forward.5} parent=35 // pred_fallthru
        _
      %v194 = vld [vmem:[%s186] sm:$0xff]
      %v195 = vld [vmem:[%s186 + $0x8] sm:$0xff]
      %v196 = vld [vmem:[%s186 + $0x10] sm:$0xff]
      %v197 = vld [vmem:[%s186 + $0x18] sm:$0xff]
      %v198 = vld [vmem:[%s186 + $0x20] sm:$0xff]
      %v199 = vld [vmem:[%s186 + $0x28] sm:$0xff]
      %v200 = vld [vmem:[%s186 + $0x30] sm:$0xff]
      %v201 = vld [vmem:[%s186 + $0x38] sm:$0xff]
      %v202 = vld [vmem:[%s186 + $0x40] sm:$0xff]
      %v203 = vld [vmem:[%s186 + $0x48] sm:$0xff]
      %v204 = vld [vmem:[%s186 + $0x50] sm:$0xff]
      %v205 = vld [vmem:[%s186 + $0x58] sm:$0xff]
      %v206 = vld [vmem:[%s186 + $0x60] sm:$0xff]
      %v207 = vld [vmem:[%s186 + $0x68] sm:$0xff]
      %v208 = vld [vmem:[%s186 + $0x70] sm:$0xff]
      %v209 = vld [vmem:[%s186 + $0x78] sm:$0xff]
      %v210 = vld [vmem:[%s186 + $0x80] sm:$0xff]
      %v211 = vld [vmem:[%s186 + $0x88] sm:$0xff]
      %v212 = vld [vmem:[%s186 + $0x90] sm:$0xff]
      %v213 = vld [vmem:[%s186 + $0x98] sm:$0xff]
      %v214 = vld [vmem:[%s186 + $0xa0] sm:$0xff]
      %v215 = vld [vmem:[%s186 + $0xa8] sm:$0xff]
      %v216 = vld [vmem:[%s186 + $0xb0] sm:$0xff]
      %v217 = vld [vmem:[%s186 + $0xb8] sm:$0xff]
      %v218 = vld [vmem:[%s186 + $0xc0] sm:$0xff]
      %v219 = vld [vmem:[%s186 + $0xc8] sm:$0xff]
      %v220 = vld [vmem:[%s186 + $0xd0] sm:$0xff]
      %v221 = vld [vmem:[%s186 + $0xd8] sm:$0xff]
      %v222 = vld [vmem:[%s186 + $0xe0] sm:$0xff]
      %v223 = vld [vmem:[%s186 + $0xe8] sm:$0xff]
      %v224 = vld [vmem:[%s186 + $0xf0] sm:$0xff]
      %v225 = vld [vmem:[%s186 + $0xf8] sm:$0xff]
      %v226 = vld [vmem:[%s186 + $0x100] sm:$0xff]
      %v227 = vld [vmem:[%s186 + $0x108] sm:$0xff]
      %v228 = vld [vmem:[%s186 + $0x110] sm:$0xff]
      %v229 = vld [vmem:[%s186 + $0x118] sm:$0xff]
      %v230 = vld [vmem:[%s186 + $0x120] sm:$0xff]
      %v231 = vld [vmem:[%s186 + $0x128] sm:$0xff]
      %v232 = vld [vmem:[%s186 + $0x130] sm:$0xff]
      %v233 = vld [vmem:[%s186 + $0x138] sm:$0xff]
      %v234 = vld [vmem:[%s186 + $0x140] sm:$0xff]
      %v235 = vld [vmem:[%s186 + $0x148] sm:$0xff]
      %v236 = vld [vmem:[%s186 + $0x150] sm:$0xff]
      %v237 = vld [vmem:[%s186 + $0x158] sm:$0xff]
      %v238 = vld [vmem:[%s186 + $0x160] sm:$0xff]
      %v239 = vld [vmem:[%s186 + $0x168] sm:$0xff]
      %v240 = vld [vmem:[%s186 + $0x170] sm:$0xff]
      %v241 = vld [vmem:[%s186 + $0x178] sm:$0xff]
      %v242 = vld [vmem:[%s186 + $0x180] sm:$0xff]
      %v243 = vld [vmem:[%s186 + $0x188] sm:$0xff]
      %v244 = vld [vmem:[%s186 + $0x190] sm:$0xff]
      %v245 = vld [vmem:[%s186 + $0x198] sm:$0xff]
      %v246 = vld [vmem:[%s186 + $0x1a0] sm:$0xff]
      %v247 = vld [vmem:[%s186 + $0x1a8] sm:$0xff]
      %v248 = vld [vmem:[%s186 + $0x1b0] sm:$0xff]
      %v249 = vld [vmem:[%s186 + $0x1b8] sm:$0xff]
      %v250 = vld [vmem:[%s186 + $0x1c0] sm:$0xff]
      %v251 = vld [vmem:[%s186 + $0x1c8] sm:$0xff]
      %v252 = vld [vmem:[%s186 + $0x1d0] sm:$0xff]
      %v253 = vld [vmem:[%s186 + $0x1d8] sm:$0xff]
      %v254 = vld [vmem:[%s186 + $0x1e0] sm:$0xff]
      %v255 = vld [vmem:[%s186 + $0x1e8] sm:$0xff]
      %v256 = vld [vmem:[%s186 + $0x1f0] sm:$0xff]
      %v257 = vld [vmem:[%s186 + $0x1f8] sm:$0xff]
      %v258 = vld [vmem:[%s186 + $0x200] sm:$0xff]
      %v259 = vld [vmem:[%s186 + $0x208] sm:$0xff]
      %v260 = vld [vmem:[%s186 + $0x210] sm:$0xff]
      %v261 = vld [vmem:[%s186 + $0x218] sm:$0xff]
      %v262 = vld [vmem:[%s186 + $0x220] sm:$0xff]
      %v263 = vld [vmem:[%s186 + $0x228] sm:$0xff]
      %v264 = vld [vmem:[%s186 + $0x230] sm:$0xff]
      %v265 = vld [vmem:[%s186 + $0x238] sm:$0xff]
      %v266 = vld [vmem:[%s186 + $0x240] sm:$0xff]
      %v267 = vld [vmem:[%s186 + $0x248] sm:$0xff]
      %v268 = vld [vmem:[%s186 + $0x250] sm:$0xff]
      %v269 = vld [vmem:[%s186 + $0x258] sm:$0xff]
      %v270 = vld [vmem:[%s186 + $0x260] sm:$0xff]
      %v271 = vld [vmem:[%s186 + $0x268] sm:$0xff]
      %v272 = vld [vmem:[%s186 + $0x270] sm:$0xff]
      %v273 = vld [vmem:[%s186 + $0x278] sm:$0xff]
      %v274 = vld [vmem:[%s186 + $0x280] sm:$0xff]
      %v275 = vld [vmem:[%s186 + $0x288] sm:$0xff]
      %v276 = vld [vmem:[%s186 + $0x290] sm:$0xff]
      %v277 = vld [vmem:[%s186 + $0x298] sm:$0xff]
      %v278 = vld [vmem:[%s186 + $0x2a0] sm:$0xff]
      %v279 = vld [vmem:[%s186 + $0x2a8] sm:$0xff]
      %v280 = vld [vmem:[%s186 + $0x2b0] sm:$0xff]
      %v281 = vld [vmem:[%s186 + $0x2b8] sm:$0xff]
      %v282 = vld [vmem:[%s186 + $0x2c0] sm:$0xff]
      %v283 = vld [vmem:[%s186 + $0x2c8] sm:$0xff]
      %v284 = vld [vmem:[%s186 + $0x2d0] sm:$0xff]
      %v285 = vld [vmem:[%s186 + $0x2d8] sm:$0xff]
      %v286 = vld [vmem:[%s186 + $0x2e0] sm:$0xff]
      %v287 = vld [vmem:[%s186 + $0x2e8] sm:$0xff]
      %v288 = vld [vmem:[%s186 + $0x2f0] sm:$0xff]
      %v289 = vld [vmem:[%s186 + $0x2f8] sm:$0xff]
      %v290 = vld [vmem:[%s186 + $0x300] sm:$0xff]
      %v291 = vld [vmem:[%s186 + $0x308] sm:$0xff]
      %v292 = vld [vmem:[%s186 + $0x310] sm:$0xff]
      %v293 = vld [vmem:[%s186 + $0x318] sm:$0xff]
      %v294 = vld [vmem:[%s186 + $0x320] sm:$0xff]
      %v295 = vld [vmem:[%s186 + $0x328] sm:$0xff]
      %v296 = vld [vmem:[%s186 + $0x330] sm:$0xff]
      %v297 = vld [vmem:[%s186 + $0x338] sm:$0xff]
      %v298 = vld [vmem:[%s186 + $0x340] sm:$0xff]
      %v299 = vld [vmem:[%s186 + $0x348] sm:$0xff]
      %v300 = vld [vmem:[%s186 + $0x350] sm:$0xff]
      %v301 = vld [vmem:[%s186 + $0x358] sm:$0xff]
      %v302 = vld [vmem:[%s186 + $0x360] sm:$0xff]
      %v303 = vld [vmem:[%s186 + $0x368] sm:$0xff]
      %v304 = vld [vmem:[%s186 + $0x370] sm:$0xff]
      %v305 = vld [vmem:[%s186 + $0x378] sm:$0xff]
      %v306 = vld [vmem:[%s1] sm:$0xf]
      %v307 = vld [vmem:[%s1 + $0x4] sm:$0xf]
      %v308 = vld [vmem:[%s1 + $0x8] sm:$0xf]
      %v309 = vld [vmem:[%s1 + $0xc] sm:$0xf]
      %v310 = vld [vmem:[%s1 + $0x10] sm:$0xf]
      %v311 = vld [vmem:[%s1 + $0x14] sm:$0xf]
      %v312 = vld [vmem:[%s1 + $0x18] sm:$0xf]
      %v313 = vld [vmem:[%s1 + $0x1c] sm:$0xf]
      %v314 = vld [vmem:[%s1 + $0x20] sm:$0xf]
      %v315 = vld [vmem:[%s1 + $0x24] sm:$0xf]
      %v316 = vld [vmem:[%s1 + $0x28] sm:$0xf]
      %v317 = vld [vmem:[%s1 + $0x2c] sm:$0xf]
      %v318 = vld [vmem:[%s1 + $0x30] sm:$0xf]
      %v319 = vld [vmem:[%s1 + $0x34] sm:$0xf]
      %v320 = vld [vmem:[%s1 + $0x38] sm:$0xf]
      %v321 = vld [vmem:[%s1 + $0x3c] sm:$0xf]
      %v322 = vld [vmem:[%s1 + $0x40] sm:$0xf]
      %v323 = vld [vmem:[%s1 + $0x44] sm:$0xf]
      %v324 = vld [vmem:[%s1 + $0x48] sm:$0xf]
      %v325 = vld [vmem:[%s1 + $0x4c] sm:$0xf]
      %v326 = vld [vmem:[%s1 + $0x50] sm:$0xf]
      %v327 = vld [vmem:[%s1 + $0x54] sm:$0xf]
      %v328 = vld [vmem:[%s1 + $0x58] sm:$0xf]
      %v329 = vld [vmem:[%s1 + $0x5c] sm:$0xf]
      %v330 = vld [vmem:[%s1 + $0x60] sm:$0xf]
      %v331 = vld [vmem:[%s1 + $0x64] sm:$0xf]
      %v332 = vld [vmem:[%s1 + $0x68] sm:$0xf]
      %v333 = vld [vmem:[%s1 + $0x6c] sm:$0xf]
      %v334 = vld [vmem:[%s1 + $0x70] sm:$0xf]
      %v335 = vld [vmem:[%s1 + $0x74] sm:$0xf]
      %v336 = vld [vmem:[%s1 + $0x78] sm:$0xf]
      %v337 = vld [vmem:[%s1 + $0x7c] sm:$0xf]
      %v338 = vld [vmem:[%s1 + $0x80] sm:$0xf]
      %v339 = vld [vmem:[%s1 + $0x84] sm:$0xf]
      %v340 = vld [vmem:[%s1 + $0x88] sm:$0xf]
      %v341 = vld [vmem:[%s1 + $0x8c] sm:$0xf]
      %v342 = vld [vmem:[%s1 + $0x90] sm:$0xf]
      %v343 = vld [vmem:[%s1 + $0x94] sm:$0xf]
      %v344 = vld [vmem:[%s1 + $0x98] sm:$0xf]
      %v345 = vld [vmem:[%s1 + $0x9c] sm:$0xf]
      %v346 = vld [vmem:[%s1 + $0xa0] sm:$0xf]
      %v347 = vld [vmem:[%s1 + $0xa4] sm:$0xf]
      %v348 = vld [vmem:[%s1 + $0xa8] sm:$0xf]
      %v349 = vld [vmem:[%s1 + $0xac] sm:$0xf]
      %v350 = vld [vmem:[%s1 + $0xb0] sm:$0xf]
      %v351 = vld [vmem:[%s1 + $0xb4] sm:$0xf]
      %v352 = vld [vmem:[%s1 + $0xb8] sm:$0xf]
      %v353 = vld [vmem:[%s1 + $0xbc] sm:$0xf]
      %v354 = vld [vmem:[%s1 + $0xc0] sm:$0xf]
      %v355 = vld [vmem:[%s1 + $0xc4] sm:$0xf]
      %v356 = vld [vmem:[%s1 + $0xc8] sm:$0xf]
      %v357 = vld [vmem:[%s1 + $0xcc] sm:$0xf]
      %v358 = vld [vmem:[%s1 + $0xd0] sm:$0xf]
      %v359 = vld [vmem:[%s1 + $0xd4] sm:$0xf]
      %v360 = vld [vmem:[%s1 + $0xd8] sm:$0xf]
      %v361 = vld [vmem:[%s1 + $0xdc] sm:$0xf]
      %v362 = vld [vmem:[%s1 + $0xe0] sm:$0xf]
      %v363 = vld [vmem:[%s1 + $0xe4] sm:$0xf]
      %v364 = vld [vmem:[%s1 + $0xe8] sm:$0xf]
      %v365 = vld [vmem:[%s1 + $0xec] sm:$0xf]
      %v366 = vld [vmem:[%s1 + $0xf0] sm:$0xf]
      %v367 = vld [vmem:[%s1 + $0xf4] sm:$0xf]
      %v368 = vld [vmem:[%s1 + $0xf8] sm:$0xf]
      %v369 = vld [vmem:[%s1 + $0xfc] sm:$0xf]
      %v370 = vld [vmem:[%s1 + $0x100] sm:$0xf]
      %v371 = vld [vmem:[%s1 + $0x104] sm:$0xf]
      %v372 = vld [vmem:[%s1 + $0x108] sm:$0xf]
      %v373 = vld [vmem:[%s1 + $0x10c] sm:$0xf]
      %v374 = vld [vmem:[%s1 + $0x110] sm:$0xf]
      %v375 = vld [vmem:[%s1 + $0x114] sm:$0xf]
      %v376 = vld [vmem:[%s1 + $0x118] sm:$0xf]
      %v377 = vld [vmem:[%s1 + $0x11c] sm:$0xf]
      %v378 = vld [vmem:[%s1 + $0x120] sm:$0xf]
      %v379 = vld [vmem:[%s1 + $0x124] sm:$0xf]
      %v380 = vld [vmem:[%s1 + $0x128] sm:$0xf]
      %v381 = vld [vmem:[%s1 + $0x12c] sm:$0xf]
      %v382 = vld [vmem:[%s1 + $0x130] sm:$0xf]
      %v383 = vld [vmem:[%s1 + $0x134] sm:$0xf]
      %v384 = vld [vmem:[%s1 + $0x138] sm:$0xf]
      %v385 = vld [vmem:[%s1 + $0x13c] sm:$0xf]
      %v386 = vld [vmem:[%s1 + $0x140] sm:$0xf]
      %v387 = vld [vmem:[%s1 + $0x144] sm:$0xf]
      %v388 = vld [vmem:[%s1 + $0x148] sm:$0xf]
      %v389 = vld [vmem:[%s1 + $0x14c] sm:$0xf]
      %v390 = vld [vmem:[%s1 + $0x150] sm:$0xf]
      %v391 = vld [vmem:[%s1 + $0x154] sm:$0xf]
      %v392 = vld [vmem:[%s1 + $0x158] sm:$0xf]
      %v393 = vld [vmem:[%s1 + $0x15c] sm:$0xf]
      %v394 = vld [vmem:[%s1 + $0x160] sm:$0xf]
      %v395 = vld [vmem:[%s1 + $0x164] sm:$0xf]
      %v396 = vld [vmem:[%s1 + $0x168] sm:$0xf]
      %v397 = vld [vmem:[%s1 + $0x16c] sm:$0xf]
      %v398 = vld [vmem:[%s1 + $0x170] sm:$0xf]
      %v399 = vld [vmem:[%s1 + $0x174] sm:$0xf]
      %v400 = vld [vmem:[%s1 + $0x178] sm:$0xf]
      %v401 = vld [vmem:[%s1 + $0x17c] sm:$0xf]
      %v402 = vld [vmem:[%s1 + $0x180] sm:$0xf]
      %v403 = vld [vmem:[%s1 + $0x184] sm:$0xf]
      %v404 = vld [vmem:[%s1 + $0x188] sm:$0xf]
      %v405 = vld [vmem:[%s1 + $0x18c] sm:$0xf]
      %v406 = vld [vmem:[%s1 + $0x190] sm:$0xf]
      %v407 = vld [vmem:[%s1 + $0x194] sm:$0xf]
      %v408 = vld [vmem:[%s1 + $0x198] sm:$0xf]
      %v409 = vld [vmem:[%s1 + $0x19c] sm:$0xf]
      %v410 = vld [vmem:[%s1 + $0x1a0] sm:$0xf]
      %v411 = vld [vmem:[%s1 + $0x1a4] sm:$0xf]
      %v412 = vld [vmem:[%s1 + $0x1a8] sm:$0xf]
      %v413 = vld [vmem:[%s1 + $0x1ac] sm:$0xf]
      %v414 = vld [vmem:[%s1 + $0x1b0] sm:$0xf]
      %v415 = vld [vmem:[%s1 + $0x1b4] sm:$0xf]
      %v416 = vld [vmem:[%s1 + $0x1b8] sm:$0xf]
      %v417 = vld [vmem:[%s1 + $0x1bc] sm:$0xf]
      %v418 = vld [vmem:[%s1 + $0x1c0] sm:$0xf]
      %v419 = vld [vmem:[%s1 + $0x1c4] sm:$0xf]
      %v420 = vld [vmem:[%s1 + $0x1c8] sm:$0xf]
      %v421 = vld [vmem:[%s1 + $0x1cc] sm:$0xf]
      %v422 = vld [vmem:[%s1 + $0x1d0] sm:$0xf]
      %v423 = vld [vmem:[%s1 + $0x1d4] sm:$0xf]
      %v424 = vld [vmem:[%s1 + $0x1d8] sm:$0xf]
      %v425 = vld [vmem:[%s1 + $0x1dc] sm:$0xf]
      %v426 = vld [vmem:[%s1 + $0x1e0] sm:$0xf]
      %v427 = vld [vmem:[%s1 + $0x1e4] sm:$0xf]
      %v428 = vld [vmem:[%s1 + $0x1e8] sm:$0xf]
      %v429 = vld [vmem:[%s1 + $0x1ec] sm:$0xf]
      %v430 = vld [vmem:[%s1 + $0x1f0] sm:$0xf]
      %v431 = vld [vmem:[%s1 + $0x1f4] sm:$0xf]
      %v432 = vld [vmem:[%s1 + $0x1f8] sm:$0xf]
      %v433 = vld [vmem:[%s1 + $0x1fc] sm:$0xf]
      %v434 = vld [vmem:[%s1 + $0x200] sm:$0xf]
      %v435 = vld [vmem:[%s1 + $0x204] sm:$0xf]
      %v436 = vld [vmem:[%s1 + $0x208] sm:$0xf]
      %v437 = vld [vmem:[%s1 + $0x20c] sm:$0xf]
      %v438 = vld [vmem:[%s1 + $0x210] sm:$0xf]
      %v439 = vld [vmem:[%s1 + $0x214] sm:$0xf]
      %v440 = vld [vmem:[%s1 + $0x218] sm:$0xf]
      %v441 = vld [vmem:[%s1 + $0x21c] sm:$0xf]
      %v442 = vld [vmem:[%s1 + $0x220] sm:$0xf]
      %v443 = vld [vmem:[%s1 + $0x224] sm:$0xf]
      %v444 = vld [vmem:[%s1 + $0x228] sm:$0xf]
      %v445 = vld [vmem:[%s1 + $0x22c] sm:$0xf]
      %v446 = vld [vmem:[%s1 + $0x230] sm:$0xf]
      %v447 = vld [vmem:[%s1 + $0x234] sm:$0xf]
      %v448 = vld [vmem:[%s1 + $0x238] sm:$0xf]
      %v449 = vld [vmem:[%s1 + $0x23c] sm:$0xf]
      %v450 = vld [vmem:[%s1 + $0x240] sm:$0xf]
      %v451 = vld [vmem:[%s1 + $0x244] sm:$0xf]
      %v452 = vld [vmem:[%s1 + $0x248] sm:$0xf]
      %v453 = vld [vmem:[%s1 + $0x24c] sm:$0xf]
      %v454 = vld [vmem:[%s1 + $0x250] sm:$0xf]
      %v455 = vld [vmem:[%s1 + $0x254] sm:$0xf]
      %v456 = vld [vmem:[%s1 + $0x258] sm:$0xf]
      %v457 = vld [vmem:[%s1 + $0x25c] sm:$0xf]
      %v458 = vld [vmem:[%s1 + $0x260] sm:$0xf]
      %v459 = vld [vmem:[%s1 + $0x264] sm:$0xf]
      %v460 = vld [vmem:[%s1 + $0x268] sm:$0xf]
      %v461 = vld [vmem:[%s1 + $0x26c] sm:$0xf]
      %v462 = vld [vmem:[%s1 + $0x270] sm:$0xf]
      %v463 = vld [vmem:[%s1 + $0x274] sm:$0xf]
      %v464 = vld [vmem:[%s1 + $0x278] sm:$0xf]
      %v465 = vld [vmem:[%s1 + $0x27c] sm:$0xf]
      %v466 = vld [vmem:[%s1 + $0x280] sm:$0xf]
      %v467 = vld [vmem:[%s1 + $0x284] sm:$0xf]
      %v468 = vld [vmem:[%s1 + $0x288] sm:$0xf]
      %v469 = vld [vmem:[%s1 + $0x28c] sm:$0xf]
      %v470 = vld [vmem:[%s1 + $0x290] sm:$0xf]
      %v471 = vld [vmem:[%s1 + $0x294] sm:$0xf]
      %v472 = vld [vmem:[%s1 + $0x298] sm:$0xf]
      %v473 = vld [vmem:[%s1 + $0x29c] sm:$0xf]
      %v474 = vld [vmem:[%s1 + $0x2a0] sm:$0xf]
      %v475 = vld [vmem:[%s1 + $0x2a4] sm:$0xf]
      %v476 = vld [vmem:[%s1 + $0x2a8] sm:$0xf]
      %v477 = vld [vmem:[%s1 + $0x2ac] sm:$0xf]
      %v478 = vld [vmem:[%s1 + $0x2b0] sm:$0xf]
      %v479 = vld [vmem:[%s1 + $0x2b4] sm:$0xf]
      %v480 = vld [vmem:[%s1 + $0x2b8] sm:$0xf]
      %v481 = vld [vmem:[%s1 + $0x2bc] sm:$0xf]
      %v482 = vld [vmem:[%s1 + $0x2c0] sm:$0xf]
      %v483 = vld [vmem:[%s1 + $0x2c4] sm:$0xf]
      %v484 = vld [vmem:[%s1 + $0x2c8] sm:$0xf]
      %v485 = vld [vmem:[%s1 + $0x2cc] sm:$0xf]
      %v486 = vld [vmem:[%s1 + $0x2d0] sm:$0xf]
      %v487 = vld [vmem:[%s1 + $0x2d4] sm:$0xf]
      %v488 = vld [vmem:[%s1 + $0x2d8] sm:$0xf]
      %v489 = vld [vmem:[%s1 + $0x2dc] sm:$0xf]
      %v490 = vld [vmem:[%s1 + $0x2e0] sm:$0xf]
      %v491 = vld [vmem:[%s1 + $0x2e4] sm:$0xf]
      %v492 = vld [vmem:[%s1 + $0x2e8] sm:$0xf]
      %v493 = vld [vmem:[%s1 + $0x2ec] sm:$0xf]
      %v494 = vld [vmem:[%s1 + $0x2f0] sm:$0xf]
      %v495 = vld [vmem:[%s1 + $0x2f4] sm:$0xf]
      %v496 = vld [vmem:[%s1 + $0x2f8] sm:$0xf]
      %v497 = vld [vmem:[%s1 + $0x2fc] sm:$0xf]
      %v498 = vld [vmem:[%s1 + $0x300] sm:$0xf]
      %v499 = vld [vmem:[%s1 + $0x304] sm:$0xf]
      %v500 = vld [vmem:[%s1 + $0x308] sm:$0xf]
      %v501 = vld [vmem:[%s1 + $0x30c] sm:$0xf]
      %v502 = vld [vmem:[%s1 + $0x310] sm:$0xf]
      %v503 = vld [vmem:[%s1 + $0x314] sm:$0xf]
      %v504 = vld [vmem:[%s1 + $0x318] sm:$0xf]
      %v505 = vld [vmem:[%s1 + $0x31c] sm:$0xf]
      %v506 = vld [vmem:[%s1 + $0x320] sm:$0xf]
      %v507 = vld [vmem:[%s1 + $0x324] sm:$0xf]
      %v508 = vld [vmem:[%s1 + $0x328] sm:$0xf]
      %v509 = vld [vmem:[%s1 + $0x32c] sm:$0xf]
      %v510 = vld [vmem:[%s1 + $0x330] sm:$0xf]
      %v511 = vld [vmem:[%s1 + $0x334] sm:$0xf]
      %v512 = vld [vmem:[%s1 + $0x338] sm:$0xf]
      %v513 = vld [vmem:[%s1 + $0x33c] sm:$0xf]
      %v514 = vld [vmem:[%s1 + $0x340] sm:$0xf]
      %v515 = vld [vmem:[%s1 + $0x344] sm:$0xf]
      %v516 = vld [vmem:[%s1 + $0x348] sm:$0xf]
      %v517 = vld [vmem:[%s1 + $0x34c] sm:$0xf]
      %v518 = vld [vmem:[%s1 + $0x350] sm:$0xf]
      %v519 = vld [vmem:[%s1 + $0x354] sm:$0xf]
      %v520 = vld [vmem:[%s1 + $0x358] sm:$0xf]
      %v521 = vld [vmem:[%s1 + $0x35c] sm:$0xf]
      %v522 = vld [vmem:[%s1 + $0x360] sm:$0xf]
      %v523 = vld [vmem:[%s1 + $0x364] sm:$0xf]
      %v524 = vld [vmem:[%s1 + $0x368] sm:$0xf]
      %v525 = vld [vmem:[%s1 + $0x36c] sm:$0xf]
      %v526 = vld [vmem:[%s1 + $0x370] sm:$0xf]
      %v527 = vld [vmem:[%s1 + $0x374] sm:$0xf]
      %v528 = vld [vmem:[%s1 + $0x378] sm:$0xf]
      %v529 = vld [vmem:[%s1 + $0x37c] sm:$0xf]
      %v530 = vld [vmem:[%s1 + $0x380] sm:$0xf]
      %v531 = vld [vmem:[%s1 + $0x384] sm:$0xf]
      %v532 = vld [vmem:[%s1 + $0x388] sm:$0xf]
      %v533 = vld [vmem:[%s1 + $0x38c] sm:$0xf]
      %v534 = vld [vmem:[%s1 + $0x390] sm:$0xf]
      %v535 = vld [vmem:[%s1 + $0x394] sm:$0xf]
      %v536 = vld [vmem:[%s1 + $0x398] sm:$0xf]
      %v537 = vld [vmem:[%s1 + $0x39c] sm:$0xf]
      %v538 = vld [vmem:[%s1 + $0x3a0] sm:$0xf]
      %v539 = vld [vmem:[%s1 + $0x3a4] sm:$0xf]
      %v540 = vld [vmem:[%s1 + $0x3a8] sm:$0xf]
      %v541 = vld [vmem:[%s1 + $0x3ac] sm:$0xf]
      %v542 = vld [vmem:[%s1 + $0x3b0] sm:$0xf]
      %v543 = vld [vmem:[%s1 + $0x3b4] sm:$0xf]
      %v544 = vld [vmem:[%s1 + $0x3b8] sm:$0xf]
      %v545 = vld [vmem:[%s1 + $0x3bc] sm:$0xf]
      %v546 = vld [vmem:[%s1 + $0x3c0] sm:$0xf]
      %v547 = vld [vmem:[%s1 + $0x3c4] sm:$0xf]
      %v548 = vld [vmem:[%s1 + $0x3c8] sm:$0xf]
      %v549 = vld [vmem:[%s1 + $0x3cc] sm:$0xf]
      %v550 = vld [vmem:[%s1 + $0x3d0] sm:$0xf]
      %v551 = vld [vmem:[%s1 + $0x3d4] sm:$0xf]
      %v552 = vld [vmem:[%s1 + $0x3d8] sm:$0xf]
      %v553 = vld [vmem:[%s1 + $0x3dc] sm:$0xf]
      %v554 = vld [vmem:[%s1 + $0x3e0] sm:$0xf]
      %v555 = vld [vmem:[%s1 + $0x3e4] sm:$0xf]
      %v556 = vld [vmem:[%s1 + $0x3e8] sm:$0xf]
      %v557 = vld [vmem:[%s1 + $0x3ec] sm:$0xf]
      %v558 = vld [vmem:[%s1 + $0x3f0] sm:$0xf]
      %v559 = vld [vmem:[%s1 + $0x3f4] sm:$0xf]
      %v560 = vld [vmem:[%s1 + $0x3f8] sm:$0xf]
      %v561 = vld [vmem:[%s1 + $0x3fc] sm:$0xf]
      %v562 = vld [vmem:[%s1 + $0x400] sm:$0xf]
      %v563 = vld [vmem:[%s1 + $0x404] sm:$0xf]
      %v564 = vld [vmem:[%s1 + $0x408] sm:$0xf]
      %v565 = vld [vmem:[%s1 + $0x40c] sm:$0xf]
      %v566 = vld [vmem:[%s1 + $0x410] sm:$0xf]
      %v567 = vld [vmem:[%s1 + $0x414] sm:$0xf]
      %v568 = vld [vmem:[%s1 + $0x418] sm:$0xf]
      %v569 = vld [vmem:[%s1 + $0x41c] sm:$0xf]
      %v570 = vld [vmem:[%s1 + $0x420] sm:$0xf]
      %v571 = vld [vmem:[%s1 + $0x424] sm:$0xf]
      %v572 = vld [vmem:[%s1 + $0x428] sm:$0xf]
      %v573 = vld [vmem:[%s1 + $0x42c] sm:$0xf]
      %v574 = vld [vmem:[%s1 + $0x430] sm:$0xf]
      %v575 = vld [vmem:[%s1 + $0x434] sm:$0xf]
      %v576 = vld [vmem:[%s1 + $0x438] sm:$0xf]
      %v577 = vld [vmem:[%s1 + $0x43c] sm:$0xf]
      %v578 = vld [vmem:[%s1 + $0x440] sm:$0xf]
      %v579 = vld [vmem:[%s1 + $0x444] sm:$0xf]
      %v580 = vld [vmem:[%s1 + $0x448] sm:$0xf]
      %v581 = vld [vmem:[%s1 + $0x44c] sm:$0xf]
      %v582 = vld [vmem:[%s1 + $0x450] sm:$0xf]
      %v583 = vld [vmem:[%s1 + $0x454] sm:$0xf]
      %v584 = vld [vmem:[%s1 + $0x458] sm:$0xf]
      %v585 = vld [vmem:[%s1 + $0x45c] sm:$0xf]
      %v586 = vld [vmem:[%s1 + $0x460] sm:$0xf]
      %v587 = vld [vmem:[%s1 + $0x464] sm:$0xf]
      %v588 = vld [vmem:[%s1 + $0x468] sm:$0xf]
      %v589 = vld [vmem:[%s1 + $0x46c] sm:$0xf]
      %v590 = vld [vmem:[%s1 + $0x470] sm:$0xf]
      %v591 = vld [vmem:[%s1 + $0x474] sm:$0xf]
      %v592 = vld [vmem:[%s1 + $0x478] sm:$0xf]
      %v593 = vld [vmem:[%s1 + $0x47c] sm:$0xf]
      %v594 = vld [vmem:[%s1 + $0x480] sm:$0xf]
      %v595 = vld [vmem:[%s1 + $0x484] sm:$0xf]
      %v596 = vld [vmem:[%s1 + $0x488] sm:$0xf]
      %v597 = vld [vmem:[%s1 + $0x48c] sm:$0xf]
      %v598 = vld [vmem:[%s1 + $0x490] sm:$0xf]
      %v599 = vld [vmem:[%s1 + $0x494] sm:$0xf]
      %v600 = vld [vmem:[%s1 + $0x498] sm:$0xf]
      %v601 = vld [vmem:[%s1 + $0x49c] sm:$0xf]
      %v602 = vld [vmem:[%s1 + $0x4a0] sm:$0xf]
      %v603 = vld [vmem:[%s1 + $0x4a4] sm:$0xf]
      %v604 = vld [vmem:[%s1 + $0x4a8] sm:$0xf]
      %v605 = vld [vmem:[%s1 + $0x4ac] sm:$0xf]
      %v606 = vld [vmem:[%s1 + $0x4b0] sm:$0xf]
      %v607 = vld [vmem:[%s1 + $0x4b4] sm:$0xf]
      %v608 = vld [vmem:[%s1 + $0x4b8] sm:$0xf]
      %v609 = vld [vmem:[%s1 + $0x4bc] sm:$0xf]
      %v610 = vld [vmem:[%s1 + $0x4c0] sm:$0xf]
      %v611 = vld [vmem:[%s1 + $0x4c4] sm:$0xf]
      %v612 = vld [vmem:[%s1 + $0x4c8] sm:$0xf]
      %v613 = vld [vmem:[%s1 + $0x4cc] sm:$0xf]
      %v614 = vld [vmem:[%s1 + $0x4d0] sm:$0xf]
      %v615 = vld [vmem:[%s1 + $0x4d4] sm:$0xf]
      %v616 = vld [vmem:[%s1 + $0x4d8] sm:$0xf]
      %v617 = vld [vmem:[%s1 + $0x4dc] sm:$0xf]
      %v618 = vld [vmem:[%s1 + $0x4e0] sm:$0xf]
      %v619 = vld [vmem:[%s1 + $0x4e4] sm:$0xf]
      %v620 = vld [vmem:[%s1 + $0x4e8] sm:$0xf]
      %v621 = vld [vmem:[%s1 + $0x4ec] sm:$0xf]
      %v622 = vld [vmem:[%s1 + $0x4f0] sm:$0xf]
      %v623 = vld [vmem:[%s1 + $0x4f4] sm:$0xf]
      %v624 = vld [vmem:[%s1 + $0x4f8] sm:$0xf]
      %v625 = vld [vmem:[%s1 + $0x4fc] sm:$0xf]
      %v626 = vld [vmem:[%s1 + $0x500] sm:$0xf]
      %v627 = vld [vmem:[%s1 + $0x504] sm:$0xf]
      %v628 = vld [vmem:[%s1 + $0x508] sm:$0xf]
      %v629 = vld [vmem:[%s1 + $0x50c] sm:$0xf]
      %v630 = vld [vmem:[%s1 + $0x510] sm:$0xf]
      %v631 = vld [vmem:[%s1 + $0x514] sm:$0xf]
      %v632 = vld [vmem:[%s1 + $0x518] sm:$0xf]
      %v633 = vld [vmem:[%s1 + $0x51c] sm:$0xf]
      %v634 = vld [vmem:[%s1 + $0x520] sm:$0xf]
      %v635 = vld [vmem:[%s1 + $0x524] sm:$0xf]
      %v636 = vld [vmem:[%s1 + $0x528] sm:$0xf]
      %v637 = vld [vmem:[%s1 + $0x52c] sm:$0xf]
      %v638 = vld [vmem:[%s1 + $0x530] sm:$0xf]
      %v639 = vld [vmem:[%s1 + $0x534] sm:$0xf]
      %v640 = vld [vmem:[%s1 + $0x538] sm:$0xf]
      %v641 = vld [vmem:[%s1 + $0x53c] sm:$0xf]
      %v642 = vld [vmem:[%s1 + $0x540] sm:$0xf]
      %v643 = vld [vmem:[%s1 + $0x544] sm:$0xf]
      %v644 = vld [vmem:[%s1 + $0x548] sm:$0xf]
      %v645 = vld [vmem:[%s1 + $0x54c] sm:$0xf]
      %v646 = vld [vmem:[%s1 + $0x550] sm:$0xf]
      %v647 = vld [vmem:[%s1 + $0x554] sm:$0xf]
      %v648 = vld [vmem:[%s1 + $0x558] sm:$0xf]
      %v649 = vld [vmem:[%s1 + $0x55c] sm:$0xf]
      %v650 = vld [vmem:[%s1 + $0x560] sm:$0xf]
      %v651 = vld [vmem:[%s1 + $0x564] sm:$0xf]
      %v652 = vld [vmem:[%s1 + $0x568] sm:$0xf]
      %v653 = vld [vmem:[%s1 + $0x56c] sm:$0xf]
      %v654 = vld [vmem:[%s1 + $0x570] sm:$0xf]
      %v655 = vld [vmem:[%s1 + $0x574] sm:$0xf]
      %v656 = vld [vmem:[%s1 + $0x578] sm:$0xf]
      %v657 = vld [vmem:[%s1 + $0x57c] sm:$0xf]
      %v658 = vld [vmem:[%s1 + $0x580] sm:$0xf]
      %v659 = vld [vmem:[%s1 + $0x584] sm:$0xf]
      %v660 = vld [vmem:[%s1 + $0x588] sm:$0xf]
      %v661 = vld [vmem:[%s1 + $0x58c] sm:$0xf]
      %v662 = vld [vmem:[%s1 + $0x590] sm:$0xf]
      %v663 = vld [vmem:[%s1 + $0x594] sm:$0xf]
      %v664 = vld [vmem:[%s1 + $0x598] sm:$0xf]
      %v665 = vld [vmem:[%s1 + $0x59c] sm:$0xf]
      %v666 = vld [vmem:[%s1 + $0x5a0] sm:$0xf]
      %v667 = vld [vmem:[%s1 + $0x5a4] sm:$0xf]
      %v668 = vld [vmem:[%s1 + $0x5a8] sm:$0xf]
      %v669 = vld [vmem:[%s1 + $0x5ac] sm:$0xf]
      %v670 = vld [vmem:[%s1 + $0x5b0] sm:$0xf]
      %v671 = vld [vmem:[%s1 + $0x5b4] sm:$0xf]
      %v672 = vld [vmem:[%s1 + $0x5b8] sm:$0xf]
      %v673 = vld [vmem:[%s1 + $0x5bc] sm:$0xf]
      %v674 = vld [vmem:[%s1 + $0x5c0] sm:$0xf]
      %v675 = vld [vmem:[%s1 + $0x5c4] sm:$0xf]
      %v676 = vld [vmem:[%s1 + $0x5c8] sm:$0xf]
      %v677 = vld [vmem:[%s1 + $0x5cc] sm:$0xf]
      %v678 = vld [vmem:[%s1 + $0x5d0] sm:$0xf]
      %v679 = vld [vmem:[%s1 + $0x5d4] sm:$0xf]
      %v680 = vld [vmem:[%s1 + $0x5d8] sm:$0xf]
      %v681 = vld [vmem:[%s1 + $0x5dc] sm:$0xf]
      %v682 = vld [vmem:[%s1 + $0x5e0] sm:$0xf]
      %v683 = vld [vmem:[%s1 + $0x5e4] sm:$0xf]
      %v684 = vld [vmem:[%s1 + $0x5e8] sm:$0xf]
      %v685 = vld [vmem:[%s1 + $0x5ec] sm:$0xf]
      %v686 = vld [vmem:[%s1 + $0x5f0] sm:$0xf]
      %v687 = vld [vmem:[%s1 + $0x5f4] sm:$0xf]
      %v688 = vld [vmem:[%s1 + $0x5f8] sm:$0xf]
      %v689 = vld [vmem:[%s1 + $0x5fc] sm:$0xf]
      %v690 = vld [vmem:[%s1 + $0x600] sm:$0xf]
      %v691 = vld [vmem:[%s1 + $0x604] sm:$0xf]
      %v692 = vld [vmem:[%s1 + $0x608] sm:$0xf]
      %v693 = vld [vmem:[%s1 + $0x60c] sm:$0xf]
      %v694 = vld [vmem:[%s1 + $0x610] sm:$0xf]
      %v695 = vld [vmem:[%s1 + $0x614] sm:$0xf]
      %v696 = vld [vmem:[%s1 + $0x618] sm:$0xf]
      %v697 = vld [vmem:[%s1 + $0x61c] sm:$0xf]
      %v698 = vld [vmem:[%s1 + $0x620] sm:$0xf]
      %v699 = vld [vmem:[%s1 + $0x624] sm:$0xf]
      %v700 = vld [vmem:[%s1 + $0x628] sm:$0xf]
      %v701 = vld [vmem:[%s1 + $0x62c] sm:$0xf]
      %v702 = vld [vmem:[%s1 + $0x630] sm:$0xf]
      %v703 = vld [vmem:[%s1 + $0x634] sm:$0xf]
      %v704 = vld [vmem:[%s1 + $0x638] sm:$0xf]
      %v705 = vld [vmem:[%s1 + $0x63c] sm:$0xf]
      %v706 = vld [vmem:[%s1 + $0x640] sm:$0xf]
      %v707 = vld [vmem:[%s1 + $0x644] sm:$0xf]
      %v708 = vld [vmem:[%s1 + $0x648] sm:$0xf]
      %v709 = vld [vmem:[%s1 + $0x64c] sm:$0xf]
      %v710 = vld [vmem:[%s1 + $0x650] sm:$0xf]
      %v711 = vld [vmem:[%s1 + $0x654] sm:$0xf]
      %v712 = vld [vmem:[%s1 + $0x658] sm:$0xf]
      %v713 = vld [vmem:[%s1 + $0x65c] sm:$0xf]
      %v714 = vld [vmem:[%s1 + $0x660] sm:$0xf]
      %v715 = vld [vmem:[%s1 + $0x664] sm:$0xf]
      %v716 = vld [vmem:[%s1 + $0x668] sm:$0xf]
      %v717 = vld [vmem:[%s1 + $0x66c] sm:$0xf]
      %v718 = vld [vmem:[%s1 + $0x670] sm:$0xf]
      %v719 = vld [vmem:[%s1 + $0x674] sm:$0xf]
      %v720 = vld [vmem:[%s1 + $0x678] sm:$0xf]
      %v721 = vld [vmem:[%s1 + $0x67c] sm:$0xf]
      %v722 = vld [vmem:[%s1 + $0x680] sm:$0xf]
      %v723 = vld [vmem:[%s1 + $0x684] sm:$0xf]
      %v724 = vld [vmem:[%s1 + $0x688] sm:$0xf]
      %v725 = vld [vmem:[%s1 + $0x68c] sm:$0xf]
      %v726 = vld [vmem:[%s1 + $0x690] sm:$0xf]
      %v727 = vld [vmem:[%s1 + $0x694] sm:$0xf]
      %v728 = vld [vmem:[%s1 + $0x698] sm:$0xf]
      %v729 = vld [vmem:[%s1 + $0x69c] sm:$0xf]
      %v730 = vld [vmem:[%s1 + $0x6a0] sm:$0xf]
      %v731 = vld [vmem:[%s1 + $0x6a4] sm:$0xf]
      %v732 = vld [vmem:[%s1 + $0x6a8] sm:$0xf]
      %v733 = vld [vmem:[%s1 + $0x6ac] sm:$0xf]
      %v734 = vld [vmem:[%s1 + $0x6b0] sm:$0xf]
      %v735 = vld [vmem:[%s1 + $0x6b4] sm:$0xf]
      %v736 = vld [vmem:[%s1 + $0x6b8] sm:$0xf]
      %v737 = vld [vmem:[%s1 + $0x6bc] sm:$0xf]
      %v738 = vld [vmem:[%s1 + $0x6c0] sm:$0xf]
      %v739 = vld [vmem:[%s1 + $0x6c4] sm:$0xf]
      %v740 = vld [vmem:[%s1 + $0x6c8] sm:$0xf]
      %v741 = vld [vmem:[%s1 + $0x6cc] sm:$0xf]
      %v742 = vld [vmem:[%s1 + $0x6d0] sm:$0xf]
      %v743 = vld [vmem:[%s1 + $0x6d4] sm:$0xf]
      %v744 = vld [vmem:[%s1 + $0x6d8] sm:$0xf]
      %v745 = vld [vmem:[%s1 + $0x6dc] sm:$0xf]
      %v746 = vld [vmem:[%s1 + $0x6e0] sm:$0xf]
      %v747 = vld [vmem:[%s1 + $0x6e4] sm:$0xf]
      %v748 = vld [vmem:[%s1 + $0x6e8] sm:$0xf]
      %v749 = vld [vmem:[%s1 + $0x6ec] sm:$0xf]
      %v750 = vld [vmem:[%s1 + $0x6f0] sm:$0xf]
      %v751 = vld [vmem:[%s1 + $0x6f4] sm:$0xf]
      %v752 = vld [vmem:[%s1 + $0x6f8] sm:$0xf]
      %v753 = vld [vmem:[%s1 + $0x6fc] sm:$0xf]
      %v754 = vld [vmem:[%s1 + $0x700] sm:$0xf]
      %v755 = vld [vmem:[%s1 + $0x704] sm:$0xf]
      %v756 = vld [vmem:[%s1 + $0x708] sm:$0xf]
      %v757 = vld [vmem:[%s1 + $0x70c] sm:$0xf]
      %v758 = vld [vmem:[%s1 + $0x710] sm:$0xf]
      %v759 = vld [vmem:[%s1 + $0x714] sm:$0xf]
      %v760 = vld [vmem:[%s1 + $0x718] sm:$0xf]
      %v761 = vld [vmem:[%s1 + $0x71c] sm:$0xf]
      %v762 = vld [vmem:[%s1 + $0x720] sm:$0xf]
      %v763 = vld [vmem:[%s1 + $0x724] sm:$0xf]
      %v764 = vld [vmem:[%s1 + $0x728] sm:$0xf]
      %v765 = vld [vmem:[%s1 + $0x72c] sm:$0xf]
      %v766 = vld [vmem:[%s1 + $0x730] sm:$0xf]
      %v767 = vld [vmem:[%s1 + $0x734] sm:$0xf]
      %v768 = vld [vmem:[%s1 + $0x738] sm:$0xf]
      %v769 = vld [vmem:[%s1 + $0x73c] sm:$0xf]
      %v770 = vld [vmem:[%s1 + $0x740] sm:$0xf]
      %v771 = vld [vmem:[%s1 + $0x744] sm:$0xf]
      %v772 = vld [vmem:[%s1 + $0x748] sm:$0xf]
      %v773 = vld [vmem:[%s1 + $0x74c] sm:$0xf]
      %v774 = vld [vmem:[%s1 + $0x750] sm:$0xf]
      %v775 = vld [vmem:[%s1 + $0x754] sm:$0xf]
      %v776 = vld [vmem:[%s1 + $0x758] sm:$0xf]
      %v777 = vld [vmem:[%s1 + $0x75c] sm:$0xf]
      %v778 = vld [vmem:[%s1 + $0x760] sm:$0xf]
      %v779 = vld [vmem:[%s1 + $0x764] sm:$0xf]
      %v780 = vld [vmem:[%s1 + $0x768] sm:$0xf]
      %v781 = vld [vmem:[%s1 + $0x76c] sm:$0xf]
      %v782 = vld [vmem:[%s1 + $0x770] sm:$0xf]
      %v783 = vld [vmem:[%s1 + $0x774] sm:$0xf]
      %v784 = vld [vmem:[%s1 + $0x778] sm:$0xf]
      %v785 = vld [vmem:[%s1 + $0x77c] sm:$0xf]
      %v786 = vld [vmem:[%s1 + $0x780] sm:$0xf]
      %v787 = vld [vmem:[%s1 + $0x784] sm:$0xf]
      %v788 = vld [vmem:[%s1 + $0x788] sm:$0xf]
      %v789 = vld [vmem:[%s1 + $0x78c] sm:$0xf]
      %v790 = vld [vmem:[%s1 + $0x790] sm:$0xf]
      %v791 = vld [vmem:[%s1 + $0x794] sm:$0xf]
      %v792 = vld [vmem:[%s1 + $0x798] sm:$0xf]
      %v793 = vld [vmem:[%s1 + $0x79c] sm:$0xf]
      %v794 = vld [vmem:[%s1 + $0x7a0] sm:$0xf]
      %v795 = vld [vmem:[%s1 + $0x7a4] sm:$0xf]
      %v796 = vld [vmem:[%s1 + $0x7a8] sm:$0xf]
      %v797 = vld [vmem:[%s1 + $0x7ac] sm:$0xf]
      %v798 = vld [vmem:[%s1 + $0x7b0] sm:$0xf]
      %v799 = vld [vmem:[%s1 + $0x7b4] sm:$0xf]
      %v800 = vld [vmem:[%s1 + $0x7b8] sm:$0xf]
      %v801 = vld [vmem:[%s1 + $0x7bc] sm:$0xf]
      %v802 = vld [vmem:[%s1 + $0x7c0] sm:$0xf]
      %v803 = vld [vmem:[%s1 + $0x7c4] sm:$0xf]
      %v804 = vld [vmem:[%s1 + $0x7c8] sm:$0xf]
      %v805 = vld [vmem:[%s1 + $0x7cc] sm:$0xf]
      %v806 = vld [vmem:[%s1 + $0x7d0] sm:$0xf]
      %v807 = vld [vmem:[%s1 + $0x7d4] sm:$0xf]
      %v808 = vld [vmem:[%s1 + $0x7d8] sm:$0xf]
      %v809 = vld [vmem:[%s1 + $0x7dc] sm:$0xf]
      %v810 = vld [vmem:[%s1 + $0x7e0] sm:$0xf]
      %v811 = vld [vmem:[%s1 + $0x7e4] sm:$0xf]
      %v812 = vld [vmem:[%s1 + $0x7e8] sm:$0xf]
      %v813 = vld [vmem:[%s1 + $0x7ec] sm:$0xf]
      %v814 = vld [vmem:[%s1 + $0x7f0] sm:$0xf]
      %v815 = vld [vmem:[%s1 + $0x7f4] sm:$0xf]
      %v816 = vld [vmem:[%s1 + $0x7f8] sm:$0xf]
      %v817 = vld [vmem:[%s1 + $0x7fc] sm:$0xf]
      %v930 = vunpack.c.l.b16 %v194
      %v931 = vunpack.c.h.b16 %v194
      %v932 = vunpack.c.l.b16 %v195
      %v933 = vunpack.c.h.b16 %v195
      %v934 = vunpack.c.l.b16 %v196
      %v935 = vunpack.c.h.b16 %v196
      %v936 = vunpack.c.l.b16 %v197
      %v937 = vunpack.c.h.b16 %v197
      %v938 = vunpack.c.l.b16 %v198
      %v939 = vunpack.c.h.b16 %v198
      %v940 = vunpack.c.l.b16 %v199
      %v941 = vunpack.c.h.b16 %v199
      %v942 = vunpack.c.l.b16 %v200
      %v943 = vunpack.c.h.b16 %v200
      %v944 = vunpack.c.l.b16 %v201
      %v945 = vunpack.c.h.b16 %v201
      %v946 = vunpack.c.l.b16 %v202
      %v947 = vunpack.c.h.b16 %v202
      %v948 = vunpack.c.l.b16 %v203
      %v949 = vunpack.c.h.b16 %v203
      %v950 = vunpack.c.l.b16 %v204
      %v951 = vunpack.c.h.b16 %v204
      %v952 = vunpack.c.l.b16 %v205
      %v953 = vunpack.c.h.b16 %v205
      %v954 = vunpack.c.l.b16 %v206
      %v955 = vunpack.c.h.b16 %v206
      %v956 = vunpack.c.l.b16 %v207
      %v957 = vunpack.c.h.b16 %v207
      %v958 = vunpack.c.l.b16 %v208
      %v959 = vunpack.c.h.b16 %v208
      %v960 = vunpack.c.l.b16 %v209
      %v961 = vunpack.c.h.b16 %v209
      %v962 = vunpack.c.l.b16 %v210
      %v963 = vunpack.c.h.b16 %v210
      %v964 = vunpack.c.l.b16 %v211
      %v965 = vunpack.c.h.b16 %v211
      %v966 = vunpack.c.l.b16 %v212
      %v967 = vunpack.c.h.b16 %v212
      %v968 = vunpack.c.l.b16 %v213
      %v969 = vunpack.c.h.b16 %v213
      %v970 = vunpack.c.l.b16 %v214
      %v971 = vunpack.c.h.b16 %v214
      %v972 = vunpack.c.l.b16 %v215
      %v973 = vunpack.c.h.b16 %v215
      %v974 = vunpack.c.l.b16 %v216
      %v975 = vunpack.c.h.b16 %v216
      %v976 = vunpack.c.l.b16 %v217
      %v977 = vunpack.c.h.b16 %v217
      %v978 = vunpack.c.l.b16 %v218
      %v979 = vunpack.c.h.b16 %v218
      %v980 = vunpack.c.l.b16 %v219
      %v981 = vunpack.c.h.b16 %v219
      %v982 = vunpack.c.l.b16 %v220
      %v983 = vunpack.c.h.b16 %v220
      %v984 = vunpack.c.l.b16 %v221
      %v985 = vunpack.c.h.b16 %v221
      %v986 = vunpack.c.l.b16 %v222
      %v987 = vunpack.c.h.b16 %v222
      %v988 = vunpack.c.l.b16 %v223
      %v989 = vunpack.c.h.b16 %v223
      %v990 = vunpack.c.l.b16 %v224
      %v991 = vunpack.c.h.b16 %v224
      %v992 = vunpack.c.l.b16 %v225
      %v993 = vunpack.c.h.b16 %v225
      %v994 = vunpack.c.l.b16 %v226
      %v995 = vunpack.c.h.b16 %v226
      %v996 = vunpack.c.l.b16 %v227
      %v997 = vunpack.c.h.b16 %v227
      %v998 = vunpack.c.l.b16 %v228
      %v999 = vunpack.c.h.b16 %v228
      %v1000 = vunpack.c.l.b16 %v229
      %v1001 = vunpack.c.h.b16 %v229
      %v1002 = vunpack.c.l.b16 %v230
      %v1003 = vunpack.c.h.b16 %v230
      %v1004 = vunpack.c.l.b16 %v231
      %v1005 = vunpack.c.h.b16 %v231
      %v1006 = vunpack.c.l.b16 %v232
      %v1007 = vunpack.c.h.b16 %v232
      %v1008 = vunpack.c.l.b16 %v233
      %v1009 = vunpack.c.h.b16 %v233
      %v1010 = vunpack.c.l.b16 %v234
      %v1011 = vunpack.c.h.b16 %v234
      %v1012 = vunpack.c.l.b16 %v235
      %v1013 = vunpack.c.h.b16 %v235
      %v1014 = vunpack.c.l.b16 %v236
      %v1015 = vunpack.c.h.b16 %v236
      %v1016 = vunpack.c.l.b16 %v237
      %v1017 = vunpack.c.h.b16 %v237
      %v1018 = vunpack.c.l.b16 %v238
      %v1019 = vunpack.c.h.b16 %v238
      %v1020 = vunpack.c.l.b16 %v239
      %v1021 = vunpack.c.h.b16 %v239
      %v1022 = vunpack.c.l.b16 %v240
      %v1023 = vunpack.c.h.b16 %v240
      %v1024 = vunpack.c.l.b16 %v241
      %v1025 = vunpack.c.h.b16 %v241
      %v1026 = vunpack.c.l.b16 %v242
      %v1027 = vunpack.c.h.b16 %v242
      %v1028 = vunpack.c.l.b16 %v243
      %v1029 = vunpack.c.h.b16 %v243
      %v1030 = vunpack.c.l.b16 %v244
      %v1031 = vunpack.c.h.b16 %v244
      %v1032 = vunpack.c.l.b16 %v245
      %v1033 = vunpack.c.h.b16 %v245
      %v1034 = vunpack.c.l.b16 %v246
      %v1035 = vunpack.c.h.b16 %v246
      %v1036 = vunpack.c.l.b16 %v247
      %v1037 = vunpack.c.h.b16 %v247
      %v1038 = vunpack.c.l.b16 %v248
      %v1039 = vunpack.c.h.b16 %v248
      %v1040 = vunpack.c.l.b16 %v249
      %v1041 = vunpack.c.h.b16 %v249
      %v1042 = vunpack.c.l.b16 %v250
      %v1043 = vunpack.c.h.b16 %v250
      %v1044 = vunpack.c.l.b16 %v251
      %v1045 = vunpack.c.h.b16 %v251
      %v1046 = vunpack.c.l.b16 %v252
      %v1047 = vunpack.c.h.b16 %v252
      %v1048 = vunpack.c.l.b16 %v253
      %v1049 = vunpack.c.h.b16 %v253
      %v1050 = vunpack.c.l.b16 %v254
      %v1051 = vunpack.c.h.b16 %v254
      %v1052 = vunpack.c.l.b16 %v255
      %v1053 = vunpack.c.h.b16 %v255
      %v1054 = vunpack.c.l.b16 %v256
      %v1055 = vunpack.c.h.b16 %v256
      %v1056 = vunpack.c.l.b16 %v257
      %v1057 = vunpack.c.h.b16 %v257
      %v1058 = vunpack.c.l.b16 %v258
      %v1059 = vunpack.c.h.b16 %v258
      %v1060 = vunpack.c.l.b16 %v259
      %v1061 = vunpack.c.h.b16 %v259
      %v1062 = vunpack.c.l.b16 %v260
      %v1063 = vunpack.c.h.b16 %v260
      %v1064 = vunpack.c.l.b16 %v261
      %v1065 = vunpack.c.h.b16 %v261
      %v1066 = vunpack.c.l.b16 %v262
      %v1067 = vunpack.c.h.b16 %v262
      %v1068 = vunpack.c.l.b16 %v263
      %v1069 = vunpack.c.h.b16 %v263
      %v1070 = vunpack.c.l.b16 %v264
      %v1071 = vunpack.c.h.b16 %v264
      %v1072 = vunpack.c.l.b16 %v265
      %v1073 = vunpack.c.h.b16 %v265
      %v1074 = vunpack.c.l.b16 %v266
      %v1075 = vunpack.c.h.b16 %v266
      %v1076 = vunpack.c.l.b16 %v267
      %v1077 = vunpack.c.h.b16 %v267
      %v1078 = vunpack.c.l.b16 %v268
      %v1079 = vunpack.c.h.b16 %v268
      %v1080 = vunpack.c.l.b16 %v269
      %v1081 = vunpack.c.h.b16 %v269
      %v1082 = vunpack.c.l.b16 %v270
      %v1083 = vunpack.c.h.b16 %v270
      %v1084 = vunpack.c.l.b16 %v271
      %v1085 = vunpack.c.h.b16 %v271
      %v1086 = vunpack.c.l.b16 %v272
      %v1087 = vunpack.c.h.b16 %v272
      %v1088 = vunpack.c.l.b16 %v273
      %v1089 = vunpack.c.h.b16 %v273
      %v1090 = vunpack.c.l.b16 %v274
      %v1091 = vunpack.c.h.b16 %v274
      %v1092 = vunpack.c.l.b16 %v275
      %v1093 = vunpack.c.h.b16 %v275
      %v1094 = vunpack.c.l.b16 %v276
      %v1095 = vunpack.c.h.b16 %v276
      %v1096 = vunpack.c.l.b16 %v277
      %v1097 = vunpack.c.h.b16 %v277
      %v1098 = vunpack.c.l.b16 %v278
      %v1099 = vunpack.c.h.b16 %v278
      %v1100 = vunpack.c.l.b16 %v279
      %v1101 = vunpack.c.h.b16 %v279
      %v1102 = vunpack.c.l.b16 %v280
      %v1103 = vunpack.c.h.b16 %v280
      %v1104 = vunpack.c.l.b16 %v281
      %v1105 = vunpack.c.h.b16 %v281
      %v1106 = vunpack.c.l.b16 %v282
      %v1107 = vunpack.c.h.b16 %v282
      %v1108 = vunpack.c.l.b16 %v283
      %v1109 = vunpack.c.h.b16 %v283
      %v1110 = vunpack.c.l.b16 %v284
      %v1111 = vunpack.c.h.b16 %v284
      %v1112 = vunpack.c.l.b16 %v285
      %v1113 = vunpack.c.h.b16 %v285
      %v1114 = vunpack.c.l.b16 %v286
      %v1115 = vunpack.c.h.b16 %v286
      %v1116 = vunpack.c.l.b16 %v287
      %v1117 = vunpack.c.h.b16 %v287
      %v1118 = vunpack.c.l.b16 %v288
      %v1119 = vunpack.c.h.b16 %v288
      %v1120 = vunpack.c.l.b16 %v289
      %v1121 = vunpack.c.h.b16 %v289
      %v1122 = vunpack.c.l.b16 %v290
      %v1123 = vunpack.c.h.b16 %v290
      %v1124 = vunpack.c.l.b16 %v291
      %v1125 = vunpack.c.h.b16 %v291
      %v1126 = vunpack.c.l.b16 %v292
      %v1127 = vunpack.c.h.b16 %v292
      %v1128 = vunpack.c.l.b16 %v293
      %v1129 = vunpack.c.h.b16 %v293
      %v1130 = vunpack.c.l.b16 %v294
      %v1131 = vunpack.c.h.b16 %v294
      %v1132 = vunpack.c.l.b16 %v295
      %v1133 = vunpack.c.h.b16 %v295
      %v1134 = vunpack.c.l.b16 %v296
      %v1135 = vunpack.c.h.b16 %v296
      %v1136 = vunpack.c.l.b16 %v297
      %v1137 = vunpack.c.h.b16 %v297
      %v1138 = vunpack.c.l.b16 %v298
      %v1139 = vunpack.c.h.b16 %v298
      %v1140 = vunpack.c.l.b16 %v299
      %v1141 = vunpack.c.h.b16 %v299
      %v1142 = vunpack.c.l.b16 %v300
      %v1143 = vunpack.c.h.b16 %v300
      %v1144 = vunpack.c.l.b16 %v301
      %v1145 = vunpack.c.h.b16 %v301
      %v1146 = vunpack.c.l.b16 %v302
      %v1147 = vunpack.c.h.b16 %v302
      %v1148 = vunpack.c.l.b16 %v303
      %v1149 = vunpack.c.h.b16 %v303
      %v1150 = vunpack.c.l.b16 %v304
      %v1151 = vunpack.c.h.b16 %v304
      %v1152 = vunpack.c.l.b16 %v305
      %v1153 = vunpack.c.h.b16 %v305
      %v1154 = vpack.c.b16 %v962, %v930
      %v1155 = vpack.c.b16 %v963, %v931
      %v1156 = vpack.c.b16 %v964, %v932
      %v1157 = vpack.c.b16 %v965, %v933
      %v1158 = vpack.c.b16 %v966, %v934
      %v1159 = vpack.c.b16 %v967, %v935
      %v1160 = vpack.c.b16 %v968, %v936
      %v1161 = vpack.c.b16 %v969, %v937
      %v1162 = vpack.c.b16 %v970, %v938
      %v1163 = vpack.c.b16 %v971, %v939
      %v1164 = vpack.c.b16 %v972, %v940
      %v1165 = vpack.c.b16 %v973, %v941
      %v1166 = vpack.c.b16 %v974, %v942
      %v1167 = vpack.c.b16 %v975, %v943
      %v1168 = vpack.c.b16 %v976, %v944
      %v1169 = vpack.c.b16 %v977, %v945
      %v1170 = vpack.c.b16 %v978, %v946
      %v1171 = vpack.c.b16 %v979, %v947
      %v1172 = vpack.c.b16 %v980, %v948
      %v1173 = vpack.c.b16 %v981, %v949
      %v1174 = vpack.c.b16 %v982, %v950
      %v1175 = vpack.c.b16 %v983, %v951
      %v1176 = vpack.c.b16 %v984, %v952
      %v1177 = vpack.c.b16 %v985, %v953
      %v1178 = vpack.c.b16 %v986, %v954
      %v1179 = vpack.c.b16 %v987, %v955
      %v1180 = vpack.c.b16 %v988, %v956
      %v1181 = vpack.c.b16 %v989, %v957
      %v1182 = vpack.c.b16 %v990, %v958
      %v1183 = vpack.c.b16 %v991, %v959
      %v1184 = vpack.c.b16 %v992, %v960
      %v1185 = vpack.c.b16 %v993, %v961
      %v1186 = vpack.c.b16 %v1026, %v994
      %v1187 = vpack.c.b16 %v1027, %v995
      %v1188 = vpack.c.b16 %v1028, %v996
      %v1189 = vpack.c.b16 %v1029, %v997
      %v1190 = vpack.c.b16 %v1030, %v998
      %v1191 = vpack.c.b16 %v1031, %v999
      %v1192 = vpack.c.b16 %v1032, %v1000
      %v1193 = vpack.c.b16 %v1033, %v1001
      %v1194 = vpack.c.b16 %v1034, %v1002
      %v1195 = vpack.c.b16 %v1035, %v1003
      %v1196 = vpack.c.b16 %v1036, %v1004
      %v1197 = vpack.c.b16 %v1037, %v1005
      %v1198 = vpack.c.b16 %v1038, %v1006
      %v1199 = vpack.c.b16 %v1039, %v1007
      %v1200 = vpack.c.b16 %v1040, %v1008
      %v1201 = vpack.c.b16 %v1041, %v1009
      %v1202 = vpack.c.b16 %v1042, %v1010
      %v1203 = vpack.c.b16 %v1043, %v1011
      %v1204 = vpack.c.b16 %v1044, %v1012
      %v1205 = vpack.c.b16 %v1045, %v1013
      %v1206 = vpack.c.b16 %v1046, %v1014
      %v1207 = vpack.c.b16 %v1047, %v1015
      %v1208 = vpack.c.b16 %v1048, %v1016
      %v1209 = vpack.c.b16 %v1049, %v1017
      %v1210 = vpack.c.b16 %v1050, %v1018
      %v1211 = vpack.c.b16 %v1051, %v1019
      %v1212 = vpack.c.b16 %v1052, %v1020
      %v1213 = vpack.c.b16 %v1053, %v1021
      %v1214 = vpack.c.b16 %v1054, %v1022
      %v1215 = vpack.c.b16 %v1055, %v1023
      %v1216 = vpack.c.b16 %v1056, %v1024
      %v1217 = vpack.c.b16 %v1057, %v1025
      %v1218 = vpack.c.b16 %v1090, %v1058
      %v1219 = vpack.c.b16 %v1091, %v1059
      %v1220 = vpack.c.b16 %v1092, %v1060
      %v1221 = vpack.c.b16 %v1093, %v1061
      %v1222 = vpack.c.b16 %v1094, %v1062
      %v1223 = vpack.c.b16 %v1095, %v1063
      %v1224 = vpack.c.b16 %v1096, %v1064
      %v1225 = vpack.c.b16 %v1097, %v1065
      %v1226 = vpack.c.b16 %v1098, %v1066
      %v1227 = vpack.c.b16 %v1099, %v1067
      %v1228 = vpack.c.b16 %v1100, %v1068
      %v1229 = vpack.c.b16 %v1101, %v1069
      %v1230 = vpack.c.b16 %v1102, %v1070
      %v1231 = vpack.c.b16 %v1103, %v1071
      %v1232 = vpack.c.b16 %v1104, %v1072
      %v1233 = vpack.c.b16 %v1105, %v1073
      %v1234 = vpack.c.b16 %v1106, %v1074
      %v1235 = vpack.c.b16 %v1107, %v1075
      %v1236 = vpack.c.b16 %v1108, %v1076
      %v1237 = vpack.c.b16 %v1109, %v1077
      %v1238 = vpack.c.b16 %v1110, %v1078
      %v1239 = vpack.c.b16 %v1111, %v1079
      %v1240 = vpack.c.b16 %v1112, %v1080
      %v1241 = vpack.c.b16 %v1113, %v1081
      %v1242 = vpack.c.b16 %v1114, %v1082
      %v1243 = vpack.c.b16 %v1115, %v1083
      %v1244 = vpack.c.b16 %v1116, %v1084
      %v1245 = vpack.c.b16 %v1117, %v1085
      %v1246 = vpack.c.b16 %v1118, %v1086
      %v1247 = vpack.c.b16 %v1119, %v1087
      %v1248 = vpack.c.b16 %v1120, %v1088
      %v1249 = vpack.c.b16 %v1121, %v1089
      %v1250 = vpack.c.b16 %v1122, %v1122
      %v1251 = vpack.c.b16 %v1123, %v1123
      %v1252 = vpack.c.b16 %v1124, %v1124
      %v1253 = vpack.c.b16 %v1125, %v1125
      %v1254 = vpack.c.b16 %v1126, %v1126
      %v1255 = vpack.c.b16 %v1127, %v1127
      %v1256 = vpack.c.b16 %v1128, %v1128
      %v1257 = vpack.c.b16 %v1129, %v1129
      %v1258 = vpack.c.b16 %v1130, %v1130
      %v1259 = vpack.c.b16 %v1131, %v1131
      %v1260 = vpack.c.b16 %v1132, %v1132
      %v1261 = vpack.c.b16 %v1133, %v1133
      %v1262 = vpack.c.b16 %v1134, %v1134
      %v1263 = vpack.c.b16 %v1135, %v1135
      %v1264 = vpack.c.b16 %v1136, %v1136
      %v1265 = vpack.c.b16 %v1137, %v1137
      %v1266 = vpack.c.b16 %v1138, %v1138
      %v1267 = vpack.c.b16 %v1139, %v1139
      %v1268 = vpack.c.b16 %v1140, %v1140
      %v1269 = vpack.c.b16 %v1141, %v1141
      %v1270 = vpack.c.b16 %v1142, %v1142
      %v1271 = vpack.c.b16 %v1143, %v1143
      %v1272 = vpack.c.b16 %v1144, %v1144
      %v1273 = vpack.c.b16 %v1145, %v1145
      %v1274 = vpack.c.b16 %v1146, %v1146
      %v1275 = vpack.c.b16 %v1147, %v1147
      %v1276 = vpack.c.b16 %v1148, %v1148
      %v1277 = vpack.c.b16 %v1149, %v1149
      %v1278 = vpack.c.b16 %v1150, %v1150
      %v1279 = vpack.c.b16 %v1151, %v1151
      %v1280 = vpack.c.b16 %v1152, %v1152
      %v1281 = vpack.c.b16 %v1153, %v1153
      %v1922 = vunpack.c.l.b16 %v306
      %v1923 = vunpack.c.l.b16 %v307
      %v1924 = vunpack.c.l.b16 %v308
      %v1925 = vunpack.c.l.b16 %v309
      %v1926 = vunpack.c.l.b16 %v310
      %v1927 = vunpack.c.l.b16 %v311
      %v1928 = vunpack.c.l.b16 %v312
      %v1929 = vunpack.c.l.b16 %v313
      %v1930 = vunpack.c.l.b16 %v314
      %v1931 = vunpack.c.l.b16 %v315
      %v1932 = vunpack.c.l.b16 %v316
      %v1933 = vunpack.c.l.b16 %v317
      %v1934 = vunpack.c.l.b16 %v318
      %v1935 = vunpack.c.l.b16 %v319
      %v1936 = vunpack.c.l.b16 %v320
      %v1937 = vunpack.c.l.b16 %v321
      %v1938 = vunpack.c.l.b16 %v322
      %v1939 = vunpack.c.l.b16 %v323
      %v1940 = vunpack.c.l.b16 %v324
      %v1941 = vunpack.c.l.b16 %v325
      %v1942 = vunpack.c.l.b16 %v326
      %v1943 = vunpack.c.l.b16 %v327
      %v1944 = vunpack.c.l.b16 %v328
      %v1945 = vunpack.c.l.b16 %v329
      %v1946 = vunpack.c.l.b16 %v330
      %v1947 = vunpack.c.l.b16 %v331
      %v1948 = vunpack.c.l.b16 %v332
      %v1949 = vunpack.c.l.b16 %v333
      %v1950 = vunpack.c.l.b16 %v334
      %v1951 = vunpack.c.l.b16 %v335
      %v1952 = vunpack.c.l.b16 %v336
      %v1953 = vunpack.c.l.b16 %v337
      %v1954 = vunpack.c.l.b16 %v338
      %v1955 = vunpack.c.l.b16 %v339
      %v1956 = vunpack.c.l.b16 %v340
      %v1957 = vunpack.c.l.b16 %v341
      %v1958 = vunpack.c.l.b16 %v342
      %v1959 = vunpack.c.l.b16 %v343
      %v1960 = vunpack.c.l.b16 %v344
      %v1961 = vunpack.c.l.b16 %v345
      %v1962 = vunpack.c.l.b16 %v346
      %v1963 = vunpack.c.l.b16 %v347
      %v1964 = vunpack.c.l.b16 %v348
      %v1965 = vunpack.c.l.b16 %v349
      %v1966 = vunpack.c.l.b16 %v350
      %v1967 = vunpack.c.l.b16 %v351
      %v1968 = vunpack.c.l.b16 %v352
      %v1969 = vunpack.c.l.b16 %v353
      %v1970 = vunpack.c.l.b16 %v354
      %v1971 = vunpack.c.l.b16 %v355
      %v1972 = vunpack.c.l.b16 %v356
      %v1973 = vunpack.c.l.b16 %v357
      %v1974 = vunpack.c.l.b16 %v358
      %v1975 = vunpack.c.l.b16 %v359
      %v1976 = vunpack.c.l.b16 %v360
      %v1977 = vunpack.c.l.b16 %v361
      %v1978 = vunpack.c.l.b16 %v362
      %v1979 = vunpack.c.l.b16 %v363
      %v1980 = vunpack.c.l.b16 %v364
      %v1981 = vunpack.c.l.b16 %v365
      %v1982 = vunpack.c.l.b16 %v366
      %v1983 = vunpack.c.l.b16 %v367
      %v1984 = vunpack.c.l.b16 %v368
      %v1985 = vunpack.c.l.b16 %v369
      %v1986 = vunpack.c.l.b16 %v370
      %v1987 = vunpack.c.l.b16 %v371
      %v1988 = vunpack.c.l.b16 %v372
      %v1989 = vunpack.c.l.b16 %v373
      %v1990 = vunpack.c.l.b16 %v374
      %v1991 = vunpack.c.l.b16 %v375
      %v1992 = vunpack.c.l.b16 %v376
      %v1993 = vunpack.c.l.b16 %v377
      %v1994 = vunpack.c.l.b16 %v378
      %v1995 = vunpack.c.l.b16 %v379
      %v1996 = vunpack.c.l.b16 %v380
      %v1997 = vunpack.c.l.b16 %v381
      %v1998 = vunpack.c.l.b16 %v382
      %v1999 = vunpack.c.l.b16 %v383
      %v2000 = vunpack.c.l.b16 %v384
      %v2001 = vunpack.c.l.b16 %v385
      %v2002 = vunpack.c.l.b16 %v386
      %v2003 = vunpack.c.l.b16 %v387
      %v2004 = vunpack.c.l.b16 %v388
      %v2005 = vunpack.c.l.b16 %v389
      %v2006 = vunpack.c.l.b16 %v390
      %v2007 = vunpack.c.l.b16 %v391
      %v2008 = vunpack.c.l.b16 %v392
      %v2009 = vunpack.c.l.b16 %v393
      %v2010 = vunpack.c.l.b16 %v394
      %v2011 = vunpack.c.l.b16 %v395
      %v2012 = vunpack.c.l.b16 %v396
      %v2013 = vunpack.c.l.b16 %v397
      %v2014 = vunpack.c.l.b16 %v398
      %v2015 = vunpack.c.l.b16 %v399
      %v2016 = vunpack.c.l.b16 %v400
      %v2017 = vunpack.c.l.b16 %v401
      %v2018 = vunpack.c.l.b16 %v402
      %v2019 = vunpack.c.l.b16 %v403
      %v2020 = vunpack.c.l.b16 %v404
      %v2021 = vunpack.c.l.b16 %v405
      %v2022 = vunpack.c.l.b16 %v406
      %v2023 = vunpack.c.l.b16 %v407
      %v2024 = vunpack.c.l.b16 %v408
      %v2025 = vunpack.c.l.b16 %v409
      %v2026 = vunpack.c.l.b16 %v410
      %v2027 = vunpack.c.l.b16 %v411
      %v2028 = vunpack.c.l.b16 %v412
      %v2029 = vunpack.c.l.b16 %v413
      %v2030 = vunpack.c.l.b16 %v414
      %v2031 = vunpack.c.l.b16 %v415
      %v2032 = vunpack.c.l.b16 %v416
      %v2033 = vunpack.c.l.b16 %v417
      %v2034 = vunpack.c.l.b16 %v418
      %v2035 = vunpack.c.l.b16 %v419
      %v2036 = vunpack.c.l.b16 %v420
      %v2037 = vunpack.c.l.b16 %v421
      %v2038 = vunpack.c.l.b16 %v422
      %v2039 = vunpack.c.l.b16 %v423
      %v2040 = vunpack.c.l.b16 %v424
      %v2041 = vunpack.c.l.b16 %v425
      %v2042 = vunpack.c.l.b16 %v426
      %v2043 = vunpack.c.l.b16 %v427
      %v2044 = vunpack.c.l.b16 %v428
      %v2045 = vunpack.c.l.b16 %v429
      %v2046 = vunpack.c.l.b16 %v430
      %v2047 = vunpack.c.l.b16 %v431
      %v2048 = vunpack.c.l.b16 %v432
      %v2049 = vunpack.c.l.b16 %v433
      %v2050 = vunpack.c.l.b16 %v434
      %v2051 = vunpack.c.l.b16 %v435
      %v2052 = vunpack.c.l.b16 %v436
      %v2053 = vunpack.c.l.b16 %v437
      %v2054 = vunpack.c.l.b16 %v438
      %v2055 = vunpack.c.l.b16 %v439
      %v2056 = vunpack.c.l.b16 %v440
      %v2057 = vunpack.c.l.b16 %v441
      %v2058 = vunpack.c.l.b16 %v442
      %v2059 = vunpack.c.l.b16 %v443
      %v2060 = vunpack.c.l.b16 %v444
      %v2061 = vunpack.c.l.b16 %v445
      %v2062 = vunpack.c.l.b16 %v446
      %v2063 = vunpack.c.l.b16 %v447
      %v2064 = vunpack.c.l.b16 %v448
      %v2065 = vunpack.c.l.b16 %v449
      %v2066 = vunpack.c.l.b16 %v450
      %v2067 = vunpack.c.l.b16 %v451
      %v2068 = vunpack.c.l.b16 %v452
      %v2069 = vunpack.c.l.b16 %v453
      %v2070 = vunpack.c.l.b16 %v454
      %v2071 = vunpack.c.l.b16 %v455
      %v2072 = vunpack.c.l.b16 %v456
      %v2073 = vunpack.c.l.b16 %v457
      %v2074 = vunpack.c.l.b16 %v458
      %v2075 = vunpack.c.l.b16 %v459
      %v2076 = vunpack.c.l.b16 %v460
      %v2077 = vunpack.c.l.b16 %v461
      %v2078 = vunpack.c.l.b16 %v462
      %v2079 = vunpack.c.l.b16 %v463
      %v2080 = vunpack.c.l.b16 %v464
      %v2081 = vunpack.c.l.b16 %v465
      %v2082 = vunpack.c.l.b16 %v466
      %v2083 = vunpack.c.l.b16 %v467
      %v2084 = vunpack.c.l.b16 %v468
      %v2085 = vunpack.c.l.b16 %v469
      %v2086 = vunpack.c.l.b16 %v470
      %v2087 = vunpack.c.l.b16 %v471
      %v2088 = vunpack.c.l.b16 %v472
      %v2089 = vunpack.c.l.b16 %v473
      %v2090 = vunpack.c.l.b16 %v474
      %v2091 = vunpack.c.l.b16 %v475
      %v2092 = vunpack.c.l.b16 %v476
      %v2093 = vunpack.c.l.b16 %v477
      %v2094 = vunpack.c.l.b16 %v478
      %v2095 = vunpack.c.l.b16 %v479
      %v2096 = vunpack.c.l.b16 %v480
      %v2097 = vunpack.c.l.b16 %v481
      %v2098 = vunpack.c.l.b16 %v482
      %v2099 = vunpack.c.l.b16 %v483
      %v2100 = vunpack.c.l.b16 %v484
      %v2101 = vunpack.c.l.b16 %v485
      %v2102 = vunpack.c.l.b16 %v486
      %v2103 = vunpack.c.l.b16 %v487
      %v2104 = vunpack.c.l.b16 %v488
      %v2105 = vunpack.c.l.b16 %v489
      %v2106 = vunpack.c.l.b16 %v490
      %v2107 = vunpack.c.l.b16 %v491
      %v2108 = vunpack.c.l.b16 %v492
      %v2109 = vunpack.c.l.b16 %v493
      %v2110 = vunpack.c.l.b16 %v494
      %v2111 = vunpack.c.l.b16 %v495
      %v2112 = vunpack.c.l.b16 %v496
      %v2113 = vunpack.c.l.b16 %v497
      %v2114 = vunpack.c.l.b16 %v498
      %v2115 = vunpack.c.l.b16 %v499
      %v2116 = vunpack.c.l.b16 %v500
      %v2117 = vunpack.c.l.b16 %v501
      %v2118 = vunpack.c.l.b16 %v502
      %v2119 = vunpack.c.l.b16 %v503
      %v2120 = vunpack.c.l.b16 %v504
      %v2121 = vunpack.c.l.b16 %v505
      %v2122 = vunpack.c.l.b16 %v506
      %v2123 = vunpack.c.l.b16 %v507
      %v2124 = vunpack.c.l.b16 %v508
      %v2125 = vunpack.c.l.b16 %v509
      %v2126 = vunpack.c.l.b16 %v510
      %v2127 = vunpack.c.l.b16 %v511
      %v2128 = vunpack.c.l.b16 %v512
      %v2129 = vunpack.c.l.b16 %v513
      %v2130 = vunpack.c.l.b16 %v514
      %v2131 = vunpack.c.l.b16 %v515
      %v2132 = vunpack.c.l.b16 %v516
      %v2133 = vunpack.c.l.b16 %v517
      %v2134 = vunpack.c.l.b16 %v518
      %v2135 = vunpack.c.l.b16 %v519
      %v2136 = vunpack.c.l.b16 %v520
      %v2137 = vunpack.c.l.b16 %v521
      %v2138 = vunpack.c.l.b16 %v522
      %v2139 = vunpack.c.l.b16 %v523
      %v2140 = vunpack.c.l.b16 %v524
      %v2141 = vunpack.c.l.b16 %v525
      %v2142 = vunpack.c.l.b16 %v526
      %v2143 = vunpack.c.l.b16 %v527
      %v2144 = vunpack.c.l.b16 %v528
      %v2145 = vunpack.c.l.b16 %v529
      %v2146 = vunpack.c.l.b16 %v530
      %v2147 = vunpack.c.l.b16 %v531
      %v2148 = vunpack.c.l.b16 %v532
      %v2149 = vunpack.c.l.b16 %v533
      %v2150 = vunpack.c.l.b16 %v534
      %v2151 = vunpack.c.l.b16 %v535
      %v2152 = vunpack.c.l.b16 %v536
      %v2153 = vunpack.c.l.b16 %v537
      %v2154 = vunpack.c.l.b16 %v538
      %v2155 = vunpack.c.l.b16 %v539
      %v2156 = vunpack.c.l.b16 %v540
      %v2157 = vunpack.c.l.b16 %v541
      %v2158 = vunpack.c.l.b16 %v542
      %v2159 = vunpack.c.l.b16 %v543
      %v2160 = vunpack.c.l.b16 %v544
      %v2161 = vunpack.c.l.b16 %v545
      %v2162 = vunpack.c.l.b16 %v546
      %v2163 = vunpack.c.l.b16 %v547
      %v2164 = vunpack.c.l.b16 %v548
      %v2165 = vunpack.c.l.b16 %v549
      %v2166 = vunpack.c.l.b16 %v550
      %v2167 = vunpack.c.l.b16 %v551
      %v2168 = vunpack.c.l.b16 %v552
      %v2169 = vunpack.c.l.b16 %v553
      %v2170 = vunpack.c.l.b16 %v554
      %v2171 = vunpack.c.l.b16 %v555
      %v2172 = vunpack.c.l.b16 %v556
      %v2173 = vunpack.c.l.b16 %v557
      %v2174 = vunpack.c.l.b16 %v558
      %v2175 = vunpack.c.l.b16 %v559
      %v2176 = vunpack.c.l.b16 %v560
      %v2177 = vunpack.c.l.b16 %v561
      %v2178 = vunpack.c.l.b16 %v562
      %v2179 = vunpack.c.l.b16 %v563
      %v2180 = vunpack.c.l.b16 %v564
      %v2181 = vunpack.c.l.b16 %v565
      %v2182 = vunpack.c.l.b16 %v566
      %v2183 = vunpack.c.l.b16 %v567
      %v2184 = vunpack.c.l.b16 %v568
      %v2185 = vunpack.c.l.b16 %v569
      %v2186 = vunpack.c.l.b16 %v570
      %v2187 = vunpack.c.l.b16 %v571
      %v2188 = vunpack.c.l.b16 %v572
      %v2189 = vunpack.c.l.b16 %v573
      %v2190 = vunpack.c.l.b16 %v574
      %v2191 = vunpack.c.l.b16 %v575
      %v2192 = vunpack.c.l.b16 %v576
      %v2193 = vunpack.c.l.b16 %v577
      %v2194 = vunpack.c.l.b16 %v578
      %v2195 = vunpack.c.l.b16 %v579
      %v2196 = vunpack.c.l.b16 %v580
      %v2197 = vunpack.c.l.b16 %v581
      %v2198 = vunpack.c.l.b16 %v582
      %v2199 = vunpack.c.l.b16 %v583
      %v2200 = vunpack.c.l.b16 %v584
      %v2201 = vunpack.c.l.b16 %v585
      %v2202 = vunpack.c.l.b16 %v586
      %v2203 = vunpack.c.l.b16 %v587
      %v2204 = vunpack.c.l.b16 %v588
      %v2205 = vunpack.c.l.b16 %v589
      %v2206 = vunpack.c.l.b16 %v590
      %v2207 = vunpack.c.l.b16 %v591
      %v2208 = vunpack.c.l.b16 %v592
      %v2209 = vunpack.c.l.b16 %v593
      %v2210 = vunpack.c.l.b16 %v594
      %v2211 = vunpack.c.l.b16 %v595
      %v2212 = vunpack.c.l.b16 %v596
      %v2213 = vunpack.c.l.b16 %v597
      %v2214 = vunpack.c.l.b16 %v598
      %v2215 = vunpack.c.l.b16 %v599
      %v2216 = vunpack.c.l.b16 %v600
      %v2217 = vunpack.c.l.b16 %v601
      %v2218 = vunpack.c.l.b16 %v602
      %v2219 = vunpack.c.l.b16 %v603
      %v2220 = vunpack.c.l.b16 %v604
      %v2221 = vunpack.c.l.b16 %v605
      %v2222 = vunpack.c.l.b16 %v606
      %v2223 = vunpack.c.l.b16 %v607
      %v2224 = vunpack.c.l.b16 %v608
      %v2225 = vunpack.c.l.b16 %v609
      %v2226 = vunpack.c.l.b16 %v610
      %v2227 = vunpack.c.l.b16 %v611
      %v2228 = vunpack.c.l.b16 %v612
      %v2229 = vunpack.c.l.b16 %v613
      %v2230 = vunpack.c.l.b16 %v614
      %v2231 = vunpack.c.l.b16 %v615
      %v2232 = vunpack.c.l.b16 %v616
      %v2233 = vunpack.c.l.b16 %v617
      %v2234 = vunpack.c.l.b16 %v618
      %v2235 = vunpack.c.l.b16 %v619
      %v2236 = vunpack.c.l.b16 %v620
      %v2237 = vunpack.c.l.b16 %v621
      %v2238 = vunpack.c.l.b16 %v622
      %v2239 = vunpack.c.l.b16 %v623
      %v2240 = vunpack.c.l.b16 %v624
      %v2241 = vunpack.c.l.b16 %v625
      %v2242 = vunpack.c.l.b16 %v626
      %v2243 = vunpack.c.l.b16 %v627
      %v2244 = vunpack.c.l.b16 %v628
      %v2245 = vunpack.c.l.b16 %v629
      %v2246 = vunpack.c.l.b16 %v630
      %v2247 = vunpack.c.l.b16 %v631
      %v2248 = vunpack.c.l.b16 %v632
      %v2249 = vunpack.c.l.b16 %v633
      %v2250 = vunpack.c.l.b16 %v634
      %v2251 = vunpack.c.l.b16 %v635
      %v2252 = vunpack.c.l.b16 %v636
      %v2253 = vunpack.c.l.b16 %v637
      %v2254 = vunpack.c.l.b16 %v638
      %v2255 = vunpack.c.l.b16 %v639
      %v2256 = vunpack.c.l.b16 %v640
      %v2257 = vunpack.c.l.b16 %v641
      %v2258 = vunpack.c.l.b16 %v642
      %v2259 = vunpack.c.l.b16 %v643
      %v2260 = vunpack.c.l.b16 %v644
      %v2261 = vunpack.c.l.b16 %v645
      %v2262 = vunpack.c.l.b16 %v646
      %v2263 = vunpack.c.l.b16 %v647
      %v2264 = vunpack.c.l.b16 %v648
      %v2265 = vunpack.c.l.b16 %v649
      %v2266 = vunpack.c.l.b16 %v650
      %v2267 = vunpack.c.l.b16 %v651
      %v2268 = vunpack.c.l.b16 %v652
      %v2269 = vunpack.c.l.b16 %v653
      %v2270 = vunpack.c.l.b16 %v654
      %v2271 = vunpack.c.l.b16 %v655
      %v2272 = vunpack.c.l.b16 %v656
      %v2273 = vunpack.c.l.b16 %v657
      %v2274 = vunpack.c.l.b16 %v658
      %v2275 = vunpack.c.l.b16 %v659
      %v2276 = vunpack.c.l.b16 %v660
      %v2277 = vunpack.c.l.b16 %v661
      %v2278 = vunpack.c.l.b16 %v662
      %v2279 = vunpack.c.l.b16 %v663
      %v2280 = vunpack.c.l.b16 %v664
      %v2281 = vunpack.c.l.b16 %v665
      %v2282 = vunpack.c.l.b16 %v666
      %v2283 = vunpack.c.l.b16 %v667
      %v2284 = vunpack.c.l.b16 %v668
      %v2285 = vunpack.c.l.b16 %v669
      %v2286 = vunpack.c.l.b16 %v670
      %v2287 = vunpack.c.l.b16 %v671
      %v2288 = vunpack.c.l.b16 %v672
      %v2289 = vunpack.c.l.b16 %v673
      %v2290 = vunpack.c.l.b16 %v674
      %v2291 = vunpack.c.l.b16 %v675
      %v2292 = vunpack.c.l.b16 %v676
      %v2293 = vunpack.c.l.b16 %v677
      %v2294 = vunpack.c.l.b16 %v678
      %v2295 = vunpack.c.l.b16 %v679
      %v2296 = vunpack.c.l.b16 %v680
      %v2297 = vunpack.c.l.b16 %v681
      %v2298 = vunpack.c.l.b16 %v682
      %v2299 = vunpack.c.l.b16 %v683
      %v2300 = vunpack.c.l.b16 %v684
      %v2301 = vunpack.c.l.b16 %v685
      %v2302 = vunpack.c.l.b16 %v686
      %v2303 = vunpack.c.l.b16 %v687
      %v2304 = vunpack.c.l.b16 %v688
      %v2305 = vunpack.c.l.b16 %v689
      %v2306 = vunpack.c.l.b16 %v690
      %v2307 = vunpack.c.l.b16 %v691
      %v2308 = vunpack.c.l.b16 %v692
      %v2309 = vunpack.c.l.b16 %v693
      %v2310 = vunpack.c.l.b16 %v694
      %v2311 = vunpack.c.l.b16 %v695
      %v2312 = vunpack.c.l.b16 %v696
      %v2313 = vunpack.c.l.b16 %v697
      %v2314 = vunpack.c.l.b16 %v698
      %v2315 = vunpack.c.l.b16 %v699
      %v2316 = vunpack.c.l.b16 %v700
      %v2317 = vunpack.c.l.b16 %v701
      %v2318 = vunpack.c.l.b16 %v702
      %v2319 = vunpack.c.l.b16 %v703
      %v2320 = vunpack.c.l.b16 %v704
      %v2321 = vunpack.c.l.b16 %v705
      %v2322 = vunpack.c.l.b16 %v706
      %v2323 = vunpack.c.l.b16 %v707
      %v2324 = vunpack.c.l.b16 %v708
      %v2325 = vunpack.c.l.b16 %v709
      %v2326 = vunpack.c.l.b16 %v710
      %v2327 = vunpack.c.l.b16 %v711
      %v2328 = vunpack.c.l.b16 %v712
      %v2329 = vunpack.c.l.b16 %v713
      %v2330 = vunpack.c.l.b16 %v714
      %v2331 = vunpack.c.l.b16 %v715
      %v2332 = vunpack.c.l.b16 %v716
      %v2333 = vunpack.c.l.b16 %v717
      %v2334 = vunpack.c.l.b16 %v718
      %v2335 = vunpack.c.l.b16 %v719
      %v2336 = vunpack.c.l.b16 %v720
      %v2337 = vunpack.c.l.b16 %v721
      %v2338 = vunpack.c.l.b16 %v722
      %v2339 = vunpack.c.l.b16 %v723
      %v2340 = vunpack.c.l.b16 %v724
      %v2341 = vunpack.c.l.b16 %v725
      %v2342 = vunpack.c.l.b16 %v726
      %v2343 = vunpack.c.l.b16 %v727
      %v2344 = vunpack.c.l.b16 %v728
      %v2345 = vunpack.c.l.b16 %v729
      %v2346 = vunpack.c.l.b16 %v730
      %v2347 = vunpack.c.l.b16 %v731
      %v2348 = vunpack.c.l.b16 %v732
      %v2349 = vunpack.c.l.b16 %v733
      %v2350 = vunpack.c.l.b16 %v734
      %v2351 = vunpack.c.l.b16 %v735
      %v2352 = vunpack.c.l.b16 %v736
      %v2353 = vunpack.c.l.b16 %v737
      %v2354 = vunpack.c.l.b16 %v738
      %v2355 = vunpack.c.l.b16 %v739
      %v2356 = vunpack.c.l.b16 %v740
      %v2357 = vunpack.c.l.b16 %v741
      %v2358 = vunpack.c.l.b16 %v742
      %v2359 = vunpack.c.l.b16 %v743
      %v2360 = vunpack.c.l.b16 %v744
      %v2361 = vunpack.c.l.b16 %v745
      %v2362 = vunpack.c.l.b16 %v746
      %v2363 = vunpack.c.l.b16 %v747
      %v2364 = vunpack.c.l.b16 %v748
      %v2365 = vunpack.c.l.b16 %v749
      %v2366 = vunpack.c.l.b16 %v750
      %v2367 = vunpack.c.l.b16 %v751
      %v2368 = vunpack.c.l.b16 %v752
      %v2369 = vunpack.c.l.b16 %v753
      %v2370 = vunpack.c.l.b16 %v754
      %v2371 = vunpack.c.l.b16 %v755
      %v2372 = vunpack.c.l.b16 %v756
      %v2373 = vunpack.c.l.b16 %v757
      %v2374 = vunpack.c.l.b16 %v758
      %v2375 = vunpack.c.l.b16 %v759
      %v2376 = vunpack.c.l.b16 %v760
      %v2377 = vunpack.c.l.b16 %v761
      %v2378 = vunpack.c.l.b16 %v762
      %v2379 = vunpack.c.l.b16 %v763
      %v2380 = vunpack.c.l.b16 %v764
      %v2381 = vunpack.c.l.b16 %v765
      %v2382 = vunpack.c.l.b16 %v766
      %v2383 = vunpack.c.l.b16 %v767
      %v2384 = vunpack.c.l.b16 %v768
      %v2385 = vunpack.c.l.b16 %v769
      %v2386 = vunpack.c.l.b16 %v770
      %v2387 = vunpack.c.l.b16 %v771
      %v2388 = vunpack.c.l.b16 %v772
      %v2389 = vunpack.c.l.b16 %v773
      %v2390 = vunpack.c.l.b16 %v774
      %v2391 = vunpack.c.l.b16 %v775
      %v2392 = vunpack.c.l.b16 %v776
      %v2393 = vunpack.c.l.b16 %v777
      %v2394 = vunpack.c.l.b16 %v778
      %v2395 = vunpack.c.l.b16 %v779
      %v2396 = vunpack.c.l.b16 %v780
      %v2397 = vunpack.c.l.b16 %v781
      %v2398 = vunpack.c.l.b16 %v782
      %v2399 = vunpack.c.l.b16 %v783
      %v2400 = vunpack.c.l.b16 %v784
      %v2401 = vunpack.c.l.b16 %v785
      %v2402 = vunpack.c.l.b16 %v786
      %v2403 = vunpack.c.l.b16 %v787
      %v2404 = vunpack.c.l.b16 %v788
      %v2405 = vunpack.c.l.b16 %v789
      %v2406 = vunpack.c.l.b16 %v790
      %v2407 = vunpack.c.l.b16 %v791
      %v2408 = vunpack.c.l.b16 %v792
      %v2409 = vunpack.c.l.b16 %v793
      %v2410 = vunpack.c.l.b16 %v794
      %v2411 = vunpack.c.l.b16 %v795
      %v2412 = vunpack.c.l.b16 %v796
      %v2413 = vunpack.c.l.b16 %v797
      %v2414 = vunpack.c.l.b16 %v798
      %v2415 = vunpack.c.l.b16 %v799
      %v2416 = vunpack.c.l.b16 %v800
      %v2417 = vunpack.c.l.b16 %v801
      %v2418 = vunpack.c.l.b16 %v802
      %v2419 = vunpack.c.l.b16 %v803
      %v2420 = vunpack.c.l.b16 %v804
      %v2421 = vunpack.c.l.b16 %v805
      %v2422 = vunpack.c.l.b16 %v806
      %v2423 = vunpack.c.l.b16 %v807
      %v2424 = vunpack.c.l.b16 %v808
      %v2425 = vunpack.c.l.b16 %v809
      %v2426 = vunpack.c.l.b16 %v810
      %v2427 = vunpack.c.l.b16 %v811
      %v2428 = vunpack.c.l.b16 %v812
      %v2429 = vunpack.c.l.b16 %v813
      %v2430 = vunpack.c.l.b16 %v814
      %v2431 = vunpack.c.l.b16 %v815
      %v2432 = vunpack.c.l.b16 %v816
      %v2433 = vunpack.c.l.b16 %v817
      %v2434 = vpack.c.b16 %v1923, %v1922
      %v2435 = vpack.c.b16 %v1925, %v1924
      %v2436 = vpack.c.b16 %v1927, %v1926
      %v2437 = vpack.c.b16 %v1929, %v1928
      %v2438 = vpack.c.b16 %v1931, %v1930
      %v2439 = vpack.c.b16 %v1933, %v1932
      %v2440 = vpack.c.b16 %v1935, %v1934
      %v2441 = vpack.c.b16 %v1937, %v1936
      %v2442 = vpack.c.b16 %v1939, %v1938
      %v2443 = vpack.c.b16 %v1941, %v1940
      %v2444 = vpack.c.b16 %v1943, %v1942
      %v2445 = vpack.c.b16 %v1945, %v1944
      %v2446 = vpack.c.b16 %v1947, %v1946
      %v2447 = vpack.c.b16 %v1949, %v1948
      %v2448 = vpack.c.b16 %v1951, %v1950
      %v2449 = vpack.c.b16 %v1953, %v1952
      %v2450 = vpack.c.b16 %v1955, %v1954
      %v2451 = vpack.c.b16 %v1957, %v1956
      %v2452 = vpack.c.b16 %v1959, %v1958
      %v2453 = vpack.c.b16 %v1961, %v1960
      %v2454 = vpack.c.b16 %v1963, %v1962
      %v2455 = vpack.c.b16 %v1965, %v1964
      %v2456 = vpack.c.b16 %v1967, %v1966
      %v2457 = vpack.c.b16 %v1969, %v1968
      %v2458 = vpack.c.b16 %v1971, %v1970
      %v2459 = vpack.c.b16 %v1973, %v1972
      %v2460 = vpack.c.b16 %v1975, %v1974
      %v2461 = vpack.c.b16 %v1977, %v1976
      %v2462 = vpack.c.b16 %v1979, %v1978
      %v2463 = vpack.c.b16 %v1981, %v1980
      %v2464 = vpack.c.b16 %v1983, %v1982
      %v2465 = vpack.c.b16 %v1985, %v1984
      %v2466 = vpack.c.b16 %v1987, %v1986
      %v2467 = vpack.c.b16 %v1989, %v1988
      %v2468 = vpack.c.b16 %v1991, %v1990
      %v2469 = vpack.c.b16 %v1993, %v1992
      %v2470 = vpack.c.b16 %v1995, %v1994
      %v2471 = vpack.c.b16 %v1997, %v1996
      %v2472 = vpack.c.b16 %v1999, %v1998
      %v2473 = vpack.c.b16 %v2001, %v2000
      %v2474 = vpack.c.b16 %v2003, %v2002
      %v2475 = vpack.c.b16 %v2005, %v2004
      %v2476 = vpack.c.b16 %v2007, %v2006
      %v2477 = vpack.c.b16 %v2009, %v2008
      %v2478 = vpack.c.b16 %v2011, %v2010
      %v2479 = vpack.c.b16 %v2013, %v2012
      %v2480 = vpack.c.b16 %v2015, %v2014
      %v2481 = vpack.c.b16 %v2017, %v2016
      %v2482 = vpack.c.b16 %v2019, %v2018
      %v2483 = vpack.c.b16 %v2021, %v2020
      %v2484 = vpack.c.b16 %v2023, %v2022
      %v2485 = vpack.c.b16 %v2025, %v2024
      %v2486 = vpack.c.b16 %v2027, %v2026
      %v2487 = vpack.c.b16 %v2029, %v2028
      %v2488 = vpack.c.b16 %v2031, %v2030
      %v2489 = vpack.c.b16 %v2033, %v2032
      %v2490 = vpack.c.b16 %v2035, %v2034
      %v2491 = vpack.c.b16 %v2037, %v2036
      %v2492 = vpack.c.b16 %v2039, %v2038
      %v2493 = vpack.c.b16 %v2041, %v2040
      %v2494 = vpack.c.b16 %v2043, %v2042
      %v2495 = vpack.c.b16 %v2045, %v2044
      %v2496 = vpack.c.b16 %v2047, %v2046
      %v2497 = vpack.c.b16 %v2049, %v2048
      %v2498 = vpack.c.b16 %v2051, %v2050
      %v2499 = vpack.c.b16 %v2053, %v2052
      %v2500 = vpack.c.b16 %v2055, %v2054
      %v2501 = vpack.c.b16 %v2057, %v2056
      %v2502 = vpack.c.b16 %v2059, %v2058
      %v2503 = vpack.c.b16 %v2061, %v2060
      %v2504 = vpack.c.b16 %v2063, %v2062
      %v2505 = vpack.c.b16 %v2065, %v2064
      %v2506 = vpack.c.b16 %v2067, %v2066
      %v2507 = vpack.c.b16 %v2069, %v2068
      %v2508 = vpack.c.b16 %v2071, %v2070
      %v2509 = vpack.c.b16 %v2073, %v2072
      %v2510 = vpack.c.b16 %v2075, %v2074
      %v2511 = vpack.c.b16 %v2077, %v2076
      %v2512 = vpack.c.b16 %v2079, %v2078
      %v2513 = vpack.c.b16 %v2081, %v2080
      %v2514 = vpack.c.b16 %v2083, %v2082
      %v2515 = vpack.c.b16 %v2085, %v2084
      %v2516 = vpack.c.b16 %v2087, %v2086
      %v2517 = vpack.c.b16 %v2089, %v2088
      %v2518 = vpack.c.b16 %v2091, %v2090
      %v2519 = vpack.c.b16 %v2093, %v2092
      %v2520 = vpack.c.b16 %v2095, %v2094
      %v2521 = vpack.c.b16 %v2097, %v2096
      %v2522 = vpack.c.b16 %v2099, %v2098
      %v2523 = vpack.c.b16 %v2101, %v2100
      %v2524 = vpack.c.b16 %v2103, %v2102
      %v2525 = vpack.c.b16 %v2105, %v2104
      %v2526 = vpack.c.b16 %v2107, %v2106
      %v2527 = vpack.c.b16 %v2109, %v2108
      %v2528 = vpack.c.b16 %v2111, %v2110
      %v2529 = vpack.c.b16 %v2113, %v2112
      %v2530 = vpack.c.b16 %v2115, %v2114
      %v2531 = vpack.c.b16 %v2117, %v2116
      %v2532 = vpack.c.b16 %v2119, %v2118
      %v2533 = vpack.c.b16 %v2121, %v2120
      %v2534 = vpack.c.b16 %v2123, %v2122
      %v2535 = vpack.c.b16 %v2125, %v2124
      %v2536 = vpack.c.b16 %v2127, %v2126
      %v2537 = vpack.c.b16 %v2129, %v2128
      %v2538 = vpack.c.b16 %v2131, %v2130
      %v2539 = vpack.c.b16 %v2133, %v2132
      %v2540 = vpack.c.b16 %v2135, %v2134
      %v2541 = vpack.c.b16 %v2137, %v2136
      %v2542 = vpack.c.b16 %v2139, %v2138
      %v2543 = vpack.c.b16 %v2141, %v2140
      %v2544 = vpack.c.b16 %v2143, %v2142
      %v2545 = vpack.c.b16 %v2145, %v2144
      %v2546 = vpack.c.b16 %v2147, %v2146
      %v2547 = vpack.c.b16 %v2149, %v2148
      %v2548 = vpack.c.b16 %v2151, %v2150
      %v2549 = vpack.c.b16 %v2153, %v2152
      %v2550 = vpack.c.b16 %v2155, %v2154
      %v2551 = vpack.c.b16 %v2157, %v2156
      %v2552 = vpack.c.b16 %v2159, %v2158
      %v2553 = vpack.c.b16 %v2161, %v2160
      %v2554 = vpack.c.b16 %v2163, %v2162
      %v2555 = vpack.c.b16 %v2165, %v2164
      %v2556 = vpack.c.b16 %v2167, %v2166
      %v2557 = vpack.c.b16 %v2169, %v2168
      %v2558 = vpack.c.b16 %v2171, %v2170
      %v2559 = vpack.c.b16 %v2173, %v2172
      %v2560 = vpack.c.b16 %v2175, %v2174
      %v2561 = vpack.c.b16 %v2177, %v2176
      %v2562 = vpack.c.b16 %v2179, %v2178
      %v2563 = vpack.c.b16 %v2181, %v2180
      %v2564 = vpack.c.b16 %v2183, %v2182
      %v2565 = vpack.c.b16 %v2185, %v2184
      %v2566 = vpack.c.b16 %v2187, %v2186
      %v2567 = vpack.c.b16 %v2189, %v2188
      %v2568 = vpack.c.b16 %v2191, %v2190
      %v2569 = vpack.c.b16 %v2193, %v2192
      %v2570 = vpack.c.b16 %v2195, %v2194
      %v2571 = vpack.c.b16 %v2197, %v2196
      %v2572 = vpack.c.b16 %v2199, %v2198
      %v2573 = vpack.c.b16 %v2201, %v2200
      %v2574 = vpack.c.b16 %v2203, %v2202
      %v2575 = vpack.c.b16 %v2205, %v2204
      %v2576 = vpack.c.b16 %v2207, %v2206
      %v2577 = vpack.c.b16 %v2209, %v2208
      %v2578 = vpack.c.b16 %v2211, %v2210
      %v2579 = vpack.c.b16 %v2213, %v2212
      %v2580 = vpack.c.b16 %v2215, %v2214
      %v2581 = vpack.c.b16 %v2217, %v2216
      %v2582 = vpack.c.b16 %v2219, %v2218
      %v2583 = vpack.c.b16 %v2221, %v2220
      %v2584 = vpack.c.b16 %v2223, %v2222
      %v2585 = vpack.c.b16 %v2225, %v2224
      %v2586 = vpack.c.b16 %v2227, %v2226
      %v2587 = vpack.c.b16 %v2229, %v2228
      %v2588 = vpack.c.b16 %v2231, %v2230
      %v2589 = vpack.c.b16 %v2233, %v2232
      %v2590 = vpack.c.b16 %v2235, %v2234
      %v2591 = vpack.c.b16 %v2237, %v2236
      %v2592 = vpack.c.b16 %v2239, %v2238
      %v2593 = vpack.c.b16 %v2241, %v2240
      %v2594 = vpack.c.b16 %v2243, %v2242
      %v2595 = vpack.c.b16 %v2245, %v2244
      %v2596 = vpack.c.b16 %v2247, %v2246
      %v2597 = vpack.c.b16 %v2249, %v2248
      %v2598 = vpack.c.b16 %v2251, %v2250
      %v2599 = vpack.c.b16 %v2253, %v2252
      %v2600 = vpack.c.b16 %v2255, %v2254
      %v2601 = vpack.c.b16 %v2257, %v2256
      %v2602 = vpack.c.b16 %v2259, %v2258
      %v2603 = vpack.c.b16 %v2261, %v2260
      %v2604 = vpack.c.b16 %v2263, %v2262
      %v2605 = vpack.c.b16 %v2265, %v2264
      %v2606 = vpack.c.b16 %v2267, %v2266
      %v2607 = vpack.c.b16 %v2269, %v2268
      %v2608 = vpack.c.b16 %v2271, %v2270
      %v2609 = vpack.c.b16 %v2273, %v2272
      %v2610 = vpack.c.b16 %v2275, %v2274
      %v2611 = vpack.c.b16 %v2277, %v2276
      %v2612 = vpack.c.b16 %v2279, %v2278
      %v2613 = vpack.c.b16 %v2281, %v2280
      %v2614 = vpack.c.b16 %v2283, %v2282
      %v2615 = vpack.c.b16 %v2285, %v2284
      %v2616 = vpack.c.b16 %v2287, %v2286
      %v2617 = vpack.c.b16 %v2289, %v2288
      %v2618 = vpack.c.b16 %v2291, %v2290
      %v2619 = vpack.c.b16 %v2293, %v2292
      %v2620 = vpack.c.b16 %v2295, %v2294
      %v2621 = vpack.c.b16 %v2297, %v2296
      %v2622 = vpack.c.b16 %v2299, %v2298
      %v2623 = vpack.c.b16 %v2301, %v2300
      %v2624 = vpack.c.b16 %v2303, %v2302
      %v2625 = vpack.c.b16 %v2305, %v2304
      %v2626 = vpack.c.b16 %v2307, %v2306
      %v2627 = vpack.c.b16 %v2309, %v2308
      %v2628 = vpack.c.b16 %v2311, %v2310
      %v2629 = vpack.c.b16 %v2313, %v2312
      %v2630 = vpack.c.b16 %v2315, %v2314
      %v2631 = vpack.c.b16 %v2317, %v2316
      %v2632 = vpack.c.b16 %v2319, %v2318
      %v2633 = vpack.c.b16 %v2321, %v2320
      %v2634 = vpack.c.b16 %v2323, %v2322
      %v2635 = vpack.c.b16 %v2325, %v2324
      %v2636 = vpack.c.b16 %v2327, %v2326
      %v2637 = vpack.c.b16 %v2329, %v2328
      %v2638 = vpack.c.b16 %v2331, %v2330
      %v2639 = vpack.c.b16 %v2333, %v2332
      %v2640 = vpack.c.b16 %v2335, %v2334
      %v2641 = vpack.c.b16 %v2337, %v2336
      %v2642 = vpack.c.b16 %v2339, %v2338
      %v2643 = vpack.c.b16 %v2341, %v2340
      %v2644 = vpack.c.b16 %v2343, %v2342
      %v2645 = vpack.c.b16 %v2345, %v2344
      %v2646 = vpack.c.b16 %v2347, %v2346
      %v2647 = vpack.c.b16 %v2349, %v2348
      %v2648 = vpack.c.b16 %v2351, %v2350
      %v2649 = vpack.c.b16 %v2353, %v2352
      %v2650 = vpack.c.b16 %v2355, %v2354
      %v2651 = vpack.c.b16 %v2357, %v2356
      %v2652 = vpack.c.b16 %v2359, %v2358
      %v2653 = vpack.c.b16 %v2361, %v2360
      %v2654 = vpack.c.b16 %v2363, %v2362
      %v2655 = vpack.c.b16 %v2365, %v2364
      %v2656 = vpack.c.b16 %v2367, %v2366
      %v2657 = vpack.c.b16 %v2369, %v2368
      %v2658 = vpack.c.b16 %v2371, %v2370
      %v2659 = vpack.c.b16 %v2373, %v2372
      %v2660 = vpack.c.b16 %v2375, %v2374
      %v2661 = vpack.c.b16 %v2377, %v2376
      %v2662 = vpack.c.b16 %v2379, %v2378
      %v2663 = vpack.c.b16 %v2381, %v2380
      %v2664 = vpack.c.b16 %v2383, %v2382
      %v2665 = vpack.c.b16 %v2385, %v2384
      %v2666 = vpack.c.b16 %v2387, %v2386
      %v2667 = vpack.c.b16 %v2389, %v2388
      %v2668 = vpack.c.b16 %v2391, %v2390
      %v2669 = vpack.c.b16 %v2393, %v2392
      %v2670 = vpack.c.b16 %v2395, %v2394
      %v2671 = vpack.c.b16 %v2397, %v2396
      %v2672 = vpack.c.b16 %v2399, %v2398
      %v2673 = vpack.c.b16 %v2401, %v2400
      %v2674 = vpack.c.b16 %v2403, %v2402
      %v2675 = vpack.c.b16 %v2405, %v2404
      %v2676 = vpack.c.b16 %v2407, %v2406
      %v2677 = vpack.c.b16 %v2409, %v2408
      %v2678 = vpack.c.b16 %v2411, %v2410
      %v2679 = vpack.c.b16 %v2413, %v2412
      %v2680 = vpack.c.b16 %v2415, %v2414
      %v2681 = vpack.c.b16 %v2417, %v2416
      %v2682 = vpack.c.b16 %v2419, %v2418
      %v2683 = vpack.c.b16 %v2421, %v2420
      %v2684 = vpack.c.b16 %v2423, %v2422
      %v2685 = vpack.c.b16 %v2425, %v2424
      %v2686 = vpack.c.b16 %v2427, %v2426
      %v2687 = vpack.c.b16 %v2429, %v2428
      %v2688 = vpack.c.b16 %v2431, %v2430
      %v2689 = vpack.c.b16 %v2433, %v2432
      %2946 = vmatprep.subr.bf16.mxu0 0
      %2947 = vmatpush1.bf16.msra.mxu0 %v2441
      %2948 = vmatprep.subr.bf16.mxu0 0
      %2949 = vmatpush1.bf16.msra.mxu0 %v2440
      %2950 = vmatprep.subr.bf16.mxu0 0
      %2951 = vmatpush1.bf16.msra.mxu0 %v2439
      %2952 = vmatprep.subr.bf16.mxu0 0
      %2953 = vmatpush1.bf16.msra.mxu0 %v2438
      %2954 = vmatprep.subr.bf16.mxu0 0
      %2955 = vmatpush1.bf16.msra.mxu0 %v2437
      %2956 = vmatprep.subr.bf16.mxu0 0
      %2957 = vmatpush1.bf16.msra.mxu0 %v2436
      %2958 = vmatprep.subr.bf16.mxu0 0
      %2959 = vmatpush1.bf16.msra.mxu0 %v2435
      %2960 = vmatprep.subr.bf16.mxu0 0
      %2961 = vmatpush1.bf16.msra.mxu0 %v2434
      %2962 = vmatprep.subr.bf16.mxu0 0
      %2963 = vmatpush2.bf16.msra.mxu0 %v2449
      %2964 = vmatprep.subr.bf16.mxu0 0
      %2965 = vmatpush2.bf16.msra.mxu0 %v2448
      %2966 = vmatprep.subr.bf16.mxu0 0
      %2967 = vmatpush2.bf16.msra.mxu0 %v2447
      %2968 = vmatprep.subr.bf16.mxu0 0
      %2969 = vmatpush2.bf16.msra.mxu0 %v2446
      %2970 = vmatprep.subr.bf16.mxu0 0
      %2971 = vmatpush2.bf16.msra.mxu0 %v2445
      %2972 = vmatprep.subr.bf16.mxu0 0
      %2973 = vmatpush2.bf16.msra.mxu0 %v2444
      %2974 = vmatprep.subr.bf16.mxu0 0
      %2975 = vmatpush2.bf16.msra.mxu0 %v2443
      %2976 = vmatprep.subr.bf16.mxu0 0
      %2977 = vmatpush2.bf16.msra.mxu0 %v2442
      %2978 = vmatprep.mubr.bf16.mxu0 %v1155
      %2979 = vmatmul.mubr.bf16.gmra.mxu0 %v1154
      %v2980 = vpop.f32.mrf.mxu0
      %v2981 = vadd.f32 0.0, %v2980
      %v2982 = vpop.f32.mrf.mxu0
      %v2983 = vpop.f32.mrf.mxu0
      %v2984 = vadd.f32 0.0, %v2983
      %v2985 = vpop.f32.mrf.mxu0
      %2986 = vmatprep.mubr.bf16.mxu0 %v1187
      %2987 = vmatmul.mubr.bf16.gmra.mxu0 %v1186
      %v2988 = vpop.f32.mrf.mxu0
      %v2989 = vadd.f32 0.0, %v2988
      %v2990 = vpop.f32.mrf.mxu0
      %v2991 = vpop.f32.mrf.mxu0
      %v2992 = vadd.f32 0.0, %v2991
      %v2993 = vpop.f32.mrf.mxu0
      %2994 = vmatprep.mubr.bf16.mxu0 %v1219
      %2995 = vmatmul.mubr.bf16.gmra.mxu0 %v1218
      %v2996 = vpop.f32.mrf.mxu0
      %v2997 = vadd.f32 0.0, %v2996
      %v2998 = vpop.f32.mrf.mxu0
      %v2999 = vpop.f32.mrf.mxu0
      %v3000 = vadd.f32 0.0, %v2999
      %v3001 = vpop.f32.mrf.mxu0
      %3002 = vmatprep.mubr.bf16.mxu0 %v1251
      %3003 = vmatmul.mubr.bf16.gmra.mxu0 %v1250
      %v3004 = vpop.f32.mrf.mxu0
      %v3005 = vadd.f32 0.0, %v3004
      %v3006 = vpop.f32.mrf.mxu0
      %v3007 = vpop.f32.mrf.mxu0
      %v3008 = vpop.f32.mrf.mxu0
      %3009 = vdwg.mxu0
      %3010 = vmatprep.subr.bf16.mxu0 0
      %3011 = vmatpush1.bf16.msra.mxu0 %v2457
      %3012 = vmatprep.subr.bf16.mxu0 0
      %3013 = vmatpush1.bf16.msra.mxu0 %v2456
      %3014 = vmatprep.subr.bf16.mxu0 0
      %3015 = vmatpush1.bf16.msra.mxu0 %v2455
      %3016 = vmatprep.subr.bf16.mxu0 0
      %3017 = vmatpush1.bf16.msra.mxu0 %v2454
      %3018 = vmatprep.subr.bf16.mxu0 0
      %3019 = vmatpush1.bf16.msra.mxu0 %v2453
      %3020 = vmatprep.subr.bf16.mxu0 0
      %3021 = vmatpush1.bf16.msra.mxu0 %v2452
      %3022 = vmatprep.subr.bf16.mxu0 0
      %3023 = vmatpush1.bf16.msra.mxu0 %v2451
      %3024 = vmatprep.subr.bf16.mxu0 0
      %3025 = vmatpush1.bf16.msra.mxu0 %v2450
      %3026 = vmatprep.subr.bf16.mxu0 0
      %3027 = vmatpush2.bf16.msra.mxu0 %v2465
      %3028 = vmatprep.subr.bf16.mxu0 0
      %3029 = vmatpush2.bf16.msra.mxu0 %v2464
      %3030 = vmatprep.subr.bf16.mxu0 0
      %3031 = vmatpush2.bf16.msra.mxu0 %v2463
      %3032 = vmatprep.subr.bf16.mxu0 0
      %3033 = vmatpush2.bf16.msra.mxu0 %v2462
      %3034 = vmatprep.subr.bf16.mxu0 0
      %3035 = vmatpush2.bf16.msra.mxu0 %v2461
      %3036 = vmatprep.subr.bf16.mxu0 0
      %3037 = vmatpush2.bf16.msra.mxu0 %v2460
      %3038 = vmatprep.subr.bf16.mxu0 0
      %3039 = vmatpush2.bf16.msra.mxu0 %v2459
      %3040 = vmatprep.subr.bf16.mxu0 0
      %3041 = vmatpush2.bf16.msra.mxu0 %v2458
      %3042 = vmatprep.mubr.bf16.mxu0 %v1157
      %3043 = vmatmul.mubr.bf16.gmra.mxu0 %v1156
      %v3044 = vpop.f32.mrf.mxu0
      %v3045 = vadd.f32 %v2981, %v3044
      %v3046 = vpop.f32.mrf.mxu0
      %v3047 = vpop.f32.mrf.mxu0
      %v3048 = vadd.f32 %v2984, %v3047
      %v3049 = vpop.f32.mrf.mxu0
      %3050 = vmatprep.mubr.bf16.mxu0 %v1189
      %3051 = vmatmul.mubr.bf16.gmra.mxu0 %v1188
      %v3052 = vpop.f32.mrf.mxu0
      %v3053 = vadd.f32 %v2989, %v3052
      %v3054 = vpop.f32.mrf.mxu0
      %v3055 = vpop.f32.mrf.mxu0
      %v3056 = vadd.f32 %v2992, %v3055
      %v3057 = vpop.f32.mrf.mxu0
      %3058 = vmatprep.mubr.bf16.mxu0 %v1221
      %3059 = vmatmul.mubr.bf16.gmra.mxu0 %v1220
      %v3060 = vpop.f32.mrf.mxu0
      %v3061 = vadd.f32 %v2997, %v3060
      %v3062 = vpop.f32.mrf.mxu0
      %v3063 = vpop.f32.mrf.mxu0
      %v3064 = vadd.f32 %v3000, %v3063
      %v3065 = vpop.f32.mrf.mxu0
      %3066 = vmatprep.mubr.bf16.mxu0 %v1253
      %3067 = vmatmul.mubr.bf16.gmra.mxu0 %v1252
      %v3068 = vpop.f32.mrf.mxu0
      %v3069 = vadd.f32 %v3005, %v3068
      %v3070 = vpop.f32.mrf.mxu0
      %v3071 = vpop.f32.mrf.mxu0
      %v3072 = vpop.f32.mrf.mxu0
      %3073 = vdwg.mxu0
      %3074 = vmatprep.subr.bf16.mxu0 0
      %3075 = vmatpush1.bf16.msra.mxu0 %v2473
      %3076 = vmatprep.subr.bf16.mxu0 0
      %3077 = vmatpush1.bf16.msra.mxu0 %v2472
      %3078 = vmatprep.subr.bf16.mxu0 0
      %3079 = vmatpush1.bf16.msra.mxu0 %v2471
      %3080 = vmatprep.subr.bf16.mxu0 0
      %3081 = vmatpush1.bf16.msra.mxu0 %v2470
      %3082 = vmatprep.subr.bf16.mxu0 0
      %3083 = vmatpush1.bf16.msra.mxu0 %v2469
      %3084 = vmatprep.subr.bf16.mxu0 0
      %3085 = vmatpush1.bf16.msra.mxu0 %v2468
      %3086 = vmatprep.subr.bf16.mxu0 0
      %3087 = vmatpush1.bf16.msra.mxu0 %v2467
      %3088 = vmatprep.subr.bf16.mxu0 0
      %3089 = vmatpush1.bf16.msra.mxu0 %v2466
      %3090 = vmatprep.subr.bf16.mxu0 0
      %3091 = vmatpush2.bf16.msra.mxu0 %v2481
      %3092 = vmatprep.subr.bf16.mxu0 0
      %3093 = vmatpush2.bf16.msra.mxu0 %v2480
      %3094 = vmatprep.subr.bf16.mxu0 0
      %3095 = vmatpush2.bf16.msra.mxu0 %v2479
      %3096 = vmatprep.subr.bf16.mxu0 0
      %3097 = vmatpush2.bf16.msra.mxu0 %v2478
      %3098 = vmatprep.subr.bf16.mxu0 0
      %3099 = vmatpush2.bf16.msra.mxu0 %v2477
      %3100 = vmatprep.subr.bf16.mxu0 0
      %3101 = vmatpush2.bf16.msra.mxu0 %v2476
      %3102 = vmatprep.subr.bf16.mxu0 0
      %3103 = vmatpush2.bf16.msra.mxu0 %v2475
      %3104 = vmatprep.subr.bf16.mxu0 0
      %3105 = vmatpush2.bf16.msra.mxu0 %v2474
      %3106 = vmatprep.mubr.bf16.mxu0 %v1159
      %3107 = vmatmul.mubr.bf16.gmra.mxu0 %v1158
      %v3108 = vpop.f32.mrf.mxu0
      %v3109 = vadd.f32 %v3045, %v3108
      %v3110 = vpop.f32.mrf.mxu0
      %v3111 = vpop.f32.mrf.mxu0
      %v3112 = vadd.f32 %v3048, %v3111
      %v3113 = vpop.f32.mrf.mxu0
      %3114 = vmatprep.mubr.bf16.mxu0 %v1191
      %3115 = vmatmul.mubr.bf16.gmra.mxu0 %v1190
      %v3116 = vpop.f32.mrf.mxu0
      %v3117 = vadd.f32 %v3053, %v3116
      %v3118 = vpop.f32.mrf.mxu0
      %v3119 = vpop.f32.mrf.mxu0
      %v3120 = vadd.f32 %v3056, %v3119
      %v3121 = vpop.f32.mrf.mxu0
      %3122 = vmatprep.mubr.bf16.mxu0 %v1223
      %3123 = vmatmul.mubr.bf16.gmra.mxu0 %v1222
      %v3124 = vpop.f32.mrf.mxu0
      %v3125 = vadd.f32 %v3061, %v3124
      %v3126 = vpop.f32.mrf.mxu0
      %v3127 = vpop.f32.mrf.mxu0
      %v3128 = vadd.f32 %v3064, %v3127
      %v3129 = vpop.f32.mrf.mxu0
      %3130 = vmatprep.mubr.bf16.mxu0 %v1255
      %3131 = vmatmul.mubr.bf16.gmra.mxu0 %v1254
      %v3132 = vpop.f32.mrf.mxu0
      %v3133 = vadd.f32 %v3069, %v3132
      %v3134 = vpop.f32.mrf.mxu0
      %v3135 = vpop.f32.mrf.mxu0
      %v3136 = vpop.f32.mrf.mxu0
      %3137 = vdwg.mxu0
      %3138 = vmatprep.subr.bf16.mxu0 0
      %3139 = vmatpush1.bf16.msra.mxu0 %v2489
      %3140 = vmatprep.subr.bf16.mxu0 0
      %3141 = vmatpush1.bf16.msra.mxu0 %v2488
      %3142 = vmatprep.subr.bf16.mxu0 0
      %3143 = vmatpush1.bf16.msra.mxu0 %v2487
      %3144 = vmatprep.subr.bf16.mxu0 0
      %3145 = vmatpush1.bf16.msra.mxu0 %v2486
      %3146 = vmatprep.subr.bf16.mxu0 0
      %3147 = vmatpush1.bf16.msra.mxu0 %v2485
      %3148 = vmatprep.subr.bf16.mxu0 0
      %3149 = vmatpush1.bf16.msra.mxu0 %v2484
      %3150 = vmatprep.subr.bf16.mxu0 0
      %3151 = vmatpush1.bf16.msra.mxu0 %v2483
      %3152 = vmatprep.subr.bf16.mxu0 0
      %3153 = vmatpush1.bf16.msra.mxu0 %v2482
      %3154 = vmatprep.subr.bf16.mxu0 0
      %3155 = vmatpush2.bf16.msra.mxu0 %v2497
      %3156 = vmatprep.subr.bf16.mxu0 0
      %3157 = vmatpush2.bf16.msra.mxu0 %v2496
      %3158 = vmatprep.subr.bf16.mxu0 0
      %3159 = vmatpush2.bf16.msra.mxu0 %v2495
      %3160 = vmatprep.subr.bf16.mxu0 0
      %3161 = vmatpush2.bf16.msra.mxu0 %v2494
      %3162 = vmatprep.subr.bf16.mxu0 0
      %3163 = vmatpush2.bf16.msra.mxu0 %v2493
      %3164 = vmatprep.subr.bf16.mxu0 0
      %3165 = vmatpush2.bf16.msra.mxu0 %v2492
      %3166 = vmatprep.subr.bf16.mxu0 0
      %3167 = vmatpush2.bf16.msra.mxu0 %v2491
      %3168 = vmatprep.subr.bf16.mxu0 0
      %3169 = vmatpush2.bf16.msra.mxu0 %v2490
      %3170 = vmatprep.mubr.bf16.mxu0 %v1161
      %3171 = vmatmul.mubr.bf16.gmra.mxu0 %v1160
      %v3172 = vpop.f32.mrf.mxu0
      %v3173 = vadd.f32 %v3109, %v3172
      %v3174 = vpop.f32.mrf.mxu0
      %v3175 = vpop.f32.mrf.mxu0
      %v3176 = vadd.f32 %v3112, %v3175
      %v3177 = vpop.f32.mrf.mxu0
      %3178 = vmatprep.mubr.bf16.mxu0 %v1193
      %3179 = vmatmul.mubr.bf16.gmra.mxu0 %v1192
      %v3180 = vpop.f32.mrf.mxu0
      %v3181 = vadd.f32 %v3117, %v3180
      %v3182 = vpop.f32.mrf.mxu0
      %v3183 = vpop.f32.mrf.mxu0
      %v3184 = vadd.f32 %v3120, %v3183
      %v3185 = vpop.f32.mrf.mxu0
      %3186 = vmatprep.mubr.bf16.mxu0 %v1225
      %3187 = vmatmul.mubr.bf16.gmra.mxu0 %v1224
      %v3188 = vpop.f32.mrf.mxu0
      %v3189 = vadd.f32 %v3125, %v3188
      %v3190 = vpop.f32.mrf.mxu0
      %v3191 = vpop.f32.mrf.mxu0
      %v3192 = vadd.f32 %v3128, %v3191
      %v3193 = vpop.f32.mrf.mxu0
      %3194 = vmatprep.mubr.bf16.mxu0 %v1257
      %3195 = vmatmul.mubr.bf16.gmra.mxu0 %v1256
      %v3196 = vpop.f32.mrf.mxu0
      %v3197 = vadd.f32 %v3133, %v3196
      %v3198 = vpop.f32.mrf.mxu0
      %v3199 = vpop.f32.mrf.mxu0
      %v3200 = vpop.f32.mrf.mxu0
      %3201 = vdwg.mxu0
      %3202 = vmatprep.subr.bf16.mxu0 0
      %3203 = vmatpush1.bf16.msra.mxu0 %v2505
      %3204 = vmatprep.subr.bf16.mxu0 0
      %3205 = vmatpush1.bf16.msra.mxu0 %v2504
      %3206 = vmatprep.subr.bf16.mxu0 0
      %3207 = vmatpush1.bf16.msra.mxu0 %v2503
      %3208 = vmatprep.subr.bf16.mxu0 0
      %3209 = vmatpush1.bf16.msra.mxu0 %v2502
      %3210 = vmatprep.subr.bf16.mxu0 0
      %3211 = vmatpush1.bf16.msra.mxu0 %v2501
      %3212 = vmatprep.subr.bf16.mxu0 0
      %3213 = vmatpush1.bf16.msra.mxu0 %v2500
      %3214 = vmatprep.subr.bf16.mxu0 0
      %3215 = vmatpush1.bf16.msra.mxu0 %v2499
      %3216 = vmatprep.subr.bf16.mxu0 0
      %3217 = vmatpush1.bf16.msra.mxu0 %v2498
      %3218 = vmatprep.subr.bf16.mxu0 0
      %3219 = vmatpush2.bf16.msra.mxu0 %v2513
      %3220 = vmatprep.subr.bf16.mxu0 0
      %3221 = vmatpush2.bf16.msra.mxu0 %v2512
      %3222 = vmatprep.subr.bf16.mxu0 0
      %3223 = vmatpush2.bf16.msra.mxu0 %v2511
      %3224 = vmatprep.subr.bf16.mxu0 0
      %3225 = vmatpush2.bf16.msra.mxu0 %v2510
      %3226 = vmatprep.subr.bf16.mxu0 0
      %3227 = vmatpush2.bf16.msra.mxu0 %v2509
      %3228 = vmatprep.subr.bf16.mxu0 0
      %3229 = vmatpush2.bf16.msra.mxu0 %v2508
      %3230 = vmatprep.subr.bf16.mxu0 0
      %3231 = vmatpush2.bf16.msra.mxu0 %v2507
      %3232 = vmatprep.subr.bf16.mxu0 0
      %3233 = vmatpush2.bf16.msra.mxu0 %v2506
      %3234 = vmatprep.mubr.bf16.mxu0 %v1163
      %3235 = vmatmul.mubr.bf16.gmra.mxu0 %v1162
      %v3236 = vpop.f32.mrf.mxu0
      %v3237 = vadd.f32 %v3173, %v3236
      %v3238 = vpop.f32.mrf.mxu0
      %v3239 = vpop.f32.mrf.mxu0
      %v3240 = vadd.f32 %v3176, %v3239
      %v3241 = vpop.f32.mrf.mxu0
      %3242 = vmatprep.mubr.bf16.mxu0 %v1195
      %3243 = vmatmul.mubr.bf16.gmra.mxu0 %v1194
      %v3244 = vpop.f32.mrf.mxu0
      %v3245 = vadd.f32 %v3181, %v3244
      %v3246 = vpop.f32.mrf.mxu0
      %v3247 = vpop.f32.mrf.mxu0
      %v3248 = vadd.f32 %v3184, %v3247
      %v3249 = vpop.f32.mrf.mxu0
      %3250 = vmatprep.mubr.bf16.mxu0 %v1227
      %3251 = vmatmul.mubr.bf16.gmra.mxu0 %v1226
      %v3252 = vpop.f32.mrf.mxu0
      %v3253 = vadd.f32 %v3189, %v3252
      %v3254 = vpop.f32.mrf.mxu0
      %v3255 = vpop.f32.mrf.mxu0
      %v3256 = vadd.f32 %v3192, %v3255
      %v3257 = vpop.f32.mrf.mxu0
      %3258 = vmatprep.mubr.bf16.mxu0 %v1259
      %3259 = vmatmul.mubr.bf16.gmra.mxu0 %v1258
      %v3260 = vpop.f32.mrf.mxu0
      %v3261 = vadd.f32 %v3197, %v3260
      %v3262 = vpop.f32.mrf.mxu0
      %v3263 = vpop.f32.mrf.mxu0
      %v3264 = vpop.f32.mrf.mxu0
      %3265 = vdwg.mxu0
      %3266 = vmatprep.subr.bf16.mxu0 0
      %3267 = vmatpush1.bf16.msra.mxu0 %v2521
      %3268 = vmatprep.subr.bf16.mxu0 0
      %3269 = vmatpush1.bf16.msra.mxu0 %v2520
      %3270 = vmatprep.subr.bf16.mxu0 0
      %3271 = vmatpush1.bf16.msra.mxu0 %v2519
      %3272 = vmatprep.subr.bf16.mxu0 0
      %3273 = vmatpush1.bf16.msra.mxu0 %v2518
      %3274 = vmatprep.subr.bf16.mxu0 0
      %3275 = vmatpush1.bf16.msra.mxu0 %v2517
      %3276 = vmatprep.subr.bf16.mxu0 0
      %3277 = vmatpush1.bf16.msra.mxu0 %v2516
      %3278 = vmatprep.subr.bf16.mxu0 0
      %3279 = vmatpush1.bf16.msra.mxu0 %v2515
      %3280 = vmatprep.subr.bf16.mxu0 0
      %3281 = vmatpush1.bf16.msra.mxu0 %v2514
      %3282 = vmatprep.subr.bf16.mxu0 0
      %3283 = vmatpush2.bf16.msra.mxu0 %v2529
      %3284 = vmatprep.subr.bf16.mxu0 0
      %3285 = vmatpush2.bf16.msra.mxu0 %v2528
      %3286 = vmatprep.subr.bf16.mxu0 0
      %3287 = vmatpush2.bf16.msra.mxu0 %v2527
      %3288 = vmatprep.subr.bf16.mxu0 0
      %3289 = vmatpush2.bf16.msra.mxu0 %v2526
      %3290 = vmatprep.subr.bf16.mxu0 0
      %3291 = vmatpush2.bf16.msra.mxu0 %v2525
      %3292 = vmatprep.subr.bf16.mxu0 0
      %3293 = vmatpush2.bf16.msra.mxu0 %v2524
      %3294 = vmatprep.subr.bf16.mxu0 0
      %3295 = vmatpush2.bf16.msra.mxu0 %v2523
      %3296 = vmatprep.subr.bf16.mxu0 0
      %3297 = vmatpush2.bf16.msra.mxu0 %v2522
      %3298 = vmatprep.mubr.bf16.mxu0 %v1165
      %3299 = vmatmul.mubr.bf16.gmra.mxu0 %v1164
      %v3300 = vpop.f32.mrf.mxu0
      %v3301 = vadd.f32 %v3237, %v3300
      %v3302 = vpop.f32.mrf.mxu0
      %v3303 = vpop.f32.mrf.mxu0
      %v3304 = vadd.f32 %v3240, %v3303
      %v3305 = vpop.f32.mrf.mxu0
      %3306 = vmatprep.mubr.bf16.mxu0 %v1197
      %3307 = vmatmul.mubr.bf16.gmra.mxu0 %v1196
      %v3308 = vpop.f32.mrf.mxu0
      %v3309 = vadd.f32 %v3245, %v3308
      %v3310 = vpop.f32.mrf.mxu0
      %v3311 = vpop.f32.mrf.mxu0
      %v3312 = vadd.f32 %v3248, %v3311
      %v3313 = vpop.f32.mrf.mxu0
      %3314 = vmatprep.mubr.bf16.mxu0 %v1229
      %3315 = vmatmul.mubr.bf16.gmra.mxu0 %v1228
      %v3316 = vpop.f32.mrf.mxu0
      %v3317 = vadd.f32 %v3253, %v3316
      %v3318 = vpop.f32.mrf.mxu0
      %v3319 = vpop.f32.mrf.mxu0
      %v3320 = vadd.f32 %v3256, %v3319
      %v3321 = vpop.f32.mrf.mxu0
      %3322 = vmatprep.mubr.bf16.mxu0 %v1261
      %3323 = vmatmul.mubr.bf16.gmra.mxu0 %v1260
      %v3324 = vpop.f32.mrf.mxu0
      %v3325 = vadd.f32 %v3261, %v3324
      %v3326 = vpop.f32.mrf.mxu0
      %v3327 = vpop.f32.mrf.mxu0
      %v3328 = vpop.f32.mrf.mxu0
      %3329 = vdwg.mxu0
      %3330 = vmatprep.subr.bf16.mxu0 0
      %3331 = vmatpush1.bf16.msra.mxu0 %v2537
      %3332 = vmatprep.subr.bf16.mxu0 0
      %3333 = vmatpush1.bf16.msra.mxu0 %v2536
      %3334 = vmatprep.subr.bf16.mxu0 0
      %3335 = vmatpush1.bf16.msra.mxu0 %v2535
      %3336 = vmatprep.subr.bf16.mxu0 0
      %3337 = vmatpush1.bf16.msra.mxu0 %v2534
      %3338 = vmatprep.subr.bf16.mxu0 0
      %3339 = vmatpush1.bf16.msra.mxu0 %v2533
      %3340 = vmatprep.subr.bf16.mxu0 0
      %3341 = vmatpush1.bf16.msra.mxu0 %v2532
      %3342 = vmatprep.subr.bf16.mxu0 0
      %3343 = vmatpush1.bf16.msra.mxu0 %v2531
      %3344 = vmatprep.subr.bf16.mxu0 0
      %3345 = vmatpush1.bf16.msra.mxu0 %v2530
      %3346 = vmatprep.subr.bf16.mxu0 0
      %3347 = vmatpush2.bf16.msra.mxu0 %v2545
      %3348 = vmatprep.subr.bf16.mxu0 0
      %3349 = vmatpush2.bf16.msra.mxu0 %v2544
      %3350 = vmatprep.subr.bf16.mxu0 0
      %3351 = vmatpush2.bf16.msra.mxu0 %v2543
      %3352 = vmatprep.subr.bf16.mxu0 0
      %3353 = vmatpush2.bf16.msra.mxu0 %v2542
      %3354 = vmatprep.subr.bf16.mxu0 0
      %3355 = vmatpush2.bf16.msra.mxu0 %v2541
      %3356 = vmatprep.subr.bf16.mxu0 0
      %3357 = vmatpush2.bf16.msra.mxu0 %v2540
      %3358 = vmatprep.subr.bf16.mxu0 0
      %3359 = vmatpush2.bf16.msra.mxu0 %v2539
      %3360 = vmatprep.subr.bf16.mxu0 0
      %3361 = vmatpush2.bf16.msra.mxu0 %v2538
      %3362 = vmatprep.mubr.bf16.mxu0 %v1167
      %3363 = vmatmul.mubr.bf16.gmra.mxu0 %v1166
      %v3364 = vpop.f32.mrf.mxu0
      %v3365 = vadd.f32 %v3301, %v3364
      %v3366 = vpop.f32.mrf.mxu0
      %v3367 = vpop.f32.mrf.mxu0
      %v3368 = vadd.f32 %v3304, %v3367
      %v3369 = vpop.f32.mrf.mxu0
      %3370 = vmatprep.mubr.bf16.mxu0 %v1199
      %3371 = vmatmul.mubr.bf16.gmra.mxu0 %v1198
      %v3372 = vpop.f32.mrf.mxu0
      %v3373 = vadd.f32 %v3309, %v3372
      %v3374 = vpop.f32.mrf.mxu0
      %v3375 = vpop.f32.mrf.mxu0
      %v3376 = vadd.f32 %v3312, %v3375
      %v3377 = vpop.f32.mrf.mxu0
      %3378 = vmatprep.mubr.bf16.mxu0 %v1231
      %3379 = vmatmul.mubr.bf16.gmra.mxu0 %v1230
      %v3380 = vpop.f32.mrf.mxu0
      %v3381 = vadd.f32 %v3317, %v3380
      %v3382 = vpop.f32.mrf.mxu0
      %v3383 = vpop.f32.mrf.mxu0
      %v3384 = vadd.f32 %v3320, %v3383
      %v3385 = vpop.f32.mrf.mxu0
      %3386 = vmatprep.mubr.bf16.mxu0 %v1263
      %3387 = vmatmul.mubr.bf16.gmra.mxu0 %v1262
      %v3388 = vpop.f32.mrf.mxu0
      %v3389 = vadd.f32 %v3325, %v3388
      %v3390 = vpop.f32.mrf.mxu0
      %v3391 = vpop.f32.mrf.mxu0
      %v3392 = vpop.f32.mrf.mxu0
      %3393 = vdwg.mxu0
      %3394 = vmatprep.subr.bf16.mxu0 0
      %3395 = vmatpush1.bf16.msra.mxu0 %v2553
      %3396 = vmatprep.subr.bf16.mxu0 0
      %3397 = vmatpush1.bf16.msra.mxu0 %v2552
      %3398 = vmatprep.subr.bf16.mxu0 0
      %3399 = vmatpush1.bf16.msra.mxu0 %v2551
      %3400 = vmatprep.subr.bf16.mxu0 0
      %3401 = vmatpush1.bf16.msra.mxu0 %v2550
      %3402 = vmatprep.subr.bf16.mxu0 0
      %3403 = vmatpush1.bf16.msra.mxu0 %v2549
      %3404 = vmatprep.subr.bf16.mxu0 0
      %3405 = vmatpush1.bf16.msra.mxu0 %v2548
      %3406 = vmatprep.subr.bf16.mxu0 0
      %3407 = vmatpush1.bf16.msra.mxu0 %v2547
      %3408 = vmatprep.subr.bf16.mxu0 0
      %3409 = vmatpush1.bf16.msra.mxu0 %v2546
      %3410 = vmatprep.subr.bf16.mxu0 0
      %3411 = vmatpush2.bf16.msra.mxu0 %v2561
      %3412 = vmatprep.subr.bf16.mxu0 0
      %3413 = vmatpush2.bf16.msra.mxu0 %v2560
      %3414 = vmatprep.subr.bf16.mxu0 0
      %3415 = vmatpush2.bf16.msra.mxu0 %v2559
      %3416 = vmatprep.subr.bf16.mxu0 0
      %3417 = vmatpush2.bf16.msra.mxu0 %v2558
      %3418 = vmatprep.subr.bf16.mxu0 0
      %3419 = vmatpush2.bf16.msra.mxu0 %v2557
      %3420 = vmatprep.subr.bf16.mxu0 0
      %3421 = vmatpush2.bf16.msra.mxu0 %v2556
      %3422 = vmatprep.subr.bf16.mxu0 0
      %3423 = vmatpush2.bf16.msra.mxu0 %v2555
      %3424 = vmatprep.subr.bf16.mxu0 0
      %3425 = vmatpush2.bf16.msra.mxu0 %v2554
      %3426 = vmatprep.mubr.bf16.mxu0 %v1169
      %3427 = vmatmul.mubr.bf16.gmra.mxu0 %v1168
      %v3428 = vpop.f32.mrf.mxu0
      %v3429 = vadd.f32 %v3365, %v3428
      %v3430 = vpop.f32.mrf.mxu0
      %v3431 = vpop.f32.mrf.mxu0
      %v3432 = vadd.f32 %v3368, %v3431
      %v3433 = vpop.f32.mrf.mxu0
      %3434 = vmatprep.mubr.bf16.mxu0 %v1201
      %3435 = vmatmul.mubr.bf16.gmra.mxu0 %v1200
      %v3436 = vpop.f32.mrf.mxu0
      %v3437 = vadd.f32 %v3373, %v3436
      %v3438 = vpop.f32.mrf.mxu0
      %v3439 = vpop.f32.mrf.mxu0
      %v3440 = vadd.f32 %v3376, %v3439
      %v3441 = vpop.f32.mrf.mxu0
      %3442 = vmatprep.mubr.bf16.mxu0 %v1233
      %3443 = vmatmul.mubr.bf16.gmra.mxu0 %v1232
      %v3444 = vpop.f32.mrf.mxu0
      %v3445 = vadd.f32 %v3381, %v3444
      %v3446 = vpop.f32.mrf.mxu0
      %v3447 = vpop.f32.mrf.mxu0
      %v3448 = vadd.f32 %v3384, %v3447
      %v3449 = vpop.f32.mrf.mxu0
      %3450 = vmatprep.mubr.bf16.mxu0 %v1265
      %3451 = vmatmul.mubr.bf16.gmra.mxu0 %v1264
      %v3452 = vpop.f32.mrf.mxu0
      %v3453 = vadd.f32 %v3389, %v3452
      %v3454 = vpop.f32.mrf.mxu0
      %v3455 = vpop.f32.mrf.mxu0
      %v3456 = vpop.f32.mrf.mxu0
      %3457 = vdwg.mxu0
      %3458 = vmatprep.subr.bf16.mxu0 0
      %3459 = vmatpush1.bf16.msra.mxu0 %v2569
      %3460 = vmatprep.subr.bf16.mxu0 0
      %3461 = vmatpush1.bf16.msra.mxu0 %v2568
      %3462 = vmatprep.subr.bf16.mxu0 0
      %3463 = vmatpush1.bf16.msra.mxu0 %v2567
      %3464 = vmatprep.subr.bf16.mxu0 0
      %3465 = vmatpush1.bf16.msra.mxu0 %v2566
      %3466 = vmatprep.subr.bf16.mxu0 0
      %3467 = vmatpush1.bf16.msra.mxu0 %v2565
      %3468 = vmatprep.subr.bf16.mxu0 0
      %3469 = vmatpush1.bf16.msra.mxu0 %v2564
      %3470 = vmatprep.subr.bf16.mxu0 0
      %3471 = vmatpush1.bf16.msra.mxu0 %v2563
      %3472 = vmatprep.subr.bf16.mxu0 0
      %3473 = vmatpush1.bf16.msra.mxu0 %v2562
      %3474 = vmatprep.subr.bf16.mxu0 0
      %3475 = vmatpush2.bf16.msra.mxu0 %v2577
      %3476 = vmatprep.subr.bf16.mxu0 0
      %3477 = vmatpush2.bf16.msra.mxu0 %v2576
      %3478 = vmatprep.subr.bf16.mxu0 0
      %3479 = vmatpush2.bf16.msra.mxu0 %v2575
      %3480 = vmatprep.subr.bf16.mxu0 0
      %3481 = vmatpush2.bf16.msra.mxu0 %v2574
      %3482 = vmatprep.subr.bf16.mxu0 0
      %3483 = vmatpush2.bf16.msra.mxu0 %v2573
      %3484 = vmatprep.subr.bf16.mxu0 0
      %3485 = vmatpush2.bf16.msra.mxu0 %v2572
      %3486 = vmatprep.subr.bf16.mxu0 0
      %3487 = vmatpush2.bf16.msra.mxu0 %v2571
      %3488 = vmatprep.subr.bf16.mxu0 0
      %3489 = vmatpush2.bf16.msra.mxu0 %v2570
      %3490 = vmatprep.mubr.bf16.mxu0 %v1171
      %3491 = vmatmul.mubr.bf16.gmra.mxu0 %v1170
      %v3492 = vpop.f32.mrf.mxu0
      %v3493 = vadd.f32 %v3429, %v3492
      %v3494 = vpop.f32.mrf.mxu0
      %v3495 = vpop.f32.mrf.mxu0
      %v3496 = vadd.f32 %v3432, %v3495
      %v3497 = vpop.f32.mrf.mxu0
      %3498 = vmatprep.mubr.bf16.mxu0 %v1203
      %3499 = vmatmul.mubr.bf16.gmra.mxu0 %v1202
      %v3500 = vpop.f32.mrf.mxu0
      %v3501 = vadd.f32 %v3437, %v3500
      %v3502 = vpop.f32.mrf.mxu0
      %v3503 = vpop.f32.mrf.mxu0
      %v3504 = vadd.f32 %v3440, %v3503
      %v3505 = vpop.f32.mrf.mxu0
      %3506 = vmatprep.mubr.bf16.mxu0 %v1235
      %3507 = vmatmul.mubr.bf16.gmra.mxu0 %v1234
      %v3508 = vpop.f32.mrf.mxu0
      %v3509 = vadd.f32 %v3445, %v3508
      %v3510 = vpop.f32.mrf.mxu0
      %v3511 = vpop.f32.mrf.mxu0
      %v3512 = vadd.f32 %v3448, %v3511
      %v3513 = vpop.f32.mrf.mxu0
      %3514 = vmatprep.mubr.bf16.mxu0 %v1267
      %3515 = vmatmul.mubr.bf16.gmra.mxu0 %v1266
      %v3516 = vpop.f32.mrf.mxu0
      %v3517 = vadd.f32 %v3453, %v3516
      %v3518 = vpop.f32.mrf.mxu0
      %v3519 = vpop.f32.mrf.mxu0
      %v3520 = vpop.f32.mrf.mxu0
      %3521 = vdwg.mxu0
      %3522 = vmatprep.subr.bf16.mxu0 0
      %3523 = vmatpush1.bf16.msra.mxu0 %v2585
      %3524 = vmatprep.subr.bf16.mxu0 0
      %3525 = vmatpush1.bf16.msra.mxu0 %v2584
      %3526 = vmatprep.subr.bf16.mxu0 0
      %3527 = vmatpush1.bf16.msra.mxu0 %v2583
      %3528 = vmatprep.subr.bf16.mxu0 0
      %3529 = vmatpush1.bf16.msra.mxu0 %v2582
      %3530 = vmatprep.subr.bf16.mxu0 0
      %3531 = vmatpush1.bf16.msra.mxu0 %v2581
      %3532 = vmatprep.subr.bf16.mxu0 0
      %3533 = vmatpush1.bf16.msra.mxu0 %v2580
      %3534 = vmatprep.subr.bf16.mxu0 0
      %3535 = vmatpush1.bf16.msra.mxu0 %v2579
      %3536 = vmatprep.subr.bf16.mxu0 0
      %3537 = vmatpush1.bf16.msra.mxu0 %v2578
      %3538 = vmatprep.subr.bf16.mxu0 0
      %3539 = vmatpush2.bf16.msra.mxu0 %v2593
      %3540 = vmatprep.subr.bf16.mxu0 0
      %3541 = vmatpush2.bf16.msra.mxu0 %v2592
      %3542 = vmatprep.subr.bf16.mxu0 0
      %3543 = vmatpush2.bf16.msra.mxu0 %v2591
      %3544 = vmatprep.subr.bf16.mxu0 0
      %3545 = vmatpush2.bf16.msra.mxu0 %v2590
      %3546 = vmatprep.subr.bf16.mxu0 0
      %3547 = vmatpush2.bf16.msra.mxu0 %v2589
      %3548 = vmatprep.subr.bf16.mxu0 0
      %3549 = vmatpush2.bf16.msra.mxu0 %v2588
      %3550 = vmatprep.subr.bf16.mxu0 0
      %3551 = vmatpush2.bf16.msra.mxu0 %v2587
      %3552 = vmatprep.subr.bf16.mxu0 0
      %3553 = vmatpush2.bf16.msra.mxu0 %v2586
      %3554 = vmatprep.mubr.bf16.mxu0 %v1173
      %3555 = vmatmul.mubr.bf16.gmra.mxu0 %v1172
      %v3556 = vpop.f32.mrf.mxu0
      %v3557 = vadd.f32 %v3493, %v3556
      %v3558 = vpop.f32.mrf.mxu0
      %v3559 = vpop.f32.mrf.mxu0
      %v3560 = vadd.f32 %v3496, %v3559
      %v3561 = vpop.f32.mrf.mxu0
      %3562 = vmatprep.mubr.bf16.mxu0 %v1205
      %3563 = vmatmul.mubr.bf16.gmra.mxu0 %v1204
      %v3564 = vpop.f32.mrf.mxu0
      %v3565 = vadd.f32 %v3501, %v3564
      %v3566 = vpop.f32.mrf.mxu0
      %v3567 = vpop.f32.mrf.mxu0
      %v3568 = vadd.f32 %v3504, %v3567
      %v3569 = vpop.f32.mrf.mxu0
      %3570 = vmatprep.mubr.bf16.mxu0 %v1237
      %3571 = vmatmul.mubr.bf16.gmra.mxu0 %v1236
      %v3572 = vpop.f32.mrf.mxu0
      %v3573 = vadd.f32 %v3509, %v3572
      %v3574 = vpop.f32.mrf.mxu0
      %v3575 = vpop.f32.mrf.mxu0
      %v3576 = vadd.f32 %v3512, %v3575
      %v3577 = vpop.f32.mrf.mxu0
      %3578 = vmatprep.mubr.bf16.mxu0 %v1269
      %3579 = vmatmul.mubr.bf16.gmra.mxu0 %v1268
      %v3580 = vpop.f32.mrf.mxu0
      %v3581 = vadd.f32 %v3517, %v3580
      %v3582 = vpop.f32.mrf.mxu0
      %v3583 = vpop.f32.mrf.mxu0
      %v3584 = vpop.f32.mrf.mxu0
      %3585 = vdwg.mxu0
      %3586 = vmatprep.subr.bf16.mxu0 0
      %3587 = vmatpush1.bf16.msra.mxu0 %v2601
      %3588 = vmatprep.subr.bf16.mxu0 0
      %3589 = vmatpush1.bf16.msra.mxu0 %v2600
      %3590 = vmatprep.subr.bf16.mxu0 0
      %3591 = vmatpush1.bf16.msra.mxu0 %v2599
      %3592 = vmatprep.subr.bf16.mxu0 0
      %3593 = vmatpush1.bf16.msra.mxu0 %v2598
      %3594 = vmatprep.subr.bf16.mxu0 0
      %3595 = vmatpush1.bf16.msra.mxu0 %v2597
      %3596 = vmatprep.subr.bf16.mxu0 0
      %3597 = vmatpush1.bf16.msra.mxu0 %v2596
      %3598 = vmatprep.subr.bf16.mxu0 0
      %3599 = vmatpush1.bf16.msra.mxu0 %v2595
      %3600 = vmatprep.subr.bf16.mxu0 0
      %3601 = vmatpush1.bf16.msra.mxu0 %v2594
      %3602 = vmatprep.subr.bf16.mxu0 0
      %3603 = vmatpush2.bf16.msra.mxu0 %v2609
      %3604 = vmatprep.subr.bf16.mxu0 0
      %3605 = vmatpush2.bf16.msra.mxu0 %v2608
      %3606 = vmatprep.subr.bf16.mxu0 0
      %3607 = vmatpush2.bf16.msra.mxu0 %v2607
      %3608 = vmatprep.subr.bf16.mxu0 0
      %3609 = vmatpush2.bf16.msra.mxu0 %v2606
      %3610 = vmatprep.subr.bf16.mxu0 0
      %3611 = vmatpush2.bf16.msra.mxu0 %v2605
      %3612 = vmatprep.subr.bf16.mxu0 0
      %3613 = vmatpush2.bf16.msra.mxu0 %v2604
      %3614 = vmatprep.subr.bf16.mxu0 0
      %3615 = vmatpush2.bf16.msra.mxu0 %v2603
      %3616 = vmatprep.subr.bf16.mxu0 0
      %3617 = vmatpush2.bf16.msra.mxu0 %v2602
      %3618 = vmatprep.mubr.bf16.mxu0 %v1175
      %3619 = vmatmul.mubr.bf16.gmra.mxu0 %v1174
      %v3620 = vpop.f32.mrf.mxu0
      %v3621 = vadd.f32 %v3557, %v3620
      %v3622 = vpop.f32.mrf.mxu0
      %v3623 = vpop.f32.mrf.mxu0
      %v3624 = vadd.f32 %v3560, %v3623
      %v3625 = vpop.f32.mrf.mxu0
      %3626 = vmatprep.mubr.bf16.mxu0 %v1207
      %3627 = vmatmul.mubr.bf16.gmra.mxu0 %v1206
      %v3628 = vpop.f32.mrf.mxu0
      %v3629 = vadd.f32 %v3565, %v3628
      %v3630 = vpop.f32.mrf.mxu0
      %v3631 = vpop.f32.mrf.mxu0
      %v3632 = vadd.f32 %v3568, %v3631
      %v3633 = vpop.f32.mrf.mxu0
      %3634 = vmatprep.mubr.bf16.mxu0 %v1239
      %3635 = vmatmul.mubr.bf16.gmra.mxu0 %v1238
      %v3636 = vpop.f32.mrf.mxu0
      %v3637 = vadd.f32 %v3573, %v3636
      %v3638 = vpop.f32.mrf.mxu0
      %v3639 = vpop.f32.mrf.mxu0
      %v3640 = vadd.f32 %v3576, %v3639
      %v3641 = vpop.f32.mrf.mxu0
      %3642 = vmatprep.mubr.bf16.mxu0 %v1271
      %3643 = vmatmul.mubr.bf16.gmra.mxu0 %v1270
      %v3644 = vpop.f32.mrf.mxu0
      %v3645 = vadd.f32 %v3581, %v3644
      %v3646 = vpop.f32.mrf.mxu0
      %v3647 = vpop.f32.mrf.mxu0
      %v3648 = vpop.f32.mrf.mxu0
      %3649 = vdwg.mxu0
      %3650 = vmatprep.subr.bf16.mxu0 0
      %3651 = vmatpush1.bf16.msra.mxu0 %v2617
      %3652 = vmatprep.subr.bf16.mxu0 0
      %3653 = vmatpush1.bf16.msra.mxu0 %v2616
      %3654 = vmatprep.subr.bf16.mxu0 0
      %3655 = vmatpush1.bf16.msra.mxu0 %v2615
      %3656 = vmatprep.subr.bf16.mxu0 0
      %3657 = vmatpush1.bf16.msra.mxu0 %v2614
      %3658 = vmatprep.subr.bf16.mxu0 0
      %3659 = vmatpush1.bf16.msra.mxu0 %v2613
      %3660 = vmatprep.subr.bf16.mxu0 0
      %3661 = vmatpush1.bf16.msra.mxu0 %v2612
      %3662 = vmatprep.subr.bf16.mxu0 0
      %3663 = vmatpush1.bf16.msra.mxu0 %v2611
      %3664 = vmatprep.subr.bf16.mxu0 0
      %3665 = vmatpush1.bf16.msra.mxu0 %v2610
      %3666 = vmatprep.subr.bf16.mxu0 0
      %3667 = vmatpush2.bf16.msra.mxu0 %v2625
      %3668 = vmatprep.subr.bf16.mxu0 0
      %3669 = vmatpush2.bf16.msra.mxu0 %v2624
      %3670 = vmatprep.subr.bf16.mxu0 0
      %3671 = vmatpush2.bf16.msra.mxu0 %v2623
      %3672 = vmatprep.subr.bf16.mxu0 0
      %3673 = vmatpush2.bf16.msra.mxu0 %v2622
      %3674 = vmatprep.subr.bf16.mxu0 0
      %3675 = vmatpush2.bf16.msra.mxu0 %v2621
      %3676 = vmatprep.subr.bf16.mxu0 0
      %3677 = vmatpush2.bf16.msra.mxu0 %v2620
      %3678 = vmatprep.subr.bf16.mxu0 0
      %3679 = vmatpush2.bf16.msra.mxu0 %v2619
      %3680 = vmatprep.subr.bf16.mxu0 0
      %3681 = vmatpush2.bf16.msra.mxu0 %v2618
      %3682 = vmatprep.mubr.bf16.mxu0 %v1177
      %3683 = vmatmul.mubr.bf16.gmra.mxu0 %v1176
      %v3684 = vpop.f32.mrf.mxu0
      %v3685 = vadd.f32 %v3621, %v3684
      %v3686 = vpop.f32.mrf.mxu0
      %v3687 = vpop.f32.mrf.mxu0
      %v3688 = vadd.f32 %v3624, %v3687
      %v3689 = vpop.f32.mrf.mxu0
      %3690 = vmatprep.mubr.bf16.mxu0 %v1209
      %3691 = vmatmul.mubr.bf16.gmra.mxu0 %v1208
      %v3692 = vpop.f32.mrf.mxu0
      %v3693 = vadd.f32 %v3629, %v3692
      %v3694 = vpop.f32.mrf.mxu0
      %v3695 = vpop.f32.mrf.mxu0
      %v3696 = vadd.f32 %v3632, %v3695
      %v3697 = vpop.f32.mrf.mxu0
      %3698 = vmatprep.mubr.bf16.mxu0 %v1241
      %3699 = vmatmul.mubr.bf16.gmra.mxu0 %v1240
      %v3700 = vpop.f32.mrf.mxu0
      %v3701 = vadd.f32 %v3637, %v3700
      %v3702 = vpop.f32.mrf.mxu0
      %v3703 = vpop.f32.mrf.mxu0
      %v3704 = vadd.f32 %v3640, %v3703
      %v3705 = vpop.f32.mrf.mxu0
      %3706 = vmatprep.mubr.bf16.mxu0 %v1273
      %3707 = vmatmul.mubr.bf16.gmra.mxu0 %v1272
      %v3708 = vpop.f32.mrf.mxu0
      %v3709 = vadd.f32 %v3645, %v3708
      %v3710 = vpop.f32.mrf.mxu0
      %v3711 = vpop.f32.mrf.mxu0
      %v3712 = vpop.f32.mrf.mxu0
      %3713 = vdwg.mxu0
      %3714 = vmatprep.subr.bf16.mxu0 0
      %3715 = vmatpush1.bf16.msra.mxu0 %v2633
      %3716 = vmatprep.subr.bf16.mxu0 0
      %3717 = vmatpush1.bf16.msra.mxu0 %v2632
      %3718 = vmatprep.subr.bf16.mxu0 0
      %3719 = vmatpush1.bf16.msra.mxu0 %v2631
      %3720 = vmatprep.subr.bf16.mxu0 0
      %3721 = vmatpush1.bf16.msra.mxu0 %v2630
      %3722 = vmatprep.subr.bf16.mxu0 0
      %3723 = vmatpush1.bf16.msra.mxu0 %v2629
      %3724 = vmatprep.subr.bf16.mxu0 0
      %3725 = vmatpush1.bf16.msra.mxu0 %v2628
      %3726 = vmatprep.subr.bf16.mxu0 0
      %3727 = vmatpush1.bf16.msra.mxu0 %v2627
      %3728 = vmatprep.subr.bf16.mxu0 0
      %3729 = vmatpush1.bf16.msra.mxu0 %v2626
      %3730 = vmatprep.subr.bf16.mxu0 0
      %3731 = vmatpush2.bf16.msra.mxu0 %v2641
      %3732 = vmatprep.subr.bf16.mxu0 0
      %3733 = vmatpush2.bf16.msra.mxu0 %v2640
      %3734 = vmatprep.subr.bf16.mxu0 0
      %3735 = vmatpush2.bf16.msra.mxu0 %v2639
      %3736 = vmatprep.subr.bf16.mxu0 0
      %3737 = vmatpush2.bf16.msra.mxu0 %v2638
      %3738 = vmatprep.subr.bf16.mxu0 0
      %3739 = vmatpush2.bf16.msra.mxu0 %v2637
      %3740 = vmatprep.subr.bf16.mxu0 0
      %3741 = vmatpush2.bf16.msra.mxu0 %v2636
      %3742 = vmatprep.subr.bf16.mxu0 0
      %3743 = vmatpush2.bf16.msra.mxu0 %v2635
      %3744 = vmatprep.subr.bf16.mxu0 0
      %3745 = vmatpush2.bf16.msra.mxu0 %v2634
      %3746 = vmatprep.mubr.bf16.mxu0 %v1179
      %3747 = vmatmul.mubr.bf16.gmra.mxu0 %v1178
      %v3748 = vpop.f32.mrf.mxu0
      %v3749 = vadd.f32 %v3685, %v3748
      %v3750 = vpop.f32.mrf.mxu0
      %v3751 = vpop.f32.mrf.mxu0
      %v3752 = vadd.f32 %v3688, %v3751
      %v3753 = vpop.f32.mrf.mxu0
      %3754 = vmatprep.mubr.bf16.mxu0 %v1211
      %3755 = vmatmul.mubr.bf16.gmra.mxu0 %v1210
      %v3756 = vpop.f32.mrf.mxu0
      %v3757 = vadd.f32 %v3693, %v3756
      %v3758 = vpop.f32.mrf.mxu0
      %v3759 = vpop.f32.mrf.mxu0
      %v3760 = vadd.f32 %v3696, %v3759
      %v3761 = vpop.f32.mrf.mxu0
      %3762 = vmatprep.mubr.bf16.mxu0 %v1243
      %3763 = vmatmul.mubr.bf16.gmra.mxu0 %v1242
      %v3764 = vpop.f32.mrf.mxu0
      %v3765 = vadd.f32 %v3701, %v3764
      %v3766 = vpop.f32.mrf.mxu0
      %v3767 = vpop.f32.mrf.mxu0
      %v3768 = vadd.f32 %v3704, %v3767
      %v3769 = vpop.f32.mrf.mxu0
      %3770 = vmatprep.mubr.bf16.mxu0 %v1275
      %3771 = vmatmul.mubr.bf16.gmra.mxu0 %v1274
      %v3772 = vpop.f32.mrf.mxu0
      %v3773 = vadd.f32 %v3709, %v3772
      %v3774 = vpop.f32.mrf.mxu0
      %v3775 = vpop.f32.mrf.mxu0
      %v3776 = vpop.f32.mrf.mxu0
      %3777 = vdwg.mxu0
      %3778 = vmatprep.subr.bf16.mxu0 0
      %3779 = vmatpush1.bf16.msra.mxu0 %v2649
      %3780 = vmatprep.subr.bf16.mxu0 0
      %3781 = vmatpush1.bf16.msra.mxu0 %v2648
      %3782 = vmatprep.subr.bf16.mxu0 0
      %3783 = vmatpush1.bf16.msra.mxu0 %v2647
      %3784 = vmatprep.subr.bf16.mxu0 0
      %3785 = vmatpush1.bf16.msra.mxu0 %v2646
      %3786 = vmatprep.subr.bf16.mxu0 0
      %3787 = vmatpush1.bf16.msra.mxu0 %v2645
      %3788 = vmatprep.subr.bf16.mxu0 0
      %3789 = vmatpush1.bf16.msra.mxu0 %v2644
      %3790 = vmatprep.subr.bf16.mxu0 0
      %3791 = vmatpush1.bf16.msra.mxu0 %v2643
      %3792 = vmatprep.subr.bf16.mxu0 0
      %3793 = vmatpush1.bf16.msra.mxu0 %v2642
      %3794 = vmatprep.subr.bf16.mxu0 0
      %3795 = vmatpush2.bf16.msra.mxu0 %v2657
      %3796 = vmatprep.subr.bf16.mxu0 0
      %3797 = vmatpush2.bf16.msra.mxu0 %v2656
      %3798 = vmatprep.subr.bf16.mxu0 0
      %3799 = vmatpush2.bf16.msra.mxu0 %v2655
      %3800 = vmatprep.subr.bf16.mxu0 0
      %3801 = vmatpush2.bf16.msra.mxu0 %v2654
      %3802 = vmatprep.subr.bf16.mxu0 0
      %3803 = vmatpush2.bf16.msra.mxu0 %v2653
      %3804 = vmatprep.subr.bf16.mxu0 0
      %3805 = vmatpush2.bf16.msra.mxu0 %v2652
      %3806 = vmatprep.subr.bf16.mxu0 0
      %3807 = vmatpush2.bf16.msra.mxu0 %v2651
      %3808 = vmatprep.subr.bf16.mxu0 0
      %3809 = vmatpush2.bf16.msra.mxu0 %v2650
      %3810 = vmatprep.mubr.bf16.mxu0 %v1181
      %3811 = vmatmul.mubr.bf16.gmra.mxu0 %v1180
      %v3812 = vpop.f32.mrf.mxu0
      %v3813 = vadd.f32 %v3749, %v3812
      %v3814 = vpop.f32.mrf.mxu0
      %v3815 = vpop.f32.mrf.mxu0
      %v3816 = vadd.f32 %v3752, %v3815
      %v3817 = vpop.f32.mrf.mxu0
      %3818 = vmatprep.mubr.bf16.mxu0 %v1213
      %3819 = vmatmul.mubr.bf16.gmra.mxu0 %v1212
      %v3820 = vpop.f32.mrf.mxu0
      %v3821 = vadd.f32 %v3757, %v3820
      %v3822 = vpop.f32.mrf.mxu0
      %v3823 = vpop.f32.mrf.mxu0
      %v3824 = vadd.f32 %v3760, %v3823
      %v3825 = vpop.f32.mrf.mxu0
      %3826 = vmatprep.mubr.bf16.mxu0 %v1245
      %3827 = vmatmul.mubr.bf16.gmra.mxu0 %v1244
      %v3828 = vpop.f32.mrf.mxu0
      %v3829 = vadd.f32 %v3765, %v3828
      %v3830 = vpop.f32.mrf.mxu0
      %v3831 = vpop.f32.mrf.mxu0
      %v3832 = vadd.f32 %v3768, %v3831
      %v3833 = vpop.f32.mrf.mxu0
      %3834 = vmatprep.mubr.bf16.mxu0 %v1277
      %3835 = vmatmul.mubr.bf16.gmra.mxu0 %v1276
      %v3836 = vpop.f32.mrf.mxu0
      %v3837 = vadd.f32 %v3773, %v3836
      %v3838 = vpop.f32.mrf.mxu0
      %v3839 = vpop.f32.mrf.mxu0
      %v3840 = vpop.f32.mrf.mxu0
      %3841 = vdwg.mxu0
      %3842 = vmatprep.subr.bf16.mxu0 0
      %3843 = vmatpush1.bf16.msra.mxu0 %v2665
      %3844 = vmatprep.subr.bf16.mxu0 0
      %3845 = vmatpush1.bf16.msra.mxu0 %v2664
      %3846 = vmatprep.subr.bf16.mxu0 0
      %3847 = vmatpush1.bf16.msra.mxu0 %v2663
      %3848 = vmatprep.subr.bf16.mxu0 0
      %3849 = vmatpush1.bf16.msra.mxu0 %v2662
      %3850 = vmatprep.subr.bf16.mxu0 0
      %3851 = vmatpush1.bf16.msra.mxu0 %v2661
      %3852 = vmatprep.subr.bf16.mxu0 0
      %3853 = vmatpush1.bf16.msra.mxu0 %v2660
      %3854 = vmatprep.subr.bf16.mxu0 0
      %3855 = vmatpush1.bf16.msra.mxu0 %v2659
      %3856 = vmatprep.subr.bf16.mxu0 0
      %3857 = vmatpush1.bf16.msra.mxu0 %v2658
      %3858 = vmatprep.subr.bf16.mxu0 0
      %3859 = vmatpush2.bf16.msra.mxu0 %v2673
      %3860 = vmatprep.subr.bf16.mxu0 0
      %3861 = vmatpush2.bf16.msra.mxu0 %v2672
      %3862 = vmatprep.subr.bf16.mxu0 0
      %3863 = vmatpush2.bf16.msra.mxu0 %v2671
      %3864 = vmatprep.subr.bf16.mxu0 0
      %3865 = vmatpush2.bf16.msra.mxu0 %v2670
      %3866 = vmatprep.subr.bf16.mxu0 0
      %3867 = vmatpush2.bf16.msra.mxu0 %v2669
      %3868 = vmatprep.subr.bf16.mxu0 0
      %3869 = vmatpush2.bf16.msra.mxu0 %v2668
      %3870 = vmatprep.subr.bf16.mxu0 0
      %3871 = vmatpush2.bf16.msra.mxu0 %v2667
      %3872 = vmatprep.subr.bf16.mxu0 0
      %3873 = vmatpush2.bf16.msra.mxu0 %v2666
      %3874 = vmatprep.mubr.bf16.mxu0 %v1183
      %3875 = vmatmul.mubr.bf16.gmra.mxu0 %v1182
      %v3876 = vpop.f32.mrf.mxu0
      %v3877 = vadd.f32 %v3813, %v3876
      %v3878 = vpop.f32.mrf.mxu0
      %v3879 = vpop.f32.mrf.mxu0
      %v3880 = vadd.f32 %v3816, %v3879
      %v3881 = vpop.f32.mrf.mxu0
      %3882 = vmatprep.mubr.bf16.mxu0 %v1215
      %3883 = vmatmul.mubr.bf16.gmra.mxu0 %v1214
      %v3884 = vpop.f32.mrf.mxu0
      %v3885 = vadd.f32 %v3821, %v3884
      %v3886 = vpop.f32.mrf.mxu0
      %v3887 = vpop.f32.mrf.mxu0
      %v3888 = vadd.f32 %v3824, %v3887
      %v3889 = vpop.f32.mrf.mxu0
      %3890 = vmatprep.mubr.bf16.mxu0 %v1247
      %3891 = vmatmul.mubr.bf16.gmra.mxu0 %v1246
      %v3892 = vpop.f32.mrf.mxu0
      %v3893 = vadd.f32 %v3829, %v3892
      %v3894 = vpop.f32.mrf.mxu0
      %v3895 = vpop.f32.mrf.mxu0
      %v3896 = vadd.f32 %v3832, %v3895
      %v3897 = vpop.f32.mrf.mxu0
      %3898 = vmatprep.mubr.bf16.mxu0 %v1279
      %3899 = vmatmul.mubr.bf16.gmra.mxu0 %v1278
      %v3900 = vpop.f32.mrf.mxu0
      %v3901 = vadd.f32 %v3837, %v3900
      %v3902 = vpop.f32.mrf.mxu0
      %v3903 = vpop.f32.mrf.mxu0
      %v3904 = vpop.f32.mrf.mxu0
      %3905 = vdwg.mxu0
      %3906 = vmatprep.subr.bf16.mxu0 0
      %3907 = vmatpush1.bf16.msra.mxu0 %v2681
      %3908 = vmatprep.subr.bf16.mxu0 0
      %3909 = vmatpush1.bf16.msra.mxu0 %v2680
      %3910 = vmatprep.subr.bf16.mxu0 0
      %3911 = vmatpush1.bf16.msra.mxu0 %v2679
      %3912 = vmatprep.subr.bf16.mxu0 0
      %3913 = vmatpush1.bf16.msra.mxu0 %v2678
      %3914 = vmatprep.subr.bf16.mxu0 0
      %3915 = vmatpush1.bf16.msra.mxu0 %v2677
      %3916 = vmatprep.subr.bf16.mxu0 0
      %3917 = vmatpush1.bf16.msra.mxu0 %v2676
      %3918 = vmatprep.subr.bf16.mxu0 0
      %3919 = vmatpush1.bf16.msra.mxu0 %v2675
      %3920 = vmatprep.subr.bf16.mxu0 0
      %3921 = vmatpush1.bf16.msra.mxu0 %v2674
      %3922 = vmatprep.subr.bf16.mxu0 0
      %3923 = vmatpush2.bf16.msra.mxu0 %v2689
      %3924 = vmatprep.subr.bf16.mxu0 0
      %3925 = vmatpush2.bf16.msra.mxu0 %v2688
      %3926 = vmatprep.subr.bf16.mxu0 0
      %3927 = vmatpush2.bf16.msra.mxu0 %v2687
      %3928 = vmatprep.subr.bf16.mxu0 0
      %3929 = vmatpush2.bf16.msra.mxu0 %v2686
      %3930 = vmatprep.subr.bf16.mxu0 0
      %3931 = vmatpush2.bf16.msra.mxu0 %v2685
      %3932 = vmatprep.subr.bf16.mxu0 0
      %3933 = vmatpush2.bf16.msra.mxu0 %v2684
      %3934 = vmatprep.subr.bf16.mxu0 0
      %3935 = vmatpush2.bf16.msra.mxu0 %v2683
      %3936 = vmatprep.subr.bf16.mxu0 0
      %3937 = vmatpush2.bf16.msra.mxu0 %v2682
      %3938 = vmatprep.mubr.bf16.mxu0 %v1185
      %3939 = vmatmul.mubr.bf16.gmra.mxu0 %v1184
      %v3940 = vpop.f32.mrf.mxu0
      %v3941 = vadd.f32 %v3877, %v3940
      %v3942 = vpop.f32.mrf.mxu0
      %v3943 = vpop.f32.mrf.mxu0
      %v3944 = vadd.f32 %v3880, %v3943
      %v3945 = vpop.f32.mrf.mxu0
      %3946 = vmatprep.mubr.bf16.mxu0 %v1217
      %3947 = vmatmul.mubr.bf16.gmra.mxu0 %v1216
      %v3948 = vpop.f32.mrf.mxu0
      %v3949 = vadd.f32 %v3885, %v3948
      %v3950 = vpop.f32.mrf.mxu0
      %v3951 = vpop.f32.mrf.mxu0
      %v3952 = vadd.f32 %v3888, %v3951
      %v3953 = vpop.f32.mrf.mxu0
      %3954 = vmatprep.mubr.bf16.mxu0 %v1249
      %3955 = vmatmul.mubr.bf16.gmra.mxu0 %v1248
      %v3956 = vpop.f32.mrf.mxu0
      %v3957 = vadd.f32 %v3893, %v3956
      %v3958 = vpop.f32.mrf.mxu0
      %v3959 = vpop.f32.mrf.mxu0
      %v3960 = vadd.f32 %v3896, %v3959
      %v3961 = vpop.f32.mrf.mxu0
      %3962 = vmatprep.mubr.bf16.mxu0 %v1281
      %3963 = vmatmul.mubr.bf16.gmra.mxu0 %v1280
      %v3964 = vpop.f32.mrf.mxu0
      %v3965 = vadd.f32 %v3901, %v3964
      %v3966 = vpop.f32.mrf.mxu0
      %v3967 = vpop.f32.mrf.mxu0
      %v3968 = vpop.f32.mrf.mxu0
      %3969 = vdwg.mxu0
      %s3970 = smul.u32 %s15, 56
      %s3971 = scalar_lea.vmem [#allocation2], %s3970
      %3972 = vst [vmem:[%s3971] sm:$0xff] %v3941
      %3973 = vst [vmem:[%s3971 + $0x8] sm:$0xff] %v3944
      %3974 = vst [vmem:[%s3971 + $0x10] sm:$0xff] %v3949
      %3975 = vst [vmem:[%s3971 + $0x18] sm:$0xff] %v3952
      %3976 = vst [vmem:[%s3971 + $0x20] sm:$0xff] %v3957
      %3977 = vst [vmem:[%s3971 + $0x28] sm:$0xff] %v3960
      %3978 = vst [vmem:[%s3971 + $0x30] sm:$0xff] %v3965
      %v3979 = vld [vmem:[#allocation3] sm:$0x1]
      %v3980 = vadd.f32 %v3941, %v3944
      %v3981 = vadd.f32 %v3980, %v3949
      %v3982 = vadd.f32 %v3981, %v3952
      %v3983 = vadd.f32 %v3982, %v3957
      %v3984 = vadd.f32 %v3983, %v3960
      %v3985 = vadd.f32 %v3984, %v3965
      %v3986 = vrot.slane %v3985, 4
      %v3987 = vadd.f32 %v3985, %v3986
      %v3988 = vrot.slane %v3987, 2
      %v3989 = vadd.f32 %v3987, %v3988
      %v3990 = vrot.slane %v3989, 1
      %v3991 = vadd.f32 %v3989, %v3990
      %v3992 = vadd.f32 %v3979, %v3991
      %3993 = vst [vmem:[#allocation3] sm:$0x1] %v3992
      %v3994 = vld [vmem:[#allocation3 + $0x1] sm:$0x1]
      %v3995 = vmul.f32 %v3941, %v3941
      %v3996 = vmul.f32 %v3944, %v3944
      %v3997 = vmul.f32 %v3949, %v3949
      %v3998 = vmul.f32 %v3952, %v3952
      %v3999 = vmul.f32 %v3957, %v3957
      %v4000 = vmul.f32 %v3960, %v3960
      %v4001 = vmul.f32 %v3965, %v3965
      %v4002 = vadd.f32 %v3995, %v3996
      %v4003 = vadd.f32 %v4002, %v3997
      %v4004 = vadd.f32 %v4003, %v3998
      %v4005 = vadd.f32 %v4004, %v3999
      %v4006 = vadd.f32 %v4005, %v4000
      %v4007 = vadd.f32 %v4006, %v4001
      %v4008 = vrot.slane %v4007, 4
      %v4009 = vadd.f32 %v4007, %v4008
      %v4010 = vrot.slane %v4009, 2
      %v4011 = vadd.f32 %v4009, %v4010
      %v4012 = vrot.slane %v4011, 1
      %v4013 = vadd.f32 %v4011, %v4012
      %v4014 = vadd.f32 %v3994, %v4013
      %4015 = vst [vmem:[#allocation3 + $0x1] sm:$0x1] %v4014
      %p4016 = scmp.eq.s32.totalorder %s15, 6
      // Predicated region
      $region41: #{generator_forward.5} parent=35 // pred_check
        %p4017 = pneg %p4016
      $region42: #{generator_forward.5} parent=35 // pred_check_branch
        %4019 = sbr.rel (%p4017) target = $region44
      $region43: #{generator_forward.5} parent=35 // pred_region
        %v4020 = vld [vmem:[#allocation3] sm:$0x1]
        %v4021 = vrcp.pop 392.0
        %v4022 = vmul.f32 %v4020, %v4021
        %v4023 = vld [vmem:[#allocation3 + $0x1] sm:$0x1]
        %v4024 = vmul.f32 %v4023, %v4021
        %v4025 = vmul.f32 %v4022, %v4022
        %v4026 = vsub.f32 %v4024, %v4025
        %v4027 = vmax.f32 %v4026, 0.0
        %v4028 = vld [vmem:[%s2] sm:$0x1]
        %v4029 = vadd.f32 %v4027, 1e-05
        %v4030 = vrsqrt.pop %v4029
        %v4031 = vmul.f32 %v4028, %v4030
        %v4032 = vld [vmem:[%s3] sm:$0x1]
        %v4033 = vmul.f32 %v4022, %v4031
        %v4034 = vsub.f32 %v4032, %v4033
        %v4035 = vld [vmem:[#allocation2] sm:$0xff]
        %v4036 = vld [vmem:[#allocation2 + $0x8] sm:$0xff]
        %v4037 = vld [vmem:[#allocation2 + $0x10] sm:$0xff]
        %v4038 = vld [vmem:[#allocation2 + $0x18] sm:$0xff]
        %v4039 = vld [vmem:[#allocation2 + $0x20] sm:$0xff]
        %v4040 = vld [vmem:[#allocation2 + $0x28] sm:$0xff]
        %v4041 = vld [vmem:[#allocation2 + $0x30] sm:$0xff]
        %v4042 = vld [vmem:[#allocation2 + $0x38] sm:$0xff]
        %v4043 = vld [vmem:[#allocation2 + $0x40] sm:$0xff]
        %v4044 = vld [vmem:[#allocation2 + $0x48] sm:$0xff]
        %v4045 = vld [vmem:[#allocation2 + $0x50] sm:$0xff]
        %v4046 = vld [vmem:[#allocation2 + $0x58] sm:$0xff]
        %v4047 = vld [vmem:[#allocation2 + $0x60] sm:$0xff]
        %v4048 = vld [vmem:[#allocation2 + $0x68] sm:$0xff]
        %v4049 = vld [vmem:[#allocation2 + $0x70] sm:$0xff]
        %v4050 = vld [vmem:[#allocation2 + $0x78] sm:$0xff]
        %v4051 = vld [vmem:[#allocation2 + $0x80] sm:$0xff]
        %v4052 = vld [vmem:[#allocation2 + $0x88] sm:$0xff]
        %v4053 = vld [vmem:[#allocation2 + $0x90] sm:$0xff]
        %v4054 = vld [vmem:[#allocation2 + $0x98] sm:$0xff]
        %v4055 = vld [vmem:[#allocation2 + $0xa0] sm:$0xff]
        %v4056 = vld [vmem:[#allocation2 + $0xa8] sm:$0xff]
        %v4057 = vld [vmem:[#allocation2 + $0xb0] sm:$0xff]
        %v4058 = vld [vmem:[#allocation2 + $0xb8] sm:$0xff]
        %v4059 = vld [vmem:[#allocation2 + $0xc0] sm:$0xff]
        %v4060 = vld [vmem:[#allocation2 + $0xc8] sm:$0xff]
        %v4061 = vld [vmem:[#allocation2 + $0xd0] sm:$0xff]
        %v4062 = vld [vmem:[#allocation2 + $0xd8] sm:$0xff]
        %v4063 = vld [vmem:[#allocation2 + $0xe0] sm:$0xff]
        %v4064 = vld [vmem:[#allocation2 + $0xe8] sm:$0xff]
        %v4065 = vld [vmem:[#allocation2 + $0xf0] sm:$0xff]
        %v4066 = vld [vmem:[#allocation2 + $0xf8] sm:$0xff]
        %v4067 = vld [vmem:[#allocation2 + $0x100] sm:$0xff]
        %v4068 = vld [vmem:[#allocation2 + $0x108] sm:$0xff]
        %v4069 = vld [vmem:[#allocation2 + $0x110] sm:$0xff]
        %v4070 = vld [vmem:[#allocation2 + $0x118] sm:$0xff]
        %v4071 = vld [vmem:[#allocation2 + $0x120] sm:$0xff]
        %v4072 = vld [vmem:[#allocation2 + $0x128] sm:$0xff]
        %v4073 = vld [vmem:[#allocation2 + $0x130] sm:$0xff]
        %v4074 = vld [vmem:[#allocation2 + $0x138] sm:$0xff]
        %v4075 = vld [vmem:[#allocation2 + $0x140] sm:$0xff]
        %v4076 = vld [vmem:[#allocation2 + $0x148] sm:$0xff]
        %v4077 = vld [vmem:[#allocation2 + $0x150] sm:$0xff]
        %v4078 = vld [vmem:[#allocation2 + $0x158] sm:$0xff]
        %v4079 = vld [vmem:[#allocation2 + $0x160] sm:$0xff]
        %v4080 = vld [vmem:[#allocation2 + $0x168] sm:$0xff]
        %v4081 = vld [vmem:[#allocation2 + $0x170] sm:$0xff]
        %v4082 = vld [vmem:[#allocation2 + $0x178] sm:$0xff]
        %v4083 = vld [vmem:[#allocation2 + $0x180] sm:$0xff]
        %v4085 = vlaneseq
        %v4086 = vshrl.u32 %v4085, 7
        %v4087 = vsub.s32 0, %v4086
        %v4088 = vrot.slane %v4031, %v4087
        %v4090 = vmul.f32 %v4035, %v4088
        %v4091 = vmul.f32 %v4036, %v4088
        %v4092 = vmul.f32 %v4037, %v4088
        %v4093 = vmul.f32 %v4038, %v4088
        %v4094 = vmul.f32 %v4039, %v4088
        %v4095 = vmul.f32 %v4040, %v4088
        %v4096 = vmul.f32 %v4041, %v4088
        %v4097 = vmul.f32 %v4042, %v4088
        %v4098 = vmul.f32 %v4043, %v4088
        %v4099 = vmul.f32 %v4044, %v4088
        %v4100 = vmul.f32 %v4045, %v4088
        %v4101 = vmul.f32 %v4046, %v4088
        %v4102 = vmul.f32 %v4047, %v4088
        %v4103 = vmul.f32 %v4048, %v4088
        %v4104 = vmul.f32 %v4049, %v4088
        %v4105 = vmul.f32 %v4050, %v4088
        %v4106 = vmul.f32 %v4051, %v4088
        %v4107 = vmul.f32 %v4052, %v4088
        %v4108 = vmul.f32 %v4053, %v4088
        %v4109 = vmul.f32 %v4054, %v4088
        %v4110 = vmul.f32 %v4055, %v4088
        %v4111 = vmul.f32 %v4056, %v4088
        %v4112 = vmul.f32 %v4057, %v4088
        %v4113 = vmul.f32 %v4058, %v4088
        %v4114 = vmul.f32 %v4059, %v4088
        %v4115 = vmul.f32 %v4060, %v4088
        %v4116 = vmul.f32 %v4061, %v4088
        %v4117 = vmul.f32 %v4062, %v4088
        %v4118 = vmul.f32 %v4063, %v4088
        %v4119 = vmul.f32 %v4064, %v4088
        %v4120 = vmul.f32 %v4065, %v4088
        %v4121 = vmul.f32 %v4066, %v4088
        %v4122 = vmul.f32 %v4067, %v4088
        %v4123 = vmul.f32 %v4068, %v4088
        %v4124 = vmul.f32 %v4069, %v4088
        %v4125 = vmul.f32 %v4070, %v4088
        %v4126 = vmul.f32 %v4071, %v4088
        %v4127 = vmul.f32 %v4072, %v4088
        %v4128 = vmul.f32 %v4073, %v4088
        %v4129 = vmul.f32 %v4074, %v4088
        %v4130 = vmul.f32 %v4075, %v4088
        %v4131 = vmul.f32 %v4076, %v4088
        %v4132 = vmul.f32 %v4077, %v4088
        %v4133 = vmul.f32 %v4078, %v4088
        %v4134 = vmul.f32 %v4079, %v4088
        %v4135 = vmul.f32 %v4080, %v4088
        %v4136 = vmul.f32 %v4081, %v4088
        %v4137 = vmul.f32 %v4082, %v4088
        %v4138 = vmul.f32 %v4083, %v4088
        %v4140 = vlaneseq
        %v4141 = vshrl.u32 %v4140, 7
        %v4142 = vsub.s32 0, %v4141
        %v4143 = vrot.slane %v4034, %v4142
        %v4145 = vadd.f32 %v4090, %v4143
        %v4146 = vadd.f32 %v4091, %v4143
        %v4147 = vadd.f32 %v4092, %v4143
        %v4148 = vadd.f32 %v4093, %v4143
        %v4149 = vadd.f32 %v4094, %v4143
        %v4150 = vadd.f32 %v4095, %v4143
        %v4151 = vadd.f32 %v4096, %v4143
        %v4152 = vadd.f32 %v4097, %v4143
        %v4153 = vadd.f32 %v4098, %v4143
        %v4154 = vadd.f32 %v4099, %v4143
        %v4155 = vadd.f32 %v4100, %v4143
        %v4156 = vadd.f32 %v4101, %v4143
        %v4157 = vadd.f32 %v4102, %v4143
        %v4158 = vadd.f32 %v4103, %v4143
        %v4159 = vadd.f32 %v4104, %v4143
        %v4160 = vadd.f32 %v4105, %v4143
        %v4161 = vadd.f32 %v4106, %v4143
        %v4162 = vadd.f32 %v4107, %v4143
        %v4163 = vadd.f32 %v4108, %v4143
        %v4164 = vadd.f32 %v4109, %v4143
        %v4165 = vadd.f32 %v4110, %v4143
        %v4166 = vadd.f32 %v4111, %v4143
        %v4167 = vadd.f32 %v4112, %v4143
        %v4168 = vadd.f32 %v4113, %v4143
        %v4169 = vadd.f32 %v4114, %v4143
        %v4170 = vadd.f32 %v4115, %v4143
        %v4171 = vadd.f32 %v4116, %v4143
        %v4172 = vadd.f32 %v4117, %v4143
        %v4173 = vadd.f32 %v4118, %v4143
        %v4174 = vadd.f32 %v4119, %v4143
        %v4175 = vadd.f32 %v4120, %v4143
        %v4176 = vadd.f32 %v4121, %v4143
        %v4177 = vadd.f32 %v4122, %v4143
        %v4178 = vadd.f32 %v4123, %v4143
        %v4179 = vadd.f32 %v4124, %v4143
        %v4180 = vadd.f32 %v4125, %v4143
        %v4181 = vadd.f32 %v4126, %v4143
        %v4182 = vadd.f32 %v4127, %v4143
        %v4183 = vadd.f32 %v4128, %v4143
        %v4184 = vadd.f32 %v4129, %v4143
        %v4185 = vadd.f32 %v4130, %v4143
        %v4186 = vadd.f32 %v4131, %v4143
        %v4187 = vadd.f32 %v4132, %v4143
        %v4188 = vadd.f32 %v4133, %v4143
        %v4189 = vadd.f32 %v4134, %v4143
        %v4190 = vadd.f32 %v4135, %v4143
        %v4191 = vadd.f32 %v4136, %v4143
        %v4192 = vadd.f32 %v4137, %v4143
        %v4193 = vadd.f32 %v4138, %v4143
        %v4194 = vmax.f32 %v4145, 0.0
        %v4195 = vmax.f32 %v4146, 0.0
        %v4196 = vmax.f32 %v4147, 0.0
        %v4197 = vmax.f32 %v4148, 0.0
        %v4198 = vmax.f32 %v4149, 0.0
        %v4199 = vmax.f32 %v4150, 0.0
        %v4200 = vmax.f32 %v4151, 0.0
        %v4201 = vmax.f32 %v4152, 0.0
        %v4202 = vmax.f32 %v4153, 0.0
        %v4203 = vmax.f32 %v4154, 0.0
        %v4204 = vmax.f32 %v4155, 0.0
        %v4205 = vmax.f32 %v4156, 0.0
        %v4206 = vmax.f32 %v4157, 0.0
        %v4207 = vmax.f32 %v4158, 0.0
        %v4208 = vmax.f32 %v4159, 0.0
        %v4209 = vmax.f32 %v4160, 0.0
        %v4210 = vmax.f32 %v4161, 0.0
        %v4211 = vmax.f32 %v4162, 0.0
        %v4212 = vmax.f32 %v4163, 0.0
        %v4213 = vmax.f32 %v4164, 0.0
        %v4214 = vmax.f32 %v4165, 0.0
        %v4215 = vmax.f32 %v4166, 0.0
        %v4216 = vmax.f32 %v4167, 0.0
        %v4217 = vmax.f32 %v4168, 0.0
        %v4218 = vmax.f32 %v4169, 0.0
        %v4219 = vmax.f32 %v4170, 0.0
        %v4220 = vmax.f32 %v4171, 0.0
        %v4221 = vmax.f32 %v4172, 0.0
        %v4222 = vmax.f32 %v4173, 0.0
        %v4223 = vmax.f32 %v4174, 0.0
        %v4224 = vmax.f32 %v4175, 0.0
        %v4225 = vmax.f32 %v4176, 0.0
        %v4226 = vmax.f32 %v4177, 0.0
        %v4227 = vmax.f32 %v4178, 0.0
        %v4228 = vmax.f32 %v4179, 0.0
        %v4229 = vmax.f32 %v4180, 0.0
        %v4230 = vmax.f32 %v4181, 0.0
        %v4231 = vmax.f32 %v4182, 0.0
        %v4232 = vmax.f32 %v4183, 0.0
        %v4233 = vmax.f32 %v4184, 0.0
        %v4234 = vmax.f32 %v4185, 0.0
        %v4235 = vmax.f32 %v4186, 0.0
        %v4236 = vmax.f32 %v4187, 0.0
        %v4237 = vmax.f32 %v4188, 0.0
        %v4238 = vmax.f32 %v4189, 0.0
        %v4239 = vmax.f32 %v4190, 0.0
        %v4240 = vmax.f32 %v4191, 0.0
        %v4241 = vmax.f32 %v4192, 0.0
        %v4242 = vmax.f32 %v4193, 0.0
        %v4243 = vpack.c.bf16 %v4195, %v4194
        %v4244 = vpack.c.bf16 %v4197, %v4196
        %v4245 = vpack.c.bf16 %v4199, %v4198
        %v4246 = vpack.c.bf16 %v4201, %v4200
        %v4247 = vpack.c.bf16 %v4203, %v4202
        %v4248 = vpack.c.bf16 %v4205, %v4204
        %v4249 = vpack.c.bf16 %v4207, %v4206
        %v4250 = vpack.c.bf16 %v4209, %v4208
        %v4251 = vpack.c.bf16 %v4211, %v4210
        %v4252 = vpack.c.bf16 %v4213, %v4212
        %v4253 = vpack.c.bf16 %v4215, %v4214
        %v4254 = vpack.c.bf16 %v4217, %v4216
        %v4255 = vpack.c.bf16 %v4219, %v4218
        %v4256 = vpack.c.bf16 %v4221, %v4220
        %v4257 = vpack.c.bf16 %v4223, %v4222
        %v4258 = vpack.c.bf16 %v4225, %v4224
        %v4259 = vpack.c.bf16 %v4227, %v4226
        %v4260 = vpack.c.bf16 %v4229, %v4228
        %v4261 = vpack.c.bf16 %v4231, %v4230
        %v4262 = vpack.c.bf16 %v4233, %v4232
        %v4263 = vpack.c.bf16 %v4235, %v4234
        %v4264 = vpack.c.bf16 %v4237, %v4236
        %v4265 = vpack.c.bf16 %v4239, %v4238
        %v4266 = vpack.c.bf16 %v4241, %v4240
        %v4267 = vpack.c.bf16 %v4242, %v4242
        %v4293 = vunpack.c.l.b16 %v4243
        %v4294 = vunpack.c.h.b16 %v4243
        %v4295 = vunpack.c.l.b16 %v4244
        %v4296 = vunpack.c.h.b16 %v4244
        %v4297 = vunpack.c.l.b16 %v4245
        %v4298 = vunpack.c.h.b16 %v4245
        %v4299 = vunpack.c.l.b16 %v4246
        %v4300 = vunpack.c.h.b16 %v4246
        %v4301 = vunpack.c.l.b16 %v4247
        %v4302 = vunpack.c.h.b16 %v4247
        %v4303 = vunpack.c.l.b16 %v4248
        %v4304 = vunpack.c.h.b16 %v4248
        %v4305 = vunpack.c.l.b16 %v4249
        %v4306 = vunpack.c.h.b16 %v4249
        %v4307 = vunpack.c.l.b16 %v4250
        %v4308 = vunpack.c.h.b16 %v4250
        %v4309 = vunpack.c.l.b16 %v4251
        %v4310 = vunpack.c.h.b16 %v4251
        %v4311 = vunpack.c.l.b16 %v4252
        %v4312 = vunpack.c.h.b16 %v4252
        %v4313 = vunpack.c.l.b16 %v4253
        %v4314 = vunpack.c.h.b16 %v4253
        %v4315 = vunpack.c.l.b16 %v4254
        %v4316 = vunpack.c.h.b16 %v4254
        %v4317 = vunpack.c.l.b16 %v4255
        %v4318 = vunpack.c.h.b16 %v4255
        %v4319 = vunpack.c.l.b16 %v4256
        %v4320 = vunpack.c.h.b16 %v4256
        %v4321 = vunpack.c.l.b16 %v4257
        %v4322 = vunpack.c.h.b16 %v4257
        %v4323 = vunpack.c.l.b16 %v4258
        %v4324 = vunpack.c.h.b16 %v4258
        %v4325 = vunpack.c.l.b16 %v4259
        %v4326 = vunpack.c.h.b16 %v4259
        %v4327 = vunpack.c.l.b16 %v4260
        %v4328 = vunpack.c.h.b16 %v4260
        %v4329 = vunpack.c.l.b16 %v4261
        %v4330 = vunpack.c.h.b16 %v4261
        %v4331 = vunpack.c.l.b16 %v4262
        %v4332 = vunpack.c.h.b16 %v4262
        %v4333 = vunpack.c.l.b16 %v4263
        %v4334 = vunpack.c.h.b16 %v4263
        %v4335 = vunpack.c.l.b16 %v4264
        %v4336 = vunpack.c.h.b16 %v4264
        %v4337 = vunpack.c.l.b16 %v4265
        %v4338 = vunpack.c.h.b16 %v4265
        %v4339 = vunpack.c.l.b16 %v4266
        %v4340 = vunpack.c.h.b16 %v4266
        %v4341 = vunpack.c.l.b16 %v4267
        %v4342 = vpack.c.b16 %v4293, %v4293
        %v4343 = vpack.c.b16 %v4294, %v4294
        %v4344 = vpack.c.b16 %v4295, %v4295
        %v4345 = vpack.c.b16 %v4296, %v4296
        %v4346 = vpack.c.b16 %v4297, %v4297
        %v4347 = vpack.c.b16 %v4298, %v4298
        %v4348 = vpack.c.b16 %v4299, %v4299
        %v4349 = vpack.c.b16 %v4300, %v4300
        %v4350 = vpack.c.b16 %v4301, %v4301
        %v4351 = vpack.c.b16 %v4302, %v4302
        %v4352 = vpack.c.b16 %v4303, %v4303
        %v4353 = vpack.c.b16 %v4304, %v4304
        %v4354 = vpack.c.b16 %v4305, %v4305
        %v4355 = vpack.c.b16 %v4306, %v4306
        %v4356 = vpack.c.b16 %v4307, %v4307
        %v4357 = vpack.c.b16 %v4308, %v4308
        %v4358 = vpack.c.b16 %v4309, %v4309
        %v4359 = vpack.c.b16 %v4310, %v4310
        %v4360 = vpack.c.b16 %v4311, %v4311
        %v4361 = vpack.c.b16 %v4312, %v4312
        %v4362 = vpack.c.b16 %v4313, %v4313
        %v4363 = vpack.c.b16 %v4314, %v4314
        %v4364 = vpack.c.b16 %v4315, %v4315
        %v4365 = vpack.c.b16 %v4316, %v4316
        %v4366 = vpack.c.b16 %v4317, %v4317
        %v4367 = vpack.c.b16 %v4318, %v4318
        %v4368 = vpack.c.b16 %v4319, %v4319
        %v4369 = vpack.c.b16 %v4320, %v4320
        %v4370 = vpack.c.b16 %v4321, %v4321
        %v4371 = vpack.c.b16 %v4322, %v4322
        %v4372 = vpack.c.b16 %v4323, %v4323
        %v4373 = vpack.c.b16 %v4324, %v4324
        %v4374 = vpack.c.b16 %v4325, %v4325
        %v4375 = vpack.c.b16 %v4326, %v4326
        %v4376 = vpack.c.b16 %v4327, %v4327
        %v4377 = vpack.c.b16 %v4328, %v4328
        %v4378 = vpack.c.b16 %v4329, %v4329
        %v4379 = vpack.c.b16 %v4330, %v4330
        %v4380 = vpack.c.b16 %v4331, %v4331
        %v4381 = vpack.c.b16 %v4332, %v4332
        %v4382 = vpack.c.b16 %v4333, %v4333
        %v4383 = vpack.c.b16 %v4334, %v4334
        %v4384 = vpack.c.b16 %v4335, %v4335
        %v4385 = vpack.c.b16 %v4336, %v4336
        %v4386 = vpack.c.b16 %v4337, %v4337
        %v4387 = vpack.c.b16 %v4338, %v4338
        %v4388 = vpack.c.b16 %v4339, %v4339
        %v4389 = vpack.c.b16 %v4340, %v4340
        %v4390 = vpack.c.b16 %v4341, %v4341
        %4440 = vst [vmem:[%s4] sm:$0xf] %v4342
        %4441 = vst [vmem:[%s4 + $0x4] sm:$0xf] %v4343
        %4442 = vst [vmem:[%s4 + $0x8] sm:$0xf] %v4344
        %4443 = vst [vmem:[%s4 + $0xc] sm:$0xf] %v4345
        %4444 = vst [vmem:[%s4 + $0x10] sm:$0xf] %v4346
        %4445 = vst [vmem:[%s4 + $0x14] sm:$0xf] %v4347
        %4446 = vst [vmem:[%s4 + $0x18] sm:$0xf] %v4348
        %4447 = vst [vmem:[%s4 + $0x1c] sm:$0xf] %v4349
        %4448 = vst [vmem:[%s4 + $0x20] sm:$0xf] %v4350
        %4449 = vst [vmem:[%s4 + $0x24] sm:$0xf] %v4351
        %4450 = vst [vmem:[%s4 + $0x28] sm:$0xf] %v4352
        %4451 = vst [vmem:[%s4 + $0x2c] sm:$0xf] %v4353
        %4452 = vst [vmem:[%s4 + $0x30] sm:$0xf] %v4354
        %4453 = vst [vmem:[%s4 + $0x34] sm:$0xf] %v4355
        %4454 = vst [vmem:[%s4 + $0x38] sm:$0xf] %v4356
        %4455 = vst [vmem:[%s4 + $0x3c] sm:$0xf] %v4357
        %4456 = vst [vmem:[%s4 + $0x40] sm:$0xf] %v4358
        %4457 = vst [vmem:[%s4 + $0x44] sm:$0xf] %v4359
        %4458 = vst [vmem:[%s4 + $0x48] sm:$0xf] %v4360
        %4459 = vst [vmem:[%s4 + $0x4c] sm:$0xf] %v4361
        %4460 = vst [vmem:[%s4 + $0x50] sm:$0xf] %v4362
        %4461 = vst [vmem:[%s4 + $0x54] sm:$0xf] %v4363
        %4462 = vst [vmem:[%s4 + $0x58] sm:$0xf] %v4364
        %4463 = vst [vmem:[%s4 + $0x5c] sm:$0xf] %v4365
        %4464 = vst [vmem:[%s4 + $0x60] sm:$0xf] %v4366
        %4465 = vst [vmem:[%s4 + $0x64] sm:$0xf] %v4367
        %4466 = vst [vmem:[%s4 + $0x68] sm:$0xf] %v4368
        %4467 = vst [vmem:[%s4 + $0x6c] sm:$0xf] %v4369
        %4468 = vst [vmem:[%s4 + $0x70] sm:$0xf] %v4370
        %4469 = vst [vmem:[%s4 + $0x74] sm:$0xf] %v4371
        %4470 = vst [vmem:[%s4 + $0x78] sm:$0xf] %v4372
        %4471 = vst [vmem:[%s4 + $0x7c] sm:$0xf] %v4373
        %4472 = vst [vmem:[%s4 + $0x80] sm:$0xf] %v4374
        %4473 = vst [vmem:[%s4 + $0x84] sm:$0xf] %v4375
        %4474 = vst [vmem:[%s4 + $0x88] sm:$0xf] %v4376
        %4475 = vst [vmem:[%s4 + $0x8c] sm:$0xf] %v4377
        %4476 = vst [vmem:[%s4 + $0x90] sm:$0xf] %v4378
        %4477 = vst [vmem:[%s4 + $0x94] sm:$0xf] %v4379
        %4478 = vst [vmem:[%s4 + $0x98] sm:$0xf] %v4380
        %4479 = vst [vmem:[%s4 + $0x9c] sm:$0xf] %v4381
        %4480 = vst [vmem:[%s4 + $0xa0] sm:$0xf] %v4382
        %4481 = vst [vmem:[%s4 + $0xa4] sm:$0xf] %v4383
        %4482 = vst [vmem:[%s4 + $0xa8] sm:$0xf] %v4384
        %4483 = vst [vmem:[%s4 + $0xac] sm:$0xf] %v4385
        %4484 = vst [vmem:[%s4 + $0xb0] sm:$0xf] %v4386
        %4485 = vst [vmem:[%s4 + $0xb4] sm:$0xf] %v4387
        %4486 = vst [vmem:[%s4 + $0xb8] sm:$0xf] %v4388
        %4487 = vst [vmem:[%s4 + $0xbc] sm:$0xf] %v4389
        %4488 = vst [vmem:[%s4 + $0xc0] sm:$0xf] %v4390
      $region44: #{generator_forward.5} parent=35 // pred_fallthru
        _
      // Predicated region
      $region45: #{generator_forward.5} parent=35 // pred_check
        %p4489 = pneg %p117
      $region46: #{generator_forward.5} parent=35 // pred_check_branch
        %4491 = sbr.rel (%p4489) target = $region48
      $region47: #{generator_forward.5} parent=35 // pred_region
        _
      $region48: #{generator_forward.5} parent=35 // pred_fallthru
        _
      // Predicated region
      $region49: #{generator_forward.5} parent=35 // pred_check
        %p4492 = pneg %p117
      $region50: #{generator_forward.5} parent=35 // pred_check_branch
        %4494 = sbr.rel (%p4492) target = $region52
      $region51: #{generator_forward.5} parent=35 // pred_region
        _
      $region52: #{generator_forward.5} parent=35 // pred_fallthru
        _
    $region36: #{generator_forward.5} parent=5 // pred_fallthru
      _
    %p4495 = scmp.le.s32.totalorder 2, %s10
    // Predicated region
    $region53: #{generator_forward.5} parent=5 // pred_check
      %p4496 = pneg %p4495
    $region54: #{generator_forward.5} parent=5 // pred_check_branch
      %4498 = sbr.rel (%p4496) target = $region56
    $region55: #{generator_forward.5} parent=5 // pred_region
      %s4499 = ssub.s32 %s10, 2
    $region56: #{generator_forward.5} parent=5 // pred_fallthru
      _
  $region6: #{generator_forward.5} parent=0 // loop_footer
    %s14 = sadd.s32 1, %s10
  $region7: #{generator_forward.5} parent=0 // loop_footer_branch
    %9 = sbr.rel target = $region3
  $region8: #{generator_forward.5} parent=0 // loop_exit
    _

// kernel: generator_forward.6
$region0: #{generator_forward.6}
  #allocation0 [shape = 'u32[]', space=smem, size = 0x4, offset = 0x4, fixed_abs, tag = 'smem constant byte address 0x4 - core index']
  #allocation1 [shape = 'u32[144,128]{1,0:T(1,128)}', space=vmem, size = 0x12000, scoped, tag = 'internal scratch']
  #allocation2 [shape = 'f32[1568,128]{1,0:T(8,128)}', space=vmem, size = 0xc4000, scoped, tag = 'scratch operand']
  #allocation3 [shape = 'f32[2,128]{1,0:T(2,128)}', space=vmem, size = 0x400, scoped, tag = 'scratch operand']
  %s0 = inlined_call_operand.vmem [shape: bf16[1568,2048], index: 0, kind: input, shape index: {}]
  %s1 = inlined_call_operand.vmem [shape: bf16[2048,128], index: 1, kind: input, shape index: {}]
  %s2 = inlined_call_operand.vmem [shape: f32[1,128], index: 2, kind: input, shape index: {}]
  %s3 = inlined_call_operand.vmem [shape: f32[1,128], index: 3, kind: input, shape index: {}]
  %s4 = inlined_call_operand.vmem [shape: bf16[1568,128], index: 4, kind: output, shape index: {}]
  %s5 = sld [smem:[#allocation0]]
  $region57: #{generator_forward.6} parent=0
    _
  %s7 = ssub.s32 1, %s5
  %s8 = scalar_select 0, %s7, %s5
  loop: start=0, step=1, limit=9
  $region2: #{generator_forward.6} parent=0 // loop_pre_header
    _
  $region3: #{generator_forward.6} parent=0 // loop_header
    %s10 = sphi 0, %s14
    %p11 = scmp.ge.s32.totalorder %s10, 9
    %s20 = sphi 0, %s22
    %s23 = sphi 0, %s20
    %s24 = sphi 0, %s23
    %s40 = sphi 0, %s24
    %s44 = sphi 0, %s44
    %s46 = sphi 0, %s44
    %s47 = sphi 0, %s46
    %s61 = sphi 0, %s47
    %s65 = sphi 0, %s65
    %s67 = sphi 0, %s65
    %s68 = sphi 0, %s67
    %s82 = sphi 0, %s68
    %s86 = sphi 0, %s86
    %s88 = sphi 0, %s86
    %s89 = sphi 0, %s88
    %s103 = sphi 0, %s89
    %s107 = sphi 0, %s107
    %s109 = sphi 0, %s107
    %s110 = sphi 0, %s109
    %s124 = sphi 0, %s110
  $region4: #{generator_forward.6} parent=0 // loop_header_branch
    %13 = sbr.rel (%p11) target = $region8
  $region5: #{generator_forward.6} parent=0 // loop_body
    %s15 = ssub.s32 %s10, 1
    %s16 = ssub.s32 %s10, 2
    %s17 = sadd.s32 %s10, 1
    %s18 = ssub.s32 %s10, %s17
    %p19 = scmp.eq.s32.totalorder %s18, 0
    %s21 = sadd.s32 %s20, 1
    %s22 = scalar_select %p19, %s20, %s21
    %p25 = pneg %p19
    %p26 = scmp.eq.s32.totalorder %s10, 6
    %p27 = por %p25, %p26
    %p28 = scmp.ne.s32.totalorder %s20, %s23
    %p29 = scmp.eq.s32.totalorder %s10, 0
    %p30 = por %p28, %p29
    %p31 = scmp.ne.s32.totalorder %s20, %s23
    %p32 = scmp.eq.s32.totalorder %s15, 6
    %p33 = por %p31, %p32
    %p34 = scmp.ne.s32.totalorder %s23, %s24
    %p35 = scmp.eq.s32.totalorder %s15, 0
    %p36 = por %p34, %p35
    %p37 = scmp.ne.s32.totalorder %s23, %s24
    %p38 = scmp.eq.s32.totalorder %s16, 6
    %p39 = por %p37, %p38
    %p41 = scmp.ne.s32.totalorder %s24, %s40
    %p42 = scmp.eq.s32.totalorder %s16, 0
    %p43 = por %p41, %p42
    %s45 = sadd.s32 %s44, 1
    %p48 = scmp.eq.s32.totalorder %s10, 6
    %p49 = scmp.ne.s32.totalorder %s44, %s46
    %p50 = scmp.eq.s32.totalorder %s10, 0
    %p51 = por %p49, %p50
    %p52 = scmp.ne.s32.totalorder %s44, %s46
    %p53 = scmp.eq.s32.totalorder %s15, 6
    %p54 = por %p52, %p53
    %p55 = scmp.ne.s32.totalorder %s46, %s47
    %p56 = scmp.eq.s32.totalorder %s15, 0
    %p57 = por %p55, %p56
    %p58 = scmp.ne.s32.totalorder %s46, %s47
    %p59 = scmp.eq.s32.totalorder %s16, 6
    %p60 = por %p58, %p59
    %p62 = scmp.ne.s32.totalorder %s47, %s61
    %p63 = scmp.eq.s32.totalorder %s16, 0
    %p64 = por %p62, %p63
    %s66 = sadd.s32 %s65, 1
    %p69 = scmp.eq.s32.totalorder %s10, 6
    %p70 = scmp.ne.s32.totalorder %s65, %s67
    %p71 = scmp.eq.s32.totalorder %s10, 0
    %p72 = por %p70, %p71
    %p73 = scmp.ne.s32.totalorder %s65, %s67
    %p74 = scmp.eq.s32.totalorder %s15, 6
    %p75 = por %p73, %p74
    %p76 = scmp.ne.s32.totalorder %s67, %s68
    %p77 = scmp.eq.s32.totalorder %s15, 0
    %p78 = por %p76, %p77
    %p79 = scmp.ne.s32.totalorder %s67, %s68
    %p80 = scmp.eq.s32.totalorder %s16, 6
    %p81 = por %p79, %p80
    %p83 = scmp.ne.s32.totalorder %s68, %s82
    %p84 = scmp.eq.s32.totalorder %s16, 0
    %p85 = por %p83, %p84
    %s87 = sadd.s32 %s86, 1
    %p90 = scmp.eq.s32.totalorder %s10, 6
    %p91 = scmp.ne.s32.totalorder %s86, %s88
    %p92 = scmp.eq.s32.totalorder %s10, 0
    %p93 = por %p91, %p92
    %p94 = scmp.ne.s32.totalorder %s86, %s88
    %p95 = scmp.eq.s32.totalorder %s15, 6
    %p96 = por %p94, %p95
    %p97 = scmp.ne.s32.totalorder %s88, %s89
    %p98 = scmp.eq.s32.totalorder %s15, 0
    %p99 = por %p97, %p98
    %p100 = scmp.ne.s32.totalorder %s88, %s89
    %p101 = scmp.eq.s32.totalorder %s16, 6
    %p102 = por %p100, %p101
    %p104 = scmp.ne.s32.totalorder %s89, %s103
    %p105 = scmp.eq.s32.totalorder %s16, 0
    %p106 = por %p104, %p105
    %s108 = sadd.s32 %s107, 1
    %p111 = scmp.eq.s32.totalorder %s10, 6
    %p112 = scmp.ne.s32.totalorder %s107, %s109
    %p113 = scmp.eq.s32.totalorder %s10, 0
    %p114 = por %p112, %p113
    %p115 = scmp.ne.s32.totalorder %s107, %s109
    %p116 = scmp.eq.s32.totalorder %s15, 6
    %p117 = por %p115, %p116
    %p118 = scmp.ne.s32.totalorder %s109, %s110
    %p119 = scmp.eq.s32.totalorder %s15, 0
    %p120 = por %p118, %p119
    %p121 = scmp.ne.s32.totalorder %s109, %s110
    %p122 = scmp.eq.s32.totalorder %s16, 6
    %p123 = por %p121, %p122
    %p125 = scmp.ne.s32.totalorder %s110, %s124
    %p126 = scmp.eq.s32.totalorder %s16, 0
    %p127 = por %p125, %p126
    %p128 = scmp.le.s32.totalorder 1, %s10
    %p129 = scmp.lt.s32.totalorder %s10, 8
    %p130 = pnand %p128, %p129
    %p131 = pneg %p130
    // Predicated region
    $region9: #{generator_forward.6} parent=5 // pred_check
      _
    $region10: #{generator_forward.6} parent=5 // pred_check_branch
      %133 = sbr.rel (%p130) target = $region12
    $region11: #{generator_forward.6} parent=5 // pred_region
      %s134 = ssub.s32 %s10, 1
      // Predicated region
      $region13: #{generator_forward.6} parent=11 // pred_check
        %p135 = pneg %p57
      $region14: #{generator_forward.6} parent=11 // pred_check_branch
        %137 = sbr.rel (%p135) target = $region16
      $region15: #{generator_forward.6} parent=11 // pred_region
        _
      $region16: #{generator_forward.6} parent=11 // pred_fallthru
        _
      // Predicated region
      $region17: #{generator_forward.6} parent=11 // pred_check
        %p138 = pneg %p78
      $region18: #{generator_forward.6} parent=11 // pred_check_branch
        %140 = sbr.rel (%p138) target = $region20
      $region19: #{generator_forward.6} parent=11 // pred_region
        _
      $region20: #{generator_forward.6} parent=11 // pred_fallthru
        _
      // Predicated region
      $region21: #{generator_forward.6} parent=11 // pred_check
        %p141 = pneg %p99
      $region22: #{generator_forward.6} parent=11 // pred_check_branch
        %143 = sbr.rel (%p141) target = $region24
      $region23: #{generator_forward.6} parent=11 // pred_region
        _
      $region24: #{generator_forward.6} parent=11 // pred_fallthru
        _
    $region12: #{generator_forward.6} parent=5 // pred_fallthru
      _
    %p144 = scmp.lt.s32.totalorder %s10, 7
    // Predicated region
    $region25: #{generator_forward.6} parent=5 // pred_check
      %p145 = pneg %p144
    $region26: #{generator_forward.6} parent=5 // pred_check_branch
      %147 = sbr.rel (%p145) target = $region28
    $region27: #{generator_forward.6} parent=5 // pred_region
      // Predicated region
      $region29: #{generator_forward.6} parent=27 // pred_check
        %p148 = pneg %p30
      $region30: #{generator_forward.6} parent=27 // pred_check_branch
        %150 = sbr.rel (%p148) target = $region32
      $region31: #{generator_forward.6} parent=27 // pred_region
        %s151 = smul.u32 28, %s10
        %p152 = scmp.lt.s32.totalorder %s151, 195
        %s153 = scalar_select %p152, %s151, 195
        %s154 = smul.addr %s153, 16
        %s155 = smul.addr %s154, 4
        %s156 = scalar_lea.vmem %s0, %s155
        %s157 = smul.u32 28, %s10
      $region32: #{generator_forward.6} parent=27 // pred_fallthru
        _
    $region28: #{generator_forward.6} parent=5 // pred_fallthru
      _
    %p158 = scmp.le.s32.totalorder 1, %s10
    %p159 = scmp.lt.s32.totalorder %s10, 8
    %p160 = pnand %p158, %p159
    %p161 = pneg %p160
    // Predicated region
    $region33: #{generator_forward.6} parent=5 // pred_check
      _
    $region34: #{generator_forward.6} parent=5 // pred_check_branch
      %163 = sbr.rel (%p160) target = $region36
    $region35: #{generator_forward.6} parent=5 // pred_region
      %s164 = ssub.s32 %s10, 1
      %s165 = smul.u32 28, %s15
      %p166 = scmp.lt.s32.totalorder %s165, 195
      %s167 = scalar_select %p166, %s165, 195
      %s168 = smul.addr %s167, 16
      %s169 = smul.addr %s168, 4
      %s170 = scalar_lea.vmem %s0, %s169
      %p171 = pneg %p36
      %p172 = pneg %p33
      %p173 = pneg %p57
      %p174 = pneg %p54
      %p175 = pneg %p78
      %p176 = pneg %p75
      %p177 = pneg %p99
      %p178 = pneg %p96
      %p179 = pneg %p120
      %p180 = pneg %p117
      %s181 = smul.u32 28, %s15
      %p182 = scmp.lt.s32.totalorder %s181, 195
      %s183 = scalar_select %p182, %s181, 195
      %s184 = smul.addr %s183, 16
      %s185 = smul.addr %s184, 4
      %s186 = scalar_lea.vmem %s0, %s185
      %s187 = smul.u32 28, %s15
      %p189 = scmp.eq.s32.totalorder %s15, 0
      // Predicated region
      $region37: #{generator_forward.6} parent=35 // pred_check
        %p190 = pneg %p189
      $region38: #{generator_forward.6} parent=35 // pred_check_branch
        %192 = sbr.rel (%p190) target = $region40
      $region39: #{generator_forward.6} parent=35 // pred_region
        %193 = vst [vmem:[#allocation3] sm:$0x3] 0.0
      $region40: #{generator_forward.6} parent=35 // pred_fallthru
        _
      %v194 = vld [vmem:[%s186] sm:$0xff]
      %v195 = vld [vmem:[%s186 + $0x8] sm:$0xff]
      %v196 = vld [vmem:[%s186 + $0x10] sm:$0xff]
      %v197 = vld [vmem:[%s186 + $0x18] sm:$0xff]
      %v198 = vld [vmem:[%s186 + $0x20] sm:$0xff]
      %v199 = vld [vmem:[%s186 + $0x28] sm:$0xff]
      %v200 = vld [vmem:[%s186 + $0x30] sm:$0xff]
      %v201 = vld [vmem:[%s186 + $0x38] sm:$0xff]
      %v202 = vld [vmem:[%s186 + $0x40] sm:$0xff]
      %v203 = vld [vmem:[%s186 + $0x48] sm:$0xff]
      %v204 = vld [vmem:[%s186 + $0x50] sm:$0xff]
      %v205 = vld [vmem:[%s186 + $0x58] sm:$0xff]
      %v206 = vld [vmem:[%s186 + $0x60] sm:$0xff]
      %v207 = vld [vmem:[%s186 + $0x68] sm:$0xff]
      %v208 = vld [vmem:[%s186 + $0x70] sm:$0xff]
      %v209 = vld [vmem:[%s186 + $0x78] sm:$0xff]
      %v210 = vld [vmem:[%s186 + $0x80] sm:$0xff]
      %v211 = vld [vmem:[%s186 + $0x88] sm:$0xff]
      %v212 = vld [vmem:[%s186 + $0x90] sm:$0xff]
      %v213 = vld [vmem:[%s186 + $0x98] sm:$0xff]
      %v214 = vld [vmem:[%s186 + $0xa0] sm:$0xff]
      %v215 = vld [vmem:[%s186 + $0xa8] sm:$0xff]
      %v216 = vld [vmem:[%s186 + $0xb0] sm:$0xff]
      %v217 = vld [vmem:[%s186 + $0xb8] sm:$0xff]
      %v218 = vld [vmem:[%s186 + $0xc0] sm:$0xff]
      %v219 = vld [vmem:[%s186 + $0xc8] sm:$0xff]
      %v220 = vld [vmem:[%s186 + $0xd0] sm:$0xff]
      %v221 = vld [vmem:[%s186 + $0xd8] sm:$0xff]
      %v222 = vld [vmem:[%s186 + $0xe0] sm:$0xff]
      %v223 = vld [vmem:[%s186 + $0xe8] sm:$0xff]
      %v224 = vld [vmem:[%s186 + $0xf0] sm:$0xff]
      %v225 = vld [vmem:[%s186 + $0xf8] sm:$0xff]
      %v226 = vld [vmem:[%s186 + $0x100] sm:$0xff]
      %v227 = vld [vmem:[%s186 + $0x108] sm:$0xff]
      %v228 = vld [vmem:[%s186 + $0x110] sm:$0xff]
      %v229 = vld [vmem:[%s186 + $0x118] sm:$0xff]
      %v230 = vld [vmem:[%s186 + $0x120] sm:$0xff]
      %v231 = vld [vmem:[%s186 + $0x128] sm:$0xff]
      %v232 = vld [vmem:[%s186 + $0x130] sm:$0xff]
      %v233 = vld [vmem:[%s186 + $0x138] sm:$0xff]
      %v234 = vld [vmem:[%s186 + $0x140] sm:$0xff]
      %v235 = vld [vmem:[%s186 + $0x148] sm:$0xff]
      %v236 = vld [vmem:[%s186 + $0x150] sm:$0xff]
      %v237 = vld [vmem:[%s186 + $0x158] sm:$0xff]
      %v238 = vld [vmem:[%s186 + $0x160] sm:$0xff]
      %v239 = vld [vmem:[%s186 + $0x168] sm:$0xff]
      %v240 = vld [vmem:[%s186 + $0x170] sm:$0xff]
      %v241 = vld [vmem:[%s186 + $0x178] sm:$0xff]
      %v242 = vld [vmem:[%s186 + $0x180] sm:$0xff]
      %v243 = vld [vmem:[%s186 + $0x188] sm:$0xff]
      %v244 = vld [vmem:[%s186 + $0x190] sm:$0xff]
      %v245 = vld [vmem:[%s186 + $0x198] sm:$0xff]
      %v246 = vld [vmem:[%s186 + $0x1a0] sm:$0xff]
      %v247 = vld [vmem:[%s186 + $0x1a8] sm:$0xff]
      %v248 = vld [vmem:[%s186 + $0x1b0] sm:$0xff]
      %v249 = vld [vmem:[%s186 + $0x1b8] sm:$0xff]
      %v250 = vld [vmem:[%s186 + $0x1c0] sm:$0xff]
      %v251 = vld [vmem:[%s186 + $0x1c8] sm:$0xff]
      %v252 = vld [vmem:[%s186 + $0x1d0] sm:$0xff]
      %v253 = vld [vmem:[%s186 + $0x1d8] sm:$0xff]
      %v254 = vld [vmem:[%s186 + $0x1e0] sm:$0xff]
      %v255 = vld [vmem:[%s186 + $0x1e8] sm:$0xff]
      %v256 = vld [vmem:[%s186 + $0x1f0] sm:$0xff]
      %v257 = vld [vmem:[%s186 + $0x1f8] sm:$0xff]
      %v258 = vld [vmem:[%s186 + $0x200] sm:$0xff]
      %v259 = vld [vmem:[%s186 + $0x208] sm:$0xff]
      %v260 = vld [vmem:[%s186 + $0x210] sm:$0xff]
      %v261 = vld [vmem:[%s186 + $0x218] sm:$0xff]
      %v262 = vld [vmem:[%s186 + $0x220] sm:$0xff]
      %v263 = vld [vmem:[%s186 + $0x228] sm:$0xff]
      %v264 = vld [vmem:[%s186 + $0x230] sm:$0xff]
      %v265 = vld [vmem:[%s186 + $0x238] sm:$0xff]
      %v266 = vld [vmem:[%s186 + $0x240] sm:$0xff]
      %v267 = vld [vmem:[%s186 + $0x248] sm:$0xff]
      %v268 = vld [vmem:[%s186 + $0x250] sm:$0xff]
      %v269 = vld [vmem:[%s186 + $0x258] sm:$0xff]
      %v270 = vld [vmem:[%s186 + $0x260] sm:$0xff]
      %v271 = vld [vmem:[%s186 + $0x268] sm:$0xff]
      %v272 = vld [vmem:[%s186 + $0x270] sm:$0xff]
      %v273 = vld [vmem:[%s186 + $0x278] sm:$0xff]
      %v274 = vld [vmem:[%s186 + $0x280] sm:$0xff]
      %v275 = vld [vmem:[%s186 + $0x288] sm:$0xff]
      %v276 = vld [vmem:[%s186 + $0x290] sm:$0xff]
      %v277 = vld [vmem:[%s186 + $0x298] sm:$0xff]
      %v278 = vld [vmem:[%s186 + $0x2a0] sm:$0xff]
      %v279 = vld [vmem:[%s186 + $0x2a8] sm:$0xff]
      %v280 = vld [vmem:[%s186 + $0x2b0] sm:$0xff]
      %v281 = vld [vmem:[%s186 + $0x2b8] sm:$0xff]
      %v282 = vld [vmem:[%s186 + $0x2c0] sm:$0xff]
      %v283 = vld [vmem:[%s186 + $0x2c8] sm:$0xff]
      %v284 = vld [vmem:[%s186 + $0x2d0] sm:$0xff]
      %v285 = vld [vmem:[%s186 + $0x2d8] sm:$0xff]
      %v286 = vld [vmem:[%s186 + $0x2e0] sm:$0xff]
      %v287 = vld [vmem:[%s186 + $0x2e8] sm:$0xff]
      %v288 = vld [vmem:[%s186 + $0x2f0] sm:$0xff]
      %v289 = vld [vmem:[%s186 + $0x2f8] sm:$0xff]
      %v290 = vld [vmem:[%s186 + $0x300] sm:$0xff]
      %v291 = vld [vmem:[%s186 + $0x308] sm:$0xff]
      %v292 = vld [vmem:[%s186 + $0x310] sm:$0xff]
      %v293 = vld [vmem:[%s186 + $0x318] sm:$0xff]
      %v294 = vld [vmem:[%s186 + $0x320] sm:$0xff]
      %v295 = vld [vmem:[%s186 + $0x328] sm:$0xff]
      %v296 = vld [vmem:[%s186 + $0x330] sm:$0xff]
      %v297 = vld [vmem:[%s186 + $0x338] sm:$0xff]
      %v298 = vld [vmem:[%s186 + $0x340] sm:$0xff]
      %v299 = vld [vmem:[%s186 + $0x348] sm:$0xff]
      %v300 = vld [vmem:[%s186 + $0x350] sm:$0xff]
      %v301 = vld [vmem:[%s186 + $0x358] sm:$0xff]
      %v302 = vld [vmem:[%s186 + $0x360] sm:$0xff]
      %v303 = vld [vmem:[%s186 + $0x368] sm:$0xff]
      %v304 = vld [vmem:[%s186 + $0x370] sm:$0xff]
      %v305 = vld [vmem:[%s186 + $0x378] sm:$0xff]
      %v306 = vld [vmem:[%s186 + $0x380] sm:$0xff]
      %v307 = vld [vmem:[%s186 + $0x388] sm:$0xff]
      %v308 = vld [vmem:[%s186 + $0x390] sm:$0xff]
      %v309 = vld [vmem:[%s186 + $0x398] sm:$0xff]
      %v310 = vld [vmem:[%s186 + $0x3a0] sm:$0xff]
      %v311 = vld [vmem:[%s186 + $0x3a8] sm:$0xff]
      %v312 = vld [vmem:[%s186 + $0x3b0] sm:$0xff]
      %v313 = vld [vmem:[%s186 + $0x3b8] sm:$0xff]
      %v314 = vld [vmem:[%s186 + $0x3c0] sm:$0xff]
      %v315 = vld [vmem:[%s186 + $0x3c8] sm:$0xff]
      %v316 = vld [vmem:[%s186 + $0x3d0] sm:$0xff]
      %v317 = vld [vmem:[%s186 + $0x3d8] sm:$0xff]
      %v318 = vld [vmem:[%s186 + $0x3e0] sm:$0xff]
      %v319 = vld [vmem:[%s186 + $0x3e8] sm:$0xff]
      %v320 = vld [vmem:[%s186 + $0x3f0] sm:$0xff]
      %v321 = vld [vmem:[%s186 + $0x3f8] sm:$0xff]
      %v322 = vld [vmem:[%s186 + $0x400] sm:$0xff]
      %v323 = vld [vmem:[%s186 + $0x408] sm:$0xff]
      %v324 = vld [vmem:[%s186 + $0x410] sm:$0xff]
      %v325 = vld [vmem:[%s186 + $0x418] sm:$0xff]
      %v326 = vld [vmem:[%s186 + $0x420] sm:$0xff]
      %v327 = vld [vmem:[%s186 + $0x428] sm:$0xff]
      %v328 = vld [vmem:[%s186 + $0x430] sm:$0xff]
      %v329 = vld [vmem:[%s186 + $0x438] sm:$0xff]
      %v330 = vld [vmem:[%s186 + $0x440] sm:$0xff]
      %v331 = vld [vmem:[%s186 + $0x448] sm:$0xff]
      %v332 = vld [vmem:[%s186 + $0x450] sm:$0xff]
      %v333 = vld [vmem:[%s186 + $0x458] sm:$0xff]
      %v334 = vld [vmem:[%s186 + $0x460] sm:$0xff]
      %v335 = vld [vmem:[%s186 + $0x468] sm:$0xff]
      %v336 = vld [vmem:[%s186 + $0x470] sm:$0xff]
      %v337 = vld [vmem:[%s186 + $0x478] sm:$0xff]
      %v338 = vld [vmem:[%s186 + $0x480] sm:$0xff]
      %v339 = vld [vmem:[%s186 + $0x488] sm:$0xff]
      %v340 = vld [vmem:[%s186 + $0x490] sm:$0xff]
      %v341 = vld [vmem:[%s186 + $0x498] sm:$0xff]
      %v342 = vld [vmem:[%s186 + $0x4a0] sm:$0xff]
      %v343 = vld [vmem:[%s186 + $0x4a8] sm:$0xff]
      %v344 = vld [vmem:[%s186 + $0x4b0] sm:$0xff]
      %v345 = vld [vmem:[%s186 + $0x4b8] sm:$0xff]
      %v346 = vld [vmem:[%s186 + $0x4c0] sm:$0xff]
      %v347 = vld [vmem:[%s186 + $0x4c8] sm:$0xff]
      %v348 = vld [vmem:[%s186 + $0x4d0] sm:$0xff]
      %v349 = vld [vmem:[%s186 + $0x4d8] sm:$0xff]
      %v350 = vld [vmem:[%s186 + $0x4e0] sm:$0xff]
      %v351 = vld [vmem:[%s186 + $0x4e8] sm:$0xff]
      %v352 = vld [vmem:[%s186 + $0x4f0] sm:$0xff]
      %v353 = vld [vmem:[%s186 + $0x4f8] sm:$0xff]
      %v354 = vld [vmem:[%s186 + $0x500] sm:$0xff]
      %v355 = vld [vmem:[%s186 + $0x508] sm:$0xff]
      %v356 = vld [vmem:[%s186 + $0x510] sm:$0xff]
      %v357 = vld [vmem:[%s186 + $0x518] sm:$0xff]
      %v358 = vld [vmem:[%s186 + $0x520] sm:$0xff]
      %v359 = vld [vmem:[%s186 + $0x528] sm:$0xff]
      %v360 = vld [vmem:[%s186 + $0x530] sm:$0xff]
      %v361 = vld [vmem:[%s186 + $0x538] sm:$0xff]
      %v362 = vld [vmem:[%s186 + $0x540] sm:$0xff]
      %v363 = vld [vmem:[%s186 + $0x548] sm:$0xff]
      %v364 = vld [vmem:[%s186 + $0x550] sm:$0xff]
      %v365 = vld [vmem:[%s186 + $0x558] sm:$0xff]
      %v366 = vld [vmem:[%s186 + $0x560] sm:$0xff]
      %v367 = vld [vmem:[%s186 + $0x568] sm:$0xff]
      %v368 = vld [vmem:[%s186 + $0x570] sm:$0xff]
      %v369 = vld [vmem:[%s186 + $0x578] sm:$0xff]
      %v370 = vld [vmem:[%s186 + $0x580] sm:$0xff]
      %v371 = vld [vmem:[%s186 + $0x588] sm:$0xff]
      %v372 = vld [vmem:[%s186 + $0x590] sm:$0xff]
      %v373 = vld [vmem:[%s186 + $0x598] sm:$0xff]
      %v374 = vld [vmem:[%s186 + $0x5a0] sm:$0xff]
      %v375 = vld [vmem:[%s186 + $0x5a8] sm:$0xff]
      %v376 = vld [vmem:[%s186 + $0x5b0] sm:$0xff]
      %v377 = vld [vmem:[%s186 + $0x5b8] sm:$0xff]
      %v378 = vld [vmem:[%s186 + $0x5c0] sm:$0xff]
      %v379 = vld [vmem:[%s186 + $0x5c8] sm:$0xff]
      %v380 = vld [vmem:[%s186 + $0x5d0] sm:$0xff]
      %v381 = vld [vmem:[%s186 + $0x5d8] sm:$0xff]
      %v382 = vld [vmem:[%s186 + $0x5e0] sm:$0xff]
      %v383 = vld [vmem:[%s186 + $0x5e8] sm:$0xff]
      %v384 = vld [vmem:[%s186 + $0x5f0] sm:$0xff]
      %v385 = vld [vmem:[%s186 + $0x5f8] sm:$0xff]
      %v386 = vld [vmem:[%s186 + $0x600] sm:$0xff]
      %v387 = vld [vmem:[%s186 + $0x608] sm:$0xff]
      %v388 = vld [vmem:[%s186 + $0x610] sm:$0xff]
      %v389 = vld [vmem:[%s186 + $0x618] sm:$0xff]
      %v390 = vld [vmem:[%s186 + $0x620] sm:$0xff]
      %v391 = vld [vmem:[%s186 + $0x628] sm:$0xff]
      %v392 = vld [vmem:[%s186 + $0x630] sm:$0xff]
      %v393 = vld [vmem:[%s186 + $0x638] sm:$0xff]
      %v394 = vld [vmem:[%s186 + $0x640] sm:$0xff]
      %v395 = vld [vmem:[%s186 + $0x648] sm:$0xff]
      %v396 = vld [vmem:[%s186 + $0x650] sm:$0xff]
      %v397 = vld [vmem:[%s186 + $0x658] sm:$0xff]
      %v398 = vld [vmem:[%s186 + $0x660] sm:$0xff]
      %v399 = vld [vmem:[%s186 + $0x668] sm:$0xff]
      %v400 = vld [vmem:[%s186 + $0x670] sm:$0xff]
      %v401 = vld [vmem:[%s186 + $0x678] sm:$0xff]
      %v402 = vld [vmem:[%s186 + $0x680] sm:$0xff]
      %v403 = vld [vmem:[%s186 + $0x688] sm:$0xff]
      %v404 = vld [vmem:[%s186 + $0x690] sm:$0xff]
      %v405 = vld [vmem:[%s186 + $0x698] sm:$0xff]
      %v406 = vld [vmem:[%s186 + $0x6a0] sm:$0xff]
      %v407 = vld [vmem:[%s186 + $0x6a8] sm:$0xff]
      %v408 = vld [vmem:[%s186 + $0x6b0] sm:$0xff]
      %v409 = vld [vmem:[%s186 + $0x6b8] sm:$0xff]
      %v410 = vld [vmem:[%s186 + $0x6c0] sm:$0xff]
      %v411 = vld [vmem:[%s186 + $0x6c8] sm:$0xff]
      %v412 = vld [vmem:[%s186 + $0x6d0] sm:$0xff]
      %v413 = vld [vmem:[%s186 + $0x6d8] sm:$0xff]
      %v414 = vld [vmem:[%s186 + $0x6e0] sm:$0xff]
      %v415 = vld [vmem:[%s186 + $0x6e8] sm:$0xff]
      %v416 = vld [vmem:[%s186 + $0x6f0] sm:$0xff]
      %v417 = vld [vmem:[%s186 + $0x6f8] sm:$0xff]
      %v418 = vld [vmem:[%s1] sm:$0xf]
      %v419 = vld [vmem:[%s1 + $0x4] sm:$0xf]
      %v420 = vld [vmem:[%s1 + $0x8] sm:$0xf]
      %v421 = vld [vmem:[%s1 + $0xc] sm:$0xf]
      %v422 = vld [vmem:[%s1 + $0x10] sm:$0xf]
      %v423 = vld [vmem:[%s1 + $0x14] sm:$0xf]
      %v424 = vld [vmem:[%s1 + $0x18] sm:$0xf]
      %v425 = vld [vmem:[%s1 + $0x1c] sm:$0xf]
      %v426 = vld [vmem:[%s1 + $0x20] sm:$0xf]
      %v427 = vld [vmem:[%s1 + $0x24] sm:$0xf]
      %v428 = vld [vmem:[%s1 + $0x28] sm:$0xf]
      %v429 = vld [vmem:[%s1 + $0x2c] sm:$0xf]
      %v430 = vld [vmem:[%s1 + $0x30] sm:$0xf]
      %v431 = vld [vmem:[%s1 + $0x34] sm:$0xf]
      %v432 = vld [vmem:[%s1 + $0x38] sm:$0xf]
      %v433 = vld [vmem:[%s1 + $0x3c] sm:$0xf]
      %v434 = vld [vmem:[%s1 + $0x40] sm:$0xf]
      %v435 = vld [vmem:[%s1 + $0x44] sm:$0xf]
      %v436 = vld [vmem:[%s1 + $0x48] sm:$0xf]
      %v437 = vld [vmem:[%s1 + $0x4c] sm:$0xf]
      %v438 = vld [vmem:[%s1 + $0x50] sm:$0xf]
      %v439 = vld [vmem:[%s1 + $0x54] sm:$0xf]
      %v440 = vld [vmem:[%s1 + $0x58] sm:$0xf]
      %v441 = vld [vmem:[%s1 + $0x5c] sm:$0xf]
      %v442 = vld [vmem:[%s1 + $0x60] sm:$0xf]
      %v443 = vld [vmem:[%s1 + $0x64] sm:$0xf]
      %v444 = vld [vmem:[%s1 + $0x68] sm:$0xf]
      %v445 = vld [vmem:[%s1 + $0x6c] sm:$0xf]
      %v446 = vld [vmem:[%s1 + $0x70] sm:$0xf]
      %v447 = vld [vmem:[%s1 + $0x74] sm:$0xf]
      %v448 = vld [vmem:[%s1 + $0x78] sm:$0xf]
      %v449 = vld [vmem:[%s1 + $0x7c] sm:$0xf]
      %v450 = vld [vmem:[%s1 + $0x80] sm:$0xf]
      %v451 = vld [vmem:[%s1 + $0x84] sm:$0xf]
      %v452 = vld [vmem:[%s1 + $0x88] sm:$0xf]
      %v453 = vld [vmem:[%s1 + $0x8c] sm:$0xf]
      %v454 = vld [vmem:[%s1 + $0x90] sm:$0xf]
      %v455 = vld [vmem:[%s1 + $0x94] sm:$0xf]
      %v456 = vld [vmem:[%s1 + $0x98] sm:$0xf]
      %v457 = vld [vmem:[%s1 + $0x9c] sm:$0xf]
      %v458 = vld [vmem:[%s1 + $0xa0] sm:$0xf]
      %v459 = vld [vmem:[%s1 + $0xa4] sm:$0xf]
      %v460 = vld [vmem:[%s1 + $0xa8] sm:$0xf]
      %v461 = vld [vmem:[%s1 + $0xac] sm:$0xf]
      %v462 = vld [vmem:[%s1 + $0xb0] sm:$0xf]
      %v463 = vld [vmem:[%s1 + $0xb4] sm:$0xf]
      %v464 = vld [vmem:[%s1 + $0xb8] sm:$0xf]
      %v465 = vld [vmem:[%s1 + $0xbc] sm:$0xf]
      %v466 = vld [vmem:[%s1 + $0xc0] sm:$0xf]
      %v467 = vld [vmem:[%s1 + $0xc4] sm:$0xf]
      %v468 = vld [vmem:[%s1 + $0xc8] sm:$0xf]
      %v469 = vld [vmem:[%s1 + $0xcc] sm:$0xf]
      %v470 = vld [vmem:[%s1 + $0xd0] sm:$0xf]
      %v471 = vld [vmem:[%s1 + $0xd4] sm:$0xf]
      %v472 = vld [vmem:[%s1 + $0xd8] sm:$0xf]
      %v473 = vld [vmem:[%s1 + $0xdc] sm:$0xf]
      %v474 = vld [vmem:[%s1 + $0xe0] sm:$0xf]
      %v475 = vld [vmem:[%s1 + $0xe4] sm:$0xf]
      %v476 = vld [vmem:[%s1 + $0xe8] sm:$0xf]
      %v477 = vld [vmem:[%s1 + $0xec] sm:$0xf]
      %v478 = vld [vmem:[%s1 + $0xf0] sm:$0xf]
      %v479 = vld [vmem:[%s1 + $0xf4] sm:$0xf]
      %v480 = vld [vmem:[%s1 + $0xf8] sm:$0xf]
      %v481 = vld [vmem:[%s1 + $0xfc] sm:$0xf]
      %v482 = vld [vmem:[%s1 + $0x100] sm:$0xf]
      %v483 = vld [vmem:[%s1 + $0x104] sm:$0xf]
      %v484 = vld [vmem:[%s1 + $0x108] sm:$0xf]
      %v485 = vld [vmem:[%s1 + $0x10c] sm:$0xf]
      %v486 = vld [vmem:[%s1 + $0x110] sm:$0xf]
      %v487 = vld [vmem:[%s1 + $0x114] sm:$0xf]
      %v488 = vld [vmem:[%s1 + $0x118] sm:$0xf]
      %v489 = vld [vmem:[%s1 + $0x11c] sm:$0xf]
      %v490 = vld [vmem:[%s1 + $0x120] sm:$0xf]
      %v491 = vld [vmem:[%s1 + $0x124] sm:$0xf]
      %v492 = vld [vmem:[%s1 + $0x128] sm:$0xf]
      %v493 = vld [vmem:[%s1 + $0x12c] sm:$0xf]
      %v494 = vld [vmem:[%s1 + $0x130] sm:$0xf]
      %v495 = vld [vmem:[%s1 + $0x134] sm:$0xf]
      %v496 = vld [vmem:[%s1 + $0x138] sm:$0xf]
      %v497 = vld [vmem:[%s1 + $0x13c] sm:$0xf]
      %v498 = vld [vmem:[%s1 + $0x140] sm:$0xf]
      %v499 = vld [vmem:[%s1 + $0x144] sm:$0xf]
      %v500 = vld [vmem:[%s1 + $0x148] sm:$0xf]
      %v501 = vld [vmem:[%s1 + $0x14c] sm:$0xf]
      %v502 = vld [vmem:[%s1 + $0x150] sm:$0xf]
      %v503 = vld [vmem:[%s1 + $0x154] sm:$0xf]
      %v504 = vld [vmem:[%s1 + $0x158] sm:$0xf]
      %v505 = vld [vmem:[%s1 + $0x15c] sm:$0xf]
      %v506 = vld [vmem:[%s1 + $0x160] sm:$0xf]
      %v507 = vld [vmem:[%s1 + $0x164] sm:$0xf]
      %v508 = vld [vmem:[%s1 + $0x168] sm:$0xf]
      %v509 = vld [vmem:[%s1 + $0x16c] sm:$0xf]
      %v510 = vld [vmem:[%s1 + $0x170] sm:$0xf]
      %v511 = vld [vmem:[%s1 + $0x174] sm:$0xf]
      %v512 = vld [vmem:[%s1 + $0x178] sm:$0xf]
      %v513 = vld [vmem:[%s1 + $0x17c] sm:$0xf]
      %v514 = vld [vmem:[%s1 + $0x180] sm:$0xf]
      %v515 = vld [vmem:[%s1 + $0x184] sm:$0xf]
      %v516 = vld [vmem:[%s1 + $0x188] sm:$0xf]
      %v517 = vld [vmem:[%s1 + $0x18c] sm:$0xf]
      %v518 = vld [vmem:[%s1 + $0x190] sm:$0xf]
      %v519 = vld [vmem:[%s1 + $0x194] sm:$0xf]
      %v520 = vld [vmem:[%s1 + $0x198] sm:$0xf]
      %v521 = vld [vmem:[%s1 + $0x19c] sm:$0xf]
      %v522 = vld [vmem:[%s1 + $0x1a0] sm:$0xf]
      %v523 = vld [vmem:[%s1 + $0x1a4] sm:$0xf]
      %v524 = vld [vmem:[%s1 + $0x1a8] sm:$0xf]
      %v525 = vld [vmem:[%s1 + $0x1ac] sm:$0xf]
      %v526 = vld [vmem:[%s1 + $0x1b0] sm:$0xf]
      %v527 = vld [vmem:[%s1 + $0x1b4] sm:$0xf]
      %v528 = vld [vmem:[%s1 + $0x1b8] sm:$0xf]
      %v529 = vld [vmem:[%s1 + $0x1bc] sm:$0xf]
      %v530 = vld [vmem:[%s1 + $0x1c0] sm:$0xf]
      %v531 = vld [vmem:[%s1 + $0x1c4] sm:$0xf]
      %v532 = vld [vmem:[%s1 + $0x1c8] sm:$0xf]
      %v533 = vld [vmem:[%s1 + $0x1cc] sm:$0xf]
      %v534 = vld [vmem:[%s1 + $0x1d0] sm:$0xf]
      %v535 = vld [vmem:[%s1 + $0x1d4] sm:$0xf]
      %v536 = vld [vmem:[%s1 + $0x1d8] sm:$0xf]
      %v537 = vld [vmem:[%s1 + $0x1dc] sm:$0xf]
      %v538 = vld [vmem:[%s1 + $0x1e0] sm:$0xf]
      %v539 = vld [vmem:[%s1 + $0x1e4] sm:$0xf]
      %v540 = vld [vmem:[%s1 + $0x1e8] sm:$0xf]
      %v541 = vld [vmem:[%s1 + $0x1ec] sm:$0xf]
      %v542 = vld [vmem:[%s1 + $0x1f0] sm:$0xf]
      %v543 = vld [vmem:[%s1 + $0x1f4] sm:$0xf]
      %v544 = vld [vmem:[%s1 + $0x1f8] sm:$0xf]
      %v545 = vld [vmem:[%s1 + $0x1fc] sm:$0xf]
      %v546 = vld [vmem:[%s1 + $0x200] sm:$0xf]
      %v547 = vld [vmem:[%s1 + $0x204] sm:$0xf]
      %v548 = vld [vmem:[%s1 + $0x208] sm:$0xf]
      %v549 = vld [vmem:[%s1 + $0x20c] sm:$0xf]
      %v550 = vld [vmem:[%s1 + $0x210] sm:$0xf]
      %v551 = vld [vmem:[%s1 + $0x214] sm:$0xf]
      %v552 = vld [vmem:[%s1 + $0x218] sm:$0xf]
      %v553 = vld [vmem:[%s1 + $0x21c] sm:$0xf]
      %v554 = vld [vmem:[%s1 + $0x220] sm:$0xf]
      %v555 = vld [vmem:[%s1 + $0x224] sm:$0xf]
      %v556 = vld [vmem:[%s1 + $0x228] sm:$0xf]
      %v557 = vld [vmem:[%s1 + $0x22c] sm:$0xf]
      %v558 = vld [vmem:[%s1 + $0x230] sm:$0xf]
      %v559 = vld [vmem:[%s1 + $0x234] sm:$0xf]
      %v560 = vld [vmem:[%s1 + $0x238] sm:$0xf]
      %v561 = vld [vmem:[%s1 + $0x23c] sm:$0xf]
      %v562 = vld [vmem:[%s1 + $0x240] sm:$0xf]
      %v563 = vld [vmem:[%s1 + $0x244] sm:$0xf]
      %v564 = vld [vmem:[%s1 + $0x248] sm:$0xf]
      %v565 = vld [vmem:[%s1 + $0x24c] sm:$0xf]
      %v566 = vld [vmem:[%s1 + $0x250] sm:$0xf]
      %v567 = vld [vmem:[%s1 + $0x254] sm:$0xf]
      %v568 = vld [vmem:[%s1 + $0x258] sm:$0xf]
      %v569 = vld [vmem:[%s1 + $0x25c] sm:$0xf]
      %v570 = vld [vmem:[%s1 + $0x260] sm:$0xf]
      %v571 = vld [vmem:[%s1 + $0x264] sm:$0xf]
      %v572 = vld [vmem:[%s1 + $0x268] sm:$0xf]
      %v573 = vld [vmem:[%s1 + $0x26c] sm:$0xf]
      %v574 = vld [vmem:[%s1 + $0x270] sm:$0xf]
      %v575 = vld [vmem:[%s1 + $0x274] sm:$0xf]
      %v576 = vld [vmem:[%s1 + $0x278] sm:$0xf]
      %v577 = vld [vmem:[%s1 + $0x27c] sm:$0xf]
      %v578 = vld [vmem:[%s1 + $0x280] sm:$0xf]
      %v579 = vld [vmem:[%s1 + $0x284] sm:$0xf]
      %v580 = vld [vmem:[%s1 + $0x288] sm:$0xf]
      %v581 = vld [vmem:[%s1 + $0x28c] sm:$0xf]
      %v582 = vld [vmem:[%s1 + $0x290] sm:$0xf]
      %v583 = vld [vmem:[%s1 + $0x294] sm:$0xf]
      %v584 = vld [vmem:[%s1 + $0x298] sm:$0xf]
      %v585 = vld [vmem:[%s1 + $0x29c] sm:$0xf]
      %v586 = vld [vmem:[%s1 + $0x2a0] sm:$0xf]
      %v587 = vld [vmem:[%s1 + $0x2a4] sm:$0xf]
      %v588 = vld [vmem:[%s1 + $0x2a8] sm:$0xf]
      %v589 = vld [vmem:[%s1 + $0x2ac] sm:$0xf]
      %v590 = vld [vmem:[%s1 + $0x2b0] sm:$0xf]
      %v591 = vld [vmem:[%s1 + $0x2b4] sm:$0xf]
      %v592 = vld [vmem:[%s1 + $0x2b8] sm:$0xf]
      %v593 = vld [vmem:[%s1 + $0x2bc] sm:$0xf]
      %v594 = vld [vmem:[%s1 + $0x2c0] sm:$0xf]
      %v595 = vld [vmem:[%s1 + $0x2c4] sm:$0xf]
      %v596 = vld [vmem:[%s1 + $0x2c8] sm:$0xf]
      %v597 = vld [vmem:[%s1 + $0x2cc] sm:$0xf]
      %v598 = vld [vmem:[%s1 + $0x2d0] sm:$0xf]
      %v599 = vld [vmem:[%s1 + $0x2d4] sm:$0xf]
      %v600 = vld [vmem:[%s1 + $0x2d8] sm:$0xf]
      %v601 = vld [vmem:[%s1 + $0x2dc] sm:$0xf]
      %v602 = vld [vmem:[%s1 + $0x2e0] sm:$0xf]
      %v603 = vld [vmem:[%s1 + $0x2e4] sm:$0xf]
      %v604 = vld [vmem:[%s1 + $0x2e8] sm:$0xf]
      %v605 = vld [vmem:[%s1 + $0x2ec] sm:$0xf]
      %v606 = vld [vmem:[%s1 + $0x2f0] sm:$0xf]
      %v607 = vld [vmem:[%s1 + $0x2f4] sm:$0xf]
      %v608 = vld [vmem:[%s1 + $0x2f8] sm:$0xf]
      %v609 = vld [vmem:[%s1 + $0x2fc] sm:$0xf]
      %v610 = vld [vmem:[%s1 + $0x300] sm:$0xf]
      %v611 = vld [vmem:[%s1 + $0x304] sm:$0xf]
      %v612 = vld [vmem:[%s1 + $0x308] sm:$0xf]
      %v613 = vld [vmem:[%s1 + $0x30c] sm:$0xf]
      %v614 = vld [vmem:[%s1 + $0x310] sm:$0xf]
      %v615 = vld [vmem:[%s1 + $0x314] sm:$0xf]
      %v616 = vld [vmem:[%s1 + $0x318] sm:$0xf]
      %v617 = vld [vmem:[%s1 + $0x31c] sm:$0xf]
      %v618 = vld [vmem:[%s1 + $0x320] sm:$0xf]
      %v619 = vld [vmem:[%s1 + $0x324] sm:$0xf]
      %v620 = vld [vmem:[%s1 + $0x328] sm:$0xf]
      %v621 = vld [vmem:[%s1 + $0x32c] sm:$0xf]
      %v622 = vld [vmem:[%s1 + $0x330] sm:$0xf]
      %v623 = vld [vmem:[%s1 + $0x334] sm:$0xf]
      %v624 = vld [vmem:[%s1 + $0x338] sm:$0xf]
      %v625 = vld [vmem:[%s1 + $0x33c] sm:$0xf]
      %v626 = vld [vmem:[%s1 + $0x340] sm:$0xf]
      %v627 = vld [vmem:[%s1 + $0x344] sm:$0xf]
      %v628 = vld [vmem:[%s1 + $0x348] sm:$0xf]
      %v629 = vld [vmem:[%s1 + $0x34c] sm:$0xf]
      %v630 = vld [vmem:[%s1 + $0x350] sm:$0xf]
      %v631 = vld [vmem:[%s1 + $0x354] sm:$0xf]
      %v632 = vld [vmem:[%s1 + $0x358] sm:$0xf]
      %v633 = vld [vmem:[%s1 + $0x35c] sm:$0xf]
      %v634 = vld [vmem:[%s1 + $0x360] sm:$0xf]
      %v635 = vld [vmem:[%s1 + $0x364] sm:$0xf]
      %v636 = vld [vmem:[%s1 + $0x368] sm:$0xf]
      %v637 = vld [vmem:[%s1 + $0x36c] sm:$0xf]
      %v638 = vld [vmem:[%s1 + $0x370] sm:$0xf]
      %v639 = vld [vmem:[%s1 + $0x374] sm:$0xf]
      %v640 = vld [vmem:[%s1 + $0x378] sm:$0xf]
      %v641 = vld [vmem:[%s1 + $0x37c] sm:$0xf]
      %v642 = vld [vmem:[%s1 + $0x380] sm:$0xf]
      %v643 = vld [vmem:[%s1 + $0x384] sm:$0xf]
      %v644 = vld [vmem:[%s1 + $0x388] sm:$0xf]
      %v645 = vld [vmem:[%s1 + $0x38c] sm:$0xf]
      %v646 = vld [vmem:[%s1 + $0x390] sm:$0xf]
      %v647 = vld [vmem:[%s1 + $0x394] sm:$0xf]
      %v648 = vld [vmem:[%s1 + $0x398] sm:$0xf]
      %v649 = vld [vmem:[%s1 + $0x39c] sm:$0xf]
      %v650 = vld [vmem:[%s1 + $0x3a0] sm:$0xf]
      %v651 = vld [vmem:[%s1 + $0x3a4] sm:$0xf]
      %v652 = vld [vmem:[%s1 + $0x3a8] sm:$0xf]
      %v653 = vld [vmem:[%s1 + $0x3ac] sm:$0xf]
      %v654 = vld [vmem:[%s1 + $0x3b0] sm:$0xf]
      %v655 = vld [vmem:[%s1 + $0x3b4] sm:$0xf]
      %v656 = vld [vmem:[%s1 + $0x3b8] sm:$0xf]
      %v657 = vld [vmem:[%s1 + $0x3bc] sm:$0xf]
      %v658 = vld [vmem:[%s1 + $0x3c0] sm:$0xf]
      %v659 = vld [vmem:[%s1 + $0x3c4] sm:$0xf]
      %v660 = vld [vmem:[%s1 + $0x3c8] sm:$0xf]
      %v661 = vld [vmem:[%s1 + $0x3cc] sm:$0xf]
      %v662 = vld [vmem:[%s1 + $0x3d0] sm:$0xf]
      %v663 = vld [vmem:[%s1 + $0x3d4] sm:$0xf]
      %v664 = vld [vmem:[%s1 + $0x3d8] sm:$0xf]
      %v665 = vld [vmem:[%s1 + $0x3dc] sm:$0xf]
      %v666 = vld [vmem:[%s1 + $0x3e0] sm:$0xf]
      %v667 = vld [vmem:[%s1 + $0x3e4] sm:$0xf]
      %v668 = vld [vmem:[%s1 + $0x3e8] sm:$0xf]
      %v669 = vld [vmem:[%s1 + $0x3ec] sm:$0xf]
      %v670 = vld [vmem:[%s1 + $0x3f0] sm:$0xf]
      %v671 = vld [vmem:[%s1 + $0x3f4] sm:$0xf]
      %v672 = vld [vmem:[%s1 + $0x3f8] sm:$0xf]
      %v673 = vld [vmem:[%s1 + $0x3fc] sm:$0xf]
      %v898 = vunpack.c.l.b16 %v194
      %v899 = vunpack.c.h.b16 %v194
      %v900 = vunpack.c.l.b16 %v195
      %v901 = vunpack.c.h.b16 %v195
      %v902 = vunpack.c.l.b16 %v196
      %v903 = vunpack.c.h.b16 %v196
      %v904 = vunpack.c.l.b16 %v197
      %v905 = vunpack.c.h.b16 %v197
      %v906 = vunpack.c.l.b16 %v198
      %v907 = vunpack.c.h.b16 %v198
      %v908 = vunpack.c.l.b16 %v199
      %v909 = vunpack.c.h.b16 %v199
      %v910 = vunpack.c.l.b16 %v200
      %v911 = vunpack.c.h.b16 %v200
      %v912 = vunpack.c.l.b16 %v201
      %v913 = vunpack.c.h.b16 %v201
      %v914 = vunpack.c.l.b16 %v202
      %v915 = vunpack.c.h.b16 %v202
      %v916 = vunpack.c.l.b16 %v203
      %v917 = vunpack.c.h.b16 %v203
      %v918 = vunpack.c.l.b16 %v204
      %v919 = vunpack.c.h.b16 %v204
      %v920 = vunpack.c.l.b16 %v205
      %v921 = vunpack.c.h.b16 %v205
      %v922 = vunpack.c.l.b16 %v206
      %v923 = vunpack.c.h.b16 %v206
      %v924 = vunpack.c.l.b16 %v207
      %v925 = vunpack.c.h.b16 %v207
      %v926 = vunpack.c.l.b16 %v208
      %v927 = vunpack.c.h.b16 %v208
      %v928 = vunpack.c.l.b16 %v209
      %v929 = vunpack.c.h.b16 %v209
      %v930 = vunpack.c.l.b16 %v210
      %v931 = vunpack.c.h.b16 %v210
      %v932 = vunpack.c.l.b16 %v211
      %v933 = vunpack.c.h.b16 %v211
      %v934 = vunpack.c.l.b16 %v212
      %v935 = vunpack.c.h.b16 %v212
      %v936 = vunpack.c.l.b16 %v213
      %v937 = vunpack.c.h.b16 %v213
      %v938 = vunpack.c.l.b16 %v214
      %v939 = vunpack.c.h.b16 %v214
      %v940 = vunpack.c.l.b16 %v215
      %v941 = vunpack.c.h.b16 %v215
      %v942 = vunpack.c.l.b16 %v216
      %v943 = vunpack.c.h.b16 %v216
      %v944 = vunpack.c.l.b16 %v217
      %v945 = vunpack.c.h.b16 %v217
      %v946 = vunpack.c.l.b16 %v218
      %v947 = vunpack.c.h.b16 %v218
      %v948 = vunpack.c.l.b16 %v219
      %v949 = vunpack.c.h.b16 %v219
      %v950 = vunpack.c.l.b16 %v220
      %v951 = vunpack.c.h.b16 %v220
      %v952 = vunpack.c.l.b16 %v221
      %v953 = vunpack.c.h.b16 %v221
      %v954 = vunpack.c.l.b16 %v222
      %v955 = vunpack.c.h.b16 %v222
      %v956 = vunpack.c.l.b16 %v223
      %v957 = vunpack.c.h.b16 %v223
      %v958 = vunpack.c.l.b16 %v224
      %v959 = vunpack.c.h.b16 %v224
      %v960 = vunpack.c.l.b16 %v225
      %v961 = vunpack.c.h.b16 %v225
      %v962 = vunpack.c.l.b16 %v226
      %v963 = vunpack.c.h.b16 %v226
      %v964 = vunpack.c.l.b16 %v227
      %v965 = vunpack.c.h.b16 %v227
      %v966 = vunpack.c.l.b16 %v228
      %v967 = vunpack.c.h.b16 %v228
      %v968 = vunpack.c.l.b16 %v229
      %v969 = vunpack.c.h.b16 %v229
      %v970 = vunpack.c.l.b16 %v230
      %v971 = vunpack.c.h.b16 %v230
      %v972 = vunpack.c.l.b16 %v231
      %v973 = vunpack.c.h.b16 %v231
      %v974 = vunpack.c.l.b16 %v232
      %v975 = vunpack.c.h.b16 %v232
      %v976 = vunpack.c.l.b16 %v233
      %v977 = vunpack.c.h.b16 %v233
      %v978 = vunpack.c.l.b16 %v234
      %v979 = vunpack.c.h.b16 %v234
      %v980 = vunpack.c.l.b16 %v235
      %v981 = vunpack.c.h.b16 %v235
      %v982 = vunpack.c.l.b16 %v236
      %v983 = vunpack.c.h.b16 %v236
      %v984 = vunpack.c.l.b16 %v237
      %v985 = vunpack.c.h.b16 %v237
      %v986 = vunpack.c.l.b16 %v238
      %v987 = vunpack.c.h.b16 %v238
      %v988 = vunpack.c.l.b16 %v239
      %v989 = vunpack.c.h.b16 %v239
      %v990 = vunpack.c.l.b16 %v240
      %v991 = vunpack.c.h.b16 %v240
      %v992 = vunpack.c.l.b16 %v241
      %v993 = vunpack.c.h.b16 %v241
      %v994 = vunpack.c.l.b16 %v242
      %v995 = vunpack.c.h.b16 %v242
      %v996 = vunpack.c.l.b16 %v243
      %v997 = vunpack.c.h.b16 %v243
      %v998 = vunpack.c.l.b16 %v244
      %v999 = vunpack.c.h.b16 %v244
      %v1000 = vunpack.c.l.b16 %v245
      %v1001 = vunpack.c.h.b16 %v245
      %v1002 = vunpack.c.l.b16 %v246
      %v1003 = vunpack.c.h.b16 %v246
      %v1004 = vunpack.c.l.b16 %v247
      %v1005 = vunpack.c.h.b16 %v247
      %v1006 = vunpack.c.l.b16 %v248
      %v1007 = vunpack.c.h.b16 %v248
      %v1008 = vunpack.c.l.b16 %v249
      %v1009 = vunpack.c.h.b16 %v249
      %v1010 = vunpack.c.l.b16 %v250
      %v1011 = vunpack.c.h.b16 %v250
      %v1012 = vunpack.c.l.b16 %v251
      %v1013 = vunpack.c.h.b16 %v251
      %v1014 = vunpack.c.l.b16 %v252
      %v1015 = vunpack.c.h.b16 %v252
      %v1016 = vunpack.c.l.b16 %v253
      %v1017 = vunpack.c.h.b16 %v253
      %v1018 = vunpack.c.l.b16 %v254
      %v1019 = vunpack.c.h.b16 %v254
      %v1020 = vunpack.c.l.b16 %v255
      %v1021 = vunpack.c.h.b16 %v255
      %v1022 = vunpack.c.l.b16 %v256
      %v1023 = vunpack.c.h.b16 %v256
      %v1024 = vunpack.c.l.b16 %v257
      %v1025 = vunpack.c.h.b16 %v257
      %v1026 = vunpack.c.l.b16 %v258
      %v1027 = vunpack.c.h.b16 %v258
      %v1028 = vunpack.c.l.b16 %v259
      %v1029 = vunpack.c.h.b16 %v259
      %v1030 = vunpack.c.l.b16 %v260
      %v1031 = vunpack.c.h.b16 %v260
      %v1032 = vunpack.c.l.b16 %v261
      %v1033 = vunpack.c.h.b16 %v261
      %v1034 = vunpack.c.l.b16 %v262
      %v1035 = vunpack.c.h.b16 %v262
      %v1036 = vunpack.c.l.b16 %v263
      %v1037 = vunpack.c.h.b16 %v263
      %v1038 = vunpack.c.l.b16 %v264
      %v1039 = vunpack.c.h.b16 %v264
      %v1040 = vunpack.c.l.b16 %v265
      %v1041 = vunpack.c.h.b16 %v265
      %v1042 = vunpack.c.l.b16 %v266
      %v1043 = vunpack.c.h.b16 %v266
      %v1044 = vunpack.c.l.b16 %v267
      %v1045 = vunpack.c.h.b16 %v267
      %v1046 = vunpack.c.l.b16 %v268
      %v1047 = vunpack.c.h.b16 %v268
      %v1048 = vunpack.c.l.b16 %v269
      %v1049 = vunpack.c.h.b16 %v269
      %v1050 = vunpack.c.l.b16 %v270
      %v1051 = vunpack.c.h.b16 %v270
      %v1052 = vunpack.c.l.b16 %v271
      %v1053 = vunpack.c.h.b16 %v271
      %v1054 = vunpack.c.l.b16 %v272
      %v1055 = vunpack.c.h.b16 %v272
      %v1056 = vunpack.c.l.b16 %v273
      %v1057 = vunpack.c.h.b16 %v273
      %v1058 = vunpack.c.l.b16 %v274
      %v1059 = vunpack.c.h.b16 %v274
      %v1060 = vunpack.c.l.b16 %v275
      %v1061 = vunpack.c.h.b16 %v275
      %v1062 = vunpack.c.l.b16 %v276
      %v1063 = vunpack.c.h.b16 %v276
      %v1064 = vunpack.c.l.b16 %v277
      %v1065 = vunpack.c.h.b16 %v277
      %v1066 = vunpack.c.l.b16 %v278
      %v1067 = vunpack.c.h.b16 %v278
      %v1068 = vunpack.c.l.b16 %v279
      %v1069 = vunpack.c.h.b16 %v279
      %v1070 = vunpack.c.l.b16 %v280
      %v1071 = vunpack.c.h.b16 %v280
      %v1072 = vunpack.c.l.b16 %v281
      %v1073 = vunpack.c.h.b16 %v281
      %v1074 = vunpack.c.l.b16 %v282
      %v1075 = vunpack.c.h.b16 %v282
      %v1076 = vunpack.c.l.b16 %v283
      %v1077 = vunpack.c.h.b16 %v283
      %v1078 = vunpack.c.l.b16 %v284
      %v1079 = vunpack.c.h.b16 %v284
      %v1080 = vunpack.c.l.b16 %v285
      %v1081 = vunpack.c.h.b16 %v285
      %v1082 = vunpack.c.l.b16 %v286
      %v1083 = vunpack.c.h.b16 %v286
      %v1084 = vunpack.c.l.b16 %v287
      %v1085 = vunpack.c.h.b16 %v287
      %v1086 = vunpack.c.l.b16 %v288
      %v1087 = vunpack.c.h.b16 %v288
      %v1088 = vunpack.c.l.b16 %v289
      %v1089 = vunpack.c.h.b16 %v289
      %v1090 = vunpack.c.l.b16 %v290
      %v1091 = vunpack.c.h.b16 %v290
      %v1092 = vunpack.c.l.b16 %v291
      %v1093 = vunpack.c.h.b16 %v291
      %v1094 = vunpack.c.l.b16 %v292
      %v1095 = vunpack.c.h.b16 %v292
      %v1096 = vunpack.c.l.b16 %v293
      %v1097 = vunpack.c.h.b16 %v293
      %v1098 = vunpack.c.l.b16 %v294
      %v1099 = vunpack.c.h.b16 %v294
      %v1100 = vunpack.c.l.b16 %v295
      %v1101 = vunpack.c.h.b16 %v295
      %v1102 = vunpack.c.l.b16 %v296
      %v1103 = vunpack.c.h.b16 %v296
      %v1104 = vunpack.c.l.b16 %v297
      %v1105 = vunpack.c.h.b16 %v297
      %v1106 = vunpack.c.l.b16 %v298
      %v1107 = vunpack.c.h.b16 %v298
      %v1108 = vunpack.c.l.b16 %v299
      %v1109 = vunpack.c.h.b16 %v299
      %v1110 = vunpack.c.l.b16 %v300
      %v1111 = vunpack.c.h.b16 %v300
      %v1112 = vunpack.c.l.b16 %v301
      %v1113 = vunpack.c.h.b16 %v301
      %v1114 = vunpack.c.l.b16 %v302
      %v1115 = vunpack.c.h.b16 %v302
      %v1116 = vunpack.c.l.b16 %v303
      %v1117 = vunpack.c.h.b16 %v303
      %v1118 = vunpack.c.l.b16 %v304
      %v1119 = vunpack.c.h.b16 %v304
      %v1120 = vunpack.c.l.b16 %v305
      %v1121 = vunpack.c.h.b16 %v305
      %v1122 = vunpack.c.l.b16 %v306
      %v1123 = vunpack.c.h.b16 %v306
      %v1124 = vunpack.c.l.b16 %v307
      %v1125 = vunpack.c.h.b16 %v307
      %v1126 = vunpack.c.l.b16 %v308
      %v1127 = vunpack.c.h.b16 %v308
      %v1128 = vunpack.c.l.b16 %v309
      %v1129 = vunpack.c.h.b16 %v309
      %v1130 = vunpack.c.l.b16 %v310
      %v1131 = vunpack.c.h.b16 %v310
      %v1132 = vunpack.c.l.b16 %v311
      %v1133 = vunpack.c.h.b16 %v311
      %v1134 = vunpack.c.l.b16 %v312
      %v1135 = vunpack.c.h.b16 %v312
      %v1136 = vunpack.c.l.b16 %v313
      %v1137 = vunpack.c.h.b16 %v313
      %v1138 = vunpack.c.l.b16 %v314
      %v1139 = vunpack.c.h.b16 %v314
      %v1140 = vunpack.c.l.b16 %v315
      %v1141 = vunpack.c.h.b16 %v315
      %v1142 = vunpack.c.l.b16 %v316
      %v1143 = vunpack.c.h.b16 %v316
      %v1144 = vunpack.c.l.b16 %v317
      %v1145 = vunpack.c.h.b16 %v317
      %v1146 = vunpack.c.l.b16 %v318
      %v1147 = vunpack.c.h.b16 %v318
      %v1148 = vunpack.c.l.b16 %v319
      %v1149 = vunpack.c.h.b16 %v319
      %v1150 = vunpack.c.l.b16 %v320
      %v1151 = vunpack.c.h.b16 %v320
      %v1152 = vunpack.c.l.b16 %v321
      %v1153 = vunpack.c.h.b16 %v321
      %v1154 = vunpack.c.l.b16 %v322
      %v1155 = vunpack.c.h.b16 %v322
      %v1156 = vunpack.c.l.b16 %v323
      %v1157 = vunpack.c.h.b16 %v323
      %v1158 = vunpack.c.l.b16 %v324
      %v1159 = vunpack.c.h.b16 %v324
      %v1160 = vunpack.c.l.b16 %v325
      %v1161 = vunpack.c.h.b16 %v325
      %v1162 = vunpack.c.l.b16 %v326
      %v1163 = vunpack.c.h.b16 %v326
      %v1164 = vunpack.c.l.b16 %v327
      %v1165 = vunpack.c.h.b16 %v327
      %v1166 = vunpack.c.l.b16 %v328
      %v1167 = vunpack.c.h.b16 %v328
      %v1168 = vunpack.c.l.b16 %v329
      %v1169 = vunpack.c.h.b16 %v329
      %v1170 = vunpack.c.l.b16 %v330
      %v1171 = vunpack.c.h.b16 %v330
      %v1172 = vunpack.c.l.b16 %v331
      %v1173 = vunpack.c.h.b16 %v331
      %v1174 = vunpack.c.l.b16 %v332
      %v1175 = vunpack.c.h.b16 %v332
      %v1176 = vunpack.c.l.b16 %v333
      %v1177 = vunpack.c.h.b16 %v333
      %v1178 = vunpack.c.l.b16 %v334
      %v1179 = vunpack.c.h.b16 %v334
      %v1180 = vunpack.c.l.b16 %v335
      %v1181 = vunpack.c.h.b16 %v335
      %v1182 = vunpack.c.l.b16 %v336
      %v1183 = vunpack.c.h.b16 %v336
      %v1184 = vunpack.c.l.b16 %v337
      %v1185 = vunpack.c.h.b16 %v337
      %v1186 = vunpack.c.l.b16 %v338
      %v1187 = vunpack.c.h.b16 %v338
      %v1188 = vunpack.c.l.b16 %v339
      %v1189 = vunpack.c.h.b16 %v339
      %v1190 = vunpack.c.l.b16 %v340
      %v1191 = vunpack.c.h.b16 %v340
      %v1192 = vunpack.c.l.b16 %v341
      %v1193 = vunpack.c.h.b16 %v341
      %v1194 = vunpack.c.l.b16 %v342
      %v1195 = vunpack.c.h.b16 %v342
      %v1196 = vunpack.c.l.b16 %v343
      %v1197 = vunpack.c.h.b16 %v343
      %v1198 = vunpack.c.l.b16 %v344
      %v1199 = vunpack.c.h.b16 %v344
      %v1200 = vunpack.c.l.b16 %v345
      %v1201 = vunpack.c.h.b16 %v345
      %v1202 = vunpack.c.l.b16 %v346
      %v1203 = vunpack.c.h.b16 %v346
      %v1204 = vunpack.c.l.b16 %v347
      %v1205 = vunpack.c.h.b16 %v347
      %v1206 = vunpack.c.l.b16 %v348
      %v1207 = vunpack.c.h.b16 %v348
      %v1208 = vunpack.c.l.b16 %v349
      %v1209 = vunpack.c.h.b16 %v349
      %v1210 = vunpack.c.l.b16 %v350
      %v1211 = vunpack.c.h.b16 %v350
      %v1212 = vunpack.c.l.b16 %v351
      %v1213 = vunpack.c.h.b16 %v351
      %v1214 = vunpack.c.l.b16 %v352
      %v1215 = vunpack.c.h.b16 %v352
      %v1216 = vunpack.c.l.b16 %v353
      %v1217 = vunpack.c.h.b16 %v353
      %v1218 = vunpack.c.l.b16 %v354
      %v1219 = vunpack.c.h.b16 %v354
      %v1220 = vunpack.c.l.b16 %v355
      %v1221 = vunpack.c.h.b16 %v355
      %v1222 = vunpack.c.l.b16 %v356
      %v1223 = vunpack.c.h.b16 %v356
      %v1224 = vunpack.c.l.b16 %v357
      %v1225 = vunpack.c.h.b16 %v357
      %v1226 = vunpack.c.l.b16 %v358
      %v1227 = vunpack.c.h.b16 %v358
      %v1228 = vunpack.c.l.b16 %v359
      %v1229 = vunpack.c.h.b16 %v359
      %v1230 = vunpack.c.l.b16 %v360
      %v1231 = vunpack.c.h.b16 %v360
      %v1232 = vunpack.c.l.b16 %v361
      %v1233 = vunpack.c.h.b16 %v361
      %v1234 = vunpack.c.l.b16 %v362
      %v1235 = vunpack.c.h.b16 %v362
      %v1236 = vunpack.c.l.b16 %v363
      %v1237 = vunpack.c.h.b16 %v363
      %v1238 = vunpack.c.l.b16 %v364
      %v1239 = vunpack.c.h.b16 %v364
      %v1240 = vunpack.c.l.b16 %v365
      %v1241 = vunpack.c.h.b16 %v365
      %v1242 = vunpack.c.l.b16 %v366
      %v1243 = vunpack.c.h.b16 %v366
      %v1244 = vunpack.c.l.b16 %v367
      %v1245 = vunpack.c.h.b16 %v367
      %v1246 = vunpack.c.l.b16 %v368
      %v1247 = vunpack.c.h.b16 %v368
      %v1248 = vunpack.c.l.b16 %v369
      %v1249 = vunpack.c.h.b16 %v369
      %v1250 = vunpack.c.l.b16 %v370
      %v1251 = vunpack.c.h.b16 %v370
      %v1252 = vunpack.c.l.b16 %v371
      %v1253 = vunpack.c.h.b16 %v371
      %v1254 = vunpack.c.l.b16 %v372
      %v1255 = vunpack.c.h.b16 %v372
      %v1256 = vunpack.c.l.b16 %v373
      %v1257 = vunpack.c.h.b16 %v373
      %v1258 = vunpack.c.l.b16 %v374
      %v1259 = vunpack.c.h.b16 %v374
      %v1260 = vunpack.c.l.b16 %v375
      %v1261 = vunpack.c.h.b16 %v375
      %v1262 = vunpack.c.l.b16 %v376
      %v1263 = vunpack.c.h.b16 %v376
      %v1264 = vunpack.c.l.b16 %v377
      %v1265 = vunpack.c.h.b16 %v377
      %v1266 = vunpack.c.l.b16 %v378
      %v1267 = vunpack.c.h.b16 %v378
      %v1268 = vunpack.c.l.b16 %v379
      %v1269 = vunpack.c.h.b16 %v379
      %v1270 = vunpack.c.l.b16 %v380
      %v1271 = vunpack.c.h.b16 %v380
      %v1272 = vunpack.c.l.b16 %v381
      %v1273 = vunpack.c.h.b16 %v381
      %v1274 = vunpack.c.l.b16 %v382
      %v1275 = vunpack.c.h.b16 %v382
      %v1276 = vunpack.c.l.b16 %v383
      %v1277 = vunpack.c.h.b16 %v383
      %v1278 = vunpack.c.l.b16 %v384
      %v1279 = vunpack.c.h.b16 %v384
      %v1280 = vunpack.c.l.b16 %v385
      %v1281 = vunpack.c.h.b16 %v385
      %v1282 = vunpack.c.l.b16 %v386
      %v1283 = vunpack.c.h.b16 %v386
      %v1284 = vunpack.c.l.b16 %v387
      %v1285 = vunpack.c.h.b16 %v387
      %v1286 = vunpack.c.l.b16 %v388
      %v1287 = vunpack.c.h.b16 %v388
      %v1288 = vunpack.c.l.b16 %v389
      %v1289 = vunpack.c.h.b16 %v389
      %v1290 = vunpack.c.l.b16 %v390
      %v1291 = vunpack.c.h.b16 %v390
      %v1292 = vunpack.c.l.b16 %v391
      %v1293 = vunpack.c.h.b16 %v391
      %v1294 = vunpack.c.l.b16 %v392
      %v1295 = vunpack.c.h.b16 %v392
      %v1296 = vunpack.c.l.b16 %v393
      %v1297 = vunpack.c.h.b16 %v393
      %v1298 = vunpack.c.l.b16 %v394
      %v1299 = vunpack.c.h.b16 %v394
      %v1300 = vunpack.c.l.b16 %v395
      %v1301 = vunpack.c.h.b16 %v395
      %v1302 = vunpack.c.l.b16 %v396
      %v1303 = vunpack.c.h.b16 %v396
      %v1304 = vunpack.c.l.b16 %v397
      %v1305 = vunpack.c.h.b16 %v397
      %v1306 = vunpack.c.l.b16 %v398
      %v1307 = vunpack.c.h.b16 %v398
      %v1308 = vunpack.c.l.b16 %v399
      %v1309 = vunpack.c.h.b16 %v399
      %v1310 = vunpack.c.l.b16 %v400
      %v1311 = vunpack.c.h.b16 %v400
      %v1312 = vunpack.c.l.b16 %v401
      %v1313 = vunpack.c.h.b16 %v401
      %v1314 = vunpack.c.l.b16 %v402
      %v1315 = vunpack.c.h.b16 %v402
      %v1316 = vunpack.c.l.b16 %v403
      %v1317 = vunpack.c.h.b16 %v403
      %v1318 = vunpack.c.l.b16 %v404
      %v1319 = vunpack.c.h.b16 %v404
      %v1320 = vunpack.c.l.b16 %v405
      %v1321 = vunpack.c.h.b16 %v405
      %v1322 = vunpack.c.l.b16 %v406
      %v1323 = vunpack.c.h.b16 %v406
      %v1324 = vunpack.c.l.b16 %v407
      %v1325 = vunpack.c.h.b16 %v407
      %v1326 = vunpack.c.l.b16 %v408
      %v1327 = vunpack.c.h.b16 %v408
      %v1328 = vunpack.c.l.b16 %v409
      %v1329 = vunpack.c.h.b16 %v409
      %v1330 = vunpack.c.l.b16 %v410
      %v1331 = vunpack.c.h.b16 %v410
      %v1332 = vunpack.c.l.b16 %v411
      %v1333 = vunpack.c.h.b16 %v411
      %v1334 = vunpack.c.l.b16 %v412
      %v1335 = vunpack.c.h.b16 %v412
      %v1336 = vunpack.c.l.b16 %v413
      %v1337 = vunpack.c.h.b16 %v413
      %v1338 = vunpack.c.l.b16 %v414
      %v1339 = vunpack.c.h.b16 %v414
      %v1340 = vunpack.c.l.b16 %v415
      %v1341 = vunpack.c.h.b16 %v415
      %v1342 = vunpack.c.l.b16 %v416
      %v1343 = vunpack.c.h.b16 %v416
      %v1344 = vunpack.c.l.b16 %v417
      %v1345 = vunpack.c.h.b16 %v417
      %v1346 = vpack.c.b16 %v914, %v898
      %v1347 = vpack.c.b16 %v915, %v899
      %v1348 = vpack.c.b16 %v916, %v900
      %v1349 = vpack.c.b16 %v917, %v901
      %v1350 = vpack.c.b16 %v918, %v902
      %v1351 = vpack.c.b16 %v919, %v903
      %v1352 = vpack.c.b16 %v920, %v904
      %v1353 = vpack.c.b16 %v921, %v905
      %v1354 = vpack.c.b16 %v922, %v906
      %v1355 = vpack.c.b16 %v923, %v907
      %v1356 = vpack.c.b16 %v924, %v908
      %v1357 = vpack.c.b16 %v925, %v909
      %v1358 = vpack.c.b16 %v926, %v910
      %v1359 = vpack.c.b16 %v927, %v911
      %v1360 = vpack.c.b16 %v928, %v912
      %v1361 = vpack.c.b16 %v929, %v913
      %v1362 = vpack.c.b16 %v946, %v930
      %v1363 = vpack.c.b16 %v947, %v931
      %v1364 = vpack.c.b16 %v948, %v932
      %v1365 = vpack.c.b16 %v949, %v933
      %v1366 = vpack.c.b16 %v950, %v934
      %v1367 = vpack.c.b16 %v951, %v935
      %v1368 = vpack.c.b16 %v952, %v936
      %v1369 = vpack.c.b16 %v953, %v937
      %v1370 = vpack.c.b16 %v954, %v938
      %v1371 = vpack.c.b16 %v955, %v939
      %v1372 = vpack.c.b16 %v956, %v940
      %v1373 = vpack.c.b16 %v957, %v941
      %v1374 = vpack.c.b16 %v958, %v942
      %v1375 = vpack.c.b16 %v959, %v943
      %v1376 = vpack.c.b16 %v960, %v944
      %v1377 = vpack.c.b16 %v961, %v945
      %v1378 = vpack.c.b16 %v978, %v962
      %v1379 = vpack.c.b16 %v979, %v963
      %v1380 = vpack.c.b16 %v980, %v964
      %v1381 = vpack.c.b16 %v981, %v965
      %v1382 = vpack.c.b16 %v982, %v966
      %v1383 = vpack.c.b16 %v983, %v967
      %v1384 = vpack.c.b16 %v984, %v968
      %v1385 = vpack.c.b16 %v985, %v969
      %v1386 = vpack.c.b16 %v986, %v970
      %v1387 = vpack.c.b16 %v987, %v971
      %v1388 = vpack.c.b16 %v988, %v972
      %v1389 = vpack.c.b16 %v989, %v973
      %v1390 = vpack.c.b16 %v990, %v974
      %v1391 = vpack.c.b16 %v991, %v975
      %v1392 = vpack.c.b16 %v992, %v976
      %v1393 = vpack.c.b16 %v993, %v977
      %v1394 = vpack.c.b16 %v1010, %v994
      %v1395 = vpack.c.b16 %v1011, %v995
      %v1396 = vpack.c.b16 %v1012, %v996
      %v1397 = vpack.c.b16 %v1013, %v997
      %v1398 = vpack.c.b16 %v1014, %v998
      %v1399 = vpack.c.b16 %v1015, %v999
      %v1400 = vpack.c.b16 %v1016, %v1000
      %v1401 = vpack.c.b16 %v1017, %v1001
      %v1402 = vpack.c.b16 %v1018, %v1002
      %v1403 = vpack.c.b16 %v1019, %v1003
      %v1404 = vpack.c.b16 %v1020, %v1004
      %v1405 = vpack.c.b16 %v1021, %v1005
      %v1406 = vpack.c.b16 %v1022, %v1006
      %v1407 = vpack.c.b16 %v1023, %v1007
      %v1408 = vpack.c.b16 %v1024, %v1008
      %v1409 = vpack.c.b16 %v1025, %v1009
      %v1410 = vpack.c.b16 %v1042, %v1026
      %v1411 = vpack.c.b16 %v1043, %v1027
      %v1412 = vpack.c.b16 %v1044, %v1028
      %v1413 = vpack.c.b16 %v1045, %v1029
      %v1414 = vpack.c.b16 %v1046, %v1030
      %v1415 = vpack.c.b16 %v1047, %v1031
      %v1416 = vpack.c.b16 %v1048, %v1032
      %v1417 = vpack.c.b16 %v1049, %v1033
      %v1418 = vpack.c.b16 %v1050, %v1034
      %v1419 = vpack.c.b16 %v1051, %v1035
      %v1420 = vpack.c.b16 %v1052, %v1036
      %v1421 = vpack.c.b16 %v1053, %v1037
      %v1422 = vpack.c.b16 %v1054, %v1038
      %v1423 = vpack.c.b16 %v1055, %v1039
      %v1424 = vpack.c.b16 %v1056, %v1040
      %v1425 = vpack.c.b16 %v1057, %v1041
      %v1426 = vpack.c.b16 %v1074, %v1058
      %v1427 = vpack.c.b16 %v1075, %v1059
      %v1428 = vpack.c.b16 %v1076, %v1060
      %v1429 = vpack.c.b16 %v1077, %v1061
      %v1430 = vpack.c.b16 %v1078, %v1062
      %v1431 = vpack.c.b16 %v1079, %v1063
      %v1432 = vpack.c.b16 %v1080, %v1064
      %v1433 = vpack.c.b16 %v1081, %v1065
      %v1434 = vpack.c.b16 %v1082, %v1066
      %v1435 = vpack.c.b16 %v1083, %v1067
      %v1436 = vpack.c.b16 %v1084, %v1068
      %v1437 = vpack.c.b16 %v1085, %v1069
      %v1438 = vpack.c.b16 %v1086, %v1070
      %v1439 = vpack.c.b16 %v1087, %v1071
      %v1440 = vpack.c.b16 %v1088, %v1072
      %v1441 = vpack.c.b16 %v1089, %v1073
      %v1442 = vpack.c.b16 %v1106, %v1090
      %v1443 = vpack.c.b16 %v1107, %v1091
      %v1444 = vpack.c.b16 %v1108, %v1092
      %v1445 = vpack.c.b16 %v1109, %v1093
      %v1446 = vpack.c.b16 %v1110, %v1094
      %v1447 = vpack.c.b16 %v1111, %v1095
      %v1448 = vpack.c.b16 %v1112, %v1096
      %v1449 = vpack.c.b16 %v1113, %v1097
      %v1450 = vpack.c.b16 %v1114, %v1098
      %v1451 = vpack.c.b16 %v1115, %v1099
      %v1452 = vpack.c.b16 %v1116, %v1100
      %v1453 = vpack.c.b16 %v1117, %v1101
      %v1454 = vpack.c.b16 %v1118, %v1102
      %v1455 = vpack.c.b16 %v1119, %v1103
      %v1456 = vpack.c.b16 %v1120, %v1104
      %v1457 = vpack.c.b16 %v1121, %v1105
      %v1458 = vpack.c.b16 %v1138, %v1122
      %v1459 = vpack.c.b16 %v1139, %v1123
      %v1460 = vpack.c.b16 %v1140, %v1124
      %v1461 = vpack.c.b16 %v1141, %v1125
      %v1462 = vpack.c.b16 %v1142, %v1126
      %v1463 = vpack.c.b16 %v1143, %v1127
      %v1464 = vpack.c.b16 %v1144, %v1128
      %v1465 = vpack.c.b16 %v1145, %v1129
      %v1466 = vpack.c.b16 %v1146, %v1130
      %v1467 = vpack.c.b16 %v1147, %v1131
      %v1468 = vpack.c.b16 %v1148, %v1132
      %v1469 = vpack.c.b16 %v1149, %v1133
      %v1470 = vpack.c.b16 %v1150, %v1134
      %v1471 = vpack.c.b16 %v1151, %v1135
      %v1472 = vpack.c.b16 %v1152, %v1136
      %v1473 = vpack.c.b16 %v1153, %v1137
      %v1474 = vpack.c.b16 %v1170, %v1154
      %v1475 = vpack.c.b16 %v1171, %v1155
      %v1476 = vpack.c.b16 %v1172, %v1156
      %v1477 = vpack.c.b16 %v1173, %v1157
      %v1478 = vpack.c.b16 %v1174, %v1158
      %v1479 = vpack.c.b16 %v1175, %v1159
      %v1480 = vpack.c.b16 %v1176, %v1160
      %v1481 = vpack.c.b16 %v1177, %v1161
      %v1482 = vpack.c.b16 %v1178, %v1162
      %v1483 = vpack.c.b16 %v1179, %v1163
      %v1484 = vpack.c.b16 %v1180, %v1164
      %v1485 = vpack.c.b16 %v1181, %v1165
      %v1486 = vpack.c.b16 %v1182, %v1166
      %v1487 = vpack.c.b16 %v1183, %v1167
      %v1488 = vpack.c.b16 %v1184, %v1168
      %v1489 = vpack.c.b16 %v1185, %v1169
      %v1490 = vpack.c.b16 %v1202, %v1186
      %v1491 = vpack.c.b16 %v1203, %v1187
      %v1492 = vpack.c.b16 %v1204, %v1188
      %v1493 = vpack.c.b16 %v1205, %v1189
      %v1494 = vpack.c.b16 %v1206, %v1190
      %v1495 = vpack.c.b16 %v1207, %v1191
      %v1496 = vpack.c.b16 %v1208, %v1192
      %v1497 = vpack.c.b16 %v1209, %v1193
      %v1498 = vpack.c.b16 %v1210, %v1194
      %v1499 = vpack.c.b16 %v1211, %v1195
      %v1500 = vpack.c.b16 %v1212, %v1196
      %v1501 = vpack.c.b16 %v1213, %v1197
      %v1502 = vpack.c.b16 %v1214, %v1198
      %v1503 = vpack.c.b16 %v1215, %v1199
      %v1504 = vpack.c.b16 %v1216, %v1200
      %v1505 = vpack.c.b16 %v1217, %v1201
      %v1506 = vpack.c.b16 %v1234, %v1218
      %v1507 = vpack.c.b16 %v1235, %v1219
      %v1508 = vpack.c.b16 %v1236, %v1220
      %v1509 = vpack.c.b16 %v1237, %v1221
      %v1510 = vpack.c.b16 %v1238, %v1222
      %v1511 = vpack.c.b16 %v1239, %v1223
      %v1512 = vpack.c.b16 %v1240, %v1224
      %v1513 = vpack.c.b16 %v1241, %v1225
      %v1514 = vpack.c.b16 %v1242, %v1226
      %v1515 = vpack.c.b16 %v1243, %v1227
      %v1516 = vpack.c.b16 %v1244, %v1228
      %v1517 = vpack.c.b16 %v1245, %v1229
      %v1518 = vpack.c.b16 %v1246, %v1230
      %v1519 = vpack.c.b16 %v1247, %v1231
      %v1520 = vpack.c.b16 %v1248, %v1232
      %v1521 = vpack.c.b16 %v1249, %v1233
      %v1522 = vpack.c.b16 %v1266, %v1250
      %v1523 = vpack.c.b16 %v1267, %v1251
      %v1524 = vpack.c.b16 %v1268, %v1252
      %v1525 = vpack.c.b16 %v1269, %v1253
      %v1526 = vpack.c.b16 %v1270, %v1254
      %v1527 = vpack.c.b16 %v1271, %v1255
      %v1528 = vpack.c.b16 %v1272, %v1256
      %v1529 = vpack.c.b16 %v1273, %v1257
      %v1530 = vpack.c.b16 %v1274, %v1258
      %v1531 = vpack.c.b16 %v1275, %v1259
      %v1532 = vpack.c.b16 %v1276, %v1260
      %v1533 = vpack.c.b16 %v1277, %v1261
      %v1534 = vpack.c.b16 %v1278, %v1262
      %v1535 = vpack.c.b16 %v1279, %v1263
      %v1536 = vpack.c.b16 %v1280, %v1264
      %v1537 = vpack.c.b16 %v1281, %v1265
      %v1538 = vpack.c.b16 %v1298, %v1282
      %v1539 = vpack.c.b16 %v1299, %v1283
      %v1540 = vpack.c.b16 %v1300, %v1284
      %v1541 = vpack.c.b16 %v1301, %v1285
      %v1542 = vpack.c.b16 %v1302, %v1286
      %v1543 = vpack.c.b16 %v1303, %v1287
      %v1544 = vpack.c.b16 %v1304, %v1288
      %v1545 = vpack.c.b16 %v1305, %v1289
      %v1546 = vpack.c.b16 %v1306, %v1290
      %v1547 = vpack.c.b16 %v1307, %v1291
      %v1548 = vpack.c.b16 %v1308, %v1292
      %v1549 = vpack.c.b16 %v1309, %v1293
      %v1550 = vpack.c.b16 %v1310, %v1294
      %v1551 = vpack.c.b16 %v1311, %v1295
      %v1552 = vpack.c.b16 %v1312, %v1296
      %v1553 = vpack.c.b16 %v1313, %v1297
      %v1554 = vpack.c.b16 %v1330, %v1314
      %v1555 = vpack.c.b16 %v1331, %v1315
      %v1556 = vpack.c.b16 %v1332, %v1316
      %v1557 = vpack.c.b16 %v1333, %v1317
      %v1558 = vpack.c.b16 %v1334, %v1318
      %v1559 = vpack.c.b16 %v1335, %v1319
      %v1560 = vpack.c.b16 %v1336, %v1320
      %v1561 = vpack.c.b16 %v1337, %v1321
      %v1562 = vpack.c.b16 %v1338, %v1322
      %v1563 = vpack.c.b16 %v1339, %v1323
      %v1564 = vpack.c.b16 %v1340, %v1324
      %v1565 = vpack.c.b16 %v1341, %v1325
      %v1566 = vpack.c.b16 %v1342, %v1326
      %v1567 = vpack.c.b16 %v1343, %v1327
      %v1568 = vpack.c.b16 %v1344, %v1328
      %v1569 = vpack.c.b16 %v1345, %v1329
      %v2050 = vunpack.c.l.b16 %v418
      %v2051 = vunpack.c.l.b16 %v419
      %v2052 = vunpack.c.l.b16 %v420
      %v2053 = vunpack.c.l.b16 %v421
      %v2054 = vunpack.c.l.b16 %v422
      %v2055 = vunpack.c.l.b16 %v423
      %v2056 = vunpack.c.l.b16 %v424
      %v2057 = vunpack.c.l.b16 %v425
      %v2058 = vunpack.c.l.b16 %v426
      %v2059 = vunpack.c.l.b16 %v427
      %v2060 = vunpack.c.l.b16 %v428
      %v2061 = vunpack.c.l.b16 %v429
      %v2062 = vunpack.c.l.b16 %v430
      %v2063 = vunpack.c.l.b16 %v431
      %v2064 = vunpack.c.l.b16 %v432
      %v2065 = vunpack.c.l.b16 %v433
      %v2066 = vunpack.c.l.b16 %v434
      %v2067 = vunpack.c.l.b16 %v435
      %v2068 = vunpack.c.l.b16 %v436
      %v2069 = vunpack.c.l.b16 %v437
      %v2070 = vunpack.c.l.b16 %v438
      %v2071 = vunpack.c.l.b16 %v439
      %v2072 = vunpack.c.l.b16 %v440
      %v2073 = vunpack.c.l.b16 %v441
      %v2074 = vunpack.c.l.b16 %v442
      %v2075 = vunpack.c.l.b16 %v443
      %v2076 = vunpack.c.l.b16 %v444
      %v2077 = vunpack.c.l.b16 %v445
      %v2078 = vunpack.c.l.b16 %v446
      %v2079 = vunpack.c.l.b16 %v447
      %v2080 = vunpack.c.l.b16 %v448
      %v2081 = vunpack.c.l.b16 %v449
      %v2082 = vunpack.c.l.b16 %v450
      %v2083 = vunpack.c.l.b16 %v451
      %v2084 = vunpack.c.l.b16 %v452
      %v2085 = vunpack.c.l.b16 %v453
      %v2086 = vunpack.c.l.b16 %v454
      %v2087 = vunpack.c.l.b16 %v455
      %v2088 = vunpack.c.l.b16 %v456
      %v2089 = vunpack.c.l.b16 %v457
      %v2090 = vunpack.c.l.b16 %v458
      %v2091 = vunpack.c.l.b16 %v459
      %v2092 = vunpack.c.l.b16 %v460
      %v2093 = vunpack.c.l.b16 %v461
      %v2094 = vunpack.c.l.b16 %v462
      %v2095 = vunpack.c.l.b16 %v463
      %v2096 = vunpack.c.l.b16 %v464
      %v2097 = vunpack.c.l.b16 %v465
      %v2098 = vunpack.c.l.b16 %v466
      %v2099 = vunpack.c.l.b16 %v467
      %v2100 = vunpack.c.l.b16 %v468
      %v2101 = vunpack.c.l.b16 %v469
      %v2102 = vunpack.c.l.b16 %v470
      %v2103 = vunpack.c.l.b16 %v471
      %v2104 = vunpack.c.l.b16 %v472
      %v2105 = vunpack.c.l.b16 %v473
      %v2106 = vunpack.c.l.b16 %v474
      %v2107 = vunpack.c.l.b16 %v475
      %v2108 = vunpack.c.l.b16 %v476
      %v2109 = vunpack.c.l.b16 %v477
      %v2110 = vunpack.c.l.b16 %v478
      %v2111 = vunpack.c.l.b16 %v479
      %v2112 = vunpack.c.l.b16 %v480
      %v2113 = vunpack.c.l.b16 %v481
      %v2114 = vunpack.c.l.b16 %v482
      %v2115 = vunpack.c.l.b16 %v483
      %v2116 = vunpack.c.l.b16 %v484
      %v2117 = vunpack.c.l.b16 %v485
      %v2118 = vunpack.c.l.b16 %v486
      %v2119 = vunpack.c.l.b16 %v487
      %v2120 = vunpack.c.l.b16 %v488
      %v2121 = vunpack.c.l.b16 %v489
      %v2122 = vunpack.c.l.b16 %v490
      %v2123 = vunpack.c.l.b16 %v491
      %v2124 = vunpack.c.l.b16 %v492
      %v2125 = vunpack.c.l.b16 %v493
      %v2126 = vunpack.c.l.b16 %v494
      %v2127 = vunpack.c.l.b16 %v495
      %v2128 = vunpack.c.l.b16 %v496
      %v2129 = vunpack.c.l.b16 %v497
      %v2130 = vunpack.c.l.b16 %v498
      %v2131 = vunpack.c.l.b16 %v499
      %v2132 = vunpack.c.l.b16 %v500
      %v2133 = vunpack.c.l.b16 %v501
      %v2134 = vunpack.c.l.b16 %v502
      %v2135 = vunpack.c.l.b16 %v503
      %v2136 = vunpack.c.l.b16 %v504
      %v2137 = vunpack.c.l.b16 %v505
      %v2138 = vunpack.c.l.b16 %v506
      %v2139 = vunpack.c.l.b16 %v507
      %v2140 = vunpack.c.l.b16 %v508
      %v2141 = vunpack.c.l.b16 %v509
      %v2142 = vunpack.c.l.b16 %v510
      %v2143 = vunpack.c.l.b16 %v511
      %v2144 = vunpack.c.l.b16 %v512
      %v2145 = vunpack.c.l.b16 %v513
      %v2146 = vunpack.c.l.b16 %v514
      %v2147 = vunpack.c.l.b16 %v515
      %v2148 = vunpack.c.l.b16 %v516
      %v2149 = vunpack.c.l.b16 %v517
      %v2150 = vunpack.c.l.b16 %v518
      %v2151 = vunpack.c.l.b16 %v519
      %v2152 = vunpack.c.l.b16 %v520
      %v2153 = vunpack.c.l.b16 %v521
      %v2154 = vunpack.c.l.b16 %v522
      %v2155 = vunpack.c.l.b16 %v523
      %v2156 = vunpack.c.l.b16 %v524
      %v2157 = vunpack.c.l.b16 %v525
      %v2158 = vunpack.c.l.b16 %v526
      %v2159 = vunpack.c.l.b16 %v527
      %v2160 = vunpack.c.l.b16 %v528
      %v2161 = vunpack.c.l.b16 %v529
      %v2162 = vunpack.c.l.b16 %v530
      %v2163 = vunpack.c.l.b16 %v531
      %v2164 = vunpack.c.l.b16 %v532
      %v2165 = vunpack.c.l.b16 %v533
      %v2166 = vunpack.c.l.b16 %v534
      %v2167 = vunpack.c.l.b16 %v535
      %v2168 = vunpack.c.l.b16 %v536
      %v2169 = vunpack.c.l.b16 %v537
      %v2170 = vunpack.c.l.b16 %v538
      %v2171 = vunpack.c.l.b16 %v539
      %v2172 = vunpack.c.l.b16 %v540
      %v2173 = vunpack.c.l.b16 %v541
      %v2174 = vunpack.c.l.b16 %v542
      %v2175 = vunpack.c.l.b16 %v543
      %v2176 = vunpack.c.l.b16 %v544
      %v2177 = vunpack.c.l.b16 %v545
      %v2178 = vunpack.c.l.b16 %v546
      %v2179 = vunpack.c.l.b16 %v547
      %v2180 = vunpack.c.l.b16 %v548
      %v2181 = vunpack.c.l.b16 %v549
      %v2182 = vunpack.c.l.b16 %v550
      %v2183 = vunpack.c.l.b16 %v551
      %v2184 = vunpack.c.l.b16 %v552
      %v2185 = vunpack.c.l.b16 %v553
      %v2186 = vunpack.c.l.b16 %v554
      %v2187 = vunpack.c.l.b16 %v555
      %v2188 = vunpack.c.l.b16 %v556
      %v2189 = vunpack.c.l.b16 %v557
      %v2190 = vunpack.c.l.b16 %v558
      %v2191 = vunpack.c.l.b16 %v559
      %v2192 = vunpack.c.l.b16 %v560
      %v2193 = vunpack.c.l.b16 %v561
      %v2194 = vunpack.c.l.b16 %v562
      %v2195 = vunpack.c.l.b16 %v563
      %v2196 = vunpack.c.l.b16 %v564
      %v2197 = vunpack.c.l.b16 %v565
      %v2198 = vunpack.c.l.b16 %v566
      %v2199 = vunpack.c.l.b16 %v567
      %v2200 = vunpack.c.l.b16 %v568
      %v2201 = vunpack.c.l.b16 %v569
      %v2202 = vunpack.c.l.b16 %v570
      %v2203 = vunpack.c.l.b16 %v571
      %v2204 = vunpack.c.l.b16 %v572
      %v2205 = vunpack.c.l.b16 %v573
      %v2206 = vunpack.c.l.b16 %v574
      %v2207 = vunpack.c.l.b16 %v575
      %v2208 = vunpack.c.l.b16 %v576
      %v2209 = vunpack.c.l.b16 %v577
      %v2210 = vunpack.c.l.b16 %v578
      %v2211 = vunpack.c.l.b16 %v579
      %v2212 = vunpack.c.l.b16 %v580
      %v2213 = vunpack.c.l.b16 %v581
      %v2214 = vunpack.c.l.b16 %v582
      %v2215 = vunpack.c.l.b16 %v583
      %v2216 = vunpack.c.l.b16 %v584
      %v2217 = vunpack.c.l.b16 %v585
      %v2218 = vunpack.c.l.b16 %v586
      %v2219 = vunpack.c.l.b16 %v587
      %v2220 = vunpack.c.l.b16 %v588
      %v2221 = vunpack.c.l.b16 %v589
      %v2222 = vunpack.c.l.b16 %v590
      %v2223 = vunpack.c.l.b16 %v591
      %v2224 = vunpack.c.l.b16 %v592
      %v2225 = vunpack.c.l.b16 %v593
      %v2226 = vunpack.c.l.b16 %v594
      %v2227 = vunpack.c.l.b16 %v595
      %v2228 = vunpack.c.l.b16 %v596
      %v2229 = vunpack.c.l.b16 %v597
      %v2230 = vunpack.c.l.b16 %v598
      %v2231 = vunpack.c.l.b16 %v599
      %v2232 = vunpack.c.l.b16 %v600
      %v2233 = vunpack.c.l.b16 %v601
      %v2234 = vunpack.c.l.b16 %v602
      %v2235 = vunpack.c.l.b16 %v603
      %v2236 = vunpack.c.l.b16 %v604
      %v2237 = vunpack.c.l.b16 %v605
      %v2238 = vunpack.c.l.b16 %v606
      %v2239 = vunpack.c.l.b16 %v607
      %v2240 = vunpack.c.l.b16 %v608
      %v2241 = vunpack.c.l.b16 %v609
      %v2242 = vunpack.c.l.b16 %v610
      %v2243 = vunpack.c.l.b16 %v611
      %v2244 = vunpack.c.l.b16 %v612
      %v2245 = vunpack.c.l.b16 %v613
      %v2246 = vunpack.c.l.b16 %v614
      %v2247 = vunpack.c.l.b16 %v615
      %v2248 = vunpack.c.l.b16 %v616
      %v2249 = vunpack.c.l.b16 %v617
      %v2250 = vunpack.c.l.b16 %v618
      %v2251 = vunpack.c.l.b16 %v619
      %v2252 = vunpack.c.l.b16 %v620
      %v2253 = vunpack.c.l.b16 %v621
      %v2254 = vunpack.c.l.b16 %v622
      %v2255 = vunpack.c.l.b16 %v623
      %v2256 = vunpack.c.l.b16 %v624
      %v2257 = vunpack.c.l.b16 %v625
      %v2258 = vunpack.c.l.b16 %v626
      %v2259 = vunpack.c.l.b16 %v627
      %v2260 = vunpack.c.l.b16 %v628
      %v2261 = vunpack.c.l.b16 %v629
      %v2262 = vunpack.c.l.b16 %v630
      %v2263 = vunpack.c.l.b16 %v631
      %v2264 = vunpack.c.l.b16 %v632
      %v2265 = vunpack.c.l.b16 %v633
      %v2266 = vunpack.c.l.b16 %v634
      %v2267 = vunpack.c.l.b16 %v635
      %v2268 = vunpack.c.l.b16 %v636
      %v2269 = vunpack.c.l.b16 %v637
      %v2270 = vunpack.c.l.b16 %v638
      %v2271 = vunpack.c.l.b16 %v639
      %v2272 = vunpack.c.l.b16 %v640
      %v2273 = vunpack.c.l.b16 %v641
      %v2274 = vunpack.c.l.b16 %v642
      %v2275 = vunpack.c.l.b16 %v643
      %v2276 = vunpack.c.l.b16 %v644
      %v2277 = vunpack.c.l.b16 %v645
      %v2278 = vunpack.c.l.b16 %v646
      %v2279 = vunpack.c.l.b16 %v647
      %v2280 = vunpack.c.l.b16 %v648
      %v2281 = vunpack.c.l.b16 %v649
      %v2282 = vunpack.c.l.b16 %v650
      %v2283 = vunpack.c.l.b16 %v651
      %v2284 = vunpack.c.l.b16 %v652
      %v2285 = vunpack.c.l.b16 %v653
      %v2286 = vunpack.c.l.b16 %v654
      %v2287 = vunpack.c.l.b16 %v655
      %v2288 = vunpack.c.l.b16 %v656
      %v2289 = vunpack.c.l.b16 %v657
      %v2290 = vunpack.c.l.b16 %v658
      %v2291 = vunpack.c.l.b16 %v659
      %v2292 = vunpack.c.l.b16 %v660
      %v2293 = vunpack.c.l.b16 %v661
      %v2294 = vunpack.c.l.b16 %v662
      %v2295 = vunpack.c.l.b16 %v663
      %v2296 = vunpack.c.l.b16 %v664
      %v2297 = vunpack.c.l.b16 %v665
      %v2298 = vunpack.c.l.b16 %v666
      %v2299 = vunpack.c.l.b16 %v667
      %v2300 = vunpack.c.l.b16 %v668
      %v2301 = vunpack.c.l.b16 %v669
      %v2302 = vunpack.c.l.b16 %v670
      %v2303 = vunpack.c.l.b16 %v671
      %v2304 = vunpack.c.l.b16 %v672
      %v2305 = vunpack.c.l.b16 %v673
      %v2306 = vpack.c.b16 %v2051, %v2050
      %v2307 = vpack.c.b16 %v2053, %v2052
      %v2308 = vpack.c.b16 %v2055, %v2054
      %v2309 = vpack.c.b16 %v2057, %v2056
      %v2310 = vpack.c.b16 %v2059, %v2058
      %v2311 = vpack.c.b16 %v2061, %v2060
      %v2312 = vpack.c.b16 %v2063, %v2062
      %v2313 = vpack.c.b16 %v2065, %v2064
      %v2314 = vpack.c.b16 %v2067, %v2066
      %v2315 = vpack.c.b16 %v2069, %v2068
      %v2316 = vpack.c.b16 %v2071, %v2070
      %v2317 = vpack.c.b16 %v2073, %v2072
      %v2318 = vpack.c.b16 %v2075, %v2074
      %v2319 = vpack.c.b16 %v2077, %v2076
      %v2320 = vpack.c.b16 %v2079, %v2078
      %v2321 = vpack.c.b16 %v2081, %v2080
      %v2322 = vpack.c.b16 %v2083, %v2082
      %v2323 = vpack.c.b16 %v2085, %v2084
      %v2324 = vpack.c.b16 %v2087, %v2086
      %v2325 = vpack.c.b16 %v2089, %v2088
      %v2326 = vpack.c.b16 %v2091, %v2090
      %v2327 = vpack.c.b16 %v2093, %v2092
      %v2328 = vpack.c.b16 %v2095, %v2094
      %v2329 = vpack.c.b16 %v2097, %v2096
      %v2330 = vpack.c.b16 %v2099, %v2098
      %v2331 = vpack.c.b16 %v2101, %v2100
      %v2332 = vpack.c.b16 %v2103, %v2102
      %v2333 = vpack.c.b16 %v2105, %v2104
      %v2334 = vpack.c.b16 %v2107, %v2106
      %v2335 = vpack.c.b16 %v2109, %v2108
      %v2336 = vpack.c.b16 %v2111, %v2110
      %v2337 = vpack.c.b16 %v2113, %v2112
      %v2338 = vpack.c.b16 %v2115, %v2114
      %v2339 = vpack.c.b16 %v2117, %v2116
      %v2340 = vpack.c.b16 %v2119, %v2118
      %v2341 = vpack.c.b16 %v2121, %v2120
      %v2342 = vpack.c.b16 %v2123, %v2122
      %v2343 = vpack.c.b16 %v2125, %v2124
      %v2344 = vpack.c.b16 %v2127, %v2126
      %v2345 = vpack.c.b16 %v2129, %v2128
      %v2346 = vpack.c.b16 %v2131, %v2130
      %v2347 = vpack.c.b16 %v2133, %v2132
      %v2348 = vpack.c.b16 %v2135, %v2134
      %v2349 = vpack.c.b16 %v2137, %v2136
      %v2350 = vpack.c.b16 %v2139, %v2138
      %v2351 = vpack.c.b16 %v2141, %v2140
      %v2352 = vpack.c.b16 %v2143, %v2142
      %v2353 = vpack.c.b16 %v2145, %v2144
      %v2354 = vpack.c.b16 %v2147, %v2146
      %v2355 = vpack.c.b16 %v2149, %v2148
      %v2356 = vpack.c.b16 %v2151, %v2150
      %v2357 = vpack.c.b16 %v2153, %v2152
      %v2358 = vpack.c.b16 %v2155, %v2154
      %v2359 = vpack.c.b16 %v2157, %v2156
      %v2360 = vpack.c.b16 %v2159, %v2158
      %v2361 = vpack.c.b16 %v2161, %v2160
      %v2362 = vpack.c.b16 %v2163, %v2162
      %v2363 = vpack.c.b16 %v2165, %v2164
      %v2364 = vpack.c.b16 %v2167, %v2166
      %v2365 = vpack.c.b16 %v2169, %v2168
      %v2366 = vpack.c.b16 %v2171, %v2170
      %v2367 = vpack.c.b16 %v2173, %v2172
      %v2368 = vpack.c.b16 %v2175, %v2174
      %v2369 = vpack.c.b16 %v2177, %v2176
      %v2370 = vpack.c.b16 %v2179, %v2178
      %v2371 = vpack.c.b16 %v2181, %v2180
      %v2372 = vpack.c.b16 %v2183, %v2182
      %v2373 = vpack.c.b16 %v2185, %v2184
      %v2374 = vpack.c.b16 %v2187, %v2186
      %v2375 = vpack.c.b16 %v2189, %v2188
      %v2376 = vpack.c.b16 %v2191, %v2190
      %v2377 = vpack.c.b16 %v2193, %v2192
      %v2378 = vpack.c.b16 %v2195, %v2194
      %v2379 = vpack.c.b16 %v2197, %v2196
      %v2380 = vpack.c.b16 %v2199, %v2198
      %v2381 = vpack.c.b16 %v2201, %v2200
      %v2382 = vpack.c.b16 %v2203, %v2202
      %v2383 = vpack.c.b16 %v2205, %v2204
      %v2384 = vpack.c.b16 %v2207, %v2206
      %v2385 = vpack.c.b16 %v2209, %v2208
      %v2386 = vpack.c.b16 %v2211, %v2210
      %v2387 = vpack.c.b16 %v2213, %v2212
      %v2388 = vpack.c.b16 %v2215, %v2214
      %v2389 = vpack.c.b16 %v2217, %v2216
      %v2390 = vpack.c.b16 %v2219, %v2218
      %v2391 = vpack.c.b16 %v2221, %v2220
      %v2392 = vpack.c.b16 %v2223, %v2222
      %v2393 = vpack.c.b16 %v2225, %v2224
      %v2394 = vpack.c.b16 %v2227, %v2226
      %v2395 = vpack.c.b16 %v2229, %v2228
      %v2396 = vpack.c.b16 %v2231, %v2230
      %v2397 = vpack.c.b16 %v2233, %v2232
      %v2398 = vpack.c.b16 %v2235, %v2234
      %v2399 = vpack.c.b16 %v2237, %v2236
      %v2400 = vpack.c.b16 %v2239, %v2238
      %v2401 = vpack.c.b16 %v2241, %v2240
      %v2402 = vpack.c.b16 %v2243, %v2242
      %v2403 = vpack.c.b16 %v2245, %v2244
      %v2404 = vpack.c.b16 %v2247, %v2246
      %v2405 = vpack.c.b16 %v2249, %v2248
      %v2406 = vpack.c.b16 %v2251, %v2250
      %v2407 = vpack.c.b16 %v2253, %v2252
      %v2408 = vpack.c.b16 %v2255, %v2254
      %v2409 = vpack.c.b16 %v2257, %v2256
      %v2410 = vpack.c.b16 %v2259, %v2258
      %v2411 = vpack.c.b16 %v2261, %v2260
      %v2412 = vpack.c.b16 %v2263, %v2262
      %v2413 = vpack.c.b16 %v2265, %v2264
      %v2414 = vpack.c.b16 %v2267, %v2266
      %v2415 = vpack.c.b16 %v2269, %v2268
      %v2416 = vpack.c.b16 %v2271, %v2270
      %v2417 = vpack.c.b16 %v2273, %v2272
      %v2418 = vpack.c.b16 %v2275, %v2274
      %v2419 = vpack.c.b16 %v2277, %v2276
      %v2420 = vpack.c.b16 %v2279, %v2278
      %v2421 = vpack.c.b16 %v2281, %v2280
      %v2422 = vpack.c.b16 %v2283, %v2282
      %v2423 = vpack.c.b16 %v2285, %v2284
      %v2424 = vpack.c.b16 %v2287, %v2286
      %v2425 = vpack.c.b16 %v2289, %v2288
      %v2426 = vpack.c.b16 %v2291, %v2290
      %v2427 = vpack.c.b16 %v2293, %v2292
      %v2428 = vpack.c.b16 %v2295, %v2294
      %v2429 = vpack.c.b16 %v2297, %v2296
      %v2430 = vpack.c.b16 %v2299, %v2298
      %v2431 = vpack.c.b16 %v2301, %v2300
      %v2432 = vpack.c.b16 %v2303, %v2302
      %v2433 = vpack.c.b16 %v2305, %v2304
      %2562 = vmatprep.subr.bf16.mxu0 0
      %2563 = vmatpush1.bf16.msra.mxu0 %v2313
      %2564 = vmatprep.subr.bf16.mxu0 0
      %2565 = vmatpush1.bf16.msra.mxu0 %v2312
      %2566 = vmatprep.subr.bf16.mxu0 0
      %2567 = vmatpush1.bf16.msra.mxu0 %v2311
      %2568 = vmatprep.subr.bf16.mxu0 0
      %2569 = vmatpush1.bf16.msra.mxu0 %v2310
      %2570 = vmatprep.subr.bf16.mxu0 0
      %2571 = vmatpush1.bf16.msra.mxu0 %v2309
      %2572 = vmatprep.subr.bf16.mxu0 0
      %2573 = vmatpush1.bf16.msra.mxu0 %v2308
      %2574 = vmatprep.subr.bf16.mxu0 0
      %2575 = vmatpush1.bf16.msra.mxu0 %v2307
      %2576 = vmatprep.subr.bf16.mxu0 0
      %2577 = vmatpush1.bf16.msra.mxu0 %v2306
      %2578 = vmatprep.subr.bf16.mxu0 0
      %2579 = vmatpush2.bf16.msra.mxu0 %v2321
      %2580 = vmatprep.subr.bf16.mxu0 0
      %2581 = vmatpush2.bf16.msra.mxu0 %v2320
      %2582 = vmatprep.subr.bf16.mxu0 0
      %2583 = vmatpush2.bf16.msra.mxu0 %v2319
      %2584 = vmatprep.subr.bf16.mxu0 0
      %2585 = vmatpush2.bf16.msra.mxu0 %v2318
      %2586 = vmatprep.subr.bf16.mxu0 0
      %2587 = vmatpush2.bf16.msra.mxu0 %v2317
      %2588 = vmatprep.subr.bf16.mxu0 0
      %2589 = vmatpush2.bf16.msra.mxu0 %v2316
      %2590 = vmatprep.subr.bf16.mxu0 0
      %2591 = vmatpush2.bf16.msra.mxu0 %v2315
      %2592 = vmatprep.subr.bf16.mxu0 0
      %2593 = vmatpush2.bf16.msra.mxu0 %v2314
      %2594 = vmatprep.mubr.bf16.mxu0 %v1347
      %2595 = vmatmul.mubr.bf16.gmra.mxu0 %v1346
      %v2596 = vpop.f32.mrf.mxu0
      %v2597 = vadd.f32 0.0, %v2596
      %v2598 = vpop.f32.mrf.mxu0
      %v2599 = vpop.f32.mrf.mxu0
      %v2600 = vadd.f32 0.0, %v2599
      %v2601 = vpop.f32.mrf.mxu0
      %2602 = vmatprep.mubr.bf16.mxu0 %v1363
      %2603 = vmatmul.mubr.bf16.gmra.mxu0 %v1362
      %v2604 = vpop.f32.mrf.mxu0
      %v2605 = vadd.f32 0.0, %v2604
      %v2606 = vpop.f32.mrf.mxu0
      %v2607 = vpop.f32.mrf.mxu0
      %v2608 = vadd.f32 0.0, %v2607
      %v2609 = vpop.f32.mrf.mxu0
      %2610 = vmatprep.mubr.bf16.mxu0 %v1379
      %2611 = vmatmul.mubr.bf16.gmra.mxu0 %v1378
      %v2612 = vpop.f32.mrf.mxu0
      %v2613 = vadd.f32 0.0, %v2612
      %v2614 = vpop.f32.mrf.mxu0
      %v2615 = vpop.f32.mrf.mxu0
      %v2616 = vadd.f32 0.0, %v2615
      %v2617 = vpop.f32.mrf.mxu0
      %2618 = vmatprep.mubr.bf16.mxu0 %v1395
      %2619 = vmatmul.mubr.bf16.gmra.mxu0 %v1394
      %v2620 = vpop.f32.mrf.mxu0
      %v2621 = vadd.f32 0.0, %v2620
      %v2622 = vpop.f32.mrf.mxu0
      %v2623 = vpop.f32.mrf.mxu0
      %v2624 = vadd.f32 0.0, %v2623
      %v2625 = vpop.f32.mrf.mxu0
      %2626 = vmatprep.mubr.bf16.mxu0 %v1411
      %2627 = vmatmul.mubr.bf16.gmra.mxu0 %v1410
      %v2628 = vpop.f32.mrf.mxu0
      %v2629 = vadd.f32 0.0, %v2628
      %v2630 = vpop.f32.mrf.mxu0
      %v2631 = vpop.f32.mrf.mxu0
      %v2632 = vadd.f32 0.0, %v2631
      %v2633 = vpop.f32.mrf.mxu0
      %2634 = vmatprep.mubr.bf16.mxu0 %v1427
      %2635 = vmatmul.mubr.bf16.gmra.mxu0 %v1426
      %v2636 = vpop.f32.mrf.mxu0
      %v2637 = vadd.f32 0.0, %v2636
      %v2638 = vpop.f32.mrf.mxu0
      %v2639 = vpop.f32.mrf.mxu0
      %v2640 = vadd.f32 0.0, %v2639
      %v2641 = vpop.f32.mrf.mxu0
      %2642 = vmatprep.mubr.bf16.mxu0 %v1443
      %2643 = vmatmul.mubr.bf16.gmra.mxu0 %v1442
      %v2644 = vpop.f32.mrf.mxu0
      %v2645 = vadd.f32 0.0, %v2644
      %v2646 = vpop.f32.mrf.mxu0
      %v2647 = vpop.f32.mrf.mxu0
      %v2648 = vadd.f32 0.0, %v2647
      %v2649 = vpop.f32.mrf.mxu0
      %2650 = vmatprep.mubr.bf16.mxu0 %v1459
      %2651 = vmatmul.mubr.bf16.gmra.mxu0 %v1458
      %v2652 = vpop.f32.mrf.mxu0
      %v2653 = vadd.f32 0.0, %v2652
      %v2654 = vpop.f32.mrf.mxu0
      %v2655 = vpop.f32.mrf.mxu0
      %v2656 = vadd.f32 0.0, %v2655
      %v2657 = vpop.f32.mrf.mxu0
      %2658 = vmatprep.mubr.bf16.mxu0 %v1475
      %2659 = vmatmul.mubr.bf16.gmra.mxu0 %v1474
      %v2660 = vpop.f32.mrf.mxu0
      %v2661 = vadd.f32 0.0, %v2660
      %v2662 = vpop.f32.mrf.mxu0
      %v2663 = vpop.f32.mrf.mxu0
      %v2664 = vadd.f32 0.0, %v2663
      %v2665 = vpop.f32.mrf.mxu0
      %2666 = vmatprep.mubr.bf16.mxu0 %v1491
      %2667 = vmatmul.mubr.bf16.gmra.mxu0 %v1490
      %v2668 = vpop.f32.mrf.mxu0
      %v2669 = vadd.f32 0.0, %v2668
      %v2670 = vpop.f32.mrf.mxu0
      %v2671 = vpop.f32.mrf.mxu0
      %v2672 = vadd.f32 0.0, %v2671
      %v2673 = vpop.f32.mrf.mxu0
      %2674 = vmatprep.mubr.bf16.mxu0 %v1507
      %2675 = vmatmul.mubr.bf16.gmra.mxu0 %v1506
      %v2676 = vpop.f32.mrf.mxu0
      %v2677 = vadd.f32 0.0, %v2676
      %v2678 = vpop.f32.mrf.mxu0
      %v2679 = vpop.f32.mrf.mxu0
      %v2680 = vadd.f32 0.0, %v2679
      %v2681 = vpop.f32.mrf.mxu0
      %2682 = vmatprep.mubr.bf16.mxu0 %v1523
      %2683 = vmatmul.mubr.bf16.gmra.mxu0 %v1522
      %v2684 = vpop.f32.mrf.mxu0
      %v2685 = vadd.f32 0.0, %v2684
      %v2686 = vpop.f32.mrf.mxu0
      %v2687 = vpop.f32.mrf.mxu0
      %v2688 = vadd.f32 0.0, %v2687
      %v2689 = vpop.f32.mrf.mxu0
      %2690 = vmatprep.mubr.bf16.mxu0 %v1539
      %2691 = vmatmul.mubr.bf16.gmra.mxu0 %v1538
      %v2692 = vpop.f32.mrf.mxu0
      %v2693 = vadd.f32 0.0, %v2692
      %v2694 = vpop.f32.mrf.mxu0
      %v2695 = vpop.f32.mrf.mxu0
      %v2696 = vadd.f32 0.0, %v2695
      %v2697 = vpop.f32.mrf.mxu0
      %2698 = vmatprep.mubr.bf16.mxu0 %v1555
      %2699 = vmatmul.mubr.bf16.gmra.mxu0 %v1554
      %v2700 = vpop.f32.mrf.mxu0
      %v2701 = vadd.f32 0.0, %v2700
      %v2702 = vpop.f32.mrf.mxu0
      %v2703 = vpop.f32.mrf.mxu0
      %v2704 = vadd.f32 0.0, %v2703
      %v2705 = vpop.f32.mrf.mxu0
      %2706 = vdwg.mxu0
      %2707 = vmatprep.subr.bf16.mxu0 0
      %2708 = vmatpush1.bf16.msra.mxu0 %v2329
      %2709 = vmatprep.subr.bf16.mxu0 0
      %2710 = vmatpush1.bf16.msra.mxu0 %v2328
      %2711 = vmatprep.subr.bf16.mxu0 0
      %2712 = vmatpush1.bf16.msra.mxu0 %v2327
      %2713 = vmatprep.subr.bf16.mxu0 0
      %2714 = vmatpush1.bf16.msra.mxu0 %v2326
      %2715 = vmatprep.subr.bf16.mxu0 0
      %2716 = vmatpush1.bf16.msra.mxu0 %v2325
      %2717 = vmatprep.subr.bf16.mxu0 0
      %2718 = vmatpush1.bf16.msra.mxu0 %v2324
      %2719 = vmatprep.subr.bf16.mxu0 0
      %2720 = vmatpush1.bf16.msra.mxu0 %v2323
      %2721 = vmatprep.subr.bf16.mxu0 0
      %2722 = vmatpush1.bf16.msra.mxu0 %v2322
      %2723 = vmatprep.subr.bf16.mxu0 0
      %2724 = vmatpush2.bf16.msra.mxu0 %v2337
      %2725 = vmatprep.subr.bf16.mxu0 0
      %2726 = vmatpush2.bf16.msra.mxu0 %v2336
      %2727 = vmatprep.subr.bf16.mxu0 0
      %2728 = vmatpush2.bf16.msra.mxu0 %v2335
      %2729 = vmatprep.subr.bf16.mxu0 0
      %2730 = vmatpush2.bf16.msra.mxu0 %v2334
      %2731 = vmatprep.subr.bf16.mxu0 0
      %2732 = vmatpush2.bf16.msra.mxu0 %v2333
      %2733 = vmatprep.subr.bf16.mxu0 0
      %2734 = vmatpush2.bf16.msra.mxu0 %v2332
      %2735 = vmatprep.subr.bf16.mxu0 0
      %2736 = vmatpush2.bf16.msra.mxu0 %v2331
      %2737 = vmatprep.subr.bf16.mxu0 0
      %2738 = vmatpush2.bf16.msra.mxu0 %v2330
      %2739 = vmatprep.mubr.bf16.mxu0 %v1349
      %2740 = vmatmul.mubr.bf16.gmra.mxu0 %v1348
      %v2741 = vpop.f32.mrf.mxu0
      %v2742 = vadd.f32 %v2597, %v2741
      %v2743 = vpop.f32.mrf.mxu0
      %v2744 = vpop.f32.mrf.mxu0
      %v2745 = vadd.f32 %v2600, %v2744
      %v2746 = vpop.f32.mrf.mxu0
      %2747 = vmatprep.mubr.bf16.mxu0 %v1365
      %2748 = vmatmul.mubr.bf16.gmra.mxu0 %v1364
      %v2749 = vpop.f32.mrf.mxu0
      %v2750 = vadd.f32 %v2605, %v2749
      %v2751 = vpop.f32.mrf.mxu0
      %v2752 = vpop.f32.mrf.mxu0
      %v2753 = vadd.f32 %v2608, %v2752
      %v2754 = vpop.f32.mrf.mxu0
      %2755 = vmatprep.mubr.bf16.mxu0 %v1381
      %2756 = vmatmul.mubr.bf16.gmra.mxu0 %v1380
      %v2757 = vpop.f32.mrf.mxu0
      %v2758 = vadd.f32 %v2613, %v2757
      %v2759 = vpop.f32.mrf.mxu0
      %v2760 = vpop.f32.mrf.mxu0
      %v2761 = vadd.f32 %v2616, %v2760
      %v2762 = vpop.f32.mrf.mxu0
      %2763 = vmatprep.mubr.bf16.mxu0 %v1397
      %2764 = vmatmul.mubr.bf16.gmra.mxu0 %v1396
      %v2765 = vpop.f32.mrf.mxu0
      %v2766 = vadd.f32 %v2621, %v2765
      %v2767 = vpop.f32.mrf.mxu0
      %v2768 = vpop.f32.mrf.mxu0
      %v2769 = vadd.f32 %v2624, %v2768
      %v2770 = vpop.f32.mrf.mxu0
      %2771 = vmatprep.mubr.bf16.mxu0 %v1413
      %2772 = vmatmul.mubr.bf16.gmra.mxu0 %v1412
      %v2773 = vpop.f32.mrf.mxu0
      %v2774 = vadd.f32 %v2629, %v2773
      %v2775 = vpop.f32.mrf.mxu0
      %v2776 = vpop.f32.mrf.mxu0
      %v2777 = vadd.f32 %v2632, %v2776
      %v2778 = vpop.f32.mrf.mxu0
      %2779 = vmatprep.mubr.bf16.mxu0 %v1429
      %2780 = vmatmul.mubr.bf16.gmra.mxu0 %v1428
      %v2781 = vpop.f32.mrf.mxu0
      %v2782 = vadd.f32 %v2637, %v2781
      %v2783 = vpop.f32.mrf.mxu0
      %v2784 = vpop.f32.mrf.mxu0
      %v2785 = vadd.f32 %v2640, %v2784
      %v2786 = vpop.f32.mrf.mxu0
      %2787 = vmatprep.mubr.bf16.mxu0 %v1445
      %2788 = vmatmul.mubr.bf16.gmra.mxu0 %v1444
      %v2789 = vpop.f32.mrf.mxu0
      %v2790 = vadd.f32 %v2645, %v2789
      %v2791 = vpop.f32.mrf.mxu0
      %v2792 = vpop.f32.mrf.mxu0
      %v2793 = vadd.f32 %v2648, %v2792
      %v2794 = vpop.f32.mrf.mxu0
      %2795 = vmatprep.mubr.bf16.mxu0 %v1461
      %2796 = vmatmul.mubr.bf16.gmra.mxu0 %v1460
      %v2797 = vpop.f32.mrf.mxu0
      %v2798 = vadd.f32 %v2653, %v2797
      %v2799 = vpop.f32.mrf.mxu0
      %v2800 = vpop.f32.mrf.mxu0
      %v2801 = vadd.f32 %v2656, %v2800
      %v2802 = vpop.f32.mrf.mxu0
      %2803 = vmatprep.mubr.bf16.mxu0 %v1477
      %2804 = vmatmul.mubr.bf16.gmra.mxu0 %v1476
      %v2805 = vpop.f32.mrf.mxu0
      %v2806 = vadd.f32 %v2661, %v2805
      %v2807 = vpop.f32.mrf.mxu0
      %v2808 = vpop.f32.mrf.mxu0
      %v2809 = vadd.f32 %v2664, %v2808
      %v2810 = vpop.f32.mrf.mxu0
      %2811 = vmatprep.mubr.bf16.mxu0 %v1493
      %2812 = vmatmul.mubr.bf16.gmra.mxu0 %v1492
      %v2813 = vpop.f32.mrf.mxu0
      %v2814 = vadd.f32 %v2669, %v2813
      %v2815 = vpop.f32.mrf.mxu0
      %v2816 = vpop.f32.mrf.mxu0
      %v2817 = vadd.f32 %v2672, %v2816
      %v2818 = vpop.f32.mrf.mxu0
      %2819 = vmatprep.mubr.bf16.mxu0 %v1509
      %2820 = vmatmul.mubr.bf16.gmra.mxu0 %v1508
      %v2821 = vpop.f32.mrf.mxu0
      %v2822 = vadd.f32 %v2677, %v2821
      %v2823 = vpop.f32.mrf.mxu0
      %v2824 = vpop.f32.mrf.mxu0
      %v2825 = vadd.f32 %v2680, %v2824
      %v2826 = vpop.f32.mrf.mxu0
      %2827 = vmatprep.mubr.bf16.mxu0 %v1525
      %2828 = vmatmul.mubr.bf16.gmra.mxu0 %v1524
      %v2829 = vpop.f32.mrf.mxu0
      %v2830 = vadd.f32 %v2685, %v2829
      %v2831 = vpop.f32.mrf.mxu0
      %v2832 = vpop.f32.mrf.mxu0
      %v2833 = vadd.f32 %v2688, %v2832
      %v2834 = vpop.f32.mrf.mxu0
      %2835 = vmatprep.mubr.bf16.mxu0 %v1541
      %2836 = vmatmul.mubr.bf16.gmra.mxu0 %v1540
      %v2837 = vpop.f32.mrf.mxu0
      %v2838 = vadd.f32 %v2693, %v2837
      %v2839 = vpop.f32.mrf.mxu0
      %v2840 = vpop.f32.mrf.mxu0
      %v2841 = vadd.f32 %v2696, %v2840
      %v2842 = vpop.f32.mrf.mxu0
      %2843 = vmatprep.mubr.bf16.mxu0 %v1557
      %2844 = vmatmul.mubr.bf16.gmra.mxu0 %v1556
      %v2845 = vpop.f32.mrf.mxu0
      %v2846 = vadd.f32 %v2701, %v2845
      %v2847 = vpop.f32.mrf.mxu0
      %v2848 = vpop.f32.mrf.mxu0
      %v2849 = vadd.f32 %v2704, %v2848
      %v2850 = vpop.f32.mrf.mxu0
      %2851 = vdwg.mxu0
      %2852 = vmatprep.subr.bf16.mxu0 0
      %2853 = vmatpush1.bf16.msra.mxu0 %v2345
      %2854 = vmatprep.subr.bf16.mxu0 0
      %2855 = vmatpush1.bf16.msra.mxu0 %v2344
      %2856 = vmatprep.subr.bf16.mxu0 0
      %2857 = vmatpush1.bf16.msra.mxu0 %v2343
      %2858 = vmatprep.subr.bf16.mxu0 0
      %2859 = vmatpush1.bf16.msra.mxu0 %v2342
      %2860 = vmatprep.subr.bf16.mxu0 0
      %2861 = vmatpush1.bf16.msra.mxu0 %v2341
      %2862 = vmatprep.subr.bf16.mxu0 0
      %2863 = vmatpush1.bf16.msra.mxu0 %v2340
      %2864 = vmatprep.subr.bf16.mxu0 0
      %2865 = vmatpush1.bf16.msra.mxu0 %v2339
      %2866 = vmatprep.subr.bf16.mxu0 0
      %2867 = vmatpush1.bf16.msra.mxu0 %v2338
      %2868 = vmatprep.subr.bf16.mxu0 0
      %2869 = vmatpush2.bf16.msra.mxu0 %v2353
      %2870 = vmatprep.subr.bf16.mxu0 0
      %2871 = vmatpush2.bf16.msra.mxu0 %v2352
      %2872 = vmatprep.subr.bf16.mxu0 0
      %2873 = vmatpush2.bf16.msra.mxu0 %v2351
      %2874 = vmatprep.subr.bf16.mxu0 0
      %2875 = vmatpush2.bf16.msra.mxu0 %v2350
      %2876 = vmatprep.subr.bf16.mxu0 0
      %2877 = vmatpush2.bf16.msra.mxu0 %v2349
      %2878 = vmatprep.subr.bf16.mxu0 0
      %2879 = vmatpush2.bf16.msra.mxu0 %v2348
      %2880 = vmatprep.subr.bf16.mxu0 0
      %2881 = vmatpush2.bf16.msra.mxu0 %v2347
      %2882 = vmatprep.subr.bf16.mxu0 0
      %2883 = vmatpush2.bf16.msra.mxu0 %v2346
      %2884 = vmatprep.mubr.bf16.mxu0 %v1351
      %2885 = vmatmul.mubr.bf16.gmra.mxu0 %v1350
      %v2886 = vpop.f32.mrf.mxu0
      %v2887 = vadd.f32 %v2742, %v2886
      %v2888 = vpop.f32.mrf.mxu0
      %v2889 = vpop.f32.mrf.mxu0
      %v2890 = vadd.f32 %v2745, %v2889
      %v2891 = vpop.f32.mrf.mxu0
      %2892 = vmatprep.mubr.bf16.mxu0 %v1367
      %2893 = vmatmul.mubr.bf16.gmra.mxu0 %v1366
      %v2894 = vpop.f32.mrf.mxu0
      %v2895 = vadd.f32 %v2750, %v2894
      %v2896 = vpop.f32.mrf.mxu0
      %v2897 = vpop.f32.mrf.mxu0
      %v2898 = vadd.f32 %v2753, %v2897
      %v2899 = vpop.f32.mrf.mxu0
      %2900 = vmatprep.mubr.bf16.mxu0 %v1383
      %2901 = vmatmul.mubr.bf16.gmra.mxu0 %v1382
      %v2902 = vpop.f32.mrf.mxu0
      %v2903 = vadd.f32 %v2758, %v2902
      %v2904 = vpop.f32.mrf.mxu0
      %v2905 = vpop.f32.mrf.mxu0
      %v2906 = vadd.f32 %v2761, %v2905
      %v2907 = vpop.f32.mrf.mxu0
      %2908 = vmatprep.mubr.bf16.mxu0 %v1399
      %2909 = vmatmul.mubr.bf16.gmra.mxu0 %v1398
      %v2910 = vpop.f32.mrf.mxu0
      %v2911 = vadd.f32 %v2766, %v2910
      %v2912 = vpop.f32.mrf.mxu0
      %v2913 = vpop.f32.mrf.mxu0
      %v2914 = vadd.f32 %v2769, %v2913
      %v2915 = vpop.f32.mrf.mxu0
      %2916 = vmatprep.mubr.bf16.mxu0 %v1415
      %2917 = vmatmul.mubr.bf16.gmra.mxu0 %v1414
      %v2918 = vpop.f32.mrf.mxu0
      %v2919 = vadd.f32 %v2774, %v2918
      %v2920 = vpop.f32.mrf.mxu0
      %v2921 = vpop.f32.mrf.mxu0
      %v2922 = vadd.f32 %v2777, %v2921
      %v2923 = vpop.f32.mrf.mxu0
      %2924 = vmatprep.mubr.bf16.mxu0 %v1431
      %2925 = vmatmul.mubr.bf16.gmra.mxu0 %v1430
      %v2926 = vpop.f32.mrf.mxu0
      %v2927 = vadd.f32 %v2782, %v2926
      %v2928 = vpop.f32.mrf.mxu0
      %v2929 = vpop.f32.mrf.mxu0
      %v2930 = vadd.f32 %v2785, %v2929
      %v2931 = vpop.f32.mrf.mxu0
      %2932 = vmatprep.mubr.bf16.mxu0 %v1447
      %2933 = vmatmul.mubr.bf16.gmra.mxu0 %v1446
      %v2934 = vpop.f32.mrf.mxu0
      %v2935 = vadd.f32 %v2790, %v2934
      %v2936 = vpop.f32.mrf.mxu0
      %v2937 = vpop.f32.mrf.mxu0
      %v2938 = vadd.f32 %v2793, %v2937
      %v2939 = vpop.f32.mrf.mxu0
      %2940 = vmatprep.mubr.bf16.mxu0 %v1463
      %2941 = vmatmul.mubr.bf16.gmra.mxu0 %v1462
      %v2942 = vpop.f32.mrf.mxu0
      %v2943 = vadd.f32 %v2798, %v2942
      %v2944 = vpop.f32.mrf.mxu0
      %v2945 = vpop.f32.mrf.mxu0
      %v2946 = vadd.f32 %v2801, %v2945
      %v2947 = vpop.f32.mrf.mxu0
      %2948 = vmatprep.mubr.bf16.mxu0 %v1479
      %2949 = vmatmul.mubr.bf16.gmra.mxu0 %v1478
      %v2950 = vpop.f32.mrf.mxu0
      %v2951 = vadd.f32 %v2806, %v2950
      %v2952 = vpop.f32.mrf.mxu0
      %v2953 = vpop.f32.mrf.mxu0
      %v2954 = vadd.f32 %v2809, %v2953
      %v2955 = vpop.f32.mrf.mxu0
      %2956 = vmatprep.mubr.bf16.mxu0 %v1495
      %2957 = vmatmul.mubr.bf16.gmra.mxu0 %v1494
      %v2958 = vpop.f32.mrf.mxu0
      %v2959 = vadd.f32 %v2814, %v2958
      %v2960 = vpop.f32.mrf.mxu0
      %v2961 = vpop.f32.mrf.mxu0
      %v2962 = vadd.f32 %v2817, %v2961
      %v2963 = vpop.f32.mrf.mxu0
      %2964 = vmatprep.mubr.bf16.mxu0 %v1511
      %2965 = vmatmul.mubr.bf16.gmra.mxu0 %v1510
      %v2966 = vpop.f32.mrf.mxu0
      %v2967 = vadd.f32 %v2822, %v2966
      %v2968 = vpop.f32.mrf.mxu0
      %v2969 = vpop.f32.mrf.mxu0
      %v2970 = vadd.f32 %v2825, %v2969
      %v2971 = vpop.f32.mrf.mxu0
      %2972 = vmatprep.mubr.bf16.mxu0 %v1527
      %2973 = vmatmul.mubr.bf16.gmra.mxu0 %v1526
      %v2974 = vpop.f32.mrf.mxu0
      %v2975 = vadd.f32 %v2830, %v2974
      %v2976 = vpop.f32.mrf.mxu0
      %v2977 = vpop.f32.mrf.mxu0
      %v2978 = vadd.f32 %v2833, %v2977
      %v2979 = vpop.f32.mrf.mxu0
      %2980 = vmatprep.mubr.bf16.mxu0 %v1543
      %2981 = vmatmul.mubr.bf16.gmra.mxu0 %v1542
      %v2982 = vpop.f32.mrf.mxu0
      %v2983 = vadd.f32 %v2838, %v2982
      %v2984 = vpop.f32.mrf.mxu0
      %v2985 = vpop.f32.mrf.mxu0
      %v2986 = vadd.f32 %v2841, %v2985
      %v2987 = vpop.f32.mrf.mxu0
      %2988 = vmatprep.mubr.bf16.mxu0 %v1559
      %2989 = vmatmul.mubr.bf16.gmra.mxu0 %v1558
      %v2990 = vpop.f32.mrf.mxu0
      %v2991 = vadd.f32 %v2846, %v2990
      %v2992 = vpop.f32.mrf.mxu0
      %v2993 = vpop.f32.mrf.mxu0
      %v2994 = vadd.f32 %v2849, %v2993
      %v2995 = vpop.f32.mrf.mxu0
      %2996 = vdwg.mxu0
      %2997 = vmatprep.subr.bf16.mxu0 0
      %2998 = vmatpush1.bf16.msra.mxu0 %v2361
      %2999 = vmatprep.subr.bf16.mxu0 0
      %3000 = vmatpush1.bf16.msra.mxu0 %v2360
      %3001 = vmatprep.subr.bf16.mxu0 0
      %3002 = vmatpush1.bf16.msra.mxu0 %v2359
      %3003 = vmatprep.subr.bf16.mxu0 0
      %3004 = vmatpush1.bf16.msra.mxu0 %v2358
      %3005 = vmatprep.subr.bf16.mxu0 0
      %3006 = vmatpush1.bf16.msra.mxu0 %v2357
      %3007 = vmatprep.subr.bf16.mxu0 0
      %3008 = vmatpush1.bf16.msra.mxu0 %v2356
      %3009 = vmatprep.subr.bf16.mxu0 0
      %3010 = vmatpush1.bf16.msra.mxu0 %v2355
      %3011 = vmatprep.subr.bf16.mxu0 0
      %3012 = vmatpush1.bf16.msra.mxu0 %v2354
      %3013 = vmatprep.subr.bf16.mxu0 0
      %3014 = vmatpush2.bf16.msra.mxu0 %v2369
      %3015 = vmatprep.subr.bf16.mxu0 0
      %3016 = vmatpush2.bf16.msra.mxu0 %v2368
      %3017 = vmatprep.subr.bf16.mxu0 0
      %3018 = vmatpush2.bf16.msra.mxu0 %v2367
      %3019 = vmatprep.subr.bf16.mxu0 0
      %3020 = vmatpush2.bf16.msra.mxu0 %v2366
      %3021 = vmatprep.subr.bf16.mxu0 0
      %3022 = vmatpush2.bf16.msra.mxu0 %v2365
      %3023 = vmatprep.subr.bf16.mxu0 0
      %3024 = vmatpush2.bf16.msra.mxu0 %v2364
      %3025 = vmatprep.subr.bf16.mxu0 0
      %3026 = vmatpush2.bf16.msra.mxu0 %v2363
      %3027 = vmatprep.subr.bf16.mxu0 0
      %3028 = vmatpush2.bf16.msra.mxu0 %v2362
      %3029 = vmatprep.mubr.bf16.mxu0 %v1353
      %3030 = vmatmul.mubr.bf16.gmra.mxu0 %v1352
      %v3031 = vpop.f32.mrf.mxu0
      %v3032 = vadd.f32 %v2887, %v3031
      %v3033 = vpop.f32.mrf.mxu0
      %v3034 = vpop.f32.mrf.mxu0
      %v3035 = vadd.f32 %v2890, %v3034
      %v3036 = vpop.f32.mrf.mxu0
      %3037 = vmatprep.mubr.bf16.mxu0 %v1369
      %3038 = vmatmul.mubr.bf16.gmra.mxu0 %v1368
      %v3039 = vpop.f32.mrf.mxu0
      %v3040 = vadd.f32 %v2895, %v3039
      %v3041 = vpop.f32.mrf.mxu0
      %v3042 = vpop.f32.mrf.mxu0
      %v3043 = vadd.f32 %v2898, %v3042
      %v3044 = vpop.f32.mrf.mxu0
      %3045 = vmatprep.mubr.bf16.mxu0 %v1385
      %3046 = vmatmul.mubr.bf16.gmra.mxu0 %v1384
      %v3047 = vpop.f32.mrf.mxu0
      %v3048 = vadd.f32 %v2903, %v3047
      %v3049 = vpop.f32.mrf.mxu0
      %v3050 = vpop.f32.mrf.mxu0
      %v3051 = vadd.f32 %v2906, %v3050
      %v3052 = vpop.f32.mrf.mxu0
      %3053 = vmatprep.mubr.bf16.mxu0 %v1401
      %3054 = vmatmul.mubr.bf16.gmra.mxu0 %v1400
      %v3055 = vpop.f32.mrf.mxu0
      %v3056 = vadd.f32 %v2911, %v3055
      %v3057 = vpop.f32.mrf.mxu0
      %v3058 = vpop.f32.mrf.mxu0
      %v3059 = vadd.f32 %v2914, %v3058
      %v3060 = vpop.f32.mrf.mxu0
      %3061 = vmatprep.mubr.bf16.mxu0 %v1417
      %3062 = vmatmul.mubr.bf16.gmra.mxu0 %v1416
      %v3063 = vpop.f32.mrf.mxu0
      %v3064 = vadd.f32 %v2919, %v3063
      %v3065 = vpop.f32.mrf.mxu0
      %v3066 = vpop.f32.mrf.mxu0
      %v3067 = vadd.f32 %v2922, %v3066
      %v3068 = vpop.f32.mrf.mxu0
      %3069 = vmatprep.mubr.bf16.mxu0 %v1433
      %3070 = vmatmul.mubr.bf16.gmra.mxu0 %v1432
      %v3071 = vpop.f32.mrf.mxu0
      %v3072 = vadd.f32 %v2927, %v3071
      %v3073 = vpop.f32.mrf.mxu0
      %v3074 = vpop.f32.mrf.mxu0
      %v3075 = vadd.f32 %v2930, %v3074
      %v3076 = vpop.f32.mrf.mxu0
      %3077 = vmatprep.mubr.bf16.mxu0 %v1449
      %3078 = vmatmul.mubr.bf16.gmra.mxu0 %v1448
      %v3079 = vpop.f32.mrf.mxu0
      %v3080 = vadd.f32 %v2935, %v3079
      %v3081 = vpop.f32.mrf.mxu0
      %v3082 = vpop.f32.mrf.mxu0
      %v3083 = vadd.f32 %v2938, %v3082
      %v3084 = vpop.f32.mrf.mxu0
      %3085 = vmatprep.mubr.bf16.mxu0 %v1465
      %3086 = vmatmul.mubr.bf16.gmra.mxu0 %v1464
      %v3087 = vpop.f32.mrf.mxu0
      %v3088 = vadd.f32 %v2943, %v3087
      %v3089 = vpop.f32.mrf.mxu0
      %v3090 = vpop.f32.mrf.mxu0
      %v3091 = vadd.f32 %v2946, %v3090
      %v3092 = vpop.f32.mrf.mxu0
      %3093 = vmatprep.mubr.bf16.mxu0 %v1481
      %3094 = vmatmul.mubr.bf16.gmra.mxu0 %v1480
      %v3095 = vpop.f32.mrf.mxu0
      %v3096 = vadd.f32 %v2951, %v3095
      %v3097 = vpop.f32.mrf.mxu0
      %v3098 = vpop.f32.mrf.mxu0
      %v3099 = vadd.f32 %v2954, %v3098
      %v3100 = vpop.f32.mrf.mxu0
      %3101 = vmatprep.mubr.bf16.mxu0 %v1497
      %3102 = vmatmul.mubr.bf16.gmra.mxu0 %v1496
      %v3103 = vpop.f32.mrf.mxu0
      %v3104 = vadd.f32 %v2959, %v3103
      %v3105 = vpop.f32.mrf.mxu0
      %v3106 = vpop.f32.mrf.mxu0
      %v3107 = vadd.f32 %v2962, %v3106
      %v3108 = vpop.f32.mrf.mxu0
      %3109 = vmatprep.mubr.bf16.mxu0 %v1513
      %3110 = vmatmul.mubr.bf16.gmra.mxu0 %v1512
      %v3111 = vpop.f32.mrf.mxu0
      %v3112 = vadd.f32 %v2967, %v3111
      %v3113 = vpop.f32.mrf.mxu0
      %v3114 = vpop.f32.mrf.mxu0
      %v3115 = vadd.f32 %v2970, %v3114
      %v3116 = vpop.f32.mrf.mxu0
      %3117 = vmatprep.mubr.bf16.mxu0 %v1529
      %3118 = vmatmul.mubr.bf16.gmra.mxu0 %v1528
      %v3119 = vpop.f32.mrf.mxu0
      %v3120 = vadd.f32 %v2975, %v3119
      %v3121 = vpop.f32.mrf.mxu0
      %v3122 = vpop.f32.mrf.mxu0
      %v3123 = vadd.f32 %v2978, %v3122
      %v3124 = vpop.f32.mrf.mxu0
      %3125 = vmatprep.mubr.bf16.mxu0 %v1545
      %3126 = vmatmul.mubr.bf16.gmra.mxu0 %v1544
      %v3127 = vpop.f32.mrf.mxu0
      %v3128 = vadd.f32 %v2983, %v3127
      %v3129 = vpop.f32.mrf.mxu0
      %v3130 = vpop.f32.mrf.mxu0
      %v3131 = vadd.f32 %v2986, %v3130
      %v3132 = vpop.f32.mrf.mxu0
      %3133 = vmatprep.mubr.bf16.mxu0 %v1561
      %3134 = vmatmul.mubr.bf16.gmra.mxu0 %v1560
      %v3135 = vpop.f32.mrf.mxu0
      %v3136 = vadd.f32 %v2991, %v3135
      %v3137 = vpop.f32.mrf.mxu0
      %v3138 = vpop.f32.mrf.mxu0
      %v3139 = vadd.f32 %v2994, %v3138
      %v3140 = vpop.f32.mrf.mxu0
      %3141 = vdwg.mxu0
      %3142 = vmatprep.subr.bf16.mxu0 0
      %3143 = vmatpush1.bf16.msra.mxu0 %v2377
      %3144 = vmatprep.subr.bf16.mxu0 0
      %3145 = vmatpush1.bf16.msra.mxu0 %v2376
      %3146 = vmatprep.subr.bf16.mxu0 0
      %3147 = vmatpush1.bf16.msra.mxu0 %v2375
      %3148 = vmatprep.subr.bf16.mxu0 0
      %3149 = vmatpush1.bf16.msra.mxu0 %v2374
      %3150 = vmatprep.subr.bf16.mxu0 0
      %3151 = vmatpush1.bf16.msra.mxu0 %v2373
      %3152 = vmatprep.subr.bf16.mxu0 0
      %3153 = vmatpush1.bf16.msra.mxu0 %v2372
      %3154 = vmatprep.subr.bf16.mxu0 0
      %3155 = vmatpush1.bf16.msra.mxu0 %v2371
      %3156 = vmatprep.subr.bf16.mxu0 0
      %3157 = vmatpush1.bf16.msra.mxu0 %v2370
      %3158 = vmatprep.subr.bf16.mxu0 0
      %3159 = vmatpush2.bf16.msra.mxu0 %v2385
      %3160 = vmatprep.subr.bf16.mxu0 0
      %3161 = vmatpush2.bf16.msra.mxu0 %v2384
      %3162 = vmatprep.subr.bf16.mxu0 0
      %3163 = vmatpush2.bf16.msra.mxu0 %v2383
      %3164 = vmatprep.subr.bf16.mxu0 0
      %3165 = vmatpush2.bf16.msra.mxu0 %v2382
      %3166 = vmatprep.subr.bf16.mxu0 0
      %3167 = vmatpush2.bf16.msra.mxu0 %v2381
      %3168 = vmatprep.subr.bf16.mxu0 0
      %3169 = vmatpush2.bf16.msra.mxu0 %v2380
      %3170 = vmatprep.subr.bf16.mxu0 0
      %3171 = vmatpush2.bf16.msra.mxu0 %v2379
      %3172 = vmatprep.subr.bf16.mxu0 0
      %3173 = vmatpush2.bf16.msra.mxu0 %v2378
      %3174 = vmatprep.mubr.bf16.mxu0 %v1355
      %3175 = vmatmul.mubr.bf16.gmra.mxu0 %v1354
      %v3176 = vpop.f32.mrf.mxu0
      %v3177 = vadd.f32 %v3032, %v3176
      %v3178 = vpop.f32.mrf.mxu0
      %v3179 = vpop.f32.mrf.mxu0
      %v3180 = vadd.f32 %v3035, %v3179
      %v3181 = vpop.f32.mrf.mxu0
      %3182 = vmatprep.mubr.bf16.mxu0 %v1371
      %3183 = vmatmul.mubr.bf16.gmra.mxu0 %v1370
      %v3184 = vpop.f32.mrf.mxu0
      %v3185 = vadd.f32 %v3040, %v3184
      %v3186 = vpop.f32.mrf.mxu0
      %v3187 = vpop.f32.mrf.mxu0
      %v3188 = vadd.f32 %v3043, %v3187
      %v3189 = vpop.f32.mrf.mxu0
      %3190 = vmatprep.mubr.bf16.mxu0 %v1387
      %3191 = vmatmul.mubr.bf16.gmra.mxu0 %v1386
      %v3192 = vpop.f32.mrf.mxu0
      %v3193 = vadd.f32 %v3048, %v3192
      %v3194 = vpop.f32.mrf.mxu0
      %v3195 = vpop.f32.mrf.mxu0
      %v3196 = vadd.f32 %v3051, %v3195
      %v3197 = vpop.f32.mrf.mxu0
      %3198 = vmatprep.mubr.bf16.mxu0 %v1403
      %3199 = vmatmul.mubr.bf16.gmra.mxu0 %v1402
      %v3200 = vpop.f32.mrf.mxu0
      %v3201 = vadd.f32 %v3056, %v3200
      %v3202 = vpop.f32.mrf.mxu0
      %v3203 = vpop.f32.mrf.mxu0
      %v3204 = vadd.f32 %v3059, %v3203
      %v3205 = vpop.f32.mrf.mxu0
      %3206 = vmatprep.mubr.bf16.mxu0 %v1419
      %3207 = vmatmul.mubr.bf16.gmra.mxu0 %v1418
      %v3208 = vpop.f32.mrf.mxu0
      %v3209 = vadd.f32 %v3064, %v3208
      %v3210 = vpop.f32.mrf.mxu0
      %v3211 = vpop.f32.mrf.mxu0
      %v3212 = vadd.f32 %v3067, %v3211
      %v3213 = vpop.f32.mrf.mxu0
      %3214 = vmatprep.mubr.bf16.mxu0 %v1435
      %3215 = vmatmul.mubr.bf16.gmra.mxu0 %v1434
      %v3216 = vpop.f32.mrf.mxu0
      %v3217 = vadd.f32 %v3072, %v3216
      %v3218 = vpop.f32.mrf.mxu0
      %v3219 = vpop.f32.mrf.mxu0
      %v3220 = vadd.f32 %v3075, %v3219
      %v3221 = vpop.f32.mrf.mxu0
      %3222 = vmatprep.mubr.bf16.mxu0 %v1451
      %3223 = vmatmul.mubr.bf16.gmra.mxu0 %v1450
      %v3224 = vpop.f32.mrf.mxu0
      %v3225 = vadd.f32 %v3080, %v3224
      %v3226 = vpop.f32.mrf.mxu0
      %v3227 = vpop.f32.mrf.mxu0
      %v3228 = vadd.f32 %v3083, %v3227
      %v3229 = vpop.f32.mrf.mxu0
      %3230 = vmatprep.mubr.bf16.mxu0 %v1467
      %3231 = vmatmul.mubr.bf16.gmra.mxu0 %v1466
      %v3232 = vpop.f32.mrf.mxu0
      %v3233 = vadd.f32 %v3088, %v3232
      %v3234 = vpop.f32.mrf.mxu0
      %v3235 = vpop.f32.mrf.mxu0
      %v3236 = vadd.f32 %v3091, %v3235
      %v3237 = vpop.f32.mrf.mxu0
      %3238 = vmatprep.mubr.bf16.mxu0 %v1483
      %3239 = vmatmul.mubr.bf16.gmra.mxu0 %v1482
      %v3240 = vpop.f32.mrf.mxu0
      %v3241 = vadd.f32 %v3096, %v3240
      %v3242 = vpop.f32.mrf.mxu0
      %v3243 = vpop.f32.mrf.mxu0
      %v3244 = vadd.f32 %v3099, %v3243
      %v3245 = vpop.f32.mrf.mxu0
      %3246 = vmatprep.mubr.bf16.mxu0 %v1499
      %3247 = vmatmul.mubr.bf16.gmra.mxu0 %v1498
      %v3248 = vpop.f32.mrf.mxu0
      %v3249 = vadd.f32 %v3104, %v3248
      %v3250 = vpop.f32.mrf.mxu0
      %v3251 = vpop.f32.mrf.mxu0
      %v3252 = vadd.f32 %v3107, %v3251
      %v3253 = vpop.f32.mrf.mxu0
      %3254 = vmatprep.mubr.bf16.mxu0 %v1515
      %3255 = vmatmul.mubr.bf16.gmra.mxu0 %v1514
      %v3256 = vpop.f32.mrf.mxu0
      %v3257 = vadd.f32 %v3112, %v3256
      %v3258 = vpop.f32.mrf.mxu0
      %v3259 = vpop.f32.mrf.mxu0
      %v3260 = vadd.f32 %v3115, %v3259
      %v3261 = vpop.f32.mrf.mxu0
      %3262 = vmatprep.mubr.bf16.mxu0 %v1531
      %3263 = vmatmul.mubr.bf16.gmra.mxu0 %v1530
      %v3264 = vpop.f32.mrf.mxu0
      %v3265 = vadd.f32 %v3120, %v3264
      %v3266 = vpop.f32.mrf.mxu0
      %v3267 = vpop.f32.mrf.mxu0
      %v3268 = vadd.f32 %v3123, %v3267
      %v3269 = vpop.f32.mrf.mxu0
      %3270 = vmatprep.mubr.bf16.mxu0 %v1547
      %3271 = vmatmul.mubr.bf16.gmra.mxu0 %v1546
      %v3272 = vpop.f32.mrf.mxu0
      %v3273 = vadd.f32 %v3128, %v3272
      %v3274 = vpop.f32.mrf.mxu0
      %v3275 = vpop.f32.mrf.mxu0
      %v3276 = vadd.f32 %v3131, %v3275
      %v3277 = vpop.f32.mrf.mxu0
      %3278 = vmatprep.mubr.bf16.mxu0 %v1563
      %3279 = vmatmul.mubr.bf16.gmra.mxu0 %v1562
      %v3280 = vpop.f32.mrf.mxu0
      %v3281 = vadd.f32 %v3136, %v3280
      %v3282 = vpop.f32.mrf.mxu0
      %v3283 = vpop.f32.mrf.mxu0
      %v3284 = vadd.f32 %v3139, %v3283
      %v3285 = vpop.f32.mrf.mxu0
      %3286 = vdwg.mxu0
      %3287 = vmatprep.subr.bf16.mxu0 0
      %3288 = vmatpush1.bf16.msra.mxu0 %v2393
      %3289 = vmatprep.subr.bf16.mxu0 0
      %3290 = vmatpush1.bf16.msra.mxu0 %v2392
      %3291 = vmatprep.subr.bf16.mxu0 0
      %3292 = vmatpush1.bf16.msra.mxu0 %v2391
      %3293 = vmatprep.subr.bf16.mxu0 0
      %3294 = vmatpush1.bf16.msra.mxu0 %v2390
      %3295 = vmatprep.subr.bf16.mxu0 0
      %3296 = vmatpush1.bf16.msra.mxu0 %v2389
      %3297 = vmatprep.subr.bf16.mxu0 0
      %3298 = vmatpush1.bf16.msra.mxu0 %v2388
      %3299 = vmatprep.subr.bf16.mxu0 0
      %3300 = vmatpush1.bf16.msra.mxu0 %v2387
      %3301 = vmatprep.subr.bf16.mxu0 0
      %3302 = vmatpush1.bf16.msra.mxu0 %v2386
      %3303 = vmatprep.subr.bf16.mxu0 0
      %3304 = vmatpush2.bf16.msra.mxu0 %v2401
      %3305 = vmatprep.subr.bf16.mxu0 0
      %3306 = vmatpush2.bf16.msra.mxu0 %v2400
      %3307 = vmatprep.subr.bf16.mxu0 0
      %3308 = vmatpush2.bf16.msra.mxu0 %v2399
      %3309 = vmatprep.subr.bf16.mxu0 0
      %3310 = vmatpush2.bf16.msra.mxu0 %v2398
      %3311 = vmatprep.subr.bf16.mxu0 0
      %3312 = vmatpush2.bf16.msra.mxu0 %v2397
      %3313 = vmatprep.subr.bf16.mxu0 0
      %3314 = vmatpush2.bf16.msra.mxu0 %v2396
      %3315 = vmatprep.subr.bf16.mxu0 0
      %3316 = vmatpush2.bf16.msra.mxu0 %v2395
      %3317 = vmatprep.subr.bf16.mxu0 0
      %3318 = vmatpush2.bf16.msra.mxu0 %v2394
      %3319 = vmatprep.mubr.bf16.mxu0 %v1357
      %3320 = vmatmul.mubr.bf16.gmra.mxu0 %v1356
      %v3321 = vpop.f32.mrf.mxu0
      %v3322 = vadd.f32 %v3177, %v3321
      %v3323 = vpop.f32.mrf.mxu0
      %v3324 = vpop.f32.mrf.mxu0
      %v3325 = vadd.f32 %v3180, %v3324
      %v3326 = vpop.f32.mrf.mxu0
      %3327 = vmatprep.mubr.bf16.mxu0 %v1373
      %3328 = vmatmul.mubr.bf16.gmra.mxu0 %v1372
      %v3329 = vpop.f32.mrf.mxu0
      %v3330 = vadd.f32 %v3185, %v3329
      %v3331 = vpop.f32.mrf.mxu0
      %v3332 = vpop.f32.mrf.mxu0
      %v3333 = vadd.f32 %v3188, %v3332
      %v3334 = vpop.f32.mrf.mxu0
      %3335 = vmatprep.mubr.bf16.mxu0 %v1389
      %3336 = vmatmul.mubr.bf16.gmra.mxu0 %v1388
      %v3337 = vpop.f32.mrf.mxu0
      %v3338 = vadd.f32 %v3193, %v3337
      %v3339 = vpop.f32.mrf.mxu0
      %v3340 = vpop.f32.mrf.mxu0
      %v3341 = vadd.f32 %v3196, %v3340
      %v3342 = vpop.f32.mrf.mxu0
      %3343 = vmatprep.mubr.bf16.mxu0 %v1405
      %3344 = vmatmul.mubr.bf16.gmra.mxu0 %v1404
      %v3345 = vpop.f32.mrf.mxu0
      %v3346 = vadd.f32 %v3201, %v3345
      %v3347 = vpop.f32.mrf.mxu0
      %v3348 = vpop.f32.mrf.mxu0
      %v3349 = vadd.f32 %v3204, %v3348
      %v3350 = vpop.f32.mrf.mxu0
      %3351 = vmatprep.mubr.bf16.mxu0 %v1421
      %3352 = vmatmul.mubr.bf16.gmra.mxu0 %v1420
      %v3353 = vpop.f32.mrf.mxu0
      %v3354 = vadd.f32 %v3209, %v3353
      %v3355 = vpop.f32.mrf.mxu0
      %v3356 = vpop.f32.mrf.mxu0
      %v3357 = vadd.f32 %v3212, %v3356
      %v3358 = vpop.f32.mrf.mxu0
      %3359 = vmatprep.mubr.bf16.mxu0 %v1437
      %3360 = vmatmul.mubr.bf16.gmra.mxu0 %v1436
      %v3361 = vpop.f32.mrf.mxu0
      %v3362 = vadd.f32 %v3217, %v3361
      %v3363 = vpop.f32.mrf.mxu0
      %v3364 = vpop.f32.mrf.mxu0
      %v3365 = vadd.f32 %v3220, %v3364
      %v3366 = vpop.f32.mrf.mxu0
      %3367 = vmatprep.mubr.bf16.mxu0 %v1453
      %3368 = vmatmul.mubr.bf16.gmra.mxu0 %v1452
      %v3369 = vpop.f32.mrf.mxu0
      %v3370 = vadd.f32 %v3225, %v3369
      %v3371 = vpop.f32.mrf.mxu0
      %v3372 = vpop.f32.mrf.mxu0
      %v3373 = vadd.f32 %v3228, %v3372
      %v3374 = vpop.f32.mrf.mxu0
      %3375 = vmatprep.mubr.bf16.mxu0 %v1469
      %3376 = vmatmul.mubr.bf16.gmra.mxu0 %v1468
      %v3377 = vpop.f32.mrf.mxu0
      %v3378 = vadd.f32 %v3233, %v3377
      %v3379 = vpop.f32.mrf.mxu0
      %v3380 = vpop.f32.mrf.mxu0
      %v3381 = vadd.f32 %v3236, %v3380
      %v3382 = vpop.f32.mrf.mxu0
      %3383 = vmatprep.mubr.bf16.mxu0 %v1485
      %3384 = vmatmul.mubr.bf16.gmra.mxu0 %v1484
      %v3385 = vpop.f32.mrf.mxu0
      %v3386 = vadd.f32 %v3241, %v3385
      %v3387 = vpop.f32.mrf.mxu0
      %v3388 = vpop.f32.mrf.mxu0
      %v3389 = vadd.f32 %v3244, %v3388
      %v3390 = vpop.f32.mrf.mxu0
      %3391 = vmatprep.mubr.bf16.mxu0 %v1501
      %3392 = vmatmul.mubr.bf16.gmra.mxu0 %v1500
      %v3393 = vpop.f32.mrf.mxu0
      %v3394 = vadd.f32 %v3249, %v3393
      %v3395 = vpop.f32.mrf.mxu0
      %v3396 = vpop.f32.mrf.mxu0
      %v3397 = vadd.f32 %v3252, %v3396
      %v3398 = vpop.f32.mrf.mxu0
      %3399 = vmatprep.mubr.bf16.mxu0 %v1517
      %3400 = vmatmul.mubr.bf16.gmra.mxu0 %v1516
      %v3401 = vpop.f32.mrf.mxu0
      %v3402 = vadd.f32 %v3257, %v3401
      %v3403 = vpop.f32.mrf.mxu0
      %v3404 = vpop.f32.mrf.mxu0
      %v3405 = vadd.f32 %v3260, %v3404
      %v3406 = vpop.f32.mrf.mxu0
      %3407 = vmatprep.mubr.bf16.mxu0 %v1533
      %3408 = vmatmul.mubr.bf16.gmra.mxu0 %v1532
      %v3409 = vpop.f32.mrf.mxu0
      %v3410 = vadd.f32 %v3265, %v3409
      %v3411 = vpop.f32.mrf.mxu0
      %v3412 = vpop.f32.mrf.mxu0
      %v3413 = vadd.f32 %v3268, %v3412
      %v3414 = vpop.f32.mrf.mxu0
      %3415 = vmatprep.mubr.bf16.mxu0 %v1549
      %3416 = vmatmul.mubr.bf16.gmra.mxu0 %v1548
      %v3417 = vpop.f32.mrf.mxu0
      %v3418 = vadd.f32 %v3273, %v3417
      %v3419 = vpop.f32.mrf.mxu0
      %v3420 = vpop.f32.mrf.mxu0
      %v3421 = vadd.f32 %v3276, %v3420
      %v3422 = vpop.f32.mrf.mxu0
      %3423 = vmatprep.mubr.bf16.mxu0 %v1565
      %3424 = vmatmul.mubr.bf16.gmra.mxu0 %v1564
      %v3425 = vpop.f32.mrf.mxu0
      %v3426 = vadd.f32 %v3281, %v3425
      %v3427 = vpop.f32.mrf.mxu0
      %v3428 = vpop.f32.mrf.mxu0
      %v3429 = vadd.f32 %v3284, %v3428
      %v3430 = vpop.f32.mrf.mxu0
      %3431 = vdwg.mxu0
      %3432 = vmatprep.subr.bf16.mxu0 0
      %3433 = vmatpush1.bf16.msra.mxu0 %v2409
      %3434 = vmatprep.subr.bf16.mxu0 0
      %3435 = vmatpush1.bf16.msra.mxu0 %v2408
      %3436 = vmatprep.subr.bf16.mxu0 0
      %3437 = vmatpush1.bf16.msra.mxu0 %v2407
      %3438 = vmatprep.subr.bf16.mxu0 0
      %3439 = vmatpush1.bf16.msra.mxu0 %v2406
      %3440 = vmatprep.subr.bf16.mxu0 0
      %3441 = vmatpush1.bf16.msra.mxu0 %v2405
      %3442 = vmatprep.subr.bf16.mxu0 0
      %3443 = vmatpush1.bf16.msra.mxu0 %v2404
      %3444 = vmatprep.subr.bf16.mxu0 0
      %3445 = vmatpush1.bf16.msra.mxu0 %v2403
      %3446 = vmatprep.subr.bf16.mxu0 0
      %3447 = vmatpush1.bf16.msra.mxu0 %v2402
      %3448 = vmatprep.subr.bf16.mxu0 0
      %3449 = vmatpush2.bf16.msra.mxu0 %v2417
      %3450 = vmatprep.subr.bf16.mxu0 0
      %3451 = vmatpush2.bf16.msra.mxu0 %v2416
      %3452 = vmatprep.subr.bf16.mxu0 0
      %3453 = vmatpush2.bf16.msra.mxu0 %v2415
      %3454 = vmatprep.subr.bf16.mxu0 0
      %3455 = vmatpush2.bf16.msra.mxu0 %v2414
      %3456 = vmatprep.subr.bf16.mxu0 0
      %3457 = vmatpush2.bf16.msra.mxu0 %v2413
      %3458 = vmatprep.subr.bf16.mxu0 0
      %3459 = vmatpush2.bf16.msra.mxu0 %v2412
      %3460 = vmatprep.subr.bf16.mxu0 0
      %3461 = vmatpush2.bf16.msra.mxu0 %v2411
      %3462 = vmatprep.subr.bf16.mxu0 0
      %3463 = vmatpush2.bf16.msra.mxu0 %v2410
      %3464 = vmatprep.mubr.bf16.mxu0 %v1359
      %3465 = vmatmul.mubr.bf16.gmra.mxu0 %v1358
      %v3466 = vpop.f32.mrf.mxu0
      %v3467 = vadd.f32 %v3322, %v3466
      %v3468 = vpop.f32.mrf.mxu0
      %v3469 = vpop.f32.mrf.mxu0
      %v3470 = vadd.f32 %v3325, %v3469
      %v3471 = vpop.f32.mrf.mxu0
      %3472 = vmatprep.mubr.bf16.mxu0 %v1375
      %3473 = vmatmul.mubr.bf16.gmra.mxu0 %v1374
      %v3474 = vpop.f32.mrf.mxu0
      %v3475 = vadd.f32 %v3330, %v3474
      %v3476 = vpop.f32.mrf.mxu0
      %v3477 = vpop.f32.mrf.mxu0
      %v3478 = vadd.f32 %v3333, %v3477
      %v3479 = vpop.f32.mrf.mxu0
      %3480 = vmatprep.mubr.bf16.mxu0 %v1391
      %3481 = vmatmul.mubr.bf16.gmra.mxu0 %v1390
      %v3482 = vpop.f32.mrf.mxu0
      %v3483 = vadd.f32 %v3338, %v3482
      %v3484 = vpop.f32.mrf.mxu0
      %v3485 = vpop.f32.mrf.mxu0
      %v3486 = vadd.f32 %v3341, %v3485
      %v3487 = vpop.f32.mrf.mxu0
      %3488 = vmatprep.mubr.bf16.mxu0 %v1407
      %3489 = vmatmul.mubr.bf16.gmra.mxu0 %v1406
      %v3490 = vpop.f32.mrf.mxu0
      %v3491 = vadd.f32 %v3346, %v3490
      %v3492 = vpop.f32.mrf.mxu0
      %v3493 = vpop.f32.mrf.mxu0
      %v3494 = vadd.f32 %v3349, %v3493
      %v3495 = vpop.f32.mrf.mxu0
      %3496 = vmatprep.mubr.bf16.mxu0 %v1423
      %3497 = vmatmul.mubr.bf16.gmra.mxu0 %v1422
      %v3498 = vpop.f32.mrf.mxu0
      %v3499 = vadd.f32 %v3354, %v3498
      %v3500 = vpop.f32.mrf.mxu0
      %v3501 = vpop.f32.mrf.mxu0
      %v3502 = vadd.f32 %v3357, %v3501
      %v3503 = vpop.f32.mrf.mxu0
      %3504 = vmatprep.mubr.bf16.mxu0 %v1439
      %3505 = vmatmul.mubr.bf16.gmra.mxu0 %v1438
      %v3506 = vpop.f32.mrf.mxu0
      %v3507 = vadd.f32 %v3362, %v3506
      %v3508 = vpop.f32.mrf.mxu0
      %v3509 = vpop.f32.mrf.mxu0
      %v3510 = vadd.f32 %v3365, %v3509
      %v3511 = vpop.f32.mrf.mxu0
      %3512 = vmatprep.mubr.bf16.mxu0 %v1455
      %3513 = vmatmul.mubr.bf16.gmra.mxu0 %v1454
      %v3514 = vpop.f32.mrf.mxu0
      %v3515 = vadd.f32 %v3370, %v3514
      %v3516 = vpop.f32.mrf.mxu0
      %v3517 = vpop.f32.mrf.mxu0
      %v3518 = vadd.f32 %v3373, %v3517
      %v3519 = vpop.f32.mrf.mxu0
      %3520 = vmatprep.mubr.bf16.mxu0 %v1471
      %3521 = vmatmul.mubr.bf16.gmra.mxu0 %v1470
      %v3522 = vpop.f32.mrf.mxu0
      %v3523 = vadd.f32 %v3378, %v3522
      %v3524 = vpop.f32.mrf.mxu0
      %v3525 = vpop.f32.mrf.mxu0
      %v3526 = vadd.f32 %v3381, %v3525
      %v3527 = vpop.f32.mrf.mxu0
      %3528 = vmatprep.mubr.bf16.mxu0 %v1487
      %3529 = vmatmul.mubr.bf16.gmra.mxu0 %v1486
      %v3530 = vpop.f32.mrf.mxu0
      %v3531 = vadd.f32 %v3386, %v3530
      %v3532 = vpop.f32.mrf.mxu0
      %v3533 = vpop.f32.mrf.mxu0
      %v3534 = vadd.f32 %v3389, %v3533
      %v3535 = vpop.f32.mrf.mxu0
      %3536 = vmatprep.mubr.bf16.mxu0 %v1503
      %3537 = vmatmul.mubr.bf16.gmra.mxu0 %v1502
      %v3538 = vpop.f32.mrf.mxu0
      %v3539 = vadd.f32 %v3394, %v3538
      %v3540 = vpop.f32.mrf.mxu0
      %v3541 = vpop.f32.mrf.mxu0
      %v3542 = vadd.f32 %v3397, %v3541
      %v3543 = vpop.f32.mrf.mxu0
      %3544 = vmatprep.mubr.bf16.mxu0 %v1519
      %3545 = vmatmul.mubr.bf16.gmra.mxu0 %v1518
      %v3546 = vpop.f32.mrf.mxu0
      %v3547 = vadd.f32 %v3402, %v3546
      %v3548 = vpop.f32.mrf.mxu0
      %v3549 = vpop.f32.mrf.mxu0
      %v3550 = vadd.f32 %v3405, %v3549
      %v3551 = vpop.f32.mrf.mxu0
      %3552 = vmatprep.mubr.bf16.mxu0 %v1535
      %3553 = vmatmul.mubr.bf16.gmra.mxu0 %v1534
      %v3554 = vpop.f32.mrf.mxu0
      %v3555 = vadd.f32 %v3410, %v3554
      %v3556 = vpop.f32.mrf.mxu0
      %v3557 = vpop.f32.mrf.mxu0
      %v3558 = vadd.f32 %v3413, %v3557
      %v3559 = vpop.f32.mrf.mxu0
      %3560 = vmatprep.mubr.bf16.mxu0 %v1551
      %3561 = vmatmul.mubr.bf16.gmra.mxu0 %v1550
      %v3562 = vpop.f32.mrf.mxu0
      %v3563 = vadd.f32 %v3418, %v3562
      %v3564 = vpop.f32.mrf.mxu0
      %v3565 = vpop.f32.mrf.mxu0
      %v3566 = vadd.f32 %v3421, %v3565
      %v3567 = vpop.f32.mrf.mxu0
      %3568 = vmatprep.mubr.bf16.mxu0 %v1567
      %3569 = vmatmul.mubr.bf16.gmra.mxu0 %v1566
      %v3570 = vpop.f32.mrf.mxu0
      %v3571 = vadd.f32 %v3426, %v3570
      %v3572 = vpop.f32.mrf.mxu0
      %v3573 = vpop.f32.mrf.mxu0
      %v3574 = vadd.f32 %v3429, %v3573
      %v3575 = vpop.f32.mrf.mxu0
      %3576 = vdwg.mxu0
      %3577 = vmatprep.subr.bf16.mxu0 0
      %3578 = vmatpush1.bf16.msra.mxu0 %v2425
      %3579 = vmatprep.subr.bf16.mxu0 0
      %3580 = vmatpush1.bf16.msra.mxu0 %v2424
      %3581 = vmatprep.subr.bf16.mxu0 0
      %3582 = vmatpush1.bf16.msra.mxu0 %v2423
      %3583 = vmatprep.subr.bf16.mxu0 0
      %3584 = vmatpush1.bf16.msra.mxu0 %v2422
      %3585 = vmatprep.subr.bf16.mxu0 0
      %3586 = vmatpush1.bf16.msra.mxu0 %v2421
      %3587 = vmatprep.subr.bf16.mxu0 0
      %3588 = vmatpush1.bf16.msra.mxu0 %v2420
      %3589 = vmatprep.subr.bf16.mxu0 0
      %3590 = vmatpush1.bf16.msra.mxu0 %v2419
      %3591 = vmatprep.subr.bf16.mxu0 0
      %3592 = vmatpush1.bf16.msra.mxu0 %v2418
      %3593 = vmatprep.subr.bf16.mxu0 0
      %3594 = vmatpush2.bf16.msra.mxu0 %v2433
      %3595 = vmatprep.subr.bf16.mxu0 0
      %3596 = vmatpush2.bf16.msra.mxu0 %v2432
      %3597 = vmatprep.subr.bf16.mxu0 0
      %3598 = vmatpush2.bf16.msra.mxu0 %v2431
      %3599 = vmatprep.subr.bf16.mxu0 0
      %3600 = vmatpush2.bf16.msra.mxu0 %v2430
      %3601 = vmatprep.subr.bf16.mxu0 0
      %3602 = vmatpush2.bf16.msra.mxu0 %v2429
      %3603 = vmatprep.subr.bf16.mxu0 0
      %3604 = vmatpush2.bf16.msra.mxu0 %v2428
      %3605 = vmatprep.subr.bf16.mxu0 0
      %3606 = vmatpush2.bf16.msra.mxu0 %v2427
      %3607 = vmatprep.subr.bf16.mxu0 0
      %3608 = vmatpush2.bf16.msra.mxu0 %v2426
      %3609 = vmatprep.mubr.bf16.mxu0 %v1361
      %3610 = vmatmul.mubr.bf16.gmra.mxu0 %v1360
      %v3611 = vpop.f32.mrf.mxu0
      %v3612 = vadd.f32 %v3467, %v3611
      %v3613 = vpop.f32.mrf.mxu0
      %v3614 = vpop.f32.mrf.mxu0
      %v3615 = vadd.f32 %v3470, %v3614
      %v3616 = vpop.f32.mrf.mxu0
      %3617 = vmatprep.mubr.bf16.mxu0 %v1377
      %3618 = vmatmul.mubr.bf16.gmra.mxu0 %v1376
      %v3619 = vpop.f32.mrf.mxu0
      %v3620 = vadd.f32 %v3475, %v3619
      %v3621 = vpop.f32.mrf.mxu0
      %v3622 = vpop.f32.mrf.mxu0
      %v3623 = vadd.f32 %v3478, %v3622
      %v3624 = vpop.f32.mrf.mxu0
      %3625 = vmatprep.mubr.bf16.mxu0 %v1393
      %3626 = vmatmul.mubr.bf16.gmra.mxu0 %v1392
      %v3627 = vpop.f32.mrf.mxu0
      %v3628 = vadd.f32 %v3483, %v3627
      %v3629 = vpop.f32.mrf.mxu0
      %v3630 = vpop.f32.mrf.mxu0
      %v3631 = vadd.f32 %v3486, %v3630
      %v3632 = vpop.f32.mrf.mxu0
      %3633 = vmatprep.mubr.bf16.mxu0 %v1409
      %3634 = vmatmul.mubr.bf16.gmra.mxu0 %v1408
      %v3635 = vpop.f32.mrf.mxu0
      %v3636 = vadd.f32 %v3491, %v3635
      %v3637 = vpop.f32.mrf.mxu0
      %v3638 = vpop.f32.mrf.mxu0
      %v3639 = vadd.f32 %v3494, %v3638
      %v3640 = vpop.f32.mrf.mxu0
      %3641 = vmatprep.mubr.bf16.mxu0 %v1425
      %3642 = vmatmul.mubr.bf16.gmra.mxu0 %v1424
      %v3643 = vpop.f32.mrf.mxu0
      %v3644 = vadd.f32 %v3499, %v3643
      %v3645 = vpop.f32.mrf.mxu0
      %v3646 = vpop.f32.mrf.mxu0
      %v3647 = vadd.f32 %v3502, %v3646
      %v3648 = vpop.f32.mrf.mxu0
      %3649 = vmatprep.mubr.bf16.mxu0 %v1441
      %3650 = vmatmul.mubr.bf16.gmra.mxu0 %v1440
      %v3651 = vpop.f32.mrf.mxu0
      %v3652 = vadd.f32 %v3507, %v3651
      %v3653 = vpop.f32.mrf.mxu0
      %v3654 = vpop.f32.mrf.mxu0
      %v3655 = vadd.f32 %v3510, %v3654
      %v3656 = vpop.f32.mrf.mxu0
      %3657 = vmatprep.mubr.bf16.mxu0 %v1457
      %3658 = vmatmul.mubr.bf16.gmra.mxu0 %v1456
      %v3659 = vpop.f32.mrf.mxu0
      %v3660 = vadd.f32 %v3515, %v3659
      %v3661 = vpop.f32.mrf.mxu0
      %v3662 = vpop.f32.mrf.mxu0
      %v3663 = vadd.f32 %v3518, %v3662
      %v3664 = vpop.f32.mrf.mxu0
      %3665 = vmatprep.mubr.bf16.mxu0 %v1473
      %3666 = vmatmul.mubr.bf16.gmra.mxu0 %v1472
      %v3667 = vpop.f32.mrf.mxu0
      %v3668 = vadd.f32 %v3523, %v3667
      %v3669 = vpop.f32.mrf.mxu0
      %v3670 = vpop.f32.mrf.mxu0
      %v3671 = vadd.f32 %v3526, %v3670
      %v3672 = vpop.f32.mrf.mxu0
      %3673 = vmatprep.mubr.bf16.mxu0 %v1489
      %3674 = vmatmul.mubr.bf16.gmra.mxu0 %v1488
      %v3675 = vpop.f32.mrf.mxu0
      %v3676 = vadd.f32 %v3531, %v3675
      %v3677 = vpop.f32.mrf.mxu0
      %v3678 = vpop.f32.mrf.mxu0
      %v3679 = vadd.f32 %v3534, %v3678
      %v3680 = vpop.f32.mrf.mxu0
      %3681 = vmatprep.mubr.bf16.mxu0 %v1505
      %3682 = vmatmul.mubr.bf16.gmra.mxu0 %v1504
      %v3683 = vpop.f32.mrf.mxu0
      %v3684 = vadd.f32 %v3539, %v3683
      %v3685 = vpop.f32.mrf.mxu0
      %v3686 = vpop.f32.mrf.mxu0
      %v3687 = vadd.f32 %v3542, %v3686
      %v3688 = vpop.f32.mrf.mxu0
      %3689 = vmatprep.mubr.bf16.mxu0 %v1521
      %3690 = vmatmul.mubr.bf16.gmra.mxu0 %v1520
      %v3691 = vpop.f32.mrf.mxu0
      %v3692 = vadd.f32 %v3547, %v3691
      %v3693 = vpop.f32.mrf.mxu0
      %v3694 = vpop.f32.mrf.mxu0
      %v3695 = vadd.f32 %v3550, %v3694
      %v3696 = vpop.f32.mrf.mxu0
      %3697 = vmatprep.mubr.bf16.mxu0 %v1537
      %3698 = vmatmul.mubr.bf16.gmra.mxu0 %v1536
      %v3699 = vpop.f32.mrf.mxu0
      %v3700 = vadd.f32 %v3555, %v3699
      %v3701 = vpop.f32.mrf.mxu0
      %v3702 = vpop.f32.mrf.mxu0
      %v3703 = vadd.f32 %v3558, %v3702
      %v3704 = vpop.f32.mrf.mxu0
      %3705 = vmatprep.mubr.bf16.mxu0 %v1553
      %3706 = vmatmul.mubr.bf16.gmra.mxu0 %v1552
      %v3707 = vpop.f32.mrf.mxu0
      %v3708 = vadd.f32 %v3563, %v3707
      %v3709 = vpop.f32.mrf.mxu0
      %v3710 = vpop.f32.mrf.mxu0
      %v3711 = vadd.f32 %v3566, %v3710
      %v3712 = vpop.f32.mrf.mxu0
      %3713 = vmatprep.mubr.bf16.mxu0 %v1569
      %3714 = vmatmul.mubr.bf16.gmra.mxu0 %v1568
      %v3715 = vpop.f32.mrf.mxu0
      %v3716 = vadd.f32 %v3571, %v3715
      %v3717 = vpop.f32.mrf.mxu0
      %v3718 = vpop.f32.mrf.mxu0
      %v3719 = vadd.f32 %v3574, %v3718
      %v3720 = vpop.f32.mrf.mxu0
      %3721 = vdwg.mxu0
      %s3722 = smul.u32 %s15, 224
      %s3723 = scalar_lea.vmem [#allocation2], %s3722
      %3724 = vst [vmem:[%s3723] sm:$0xff] %v3612
      %3725 = vst [vmem:[%s3723 + $0x8] sm:$0xff] %v3615
      %3726 = vst [vmem:[%s3723 + $0x10] sm:$0xff] %v3620
      %3727 = vst [vmem:[%s3723 + $0x18] sm:$0xff] %v3623
      %3728 = vst [vmem:[%s3723 + $0x20] sm:$0xff] %v3628
      %3729 = vst [vmem:[%s3723 + $0x28] sm:$0xff] %v3631
      %3730 = vst [vmem:[%s3723 + $0x30] sm:$0xff] %v3636
      %3731 = vst [vmem:[%s3723 + $0x38] sm:$0xff] %v3639
      %3732 = vst [vmem:[%s3723 + $0x40] sm:$0xff] %v3644
      %3733 = vst [vmem:[%s3723 + $0x48] sm:$0xff] %v3647
      %3734 = vst [vmem:[%s3723 + $0x50] sm:$0xff] %v3652
      %3735 = vst [vmem:[%s3723 + $0x58] sm:$0xff] %v3655
      %3736 = vst [vmem:[%s3723 + $0x60] sm:$0xff] %v3660
      %3737 = vst [vmem:[%s3723 + $0x68] sm:$0xff] %v3663
      %3738 = vst [vmem:[%s3723 + $0x70] sm:$0xff] %v3668
      %3739 = vst [vmem:[%s3723 + $0x78] sm:$0xff] %v3671
      %3740 = vst [vmem:[%s3723 + $0x80] sm:$0xff] %v3676
      %3741 = vst [vmem:[%s3723 + $0x88] sm:$0xff] %v3679
      %3742 = vst [vmem:[%s3723 + $0x90] sm:$0xff] %v3684
      %3743 = vst [vmem:[%s3723 + $0x98] sm:$0xff] %v3687
      %3744 = vst [vmem:[%s3723 + $0xa0] sm:$0xff] %v3692
      %3745 = vst [vmem:[%s3723 + $0xa8] sm:$0xff] %v3695
      %3746 = vst [vmem:[%s3723 + $0xb0] sm:$0xff] %v3700
      %3747 = vst [vmem:[%s3723 + $0xb8] sm:$0xff] %v3703
      %3748 = vst [vmem:[%s3723 + $0xc0] sm:$0xff] %v3708
      %3749 = vst [vmem:[%s3723 + $0xc8] sm:$0xff] %v3711
      %3750 = vst [vmem:[%s3723 + $0xd0] sm:$0xff] %v3716
      %3751 = vst [vmem:[%s3723 + $0xd8] sm:$0xff] %v3719
      %v3752 = vld [vmem:[#allocation3] sm:$0x1]
      %v3753 = vadd.f32 %v3612, %v3615
      %v3754 = vadd.f32 %v3753, %v3620
      %v3755 = vadd.f32 %v3754, %v3623
      %v3756 = vadd.f32 %v3755, %v3628
      %v3757 = vadd.f32 %v3756, %v3631
      %v3758 = vadd.f32 %v3757, %v3636
      %v3759 = vadd.f32 %v3758, %v3639
      %v3760 = vadd.f32 %v3759, %v3644
      %v3761 = vadd.f32 %v3760, %v3647
      %v3762 = vadd.f32 %v3761, %v3652
      %v3763 = vadd.f32 %v3762, %v3655
      %v3764 = vadd.f32 %v3763, %v3660
      %v3765 = vadd.f32 %v3764, %v3663
      %v3766 = vadd.f32 %v3765, %v3668
      %v3767 = vadd.f32 %v3766, %v3671
      %v3768 = vadd.f32 %v3767, %v3676
      %v3769 = vadd.f32 %v3768, %v3679
      %v3770 = vadd.f32 %v3769, %v3684
      %v3771 = vadd.f32 %v3770, %v3687
      %v3772 = vadd.f32 %v3771, %v3692
      %v3773 = vadd.f32 %v3772, %v3695
      %v3774 = vadd.f32 %v3773, %v3700
      %v3775 = vadd.f32 %v3774, %v3703
      %v3776 = vadd.f32 %v3775, %v3708
      %v3777 = vadd.f32 %v3776, %v3711
      %v3778 = vadd.f32 %v3777, %v3716
      %v3779 = vadd.f32 %v3778, %v3719
      %v3780 = vrot.slane %v3779, 4
      %v3781 = vadd.f32 %v3779, %v3780
      %v3782 = vrot.slane %v3781, 2
      %v3783 = vadd.f32 %v3781, %v3782
      %v3784 = vrot.slane %v3783, 1
      %v3785 = vadd.f32 %v3783, %v3784
      %v3786 = vadd.f32 %v3752, %v3785
      %3787 = vst [vmem:[#allocation3] sm:$0x1] %v3786
      %v3788 = vld [vmem:[#allocation3 + $0x1] sm:$0x1]
      %v3789 = vmul.f32 %v3612, %v3612
      %v3790 = vmul.f32 %v3615, %v3615
      %v3791 = vmul.f32 %v3620, %v3620
      %v3792 = vmul.f32 %v3623, %v3623
      %v3793 = vmul.f32 %v3628, %v3628
      %v3794 = vmul.f32 %v3631, %v3631
      %v3795 = vmul.f32 %v3636, %v3636
      %v3796 = vmul.f32 %v3639, %v3639
      %v3797 = vmul.f32 %v3644, %v3644
      %v3798 = vmul.f32 %v3647, %v3647
      %v3799 = vmul.f32 %v3652, %v3652
      %v3800 = vmul.f32 %v3655, %v3655
      %v3801 = vmul.f32 %v3660, %v3660
      %v3802 = vmul.f32 %v3663, %v3663
      %v3803 = vmul.f32 %v3668, %v3668
      %v3804 = vmul.f32 %v3671, %v3671
      %v3805 = vmul.f32 %v3676, %v3676
      %v3806 = vmul.f32 %v3679, %v3679
      %v3807 = vmul.f32 %v3684, %v3684
      %v3808 = vmul.f32 %v3687, %v3687
      %v3809 = vmul.f32 %v3692, %v3692
      %v3810 = vmul.f32 %v3695, %v3695
      %v3811 = vmul.f32 %v3700, %v3700
      %v3812 = vmul.f32 %v3703, %v3703
      %v3813 = vmul.f32 %v3708, %v3708
      %v3814 = vmul.f32 %v3711, %v3711
      %v3815 = vmul.f32 %v3716, %v3716
      %v3816 = vmul.f32 %v3719, %v3719
      %v3817 = vadd.f32 %v3789, %v3790
      %v3818 = vadd.f32 %v3817, %v3791
      %v3819 = vadd.f32 %v3818, %v3792
      %v3820 = vadd.f32 %v3819, %v3793
      %v3821 = vadd.f32 %v3820, %v3794
      %v3822 = vadd.f32 %v3821, %v3795
      %v3823 = vadd.f32 %v3822, %v3796
      %v3824 = vadd.f32 %v3823, %v3797
      %v3825 = vadd.f32 %v3824, %v3798
      %v3826 = vadd.f32 %v3825, %v3799
      %v3827 = vadd.f32 %v3826, %v3800
      %v3828 = vadd.f32 %v3827, %v3801
      %v3829 = vadd.f32 %v3828, %v3802
      %v3830 = vadd.f32 %v3829, %v3803
      %v3831 = vadd.f32 %v3830, %v3804
      %v3832 = vadd.f32 %v3831, %v3805
      %v3833 = vadd.f32 %v3832, %v3806
      %v3834 = vadd.f32 %v3833, %v3807
      %v3835 = vadd.f32 %v3834, %v3808
      %v3836 = vadd.f32 %v3835, %v3809
      %v3837 = vadd.f32 %v3836, %v3810
      %v3838 = vadd.f32 %v3837, %v3811
      %v3839 = vadd.f32 %v3838, %v3812
      %v3840 = vadd.f32 %v3839, %v3813
      %v3841 = vadd.f32 %v3840, %v3814
      %v3842 = vadd.f32 %v3841, %v3815
      %v3843 = vadd.f32 %v3842, %v3816
      %v3844 = vrot.slane %v3843, 4
      %v3845 = vadd.f32 %v3843, %v3844
      %v3846 = vrot.slane %v3845, 2
      %v3847 = vadd.f32 %v3845, %v3846
      %v3848 = vrot.slane %v3847, 1
      %v3849 = vadd.f32 %v3847, %v3848
      %v3850 = vadd.f32 %v3788, %v3849
      %3851 = vst [vmem:[#allocation3 + $0x1] sm:$0x1] %v3850
      %p3852 = scmp.eq.s32.totalorder %s15, 6
      // Predicated region
      $region41: #{generator_forward.6} parent=35 // pred_check
        %p3853 = pneg %p3852
      $region42: #{generator_forward.6} parent=35 // pred_check_branch
        %3855 = sbr.rel (%p3853) target = $region44
      $region43: #{generator_forward.6} parent=35 // pred_region
        %v3856 = vld [vmem:[#allocation3] sm:$0x1]
        %v3857 = vrcp.pop 1568.0
        %v3858 = vmul.f32 %v3856, %v3857
        %v3859 = vld [vmem:[#allocation3 + $0x1] sm:$0x1]
        %v3860 = vmul.f32 %v3859, %v3857
        %v3861 = vmul.f32 %v3858, %v3858
        %v3862 = vsub.f32 %v3860, %v3861
        %v3863 = vmax.f32 %v3862, 0.0
        %v3864 = vld [vmem:[%s2] sm:$0x1]
        %v3865 = vadd.f32 %v3863, 1e-05
        %v3866 = vrsqrt.pop %v3865
        %v3867 = vmul.f32 %v3864, %v3866
        %v3868 = vld [vmem:[%s3] sm:$0x1]
        %v3869 = vmul.f32 %v3858, %v3867
        %v3870 = vsub.f32 %v3868, %v3869
        %v3871 = vld [vmem:[#allocation2] sm:$0xff]
        %v3872 = vld [vmem:[#allocation2 + $0x8] sm:$0xff]
        %v3873 = vld [vmem:[#allocation2 + $0x10] sm:$0xff]
        %v3874 = vld [vmem:[#allocation2 + $0x18] sm:$0xff]
        %v3875 = vld [vmem:[#allocation2 + $0x20] sm:$0xff]
        %v3876 = vld [vmem:[#allocation2 + $0x28] sm:$0xff]
        %v3877 = vld [vmem:[#allocation2 + $0x30] sm:$0xff]
        %v3878 = vld [vmem:[#allocation2 + $0x38] sm:$0xff]
        %v3879 = vld [vmem:[#allocation2 + $0x40] sm:$0xff]
        %v3880 = vld [vmem:[#allocation2 + $0x48] sm:$0xff]
        %v3881 = vld [vmem:[#allocation2 + $0x50] sm:$0xff]
        %v3882 = vld [vmem:[#allocation2 + $0x58] sm:$0xff]
        %v3883 = vld [vmem:[#allocation2 + $0x60] sm:$0xff]
        %v3884 = vld [vmem:[#allocation2 + $0x68] sm:$0xff]
        %v3885 = vld [vmem:[#allocation2 + $0x70] sm:$0xff]
        %v3886 = vld [vmem:[#allocation2 + $0x78] sm:$0xff]
        %v3887 = vld [vmem:[#allocation2 + $0x80] sm:$0xff]
        %v3888 = vld [vmem:[#allocation2 + $0x88] sm:$0xff]
        %v3889 = vld [vmem:[#allocation2 + $0x90] sm:$0xff]
        %v3890 = vld [vmem:[#allocation2 + $0x98] sm:$0xff]
        %v3891 = vld [vmem:[#allocation2 + $0xa0] sm:$0xff]
        %v3892 = vld [vmem:[#allocation2 + $0xa8] sm:$0xff]
        %v3893 = vld [vmem:[#allocation2 + $0xb0] sm:$0xff]
        %v3894 = vld [vmem:[#allocation2 + $0xb8] sm:$0xff]
        %v3895 = vld [vmem:[#allocation2 + $0xc0] sm:$0xff]
        %v3896 = vld [vmem:[#allocation2 + $0xc8] sm:$0xff]
        %v3897 = vld [vmem:[#allocation2 + $0xd0] sm:$0xff]
        %v3898 = vld [vmem:[#allocation2 + $0xd8] sm:$0xff]
        %v3899 = vld [vmem:[#allocation2 + $0xe0] sm:$0xff]
        %v3900 = vld [vmem:[#allocation2 + $0xe8] sm:$0xff]
        %v3901 = vld [vmem:[#allocation2 + $0xf0] sm:$0xff]
        %v3902 = vld [vmem:[#allocation2 + $0xf8] sm:$0xff]
        %v3903 = vld [vmem:[#allocation2 + $0x100] sm:$0xff]
        %v3904 = vld [vmem:[#allocation2 + $0x108] sm:$0xff]
        %v3905 = vld [vmem:[#allocation2 + $0x110] sm:$0xff]
        %v3906 = vld [vmem:[#allocation2 + $0x118] sm:$0xff]
        %v3907 = vld [vmem:[#allocation2 + $0x120] sm:$0xff]
        %v3908 = vld [vmem:[#allocation2 + $0x128] sm:$0xff]
        %v3909 = vld [vmem:[#allocation2 + $0x130] sm:$0xff]
        %v3910 = vld [vmem:[#allocation2 + $0x138] sm:$0xff]
        %v3911 = vld [vmem:[#allocation2 + $0x140] sm:$0xff]
        %v3912 = vld [vmem:[#allocation2 + $0x148] sm:$0xff]
        %v3913 = vld [vmem:[#allocation2 + $0x150] sm:$0xff]
        %v3914 = vld [vmem:[#allocation2 + $0x158] sm:$0xff]
        %v3915 = vld [vmem:[#allocation2 + $0x160] sm:$0xff]
        %v3916 = vld [vmem:[#allocation2 + $0x168] sm:$0xff]
        %v3917 = vld [vmem:[#allocation2 + $0x170] sm:$0xff]
        %v3918 = vld [vmem:[#allocation2 + $0x178] sm:$0xff]
        %v3919 = vld [vmem:[#allocation2 + $0x180] sm:$0xff]
        %v3920 = vld [vmem:[#allocation2 + $0x188] sm:$0xff]
        %v3921 = vld [vmem:[#allocation2 + $0x190] sm:$0xff]
        %v3922 = vld [vmem:[#allocation2 + $0x198] sm:$0xff]
        %v3923 = vld [vmem:[#allocation2 + $0x1a0] sm:$0xff]
        %v3924 = vld [vmem:[#allocation2 + $0x1a8] sm:$0xff]
        %v3925 = vld [vmem:[#allocation2 + $0x1b0] sm:$0xff]
        %v3926 = vld [vmem:[#allocation2 + $0x1b8] sm:$0xff]
        %v3927 = vld [vmem:[#allocation2 + $0x1c0] sm:$0xff]
        %v3928 = vld [vmem:[#allocation2 + $0x1c8] sm:$0xff]
        %v3929 = vld [vmem:[#allocation2 + $0x1d0] sm:$0xff]
        %v3930 = vld [vmem:[#allocation2 + $0x1d8] sm:$0xff]
        %v3931 = vld [vmem:[#allocation2 + $0x1e0] sm:$0xff]
        %v3932 = vld [vmem:[#allocation2 + $0x1e8] sm:$0xff]
        %v3933 = vld [vmem:[#allocation2 + $0x1f0] sm:$0xff]
        %v3934 = vld [vmem:[#allocation2 + $0x1f8] sm:$0xff]
        %v3935 = vld [vmem:[#allocation2 + $0x200] sm:$0xff]
        %v3936 = vld [vmem:[#allocation2 + $0x208] sm:$0xff]
        %v3937 = vld [vmem:[#allocation2 + $0x210] sm:$0xff]
        %v3938 = vld [vmem:[#allocation2 + $0x218] sm:$0xff]
        %v3939 = vld [vmem:[#allocation2 + $0x220] sm:$0xff]
        %v3940 = vld [vmem:[#allocation2 + $0x228] sm:$0xff]
        %v3941 = vld [vmem:[#allocation2 + $0x230] sm:$0xff]
        %v3942 = vld [vmem:[#allocation2 + $0x238] sm:$0xff]
        %v3943 = vld [vmem:[#allocation2 + $0x240] sm:$0xff]
        %v3944 = vld [vmem:[#allocation2 + $0x248] sm:$0xff]
        %v3945 = vld [vmem:[#allocation2 + $0x250] sm:$0xff]
        %v3946 = vld [vmem:[#allocation2 + $0x258] sm:$0xff]
        %v3947 = vld [vmem:[#allocation2 + $0x260] sm:$0xff]
        %v3948 = vld [vmem:[#allocation2 + $0x268] sm:$0xff]
        %v3949 = vld [vmem:[#allocation2 + $0x270] sm:$0xff]
        %v3950 = vld [vmem:[#allocation2 + $0x278] sm:$0xff]
        %v3951 = vld [vmem:[#allocation2 + $0x280] sm:$0xff]
        %v3952 = vld [vmem:[#allocation2 + $0x288] sm:$0xff]
        %v3953 = vld [vmem:[#allocation2 + $0x290] sm:$0xff]
        %v3954 = vld [vmem:[#allocation2 + $0x298] sm:$0xff]
        %v3955 = vld [vmem:[#allocation2 + $0x2a0] sm:$0xff]
        %v3956 = vld [vmem:[#allocation2 + $0x2a8] sm:$0xff]
        %v3957 = vld [vmem:[#allocation2 + $0x2b0] sm:$0xff]
        %v3958 = vld [vmem:[#allocation2 + $0x2b8] sm:$0xff]
        %v3959 = vld [vmem:[#allocation2 + $0x2c0] sm:$0xff]
        %v3960 = vld [vmem:[#allocation2 + $0x2c8] sm:$0xff]
        %v3961 = vld [vmem:[#allocation2 + $0x2d0] sm:$0xff]
        %v3962 = vld [vmem:[#allocation2 + $0x2d8] sm:$0xff]
        %v3963 = vld [vmem:[#allocation2 + $0x2e0] sm:$0xff]
        %v3964 = vld [vmem:[#allocation2 + $0x2e8] sm:$0xff]
        %v3965 = vld [vmem:[#allocation2 + $0x2f0] sm:$0xff]
        %v3966 = vld [vmem:[#allocation2 + $0x2f8] sm:$0xff]
        %v3967 = vld [vmem:[#allocation2 + $0x300] sm:$0xff]
        %v3968 = vld [vmem:[#allocation2 + $0x308] sm:$0xff]
        %v3969 = vld [vmem:[#allocation2 + $0x310] sm:$0xff]
        %v3970 = vld [vmem:[#allocation2 + $0x318] sm:$0xff]
        %v3971 = vld [vmem:[#allocation2 + $0x320] sm:$0xff]
        %v3972 = vld [vmem:[#allocation2 + $0x328] sm:$0xff]
        %v3973 = vld [vmem:[#allocation2 + $0x330] sm:$0xff]
        %v3974 = vld [vmem:[#allocation2 + $0x338] sm:$0xff]
        %v3975 = vld [vmem:[#allocation2 + $0x340] sm:$0xff]
        %v3976 = vld [vmem:[#allocation2 + $0x348] sm:$0xff]
        %v3977 = vld [vmem:[#allocation2 + $0x350] sm:$0xff]
        %v3978 = vld [vmem:[#allocation2 + $0x358] sm:$0xff]
        %v3979 = vld [vmem:[#allocation2 + $0x360] sm:$0xff]
        %v3980 = vld [vmem:[#allocation2 + $0x368] sm:$0xff]
        %v3981 = vld [vmem:[#allocation2 + $0x370] sm:$0xff]
        %v3982 = vld [vmem:[#allocation2 + $0x378] sm:$0xff]
        %v3983 = vld [vmem:[#allocation2 + $0x380] sm:$0xff]
        %v3984 = vld [vmem:[#allocation2 + $0x388] sm:$0xff]
        %v3985 = vld [vmem:[#allocation2 + $0x390] sm:$0xff]
        %v3986 = vld [vmem:[#allocation2 + $0x398] sm:$0xff]
        %v3987 = vld [vmem:[#allocation2 + $0x3a0] sm:$0xff]
        %v3988 = vld [vmem:[#allocation2 + $0x3a8] sm:$0xff]
        %v3989 = vld [vmem:[#allocation2 + $0x3b0] sm:$0xff]
        %v3990 = vld [vmem:[#allocation2 + $0x3b8] sm:$0xff]
        %v3991 = vld [vmem:[#allocation2 + $0x3c0] sm:$0xff]
        %v3992 = vld [vmem:[#allocation2 + $0x3c8] sm:$0xff]
        %v3993 = vld [vmem:[#allocation2 + $0x3d0] sm:$0xff]
        %v3994 = vld [vmem:[#allocation2 + $0x3d8] sm:$0xff]
        %v3995 = vld [vmem:[#allocation2 + $0x3e0] sm:$0xff]
        %v3996 = vld [vmem:[#allocation2 + $0x3e8] sm:$0xff]
        %v3997 = vld [vmem:[#allocation2 + $0x3f0] sm:$0xff]
        %v3998 = vld [vmem:[#allocation2 + $0x3f8] sm:$0xff]
        %v3999 = vld [vmem:[#allocation2 + $0x400] sm:$0xff]
        %v4000 = vld [vmem:[#allocation2 + $0x408] sm:$0xff]
        %v4001 = vld [vmem:[#allocation2 + $0x410] sm:$0xff]
        %v4002 = vld [vmem:[#allocation2 + $0x418] sm:$0xff]
        %v4003 = vld [vmem:[#allocation2 + $0x420] sm:$0xff]
        %v4004 = vld [vmem:[#allocation2 + $0x428] sm:$0xff]
        %v4005 = vld [vmem:[#allocation2 + $0x430] sm:$0xff]
        %v4006 = vld [vmem:[#allocation2 + $0x438] sm:$0xff]
        %v4007 = vld [vmem:[#allocation2 + $0x440] sm:$0xff]
        %v4008 = vld [vmem:[#allocation2 + $0x448] sm:$0xff]
        %v4009 = vld [vmem:[#allocation2 + $0x450] sm:$0xff]
        %v4010 = vld [vmem:[#allocation2 + $0x458] sm:$0xff]
        %v4011 = vld [vmem:[#allocation2 + $0x460] sm:$0xff]
        %v4012 = vld [vmem:[#allocation2 + $0x468] sm:$0xff]
        %v4013 = vld [vmem:[#allocation2 + $0x470] sm:$0xff]
        %v4014 = vld [vmem:[#allocation2 + $0x478] sm:$0xff]
        %v4015 = vld [vmem:[#allocation2 + $0x480] sm:$0xff]
        %v4016 = vld [vmem:[#allocation2 + $0x488] sm:$0xff]
        %v4017 = vld [vmem:[#allocation2 + $0x490] sm:$0xff]
        %v4018 = vld [vmem:[#allocation2 + $0x498] sm:$0xff]
        %v4019 = vld [vmem:[#allocation2 + $0x4a0] sm:$0xff]
        %v4020 = vld [vmem:[#allocation2 + $0x4a8] sm:$0xff]
        %v4021 = vld [vmem:[#allocation2 + $0x4b0] sm:$0xff]
        %v4022 = vld [vmem:[#allocation2 + $0x4b8] sm:$0xff]
        %v4023 = vld [vmem:[#allocation2 + $0x4c0] sm:$0xff]
        %v4024 = vld [vmem:[#allocation2 + $0x4c8] sm:$0xff]
        %v4025 = vld [vmem:[#allocation2 + $0x4d0] sm:$0xff]
        %v4026 = vld [vmem:[#allocation2 + $0x4d8] sm:$0xff]
        %v4027 = vld [vmem:[#allocation2 + $0x4e0] sm:$0xff]
        %v4028 = vld [vmem:[#allocation2 + $0x4e8] sm:$0xff]
        %v4029 = vld [vmem:[#allocation2 + $0x4f0] sm:$0xff]
        %v4030 = vld [vmem:[#allocation2 + $0x4f8] sm:$0xff]
        %v4031 = vld [vmem:[#allocation2 + $0x500] sm:$0xff]
        %v4032 = vld [vmem:[#allocation2 + $0x508] sm:$0xff]
        %v4033 = vld [vmem:[#allocation2 + $0x510] sm:$0xff]
        %v4034 = vld [vmem:[#allocation2 + $0x518] sm:$0xff]
        %v4035 = vld [vmem:[#allocation2 + $0x520] sm:$0xff]
        %v4036 = vld [vmem:[#allocation2 + $0x528] sm:$0xff]
        %v4037 = vld [vmem:[#allocation2 + $0x530] sm:$0xff]
        %v4038 = vld [vmem:[#allocation2 + $0x538] sm:$0xff]
        %v4039 = vld [vmem:[#allocation2 + $0x540] sm:$0xff]
        %v4040 = vld [vmem:[#allocation2 + $0x548] sm:$0xff]
        %v4041 = vld [vmem:[#allocation2 + $0x550] sm:$0xff]
        %v4042 = vld [vmem:[#allocation2 + $0x558] sm:$0xff]
        %v4043 = vld [vmem:[#allocation2 + $0x560] sm:$0xff]
        %v4044 = vld [vmem:[#allocation2 + $0x568] sm:$0xff]
        %v4045 = vld [vmem:[#allocation2 + $0x570] sm:$0xff]
        %v4046 = vld [vmem:[#allocation2 + $0x578] sm:$0xff]
        %v4047 = vld [vmem:[#allocation2 + $0x580] sm:$0xff]
        %v4048 = vld [vmem:[#allocation2 + $0x588] sm:$0xff]
        %v4049 = vld [vmem:[#allocation2 + $0x590] sm:$0xff]
        %v4050 = vld [vmem:[#allocation2 + $0x598] sm:$0xff]
        %v4051 = vld [vmem:[#allocation2 + $0x5a0] sm:$0xff]
        %v4052 = vld [vmem:[#allocation2 + $0x5a8] sm:$0xff]
        %v4053 = vld [vmem:[#allocation2 + $0x5b0] sm:$0xff]
        %v4054 = vld [vmem:[#allocation2 + $0x5b8] sm:$0xff]
        %v4055 = vld [vmem:[#allocation2 + $0x5c0] sm:$0xff]
        %v4056 = vld [vmem:[#allocation2 + $0x5c8] sm:$0xff]
        %v4057 = vld [vmem:[#allocation2 + $0x5d0] sm:$0xff]
        %v4058 = vld [vmem:[#allocation2 + $0x5d8] sm:$0xff]
        %v4059 = vld [vmem:[#allocation2 + $0x5e0] sm:$0xff]
        %v4060 = vld [vmem:[#allocation2 + $0x5e8] sm:$0xff]
        %v4061 = vld [vmem:[#allocation2 + $0x5f0] sm:$0xff]
        %v4062 = vld [vmem:[#allocation2 + $0x5f8] sm:$0xff]
        %v4063 = vld [vmem:[#allocation2 + $0x600] sm:$0xff]
        %v4064 = vld [vmem:[#allocation2 + $0x608] sm:$0xff]
        %v4065 = vld [vmem:[#allocation2 + $0x610] sm:$0xff]
        %v4066 = vld [vmem:[#allocation2 + $0x618] sm:$0xff]
        %v4068 = vlaneseq
        %v4069 = vshrl.u32 %v4068, 7
        %v4070 = vsub.s32 0, %v4069
        %v4071 = vrot.slane %v3867, %v4070
        %v4073 = vmul.f32 %v3871, %v4071
        %v4074 = vmul.f32 %v3872, %v4071
        %v4075 = vmul.f32 %v3873, %v4071
        %v4076 = vmul.f32 %v3874, %v4071
        %v4077 = vmul.f32 %v3875, %v4071
        %v4078 = vmul.f32 %v3876, %v4071
        %v4079 = vmul.f32 %v3877, %v4071
        %v4080 = vmul.f32 %v3878, %v4071
        %v4081 = vmul.f32 %v3879, %v4071
        %v4082 = vmul.f32 %v3880, %v4071
        %v4083 = vmul.f32 %v3881, %v4071
        %v4084 = vmul.f32 %v3882, %v4071
        %v4085 = vmul.f32 %v3883, %v4071
        %v4086 = vmul.f32 %v3884, %v4071
        %v4087 = vmul.f32 %v3885, %v4071
        %v4088 = vmul.f32 %v3886, %v4071
        %v4089 = vmul.f32 %v3887, %v4071
        %v4090 = vmul.f32 %v3888, %v4071
        %v4091 = vmul.f32 %v3889, %v4071
        %v4092 = vmul.f32 %v3890, %v4071
        %v4093 = vmul.f32 %v3891, %v4071
        %v4094 = vmul.f32 %v3892, %v4071
        %v4095 = vmul.f32 %v3893, %v4071
        %v4096 = vmul.f32 %v3894, %v4071
        %v4097 = vmul.f32 %v3895, %v4071
        %v4098 = vmul.f32 %v3896, %v4071
        %v4099 = vmul.f32 %v3897, %v4071
        %v4100 = vmul.f32 %v3898, %v4071
        %v4101 = vmul.f32 %v3899, %v4071
        %v4102 = vmul.f32 %v3900, %v4071
        %v4103 = vmul.f32 %v3901, %v4071
        %v4104 = vmul.f32 %v3902, %v4071
        %v4105 = vmul.f32 %v3903, %v4071
        %v4106 = vmul.f32 %v3904, %v4071
        %v4107 = vmul.f32 %v3905, %v4071
        %v4108 = vmul.f32 %v3906, %v4071
        %v4109 = vmul.f32 %v3907, %v4071
        %v4110 = vmul.f32 %v3908, %v4071
        %v4111 = vmul.f32 %v3909, %v4071
        %v4112 = vmul.f32 %v3910, %v4071
        %v4113 = vmul.f32 %v3911, %v4071
        %v4114 = vmul.f32 %v3912, %v4071
        %v4115 = vmul.f32 %v3913, %v4071
        %v4116 = vmul.f32 %v3914, %v4071
        %v4117 = vmul.f32 %v3915, %v4071
        %v4118 = vmul.f32 %v3916, %v4071
        %v4119 = vmul.f32 %v3917, %v4071
        %v4120 = vmul.f32 %v3918, %v4071
        %v4121 = vmul.f32 %v3919, %v4071
        %v4122 = vmul.f32 %v3920, %v4071
        %v4123 = vmul.f32 %v3921, %v4071
        %v4124 = vmul.f32 %v3922, %v4071
        %v4125 = vmul.f32 %v3923, %v4071
        %v4126 = vmul.f32 %v3924, %v4071
        %v4127 = vmul.f32 %v3925, %v4071
        %v4128 = vmul.f32 %v3926, %v4071
        %v4129 = vmul.f32 %v3927, %v4071
        %v4130 = vmul.f32 %v3928, %v4071
        %v4131 = vmul.f32 %v3929, %v4071
        %v4132 = vmul.f32 %v3930, %v4071
        %v4133 = vmul.f32 %v3931, %v4071
        %v4134 = vmul.f32 %v3932, %v4071
        %v4135 = vmul.f32 %v3933, %v4071
        %v4136 = vmul.f32 %v3934, %v4071
        %v4137 = vmul.f32 %v3935, %v4071
        %v4138 = vmul.f32 %v3936, %v4071
        %v4139 = vmul.f32 %v3937, %v4071
        %v4140 = vmul.f32 %v3938, %v4071
        %v4141 = vmul.f32 %v3939, %v4071
        %v4142 = vmul.f32 %v3940, %v4071
        %v4143 = vmul.f32 %v3941, %v4071
        %v4144 = vmul.f32 %v3942, %v4071
        %v4145 = vmul.f32 %v3943, %v4071
        %v4146 = vmul.f32 %v3944, %v4071
        %v4147 = vmul.f32 %v3945, %v4071
        %v4148 = vmul.f32 %v3946, %v4071
        %v4149 = vmul.f32 %v3947, %v4071
        %v4150 = vmul.f32 %v3948, %v4071
        %v4151 = vmul.f32 %v3949, %v4071
        %v4152 = vmul.f32 %v3950, %v4071
        %v4153 = vmul.f32 %v3951, %v4071
        %v4154 = vmul.f32 %v3952, %v4071
        %v4155 = vmul.f32 %v3953, %v4071
        %v4156 = vmul.f32 %v3954, %v4071
        %v4157 = vmul.f32 %v3955, %v4071
        %v4158 = vmul.f32 %v3956, %v4071
        %v4159 = vmul.f32 %v3957, %v4071
        %v4160 = vmul.f32 %v3958, %v4071
        %v4161 = vmul.f32 %v3959, %v4071
        %v4162 = vmul.f32 %v3960, %v4071
        %v4163 = vmul.f32 %v3961, %v4071
        %v4164 = vmul.f32 %v3962, %v4071
        %v4165 = vmul.f32 %v3963, %v4071
        %v4166 = vmul.f32 %v3964, %v4071
        %v4167 = vmul.f32 %v3965, %v4071
        %v4168 = vmul.f32 %v3966, %v4071
        %v4169 = vmul.f32 %v3967, %v4071
        %v4170 = vmul.f32 %v3968, %v4071
        %v4171 = vmul.f32 %v3969, %v4071
        %v4172 = vmul.f32 %v3970, %v4071
        %v4173 = vmul.f32 %v3971, %v4071
        %v4174 = vmul.f32 %v3972, %v4071
        %v4175 = vmul.f32 %v3973, %v4071
        %v4176 = vmul.f32 %v3974, %v4071
        %v4177 = vmul.f32 %v3975, %v4071
        %v4178 = vmul.f32 %v3976, %v4071
        %v4179 = vmul.f32 %v3977, %v4071
        %v4180 = vmul.f32 %v3978, %v4071
        %v4181 = vmul.f32 %v3979, %v4071
        %v4182 = vmul.f32 %v3980, %v4071
        %v4183 = vmul.f32 %v3981, %v4071
        %v4184 = vmul.f32 %v3982, %v4071
        %v4185 = vmul.f32 %v3983, %v4071
        %v4186 = vmul.f32 %v3984, %v4071
        %v4187 = vmul.f32 %v3985, %v4071
        %v4188 = vmul.f32 %v3986, %v4071
        %v4189 = vmul.f32 %v3987, %v4071
        %v4190 = vmul.f32 %v3988, %v4071
        %v4191 = vmul.f32 %v3989, %v4071
        %v4192 = vmul.f32 %v3990, %v4071
        %v4193 = vmul.f32 %v3991, %v4071
        %v4194 = vmul.f32 %v3992, %v4071
        %v4195 = vmul.f32 %v3993, %v4071
        %v4196 = vmul.f32 %v3994, %v4071
        %v4197 = vmul.f32 %v3995, %v4071
        %v4198 = vmul.f32 %v3996, %v4071
        %v4199 = vmul.f32 %v3997, %v4071
        %v4200 = vmul.f32 %v3998, %v4071
        %v4201 = vmul.f32 %v3999, %v4071
        %v4202 = vmul.f32 %v4000, %v4071
        %v4203 = vmul.f32 %v4001, %v4071
        %v4204 = vmul.f32 %v4002, %v4071
        %v4205 = vmul.f32 %v4003, %v4071
        %v4206 = vmul.f32 %v4004, %v4071
        %v4207 = vmul.f32 %v4005, %v4071
        %v4208 = vmul.f32 %v4006, %v4071
        %v4209 = vmul.f32 %v4007, %v4071
        %v4210 = vmul.f32 %v4008, %v4071
        %v4211 = vmul.f32 %v4009, %v4071
        %v4212 = vmul.f32 %v4010, %v4071
        %v4213 = vmul.f32 %v4011, %v4071
        %v4214 = vmul.f32 %v4012, %v4071
        %v4215 = vmul.f32 %v4013, %v4071
        %v4216 = vmul.f32 %v4014, %v4071
        %v4217 = vmul.f32 %v4015, %v4071
        %v4218 = vmul.f32 %v4016, %v4071
        %v4219 = vmul.f32 %v4017, %v4071
        %v4220 = vmul.f32 %v4018, %v4071
        %v4221 = vmul.f32 %v4019, %v4071
        %v4222 = vmul.f32 %v4020, %v4071
        %v4223 = vmul.f32 %v4021, %v4071
        %v4224 = vmul.f32 %v4022, %v4071
        %v4225 = vmul.f32 %v4023, %v4071
        %v4226 = vmul.f32 %v4024, %v4071
        %v4227 = vmul.f32 %v4025, %v4071
        %v4228 = vmul.f32 %v4026, %v4071
        %v4229 = vmul.f32 %v4027, %v4071
        %v4230 = vmul.f32 %v4028, %v4071
        %v4231 = vmul.f32 %v4029, %v4071
        %v4232 = vmul.f32 %v4030, %v4071
        %v4233 = vmul.f32 %v4031, %v4071
        %v4234 = vmul.f32 %v4032, %v4071
        %v4235 = vmul.f32 %v4033, %v4071
        %v4236 = vmul.f32 %v4034, %v4071
        %v4237 = vmul.f32 %v4035, %v4071
        %v4238 = vmul.f32 %v4036, %v4071
        %v4239 = vmul.f32 %v4037, %v4071
        %v4240 = vmul.f32 %v4038, %v4071
        %v4241 = vmul.f32 %v4039, %v4071
        %v4242 = vmul.f32 %v4040, %v4071
        %v4243 = vmul.f32 %v4041, %v4071
        %v4244 = vmul.f32 %v4042, %v4071
        %v4245 = vmul.f32 %v4043, %v4071
        %v4246 = vmul.f32 %v4044, %v4071
        %v4247 = vmul.f32 %v4045, %v4071
        %v4248 = vmul.f32 %v4046, %v4071
        %v4249 = vmul.f32 %v4047, %v4071
        %v4250 = vmul.f32 %v4048, %v4071
        %v4251 = vmul.f32 %v4049, %v4071
        %v4252 = vmul.f32 %v4050, %v4071
        %v4253 = vmul.f32 %v4051, %v4071
        %v4254 = vmul.f32 %v4052, %v4071
        %v4255 = vmul.f32 %v4053, %v4071
        %v4256 = vmul.f32 %v4054, %v4071
        %v4257 = vmul.f32 %v4055, %v4071
        %v4258 = vmul.f32 %v4056, %v4071
        %v4259 = vmul.f32 %v4057, %v4071
        %v4260 = vmul.f32 %v4058, %v4071
        %v4261 = vmul.f32 %v4059, %v4071
        %v4262 = vmul.f32 %v4060, %v4071
        %v4263 = vmul.f32 %v4061, %v4071
        %v4264 = vmul.f32 %v4062, %v4071
        %v4265 = vmul.f32 %v4063, %v4071
        %v4266 = vmul.f32 %v4064, %v4071
        %v4267 = vmul.f32 %v4065, %v4071
        %v4268 = vmul.f32 %v4066, %v4071
        %v4270 = vlaneseq
        %v4271 = vshrl.u32 %v4270, 7
        %v4272 = vsub.s32 0, %v4271
        %v4273 = vrot.slane %v3870, %v4272
        %v4275 = vadd.f32 %v4073, %v4273
        %v4276 = vadd.f32 %v4074, %v4273
        %v4277 = vadd.f32 %v4075, %v4273
        %v4278 = vadd.f32 %v4076, %v4273
        %v4279 = vadd.f32 %v4077, %v4273
        %v4280 = vadd.f32 %v4078, %v4273
        %v4281 = vadd.f32 %v4079, %v4273
        %v4282 = vadd.f32 %v4080, %v4273
        %v4283 = vadd.f32 %v4081, %v4273
        %v4284 = vadd.f32 %v4082, %v4273
        %v4285 = vadd.f32 %v4083, %v4273
        %v4286 = vadd.f32 %v4084, %v4273
        %v4287 = vadd.f32 %v4085, %v4273
        %v4288 = vadd.f32 %v4086, %v4273
        %v4289 = vadd.f32 %v4087, %v4273
        %v4290 = vadd.f32 %v4088, %v4273
        %v4291 = vadd.f32 %v4089, %v4273
        %v4292 = vadd.f32 %v4090, %v4273
        %v4293 = vadd.f32 %v4091, %v4273
        %v4294 = vadd.f32 %v4092, %v4273
        %v4295 = vadd.f32 %v4093, %v4273
        %v4296 = vadd.f32 %v4094, %v4273
        %v4297 = vadd.f32 %v4095, %v4273
        %v4298 = vadd.f32 %v4096, %v4273
        %v4299 = vadd.f32 %v4097, %v4273
        %v4300 = vadd.f32 %v4098, %v4273
        %v4301 = vadd.f32 %v4099, %v4273
        %v4302 = vadd.f32 %v4100, %v4273
        %v4303 = vadd.f32 %v4101, %v4273
        %v4304 = vadd.f32 %v4102, %v4273
        %v4305 = vadd.f32 %v4103, %v4273
        %v4306 = vadd.f32 %v4104, %v4273
        %v4307 = vadd.f32 %v4105, %v4273
        %v4308 = vadd.f32 %v4106, %v4273
        %v4309 = vadd.f32 %v4107, %v4273
        %v4310 = vadd.f32 %v4108, %v4273
        %v4311 = vadd.f32 %v4109, %v4273
        %v4312 = vadd.f32 %v4110, %v4273
        %v4313 = vadd.f32 %v4111, %v4273
        %v4314 = vadd.f32 %v4112, %v4273
        %v4315 = vadd.f32 %v4113, %v4273
        %v4316 = vadd.f32 %v4114, %v4273
        %v4317 = vadd.f32 %v4115, %v4273
        %v4318 = vadd.f32 %v4116, %v4273
        %v4319 = vadd.f32 %v4117, %v4273
        %v4320 = vadd.f32 %v4118, %v4273
        %v4321 = vadd.f32 %v4119, %v4273
        %v4322 = vadd.f32 %v4120, %v4273
        %v4323 = vadd.f32 %v4121, %v4273
        %v4324 = vadd.f32 %v4122, %v4273
        %v4325 = vadd.f32 %v4123, %v4273
        %v4326 = vadd.f32 %v4124, %v4273
        %v4327 = vadd.f32 %v4125, %v4273
        %v4328 = vadd.f32 %v4126, %v4273
        %v4329 = vadd.f32 %v4127, %v4273
        %v4330 = vadd.f32 %v4128, %v4273
        %v4331 = vadd.f32 %v4129, %v4273
        %v4332 = vadd.f32 %v4130, %v4273
        %v4333 = vadd.f32 %v4131, %v4273
        %v4334 = vadd.f32 %v4132, %v4273
        %v4335 = vadd.f32 %v4133, %v4273
        %v4336 = vadd.f32 %v4134, %v4273
        %v4337 = vadd.f32 %v4135, %v4273
        %v4338 = vadd.f32 %v4136, %v4273
        %v4339 = vadd.f32 %v4137, %v4273
        %v4340 = vadd.f32 %v4138, %v4273
        %v4341 = vadd.f32 %v4139, %v4273
        %v4342 = vadd.f32 %v4140, %v4273
        %v4343 = vadd.f32 %v4141, %v4273
        %v4344 = vadd.f32 %v4142, %v4273
        %v4345 = vadd.f32 %v4143, %v4273
        %v4346 = vadd.f32 %v4144, %v4273
        %v4347 = vadd.f32 %v4145, %v4273
        %v4348 = vadd.f32 %v4146, %v4273
        %v4349 = vadd.f32 %v4147, %v4273
        %v4350 = vadd.f32 %v4148, %v4273
        %v4351 = vadd.f32 %v4149, %v4273
        %v4352 = vadd.f32 %v4150, %v4273
        %v4353 = vadd.f32 %v4151, %v4273
        %v4354 = vadd.f32 %v4152, %v4273
        %v4355 = vadd.f32 %v4153, %v4273
        %v4356 = vadd.f32 %v4154, %v4273
        %v4357 = vadd.f32 %v4155, %v4273
        %v4358 = vadd.f32 %v4156, %v4273
        %v4359 = vadd.f32 %v4157, %v4273
        %v4360 = vadd.f32 %v4158, %v4273
        %v4361 = vadd.f32 %v4159, %v4273
        %v4362 = vadd.f32 %v4160, %v4273
        %v4363 = vadd.f32 %v4161, %v4273
        %v4364 = vadd.f32 %v4162, %v4273
        %v4365 = vadd.f32 %v4163, %v4273
        %v4366 = vadd.f32 %v4164, %v4273
        %v4367 = vadd.f32 %v4165, %v4273
        %v4368 = vadd.f32 %v4166, %v4273
        %v4369 = vadd.f32 %v4167, %v4273
        %v4370 = vadd.f32 %v4168, %v4273
        %v4371 = vadd.f32 %v4169, %v4273
        %v4372 = vadd.f32 %v4170, %v4273
        %v4373 = vadd.f32 %v4171, %v4273
        %v4374 = vadd.f32 %v4172, %v4273
        %v4375 = vadd.f32 %v4173, %v4273
        %v4376 = vadd.f32 %v4174, %v4273
        %v4377 = vadd.f32 %v4175, %v4273
        %v4378 = vadd.f32 %v4176, %v4273
        %v4379 = vadd.f32 %v4177, %v4273
        %v4380 = vadd.f32 %v4178, %v4273
        %v4381 = vadd.f32 %v4179, %v4273
        %v4382 = vadd.f32 %v4180, %v4273
        %v4383 = vadd.f32 %v4181, %v4273
        %v4384 = vadd.f32 %v4182, %v4273
        %v4385 = vadd.f32 %v4183, %v4273
        %v4386 = vadd.f32 %v4184, %v4273
        %v4387 = vadd.f32 %v4185, %v4273
        %v4388 = vadd.f32 %v4186, %v4273
        %v4389 = vadd.f32 %v4187, %v4273
        %v4390 = vadd.f32 %v4188, %v4273
        %v4391 = vadd.f32 %v4189, %v4273
        %v4392 = vadd.f32 %v4190, %v4273
        %v4393 = vadd.f32 %v4191, %v4273
        %v4394 = vadd.f32 %v4192, %v4273
        %v4395 = vadd.f32 %v4193, %v4273
        %v4396 = vadd.f32 %v4194, %v4273
        %v4397 = vadd.f32 %v4195, %v4273
        %v4398 = vadd.f32 %v4196, %v4273
        %v4399 = vadd.f32 %v4197, %v4273
        %v4400 = vadd.f32 %v4198, %v4273
        %v4401 = vadd.f32 %v4199, %v4273
        %v4402 = vadd.f32 %v4200, %v4273
        %v4403 = vadd.f32 %v4201, %v4273
        %v4404 = vadd.f32 %v4202, %v4273
        %v4405 = vadd.f32 %v4203, %v4273
        %v4406 = vadd.f32 %v4204, %v4273
        %v4407 = vadd.f32 %v4205, %v4273
        %v4408 = vadd.f32 %v4206, %v4273
        %v4409 = vadd.f32 %v4207, %v4273
        %v4410 = vadd.f32 %v4208, %v4273
        %v4411 = vadd.f32 %v4209, %v4273
        %v4412 = vadd.f32 %v4210, %v4273
        %v4413 = vadd.f32 %v4211, %v4273
        %v4414 = vadd.f32 %v4212, %v4273
        %v4415 = vadd.f32 %v4213, %v4273
        %v4416 = vadd.f32 %v4214, %v4273
        %v4417 = vadd.f32 %v4215, %v4273
        %v4418 = vadd.f32 %v4216, %v4273
        %v4419 = vadd.f32 %v4217, %v4273
        %v4420 = vadd.f32 %v4218, %v4273
        %v4421 = vadd.f32 %v4219, %v4273
        %v4422 = vadd.f32 %v4220, %v4273
        %v4423 = vadd.f32 %v4221, %v4273
        %v4424 = vadd.f32 %v4222, %v4273
        %v4425 = vadd.f32 %v4223, %v4273
        %v4426 = vadd.f32 %v4224, %v4273
        %v4427 = vadd.f32 %v4225, %v4273
        %v4428 = vadd.f32 %v4226, %v4273
        %v4429 = vadd.f32 %v4227, %v4273
        %v4430 = vadd.f32 %v4228, %v4273
        %v4431 = vadd.f32 %v4229, %v4273
        %v4432 = vadd.f32 %v4230, %v4273
        %v4433 = vadd.f32 %v4231, %v4273
        %v4434 = vadd.f32 %v4232, %v4273
        %v4435 = vadd.f32 %v4233, %v4273
        %v4436 = vadd.f32 %v4234, %v4273
        %v4437 = vadd.f32 %v4235, %v4273
        %v4438 = vadd.f32 %v4236, %v4273
        %v4439 = vadd.f32 %v4237, %v4273
        %v4440 = vadd.f32 %v4238, %v4273
        %v4441 = vadd.f32 %v4239, %v4273
        %v4442 = vadd.f32 %v4240, %v4273
        %v4443 = vadd.f32 %v4241, %v4273
        %v4444 = vadd.f32 %v4242, %v4273
        %v4445 = vadd.f32 %v4243, %v4273
        %v4446 = vadd.f32 %v4244, %v4273
        %v4447 = vadd.f32 %v4245, %v4273
        %v4448 = vadd.f32 %v4246, %v4273
        %v4449 = vadd.f32 %v4247, %v4273
        %v4450 = vadd.f32 %v4248, %v4273
        %v4451 = vadd.f32 %v4249, %v4273
        %v4452 = vadd.f32 %v4250, %v4273
        %v4453 = vadd.f32 %v4251, %v4273
        %v4454 = vadd.f32 %v4252, %v4273
        %v4455 = vadd.f32 %v4253, %v4273
        %v4456 = vadd.f32 %v4254, %v4273
        %v4457 = vadd.f32 %v4255, %v4273
        %v4458 = vadd.f32 %v4256, %v4273
        %v4459 = vadd.f32 %v4257, %v4273
        %v4460 = vadd.f32 %v4258, %v4273
        %v4461 = vadd.f32 %v4259, %v4273
        %v4462 = vadd.f32 %v4260, %v4273
        %v4463 = vadd.f32 %v4261, %v4273
        %v4464 = vadd.f32 %v4262, %v4273
        %v4465 = vadd.f32 %v4263, %v4273
        %v4466 = vadd.f32 %v4264, %v4273
        %v4467 = vadd.f32 %v4265, %v4273
        %v4468 = vadd.f32 %v4266, %v4273
        %v4469 = vadd.f32 %v4267, %v4273
        %v4470 = vadd.f32 %v4268, %v4273
        %v4471 = vmax.f32 %v4275, 0.0
        %v4472 = vmax.f32 %v4276, 0.0
        %v4473 = vmax.f32 %v4277, 0.0
        %v4474 = vmax.f32 %v4278, 0.0
        %v4475 = vmax.f32 %v4279, 0.0
        %v4476 = vmax.f32 %v4280, 0.0
        %v4477 = vmax.f32 %v4281, 0.0
        %v4478 = vmax.f32 %v4282, 0.0
        %v4479 = vmax.f32 %v4283, 0.0
        %v4480 = vmax.f32 %v4284, 0.0
        %v4481 = vmax.f32 %v4285, 0.0
        %v4482 = vmax.f32 %v4286, 0.0
        %v4483 = vmax.f32 %v4287, 0.0
        %v4484 = vmax.f32 %v4288, 0.0
        %v4485 = vmax.f32 %v4289, 0.0
        %v4486 = vmax.f32 %v4290, 0.0
        %v4487 = vmax.f32 %v4291, 0.0
        %v4488 = vmax.f32 %v4292, 0.0
        %v4489 = vmax.f32 %v4293, 0.0
        %v4490 = vmax.f32 %v4294, 0.0
        %v4491 = vmax.f32 %v4295, 0.0
        %v4492 = vmax.f32 %v4296, 0.0
        %v4493 = vmax.f32 %v4297, 0.0
        %v4494 = vmax.f32 %v4298, 0.0
        %v4495 = vmax.f32 %v4299, 0.0
        %v4496 = vmax.f32 %v4300, 0.0
        %v4497 = vmax.f32 %v4301, 0.0
        %v4498 = vmax.f32 %v4302, 0.0
        %v4499 = vmax.f32 %v4303, 0.0
        %v4500 = vmax.f32 %v4304, 0.0
        %v4501 = vmax.f32 %v4305, 0.0
        %v4502 = vmax.f32 %v4306, 0.0
        %v4503 = vmax.f32 %v4307, 0.0
        %v4504 = vmax.f32 %v4308, 0.0
        %v4505 = vmax.f32 %v4309, 0.0
        %v4506 = vmax.f32 %v4310, 0.0
        %v4507 = vmax.f32 %v4311, 0.0
        %v4508 = vmax.f32 %v4312, 0.0
        %v4509 = vmax.f32 %v4313, 0.0
        %v4510 = vmax.f32 %v4314, 0.0
        %v4511 = vmax.f32 %v4315, 0.0
        %v4512 = vmax.f32 %v4316, 0.0
        %v4513 = vmax.f32 %v4317, 0.0
        %v4514 = vmax.f32 %v4318, 0.0
        %v4515 = vmax.f32 %v4319, 0.0
        %v4516 = vmax.f32 %v4320, 0.0
        %v4517 = vmax.f32 %v4321, 0.0
        %v4518 = vmax.f32 %v4322, 0.0
        %v4519 = vmax.f32 %v4323, 0.0
        %v4520 = vmax.f32 %v4324, 0.0
        %v4521 = vmax.f32 %v4325, 0.0
        %v4522 = vmax.f32 %v4326, 0.0
        %v4523 = vmax.f32 %v4327, 0.0
        %v4524 = vmax.f32 %v4328, 0.0
        %v4525 = vmax.f32 %v4329, 0.0
        %v4526 = vmax.f32 %v4330, 0.0
        %v4527 = vmax.f32 %v4331, 0.0
        %v4528 = vmax.f32 %v4332, 0.0
        %v4529 = vmax.f32 %v4333, 0.0
        %v4530 = vmax.f32 %v4334, 0.0
        %v4531 = vmax.f32 %v4335, 0.0
        %v4532 = vmax.f32 %v4336, 0.0
        %v4533 = vmax.f32 %v4337, 0.0
        %v4534 = vmax.f32 %v4338, 0.0
        %v4535 = vmax.f32 %v4339, 0.0
        %v4536 = vmax.f32 %v4340, 0.0
        %v4537 = vmax.f32 %v4341, 0.0
        %v4538 = vmax.f32 %v4342, 0.0
        %v4539 = vmax.f32 %v4343, 0.0
        %v4540 = vmax.f32 %v4344, 0.0
        %v4541 = vmax.f32 %v4345, 0.0
        %v4542 = vmax.f32 %v4346, 0.0
        %v4543 = vmax.f32 %v4347, 0.0
        %v4544 = vmax.f32 %v4348, 0.0
        %v4545 = vmax.f32 %v4349, 0.0
        %v4546 = vmax.f32 %v4350, 0.0
        %v4547 = vmax.f32 %v4351, 0.0
        %v4548 = vmax.f32 %v4352, 0.0
        %v4549 = vmax.f32 %v4353, 0.0
        %v4550 = vmax.f32 %v4354, 0.0
        %v4551 = vmax.f32 %v4355, 0.0
        %v4552 = vmax.f32 %v4356, 0.0
        %v4553 = vmax.f32 %v4357, 0.0
        %v4554 = vmax.f32 %v4358, 0.0
        %v4555 = vmax.f32 %v4359, 0.0
        %v4556 = vmax.f32 %v4360, 0.0
        %v4557 = vmax.f32 %v4361, 0.0
        %v4558 = vmax.f32 %v4362, 0.0
        %v4559 = vmax.f32 %v4363, 0.0
        %v4560 = vmax.f32 %v4364, 0.0
        %v4561 = vmax.f32 %v4365, 0.0
        %v4562 = vmax.f32 %v4366, 0.0
        %v4563 = vmax.f32 %v4367, 0.0
        %v4564 = vmax.f32 %v4368, 0.0
        %v4565 = vmax.f32 %v4369, 0.0
        %v4566 = vmax.f32 %v4370, 0.0
        %v4567 = vmax.f32 %v4371, 0.0
        %v4568 = vmax.f32 %v4372, 0.0
        %v4569 = vmax.f32 %v4373, 0.0
        %v4570 = vmax.f32 %v4374, 0.0
        %v4571 = vmax.f32 %v4375, 0.0
        %v4572 = vmax.f32 %v4376, 0.0
        %v4573 = vmax.f32 %v4377, 0.0
        %v4574 = vmax.f32 %v4378, 0.0
        %v4575 = vmax.f32 %v4379, 0.0
        %v4576 = vmax.f32 %v4380, 0.0
        %v4577 = vmax.f32 %v4381, 0.0
        %v4578 = vmax.f32 %v4382, 0.0
        %v4579 = vmax.f32 %v4383, 0.0
        %v4580 = vmax.f32 %v4384, 0.0
        %v4581 = vmax.f32 %v4385, 0.0
        %v4582 = vmax.f32 %v4386, 0.0
        %v4583 = vmax.f32 %v4387, 0.0
        %v4584 = vmax.f32 %v4388, 0.0
        %v4585 = vmax.f32 %v4389, 0.0
        %v4586 = vmax.f32 %v4390, 0.0
        %v4587 = vmax.f32 %v4391, 0.0
        %v4588 = vmax.f32 %v4392, 0.0
        %v4589 = vmax.f32 %v4393, 0.0
        %v4590 = vmax.f32 %v4394, 0.0
        %v4591 = vmax.f32 %v4395, 0.0
        %v4592 = vmax.f32 %v4396, 0.0
        %v4593 = vmax.f32 %v4397, 0.0
        %v4594 = vmax.f32 %v4398, 0.0
        %v4595 = vmax.f32 %v4399, 0.0
        %v4596 = vmax.f32 %v4400, 0.0
        %v4597 = vmax.f32 %v4401, 0.0
        %v4598 = vmax.f32 %v4402, 0.0
        %v4599 = vmax.f32 %v4403, 0.0
        %v4600 = vmax.f32 %v4404, 0.0
        %v4601 = vmax.f32 %v4405, 0.0
        %v4602 = vmax.f32 %v4406, 0.0
        %v4603 = vmax.f32 %v4407, 0.0
        %v4604 = vmax.f32 %v4408, 0.0
        %v4605 = vmax.f32 %v4409, 0.0
        %v4606 = vmax.f32 %v4410, 0.0
        %v4607 = vmax.f32 %v4411, 0.0
        %v4608 = vmax.f32 %v4412, 0.0
        %v4609 = vmax.f32 %v4413, 0.0
        %v4610 = vmax.f32 %v4414, 0.0
        %v4611 = vmax.f32 %v4415, 0.0
        %v4612 = vmax.f32 %v4416, 0.0
        %v4613 = vmax.f32 %v4417, 0.0
        %v4614 = vmax.f32 %v4418, 0.0
        %v4615 = vmax.f32 %v4419, 0.0
        %v4616 = vmax.f32 %v4420, 0.0
        %v4617 = vmax.f32 %v4421, 0.0
        %v4618 = vmax.f32 %v4422, 0.0
        %v4619 = vmax.f32 %v4423, 0.0
        %v4620 = vmax.f32 %v4424, 0.0
        %v4621 = vmax.f32 %v4425, 0.0
        %v4622 = vmax.f32 %v4426, 0.0
        %v4623 = vmax.f32 %v4427, 0.0
        %v4624 = vmax.f32 %v4428, 0.0
        %v4625 = vmax.f32 %v4429, 0.0
        %v4626 = vmax.f32 %v4430, 0.0
        %v4627 = vmax.f32 %v4431, 0.0
        %v4628 = vmax.f32 %v4432, 0.0
        %v4629 = vmax.f32 %v4433, 0.0
        %v4630 = vmax.f32 %v4434, 0.0
        %v4631 = vmax.f32 %v4435, 0.0
        %v4632 = vmax.f32 %v4436, 0.0
        %v4633 = vmax.f32 %v4437, 0.0
        %v4634 = vmax.f32 %v4438, 0.0
        %v4635 = vmax.f32 %v4439, 0.0
        %v4636 = vmax.f32 %v4440, 0.0
        %v4637 = vmax.f32 %v4441, 0.0
        %v4638 = vmax.f32 %v4442, 0.0
        %v4639 = vmax.f32 %v4443, 0.0
        %v4640 = vmax.f32 %v4444, 0.0
        %v4641 = vmax.f32 %v4445, 0.0
        %v4642 = vmax.f32 %v4446, 0.0
        %v4643 = vmax.f32 %v4447, 0.0
        %v4644 = vmax.f32 %v4448, 0.0
        %v4645 = vmax.f32 %v4449, 0.0
        %v4646 = vmax.f32 %v4450, 0.0
        %v4647 = vmax.f32 %v4451, 0.0
        %v4648 = vmax.f32 %v4452, 0.0
        %v4649 = vmax.f32 %v4453, 0.0
        %v4650 = vmax.f32 %v4454, 0.0
        %v4651 = vmax.f32 %v4455, 0.0
        %v4652 = vmax.f32 %v4456, 0.0
        %v4653 = vmax.f32 %v4457, 0.0
        %v4654 = vmax.f32 %v4458, 0.0
        %v4655 = vmax.f32 %v4459, 0.0
        %v4656 = vmax.f32 %v4460, 0.0
        %v4657 = vmax.f32 %v4461, 0.0
        %v4658 = vmax.f32 %v4462, 0.0
        %v4659 = vmax.f32 %v4463, 0.0
        %v4660 = vmax.f32 %v4464, 0.0
        %v4661 = vmax.f32 %v4465, 0.0
        %v4662 = vmax.f32 %v4466, 0.0
        %v4663 = vmax.f32 %v4467, 0.0
        %v4664 = vmax.f32 %v4468, 0.0
        %v4665 = vmax.f32 %v4469, 0.0
        %v4666 = vmax.f32 %v4470, 0.0
        %v4667 = vpack.c.bf16 %v4472, %v4471
        %v4668 = vpack.c.bf16 %v4474, %v4473
        %v4669 = vpack.c.bf16 %v4476, %v4475
        %v4670 = vpack.c.bf16 %v4478, %v4477
        %v4671 = vpack.c.bf16 %v4480, %v4479
        %v4672 = vpack.c.bf16 %v4482, %v4481
        %v4673 = vpack.c.bf16 %v4484, %v4483
        %v4674 = vpack.c.bf16 %v4486, %v4485
        %v4675 = vpack.c.bf16 %v4488, %v4487
        %v4676 = vpack.c.bf16 %v4490, %v4489
        %v4677 = vpack.c.bf16 %v4492, %v4491
        %v4678 = vpack.c.bf16 %v4494, %v4493
        %v4679 = vpack.c.bf16 %v4496, %v4495
        %v4680 = vpack.c.bf16 %v4498, %v4497
        %v4681 = vpack.c.bf16 %v4500, %v4499
        %v4682 = vpack.c.bf16 %v4502, %v4501
        %v4683 = vpack.c.bf16 %v4504, %v4503
        %v4684 = vpack.c.bf16 %v4506, %v4505
        %v4685 = vpack.c.bf16 %v4508, %v4507
        %v4686 = vpack.c.bf16 %v4510, %v4509
        %v4687 = vpack.c.bf16 %v4512, %v4511
        %v4688 = vpack.c.bf16 %v4514, %v4513
        %v4689 = vpack.c.bf16 %v4516, %v4515
        %v4690 = vpack.c.bf16 %v4518, %v4517
        %v4691 = vpack.c.bf16 %v4520, %v4519
        %v4692 = vpack.c.bf16 %v4522, %v4521
        %v4693 = vpack.c.bf16 %v4524, %v4523
        %v4694 = vpack.c.bf16 %v4526, %v4525
        %v4695 = vpack.c.bf16 %v4528, %v4527
        %v4696 = vpack.c.bf16 %v4530, %v4529
        %v4697 = vpack.c.bf16 %v4532, %v4531
        %v4698 = vpack.c.bf16 %v4534, %v4533
        %v4699 = vpack.c.bf16 %v4536, %v4535
        %v4700 = vpack.c.bf16 %v4538, %v4537
        %v4701 = vpack.c.bf16 %v4540, %v4539
        %v4702 = vpack.c.bf16 %v4542, %v4541
        %v4703 = vpack.c.bf16 %v4544, %v4543
        %v4704 = vpack.c.bf16 %v4546, %v4545
        %v4705 = vpack.c.bf16 %v4548, %v4547
        %v4706 = vpack.c.bf16 %v4550, %v4549
        %v4707 = vpack.c.bf16 %v4552, %v4551
        %v4708 = vpack.c.bf16 %v4554, %v4553
        %v4709 = vpack.c.bf16 %v4556, %v4555
        %v4710 = vpack.c.bf16 %v4558, %v4557
        %v4711 = vpack.c.bf16 %v4560, %v4559
        %v4712 = vpack.c.bf16 %v4562, %v4561
        %v4713 = vpack.c.bf16 %v4564, %v4563
        %v4714 = vpack.c.bf16 %v4566, %v4565
        %v4715 = vpack.c.bf16 %v4568, %v4567
        %v4716 = vpack.c.bf16 %v4570, %v4569
        %v4717 = vpack.c.bf16 %v4572, %v4571
        %v4718 = vpack.c.bf16 %v4574, %v4573
        %v4719 = vpack.c.bf16 %v4576, %v4575
        %v4720 = vpack.c.bf16 %v4578, %v4577
        %v4721 = vpack.c.bf16 %v4580, %v4579
        %v4722 = vpack.c.bf16 %v4582, %v4581
        %v4723 = vpack.c.bf16 %v4584, %v4583
        %v4724 = vpack.c.bf16 %v4586, %v4585
        %v4725 = vpack.c.bf16 %v4588, %v4587
        %v4726 = vpack.c.bf16 %v4590, %v4589
        %v4727 = vpack.c.bf16 %v4592, %v4591
        %v4728 = vpack.c.bf16 %v4594, %v4593
        %v4729 = vpack.c.bf16 %v4596, %v4595
        %v4730 = vpack.c.bf16 %v4598, %v4597
        %v4731 = vpack.c.bf16 %v4600, %v4599
        %v4732 = vpack.c.bf16 %v4602, %v4601
        %v4733 = vpack.c.bf16 %v4604, %v4603
        %v4734 = vpack.c.bf16 %v4606, %v4605
        %v4735 = vpack.c.bf16 %v4608, %v4607
        %v4736 = vpack.c.bf16 %v4610, %v4609
        %v4737 = vpack.c.bf16 %v4612, %v4611
        %v4738 = vpack.c.bf16 %v4614, %v4613
        %v4739 = vpack.c.bf16 %v4616, %v4615
        %v4740 = vpack.c.bf16 %v4618, %v4617
        %v4741 = vpack.c.bf16 %v4620, %v4619
        %v4742 = vpack.c.bf16 %v4622, %v4621
        %v4743 = vpack.c.bf16 %v4624, %v4623
        %v4744 = vpack.c.bf16 %v4626, %v4625
        %v4745 = vpack.c.bf16 %v4628, %v4627
        %v4746 = vpack.c.bf16 %v4630, %v4629
        %v4747 = vpack.c.bf16 %v4632, %v4631
        %v4748 = vpack.c.bf16 %v4634, %v4633
        %v4749 = vpack.c.bf16 %v4636, %v4635
        %v4750 = vpack.c.bf16 %v4638, %v4637
        %v4751 = vpack.c.bf16 %v4640, %v4639
        %v4752 = vpack.c.bf16 %v4642, %v4641
        %v4753 = vpack.c.bf16 %v4644, %v4643
        %v4754 = vpack.c.bf16 %v4646, %v4645
        %v4755 = vpack.c.bf16 %v4648, %v4647
        %v4756 = vpack.c.bf16 %v4650, %v4649
        %v4757 = vpack.c.bf16 %v4652, %v4651
        %v4758 = vpack.c.bf16 %v4654, %v4653
        %v4759 = vpack.c.bf16 %v4656, %v4655
        %v4760 = vpack.c.bf16 %v4658, %v4657
        %v4761 = vpack.c.bf16 %v4660, %v4659
        %v4762 = vpack.c.bf16 %v4662, %v4661
        %v4763 = vpack.c.bf16 %v4664, %v4663
        %v4764 = vpack.c.bf16 %v4666, %v4665
        %v4863 = vunpack.c.l.b16 %v4667
        %v4864 = vunpack.c.h.b16 %v4667
        %v4865 = vunpack.c.l.b16 %v4668
        %v4866 = vunpack.c.h.b16 %v4668
        %v4867 = vunpack.c.l.b16 %v4669
        %v4868 = vunpack.c.h.b16 %v4669
        %v4869 = vunpack.c.l.b16 %v4670
        %v4870 = vunpack.c.h.b16 %v4670
        %v4871 = vunpack.c.l.b16 %v4671
        %v4872 = vunpack.c.h.b16 %v4671
        %v4873 = vunpack.c.l.b16 %v4672
        %v4874 = vunpack.c.h.b16 %v4672
        %v4875 = vunpack.c.l.b16 %v4673
        %v4876 = vunpack.c.h.b16 %v4673
        %v4877 = vunpack.c.l.b16 %v4674
        %v4878 = vunpack.c.h.b16 %v4674
        %v4879 = vunpack.c.l.b16 %v4675
        %v4880 = vunpack.c.h.b16 %v4675
        %v4881 = vunpack.c.l.b16 %v4676
        %v4882 = vunpack.c.h.b16 %v4676
        %v4883 = vunpack.c.l.b16 %v4677
        %v4884 = vunpack.c.h.b16 %v4677
        %v4885 = vunpack.c.l.b16 %v4678
        %v4886 = vunpack.c.h.b16 %v4678
        %v4887 = vunpack.c.l.b16 %v4679
        %v4888 = vunpack.c.h.b16 %v4679
        %v4889 = vunpack.c.l.b16 %v4680
        %v4890 = vunpack.c.h.b16 %v4680
        %v4891 = vunpack.c.l.b16 %v4681
        %v4892 = vunpack.c.h.b16 %v4681
        %v4893 = vunpack.c.l.b16 %v4682
        %v4894 = vunpack.c.h.b16 %v4682
        %v4895 = vunpack.c.l.b16 %v4683
        %v4896 = vunpack.c.h.b16 %v4683
        %v4897 = vunpack.c.l.b16 %v4684
        %v4898 = vunpack.c.h.b16 %v4684
        %v4899 = vunpack.c.l.b16 %v4685
        %v4900 = vunpack.c.h.b16 %v4685
        %v4901 = vunpack.c.l.b16 %v4686
        %v4902 = vunpack.c.h.b16 %v4686
        %v4903 = vunpack.c.l.b16 %v4687
        %v4904 = vunpack.c.h.b16 %v4687
        %v4905 = vunpack.c.l.b16 %v4688
        %v4906 = vunpack.c.h.b16 %v4688
        %v4907 = vunpack.c.l.b16 %v4689
        %v4908 = vunpack.c.h.b16 %v4689
        %v4909 = vunpack.c.l.b16 %v4690
        %v4910 = vunpack.c.h.b16 %v4690
        %v4911 = vunpack.c.l.b16 %v4691
        %v4912 = vunpack.c.h.b16 %v4691
        %v4913 = vunpack.c.l.b16 %v4692
        %v4914 = vunpack.c.h.b16 %v4692
        %v4915 = vunpack.c.l.b16 %v4693
        %v4916 = vunpack.c.h.b16 %v4693
        %v4917 = vunpack.c.l.b16 %v4694
        %v4918 = vunpack.c.h.b16 %v4694
        %v4919 = vunpack.c.l.b16 %v4695
        %v4920 = vunpack.c.h.b16 %v4695
        %v4921 = vunpack.c.l.b16 %v4696
        %v4922 = vunpack.c.h.b16 %v4696
        %v4923 = vunpack.c.l.b16 %v4697
        %v4924 = vunpack.c.h.b16 %v4697
        %v4925 = vunpack.c.l.b16 %v4698
        %v4926 = vunpack.c.h.b16 %v4698
        %v4927 = vunpack.c.l.b16 %v4699
        %v4928 = vunpack.c.h.b16 %v4699
        %v4929 = vunpack.c.l.b16 %v4700
        %v4930 = vunpack.c.h.b16 %v4700
        %v4931 = vunpack.c.l.b16 %v4701
        %v4932 = vunpack.c.h.b16 %v4701
        %v4933 = vunpack.c.l.b16 %v4702
        %v4934 = vunpack.c.h.b16 %v4702
        %v4935 = vunpack.c.l.b16 %v4703
        %v4936 = vunpack.c.h.b16 %v4703
        %v4937 = vunpack.c.l.b16 %v4704
        %v4938 = vunpack.c.h.b16 %v4704
        %v4939 = vunpack.c.l.b16 %v4705
        %v4940 = vunpack.c.h.b16 %v4705
        %v4941 = vunpack.c.l.b16 %v4706
        %v4942 = vunpack.c.h.b16 %v4706
        %v4943 = vunpack.c.l.b16 %v4707
        %v4944 = vunpack.c.h.b16 %v4707
        %v4945 = vunpack.c.l.b16 %v4708
        %v4946 = vunpack.c.h.b16 %v4708
        %v4947 = vunpack.c.l.b16 %v4709
        %v4948 = vunpack.c.h.b16 %v4709
        %v4949 = vunpack.c.l.b16 %v4710
        %v4950 = vunpack.c.h.b16 %v4710
        %v4951 = vunpack.c.l.b16 %v4711
        %v4952 = vunpack.c.h.b16 %v4711
        %v4953 = vunpack.c.l.b16 %v4712
        %v4954 = vunpack.c.h.b16 %v4712
        %v4955 = vunpack.c.l.b16 %v4713
        %v4956 = vunpack.c.h.b16 %v4713
        %v4957 = vunpack.c.l.b16 %v4714
        %v4958 = vunpack.c.h.b16 %v4714
        %v4959 = vunpack.c.l.b16 %v4715
        %v4960 = vunpack.c.h.b16 %v4715
        %v4961 = vunpack.c.l.b16 %v4716
        %v4962 = vunpack.c.h.b16 %v4716
        %v4963 = vunpack.c.l.b16 %v4717
        %v4964 = vunpack.c.h.b16 %v4717
        %v4965 = vunpack.c.l.b16 %v4718
        %v4966 = vunpack.c.h.b16 %v4718
        %v4967 = vunpack.c.l.b16 %v4719
        %v4968 = vunpack.c.h.b16 %v4719
        %v4969 = vunpack.c.l.b16 %v4720
        %v4970 = vunpack.c.h.b16 %v4720
        %v4971 = vunpack.c.l.b16 %v4721
        %v4972 = vunpack.c.h.b16 %v4721
        %v4973 = vunpack.c.l.b16 %v4722
        %v4974 = vunpack.c.h.b16 %v4722
        %v4975 = vunpack.c.l.b16 %v4723
        %v4976 = vunpack.c.h.b16 %v4723
        %v4977 = vunpack.c.l.b16 %v4724
        %v4978 = vunpack.c.h.b16 %v4724
        %v4979 = vunpack.c.l.b16 %v4725
        %v4980 = vunpack.c.h.b16 %v4725
        %v4981 = vunpack.c.l.b16 %v4726
        %v4982 = vunpack.c.h.b16 %v4726
        %v4983 = vunpack.c.l.b16 %v4727
        %v4984 = vunpack.c.h.b16 %v4727
        %v4985 = vunpack.c.l.b16 %v4728
        %v4986 = vunpack.c.h.b16 %v4728
        %v4987 = vunpack.c.l.b16 %v4729
        %v4988 = vunpack.c.h.b16 %v4729
        %v4989 = vunpack.c.l.b16 %v4730
        %v4990 = vunpack.c.h.b16 %v4730
        %v4991 = vunpack.c.l.b16 %v4731
        %v4992 = vunpack.c.h.b16 %v4731
        %v4993 = vunpack.c.l.b16 %v4732
        %v4994 = vunpack.c.h.b16 %v4732
        %v4995 = vunpack.c.l.b16 %v4733
        %v4996 = vunpack.c.h.b16 %v4733
        %v4997 = vunpack.c.l.b16 %v4734
        %v4998 = vunpack.c.h.b16 %v4734
        %v4999 = vunpack.c.l.b16 %v4735
        %v5000 = vunpack.c.h.b16 %v4735
        %v5001 = vunpack.c.l.b16 %v4736
        %v5002 = vunpack.c.h.b16 %v4736
        %v5003 = vunpack.c.l.b16 %v4737
        %v5004 = vunpack.c.h.b16 %v4737
        %v5005 = vunpack.c.l.b16 %v4738
        %v5006 = vunpack.c.h.b16 %v4738
        %v5007 = vunpack.c.l.b16 %v4739
        %v5008 = vunpack.c.h.b16 %v4739
        %v5009 = vunpack.c.l.b16 %v4740
        %v5010 = vunpack.c.h.b16 %v4740
        %v5011 = vunpack.c.l.b16 %v4741
        %v5012 = vunpack.c.h.b16 %v4741
        %v5013 = vunpack.c.l.b16 %v4742
        %v5014 = vunpack.c.h.b16 %v4742
        %v5015 = vunpack.c.l.b16 %v4743
        %v5016 = vunpack.c.h.b16 %v4743
        %v5017 = vunpack.c.l.b16 %v4744
        %v5018 = vunpack.c.h.b16 %v4744
        %v5019 = vunpack.c.l.b16 %v4745
        %v5020 = vunpack.c.h.b16 %v4745
        %v5021 = vunpack.c.l.b16 %v4746
        %v5022 = vunpack.c.h.b16 %v4746
        %v5023 = vunpack.c.l.b16 %v4747
        %v5024 = vunpack.c.h.b16 %v4747
        %v5025 = vunpack.c.l.b16 %v4748
        %v5026 = vunpack.c.h.b16 %v4748
        %v5027 = vunpack.c.l.b16 %v4749
        %v5028 = vunpack.c.h.b16 %v4749
        %v5029 = vunpack.c.l.b16 %v4750
        %v5030 = vunpack.c.h.b16 %v4750
        %v5031 = vunpack.c.l.b16 %v4751
        %v5032 = vunpack.c.h.b16 %v4751
        %v5033 = vunpack.c.l.b16 %v4752
        %v5034 = vunpack.c.h.b16 %v4752
        %v5035 = vunpack.c.l.b16 %v4753
        %v5036 = vunpack.c.h.b16 %v4753
        %v5037 = vunpack.c.l.b16 %v4754
        %v5038 = vunpack.c.h.b16 %v4754
        %v5039 = vunpack.c.l.b16 %v4755
        %v5040 = vunpack.c.h.b16 %v4755
        %v5041 = vunpack.c.l.b16 %v4756
        %v5042 = vunpack.c.h.b16 %v4756
        %v5043 = vunpack.c.l.b16 %v4757
        %v5044 = vunpack.c.h.b16 %v4757
        %v5045 = vunpack.c.l.b16 %v4758
        %v5046 = vunpack.c.h.b16 %v4758
        %v5047 = vunpack.c.l.b16 %v4759
        %v5048 = vunpack.c.h.b16 %v4759
        %v5049 = vunpack.c.l.b16 %v4760
        %v5050 = vunpack.c.h.b16 %v4760
        %v5051 = vunpack.c.l.b16 %v4761
        %v5052 = vunpack.c.h.b16 %v4761
        %v5053 = vunpack.c.l.b16 %v4762
        %v5054 = vunpack.c.h.b16 %v4762
        %v5055 = vunpack.c.l.b16 %v4763
        %v5056 = vunpack.c.h.b16 %v4763
        %v5057 = vunpack.c.l.b16 %v4764
        %v5058 = vunpack.c.h.b16 %v4764
        %v5059 = vpack.c.b16 %v4863, %v4863
        %v5060 = vpack.c.b16 %v4864, %v4864
        %v5061 = vpack.c.b16 %v4865, %v4865
        %v5062 = vpack.c.b16 %v4866, %v4866
        %v5063 = vpack.c.b16 %v4867, %v4867
        %v5064 = vpack.c.b16 %v4868, %v4868
        %v5065 = vpack.c.b16 %v4869, %v4869
        %v5066 = vpack.c.b16 %v4870, %v4870
        %v5067 = vpack.c.b16 %v4871, %v4871
        %v5068 = vpack.c.b16 %v4872, %v4872
        %v5069 = vpack.c.b16 %v4873, %v4873
        %v5070 = vpack.c.b16 %v4874, %v4874
        %v5071 = vpack.c.b16 %v4875, %v4875
        %v5072 = vpack.c.b16 %v4876, %v4876
        %v5073 = vpack.c.b16 %v4877, %v4877
        %v5074 = vpack.c.b16 %v4878, %v4878
        %v5075 = vpack.c.b16 %v4879, %v4879
        %v5076 = vpack.c.b16 %v4880, %v4880
        %v5077 = vpack.c.b16 %v4881, %v4881
        %v5078 = vpack.c.b16 %v4882, %v4882
        %v5079 = vpack.c.b16 %v4883, %v4883
        %v5080 = vpack.c.b16 %v4884, %v4884
        %v5081 = vpack.c.b16 %v4885, %v4885
        %v5082 = vpack.c.b16 %v4886, %v4886
        %v5083 = vpack.c.b16 %v4887, %v4887
        %v5084 = vpack.c.b16 %v4888, %v4888
        %v5085 = vpack.c.b16 %v4889, %v4889
        %v5086 = vpack.c.b16 %v4890, %v4890
        %v5087 = vpack.c.b16 %v4891, %v4891
        %v5088 = vpack.c.b16 %v4892, %v4892
        %v5089 = vpack.c.b16 %v4893, %v4893
        %v5090 = vpack.c.b16 %v4894, %v4894
        %v5091 = vpack.c.b16 %v4895, %v4895
        %v5092 = vpack.c.b16 %v4896, %v4896
        %v5093 = vpack.c.b16 %v4897, %v4897
        %v5094 = vpack.c.b16 %v4898, %v4898
        %v5095 = vpack.c.b16 %v4899, %v4899
        %v5096 = vpack.c.b16 %v4900, %v4900
        %v5097 = vpack.c.b16 %v4901, %v4901
        %v5098 = vpack.c.b16 %v4902, %v4902
        %v5099 = vpack.c.b16 %v4903, %v4903
        %v5100 = vpack.c.b16 %v4904, %v4904
        %v5101 = vpack.c.b16 %v4905, %v4905
        %v5102 = vpack.c.b16 %v4906, %v4906
        %v5103 = vpack.c.b16 %v4907, %v4907
        %v5104 = vpack.c.b16 %v4908, %v4908
        %v5105 = vpack.c.b16 %v4909, %v4909
        %v5106 = vpack.c.b16 %v4910, %v4910
        %v5107 = vpack.c.b16 %v4911, %v4911
        %v5108 = vpack.c.b16 %v4912, %v4912
        %v5109 = vpack.c.b16 %v4913, %v4913
        %v5110 = vpack.c.b16 %v4914, %v4914
        %v5111 = vpack.c.b16 %v4915, %v4915
        %v5112 = vpack.c.b16 %v4916, %v4916
        %v5113 = vpack.c.b16 %v4917, %v4917
        %v5114 = vpack.c.b16 %v4918, %v4918
        %v5115 = vpack.c.b16 %v4919, %v4919
        %v5116 = vpack.c.b16 %v4920, %v4920
        %v5117 = vpack.c.b16 %v4921, %v4921
        %v5118 = vpack.c.b16 %v4922, %v4922
        %v5119 = vpack.c.b16 %v4923, %v4923
        %v5120 = vpack.c.b16 %v4924, %v4924
        %v5121 = vpack.c.b16 %v4925, %v4925
        %v5122 = vpack.c.b16 %v4926, %v4926
        %v5123 = vpack.c.b16 %v4927, %v4927
        %v5124 = vpack.c.b16 %v4928, %v4928
        %v5125 = vpack.c.b16 %v4929, %v4929
        %v5126 = vpack.c.b16 %v4930, %v4930
        %v5127 = vpack.c.b16 %v4931, %v4931
        %v5128 = vpack.c.b16 %v4932, %v4932
        %v5129 = vpack.c.b16 %v4933, %v4933
        %v5130 = vpack.c.b16 %v4934, %v4934
        %v5131 = vpack.c.b16 %v4935, %v4935
        %v5132 = vpack.c.b16 %v4936, %v4936
        %v5133 = vpack.c.b16 %v4937, %v4937
        %v5134 = vpack.c.b16 %v4938, %v4938
        %v5135 = vpack.c.b16 %v4939, %v4939
        %v5136 = vpack.c.b16 %v4940, %v4940
        %v5137 = vpack.c.b16 %v4941, %v4941
        %v5138 = vpack.c.b16 %v4942, %v4942
        %v5139 = vpack.c.b16 %v4943, %v4943
        %v5140 = vpack.c.b16 %v4944, %v4944
        %v5141 = vpack.c.b16 %v4945, %v4945
        %v5142 = vpack.c.b16 %v4946, %v4946
        %v5143 = vpack.c.b16 %v4947, %v4947
        %v5144 = vpack.c.b16 %v4948, %v4948
        %v5145 = vpack.c.b16 %v4949, %v4949
        %v5146 = vpack.c.b16 %v4950, %v4950
        %v5147 = vpack.c.b16 %v4951, %v4951
        %v5148 = vpack.c.b16 %v4952, %v4952
        %v5149 = vpack.c.b16 %v4953, %v4953
        %v5150 = vpack.c.b16 %v4954, %v4954
        %v5151 = vpack.c.b16 %v4955, %v4955
        %v5152 = vpack.c.b16 %v4956, %v4956
        %v5153 = vpack.c.b16 %v4957, %v4957
        %v5154 = vpack.c.b16 %v4958, %v4958
        %v5155 = vpack.c.b16 %v4959, %v4959
        %v5156 = vpack.c.b16 %v4960, %v4960
        %v5157 = vpack.c.b16 %v4961, %v4961
        %v5158 = vpack.c.b16 %v4962, %v4962
        %v5159 = vpack.c.b16 %v4963, %v4963
        %v5160 = vpack.c.b16 %v4964, %v4964
        %v5161 = vpack.c.b16 %v4965, %v4965
        %v5162 = vpack.c.b16 %v4966, %v4966
        %v5163 = vpack.c.b16 %v4967, %v4967
        %v5164 = vpack.c.b16 %v4968, %v4968
        %v5165 = vpack.c.b16 %v4969, %v4969
        %v5166 = vpack.c.b16 %v4970, %v4970
        %v5167 = vpack.c.b16 %v4971, %v4971
        %v5168 = vpack.c.b16 %v4972, %v4972
        %v5169 = vpack.c.b16 %v4973, %v4973
        %v5170 = vpack.c.b16 %v4974, %v4974
        %v5171 = vpack.c.b16 %v4975, %v4975
        %v5172 = vpack.c.b16 %v4976, %v4976
        %v5173 = vpack.c.b16 %v4977, %v4977
        %v5174 = vpack.c.b16 %v4978, %v4978
        %v5175 = vpack.c.b16 %v4979, %v4979
        %v5176 = vpack.c.b16 %v4980, %v4980
        %v5177 = vpack.c.b16 %v4981, %v4981
        %v5178 = vpack.c.b16 %v4982, %v4982
        %v5179 = vpack.c.b16 %v4983, %v4983
        %v5180 = vpack.c.b16 %v4984, %v4984
        %v5181 = vpack.c.b16 %v4985, %v4985
        %v5182 = vpack.c.b16 %v4986, %v4986
        %v5183 = vpack.c.b16 %v4987, %v4987
        %v5184 = vpack.c.b16 %v4988, %v4988
        %v5185 = vpack.c.b16 %v4989, %v4989
        %v5186 = vpack.c.b16 %v4990, %v4990
        %v5187 = vpack.c.b16 %v4991, %v4991
        %v5188 = vpack.c.b16 %v4992, %v4992
        %v5189 = vpack.c.b16 %v4993, %v4993
        %v5190 = vpack.c.b16 %v4994, %v4994
        %v5191 = vpack.c.b16 %v4995, %v4995
        %v5192 = vpack.c.b16 %v4996, %v4996
        %v5193 = vpack.c.b16 %v4997, %v4997
        %v5194 = vpack.c.b16 %v4998, %v4998
        %v5195 = vpack.c.b16 %v4999, %v4999
        %v5196 = vpack.c.b16 %v5000, %v5000
        %v5197 = vpack.c.b16 %v5001, %v5001
        %v5198 = vpack.c.b16 %v5002, %v5002
        %v5199 = vpack.c.b16 %v5003, %v5003
        %v5200 = vpack.c.b16 %v5004, %v5004
        %v5201 = vpack.c.b16 %v5005, %v5005
        %v5202 = vpack.c.b16 %v5006, %v5006
        %v5203 = vpack.c.b16 %v5007, %v5007
        %v5204 = vpack.c.b16 %v5008, %v5008
        %v5205 = vpack.c.b16 %v5009, %v5009
        %v5206 = vpack.c.b16 %v5010, %v5010
        %v5207 = vpack.c.b16 %v5011, %v5011
        %v5208 = vpack.c.b16 %v5012, %v5012
        %v5209 = vpack.c.b16 %v5013, %v5013
        %v5210 = vpack.c.b16 %v5014, %v5014
        %v5211 = vpack.c.b16 %v5015, %v5015
        %v5212 = vpack.c.b16 %v5016, %v5016
        %v5213 = vpack.c.b16 %v5017, %v5017
        %v5214 = vpack.c.b16 %v5018, %v5018
        %v5215 = vpack.c.b16 %v5019, %v5019
        %v5216 = vpack.c.b16 %v5020, %v5020
        %v5217 = vpack.c.b16 %v5021, %v5021
        %v5218 = vpack.c.b16 %v5022, %v5022
        %v5219 = vpack.c.b16 %v5023, %v5023
        %v5220 = vpack.c.b16 %v5024, %v5024
        %v5221 = vpack.c.b16 %v5025, %v5025
        %v5222 = vpack.c.b16 %v5026, %v5026
        %v5223 = vpack.c.b16 %v5027, %v5027
        %v5224 = vpack.c.b16 %v5028, %v5028
        %v5225 = vpack.c.b16 %v5029, %v5029
        %v5226 = vpack.c.b16 %v5030, %v5030
        %v5227 = vpack.c.b16 %v5031, %v5031
        %v5228 = vpack.c.b16 %v5032, %v5032
        %v5229 = vpack.c.b16 %v5033, %v5033
        %v5230 = vpack.c.b16 %v5034, %v5034
        %v5231 = vpack.c.b16 %v5035, %v5035
        %v5232 = vpack.c.b16 %v5036, %v5036
        %v5233 = vpack.c.b16 %v5037, %v5037
        %v5234 = vpack.c.b16 %v5038, %v5038
        %v5235 = vpack.c.b16 %v5039, %v5039
        %v5236 = vpack.c.b16 %v5040, %v5040
        %v5237 = vpack.c.b16 %v5041, %v5041
        %v5238 = vpack.c.b16 %v5042, %v5042
        %v5239 = vpack.c.b16 %v5043, %v5043
        %v5240 = vpack.c.b16 %v5044, %v5044
        %v5241 = vpack.c.b16 %v5045, %v5045
        %v5242 = vpack.c.b16 %v5046, %v5046
        %v5243 = vpack.c.b16 %v5047, %v5047
        %v5244 = vpack.c.b16 %v5048, %v5048
        %v5245 = vpack.c.b16 %v5049, %v5049
        %v5246 = vpack.c.b16 %v5050, %v5050
        %v5247 = vpack.c.b16 %v5051, %v5051
        %v5248 = vpack.c.b16 %v5052, %v5052
        %v5249 = vpack.c.b16 %v5053, %v5053
        %v5250 = vpack.c.b16 %v5054, %v5054
        %v5251 = vpack.c.b16 %v5055, %v5055
        %v5252 = vpack.c.b16 %v5056, %v5056
        %v5253 = vpack.c.b16 %v5057, %v5057
        %v5254 = vpack.c.b16 %v5058, %v5058
        %5451 = vst [vmem:[%s4] sm:$0xf] %v5059
        %5452 = vst [vmem:[%s4 + $0x4] sm:$0xf] %v5060
        %5453 = vst [vmem:[%s4 + $0x8] sm:$0xf] %v5061
        %5454 = vst [vmem:[%s4 + $0xc] sm:$0xf] %v5062
        %5455 = vst [vmem:[%s4 + $0x10] sm:$0xf] %v5063
        %5456 = vst [vmem:[%s4 + $0x14] sm:$0xf] %v5064
        %5457 = vst [vmem:[%s4 + $0x18] sm:$0xf] %v5065
        %5458 = vst [vmem:[%s4 + $0x1c] sm:$0xf] %v5066
        %5459 = vst [vmem:[%s4 + $0x20] sm:$0xf] %v5067
        %5460 = vst [vmem:[%s4 + $0x24] sm:$0xf] %v5068
        %5461 = vst [vmem:[%s4 + $0x28] sm:$0xf] %v5069
        %5462 = vst [vmem:[%s4 + $0x2c] sm:$0xf] %v5070
        %5463 = vst [vmem:[%s4 + $0x30] sm:$0xf] %v5071
        %5464 = vst [vmem:[%s4 + $0x34] sm:$0xf] %v5072
        %5465 = vst [vmem:[%s4 + $0x38] sm:$0xf] %v5073
        %5466 = vst [vmem:[%s4 + $0x3c] sm:$0xf] %v5074
        %5467 = vst [vmem:[%s4 + $0x40] sm:$0xf] %v5075
        %5468 = vst [vmem:[%s4 + $0x44] sm:$0xf] %v5076
        %5469 = vst [vmem:[%s4 + $0x48] sm:$0xf] %v5077
        %5470 = vst [vmem:[%s4 + $0x4c] sm:$0xf] %v5078
        %5471 = vst [vmem:[%s4 + $0x50] sm:$0xf] %v5079
        %5472 = vst [vmem:[%s4 + $0x54] sm:$0xf] %v5080
        %5473 = vst [vmem:[%s4 + $0x58] sm:$0xf] %v5081
        %5474 = vst [vmem:[%s4 + $0x5c] sm:$0xf] %v5082
        %5475 = vst [vmem:[%s4 + $0x60] sm:$0xf] %v5083
        %5476 = vst [vmem:[%s4 + $0x64] sm:$0xf] %v5084
        %5477 = vst [vmem:[%s4 + $0x68] sm:$0xf] %v5085
        %5478 = vst [vmem:[%s4 + $0x6c] sm:$0xf] %v5086
        %5479 = vst [vmem:[%s4 + $0x70] sm:$0xf] %v5087
        %5480 = vst [vmem:[%s4 + $0x74] sm:$0xf] %v5088
        %5481 = vst [vmem:[%s4 + $0x78] sm:$0xf] %v5089
        %5482 = vst [vmem:[%s4 + $0x7c] sm:$0xf] %v5090
        %5483 = vst [vmem:[%s4 + $0x80] sm:$0xf] %v5091
        %5484 = vst [vmem:[%s4 + $0x84] sm:$0xf] %v5092
        %5485 = vst [vmem:[%s4 + $0x88] sm:$0xf] %v5093
        %5486 = vst [vmem:[%s4 + $0x8c] sm:$0xf] %v5094
        %5487 = vst [vmem:[%s4 + $0x90] sm:$0xf] %v5095
        %5488 = vst [vmem:[%s4 + $0x94] sm:$0xf] %v5096
        %5489 = vst [vmem:[%s4 + $0x98] sm:$0xf] %v5097
        %5490 = vst [vmem:[%s4 + $0x9c] sm:$0xf] %v5098
        %5491 = vst [vmem:[%s4 + $0xa0] sm:$0xf] %v5099
        %5492 = vst [vmem:[%s4 + $0xa4] sm:$0xf] %v5100
        %5493 = vst [vmem:[%s4 + $0xa8] sm:$0xf] %v5101
        %5494 = vst [vmem:[%s4 + $0xac] sm:$0xf] %v5102
        %5495 = vst [vmem:[%s4 + $0xb0] sm:$0xf] %v5103
        %5496 = vst [vmem:[%s4 + $0xb4] sm:$0xf] %v5104
        %5497 = vst [vmem:[%s4 + $0xb8] sm:$0xf] %v5105
        %5498 = vst [vmem:[%s4 + $0xbc] sm:$0xf] %v5106
        %5499 = vst [vmem:[%s4 + $0xc0] sm:$0xf] %v5107
        %5500 = vst [vmem:[%s4 + $0xc4] sm:$0xf] %v5108
        %5501 = vst [vmem:[%s4 + $0xc8] sm:$0xf] %v5109
        %5502 = vst [vmem:[%s4 + $0xcc] sm:$0xf] %v5110
        %5503 = vst [vmem:[%s4 + $0xd0] sm:$0xf] %v5111
        %5504 = vst [vmem:[%s4 + $0xd4] sm:$0xf] %v5112
        %5505 = vst [vmem:[%s4 + $0xd8] sm:$0xf] %v5113
        %5506 = vst [vmem:[%s4 + $0xdc] sm:$0xf] %v5114
        %5507 = vst [vmem:[%s4 + $0xe0] sm:$0xf] %v5115
        %5508 = vst [vmem:[%s4 + $0xe4] sm:$0xf] %v5116
        %5509 = vst [vmem:[%s4 + $0xe8] sm:$0xf] %v5117
        %5510 = vst [vmem:[%s4 + $0xec] sm:$0xf] %v5118
        %5511 = vst [vmem:[%s4 + $0xf0] sm:$0xf] %v5119
        %5512 = vst [vmem:[%s4 + $0xf4] sm:$0xf] %v5120
        %5513 = vst [vmem:[%s4 + $0xf8] sm:$0xf] %v5121
        %5514 = vst [vmem:[%s4 + $0xfc] sm:$0xf] %v5122
        %5515 = vst [vmem:[%s4 + $0x100] sm:$0xf] %v5123
        %5516 = vst [vmem:[%s4 + $0x104] sm:$0xf] %v5124
        %5517 = vst [vmem:[%s4 + $0x108] sm:$0xf] %v5125
        %5518 = vst [vmem:[%s4 + $0x10c] sm:$0xf] %v5126
        %5519 = vst [vmem:[%s4 + $0x110] sm:$0xf] %v5127
        %5520 = vst [vmem:[%s4 + $0x114] sm:$0xf] %v5128
        %5521 = vst [vmem:[%s4 + $0x118] sm:$0xf] %v5129
        %5522 = vst [vmem:[%s4 + $0x11c] sm:$0xf] %v5130
        %5523 = vst [vmem:[%s4 + $0x120] sm:$0xf] %v5131
        %5524 = vst [vmem:[%s4 + $0x124] sm:$0xf] %v5132
        %5525 = vst [vmem:[%s4 + $0x128] sm:$0xf] %v5133
        %5526 = vst [vmem:[%s4 + $0x12c] sm:$0xf] %v5134
        %5527 = vst [vmem:[%s4 + $0x130] sm:$0xf] %v5135
        %5528 = vst [vmem:[%s4 + $0x134] sm:$0xf] %v5136
        %5529 = vst [vmem:[%s4 + $0x138] sm:$0xf] %v5137
        %5530 = vst [vmem:[%s4 + $0x13c] sm:$0xf] %v5138
        %5531 = vst [vmem:[%s4 + $0x140] sm:$0xf] %v5139
        %5532 = vst [vmem:[%s4 + $0x144] sm:$0xf] %v5140
        %5533 = vst [vmem:[%s4 + $0x148] sm:$0xf] %v5141
        %5534 = vst [vmem:[%s4 + $0x14c] sm:$0xf] %v5142
        %5535 = vst [vmem:[%s4 + $0x150] sm:$0xf] %v5143
        %5536 = vst [vmem:[%s4 + $0x154] sm:$0xf] %v5144
        %5537 = vst [vmem:[%s4 + $0x158] sm:$0xf] %v5145
        %5538 = vst [vmem:[%s4 + $0x15c] sm:$0xf] %v5146
        %5539 = vst [vmem:[%s4 + $0x160] sm:$0xf] %v5147
        %5540 = vst [vmem:[%s4 + $0x164] sm:$0xf] %v5148
        %5541 = vst [vmem:[%s4 + $0x168] sm:$0xf] %v5149
        %5542 = vst [vmem:[%s4 + $0x16c] sm:$0xf] %v5150
        %5543 = vst [vmem:[%s4 + $0x170] sm:$0xf] %v5151
        %5544 = vst [vmem:[%s4 + $0x174] sm:$0xf] %v5152
        %5545 = vst [vmem:[%s4 + $0x178] sm:$0xf] %v5153
        %5546 = vst [vmem:[%s4 + $0x17c] sm:$0xf] %v5154
        %5547 = vst [vmem:[%s4 + $0x180] sm:$0xf] %v5155
        %5548 = vst [vmem:[%s4 + $0x184] sm:$0xf] %v5156
        %5549 = vst [vmem:[%s4 + $0x188] sm:$0xf] %v5157
        %5550 = vst [vmem:[%s4 + $0x18c] sm:$0xf] %v5158
        %5551 = vst [vmem:[%s4 + $0x190] sm:$0xf] %v5159
        %5552 = vst [vmem:[%s4 + $0x194] sm:$0xf] %v5160
        %5553 = vst [vmem:[%s4 + $0x198] sm:$0xf] %v5161
        %5554 = vst [vmem:[%s4 + $0x19c] sm:$0xf] %v5162
        %5555 = vst [vmem:[%s4 + $0x1a0] sm:$0xf] %v5163
        %5556 = vst [vmem:[%s4 + $0x1a4] sm:$0xf] %v5164
        %5557 = vst [vmem:[%s4 + $0x1a8] sm:$0xf] %v5165
        %5558 = vst [vmem:[%s4 + $0x1ac] sm:$0xf] %v5166
        %5559 = vst [vmem:[%s4 + $0x1b0] sm:$0xf] %v5167
        %5560 = vst [vmem:[%s4 + $0x1b4] sm:$0xf] %v5168
        %5561 = vst [vmem:[%s4 + $0x1b8] sm:$0xf] %v5169
        %5562 = vst [vmem:[%s4 + $0x1bc] sm:$0xf] %v5170
        %5563 = vst [vmem:[%s4 + $0x1c0] sm:$0xf] %v5171
        %5564 = vst [vmem:[%s4 + $0x1c4] sm:$0xf] %v5172
        %5565 = vst [vmem:[%s4 + $0x1c8] sm:$0xf] %v5173
        %5566 = vst [vmem:[%s4 + $0x1cc] sm:$0xf] %v5174
        %5567 = vst [vmem:[%s4 + $0x1d0] sm:$0xf] %v5175
        %5568 = vst [vmem:[%s4 + $0x1d4] sm:$0xf] %v5176
        %5569 = vst [vmem:[%s4 + $0x1d8] sm:$0xf] %v5177
        %5570 = vst [vmem:[%s4 + $0x1dc] sm:$0xf] %v5178
        %5571 = vst [vmem:[%s4 + $0x1e0] sm:$0xf] %v5179
        %5572 = vst [vmem:[%s4 + $0x1e4] sm:$0xf] %v5180
        %5573 = vst [vmem:[%s4 + $0x1e8] sm:$0xf] %v5181
        %5574 = vst [vmem:[%s4 + $0x1ec] sm:$0xf] %v5182
        %5575 = vst [vmem:[%s4 + $0x1f0] sm:$0xf] %v5183
        %5576 = vst [vmem:[%s4 + $0x1f4] sm:$0xf] %v5184
        %5577 = vst [vmem:[%s4 + $0x1f8] sm:$0xf] %v5185
        %5578 = vst [vmem:[%s4 + $0x1fc] sm:$0xf] %v5186
        %5579 = vst [vmem:[%s4 + $0x200] sm:$0xf] %v5187
        %5580 = vst [vmem:[%s4 + $0x204] sm:$0xf] %v5188
        %5581 = vst [vmem:[%s4 + $0x208] sm:$0xf] %v5189
        %5582 = vst [vmem:[%s4 + $0x20c] sm:$0xf] %v5190
        %5583 = vst [vmem:[%s4 + $0x210] sm:$0xf] %v5191
        %5584 = vst [vmem:[%s4 + $0x214] sm:$0xf] %v5192
        %5585 = vst [vmem:[%s4 + $0x218] sm:$0xf] %v5193
        %5586 = vst [vmem:[%s4 + $0x21c] sm:$0xf] %v5194
        %5587 = vst [vmem:[%s4 + $0x220] sm:$0xf] %v5195
        %5588 = vst [vmem:[%s4 + $0x224] sm:$0xf] %v5196
        %5589 = vst [vmem:[%s4 + $0x228] sm:$0xf] %v5197
        %5590 = vst [vmem:[%s4 + $0x22c] sm:$0xf] %v5198
        %5591 = vst [vmem:[%s4 + $0x230] sm:$0xf] %v5199
        %5592 = vst [vmem:[%s4 + $0x234] sm:$0xf] %v5200
        %5593 = vst [vmem:[%s4 + $0x238] sm:$0xf] %v5201
        %5594 = vst [vmem:[%s4 + $0x23c] sm:$0xf] %v5202
        %5595 = vst [vmem:[%s4 + $0x240] sm:$0xf] %v5203
        %5596 = vst [vmem:[%s4 + $0x244] sm:$0xf] %v5204
        %5597 = vst [vmem:[%s4 + $0x248] sm:$0xf] %v5205
        %5598 = vst [vmem:[%s4 + $0x24c] sm:$0xf] %v5206
        %5599 = vst [vmem:[%s4 + $0x250] sm:$0xf] %v5207
        %5600 = vst [vmem:[%s4 + $0x254] sm:$0xf] %v5208
        %5601 = vst [vmem:[%s4 + $0x258] sm:$0xf] %v5209
        %5602 = vst [vmem:[%s4 + $0x25c] sm:$0xf] %v5210
        %5603 = vst [vmem:[%s4 + $0x260] sm:$0xf] %v5211
        %5604 = vst [vmem:[%s4 + $0x264] sm:$0xf] %v5212
        %5605 = vst [vmem:[%s4 + $0x268] sm:$0xf] %v5213
        %5606 = vst [vmem:[%s4 + $0x26c] sm:$0xf] %v5214
        %5607 = vst [vmem:[%s4 + $0x270] sm:$0xf] %v5215
        %5608 = vst [vmem:[%s4 + $0x274] sm:$0xf] %v5216
        %5609 = vst [vmem:[%s4 + $0x278] sm:$0xf] %v5217
        %5610 = vst [vmem:[%s4 + $0x27c] sm:$0xf] %v5218
        %5611 = vst [vmem:[%s4 + $0x280] sm:$0xf] %v5219
        %5612 = vst [vmem:[%s4 + $0x284] sm:$0xf] %v5220
        %5613 = vst [vmem:[%s4 + $0x288] sm:$0xf] %v5221
        %5614 = vst [vmem:[%s4 + $0x28c] sm:$0xf] %v5222
        %5615 = vst [vmem:[%s4 + $0x290] sm:$0xf] %v5223
        %5616 = vst [vmem:[%s4 + $0x294] sm:$0xf] %v5224
        %5617 = vst [vmem:[%s4 + $0x298] sm:$0xf] %v5225
        %5618 = vst [vmem:[%s4 + $0x29c] sm:$0xf] %v5226
        %5619 = vst [vmem:[%s4 + $0x2a0] sm:$0xf] %v5227
        %5620 = vst [vmem:[%s4 + $0x2a4] sm:$0xf] %v5228
        %5621 = vst [vmem:[%s4 + $0x2a8] sm:$0xf] %v5229
        %5622 = vst [vmem:[%s4 + $0x2ac] sm:$0xf] %v5230
        %5623 = vst [vmem:[%s4 + $0x2b0] sm:$0xf] %v5231
        %5624 = vst [vmem:[%s4 + $0x2b4] sm:$0xf] %v5232
        %5625 = vst [vmem:[%s4 + $0x2b8] sm:$0xf] %v5233
        %5626 = vst [vmem:[%s4 + $0x2bc] sm:$0xf] %v5234
        %5627 = vst [vmem:[%s4 + $0x2c0] sm:$0xf] %v5235
        %5628 = vst [vmem:[%s4 + $0x2c4] sm:$0xf] %v5236
        %5629 = vst [vmem:[%s4 + $0x2c8] sm:$0xf] %v5237
        %5630 = vst [vmem:[%s4 + $0x2cc] sm:$0xf] %v5238
        %5631 = vst [vmem:[%s4 + $0x2d0] sm:$0xf] %v5239
        %5632 = vst [vmem:[%s4 + $0x2d4] sm:$0xf] %v5240
        %5633 = vst [vmem:[%s4 + $0x2d8] sm:$0xf] %v5241
        %5634 = vst [vmem:[%s4 + $0x2dc] sm:$0xf] %v5242
        %5635 = vst [vmem:[%s4 + $0x2e0] sm:$0xf] %v5243
        %5636 = vst [vmem:[%s4 + $0x2e4] sm:$0xf] %v5244
        %5637 = vst [vmem:[%s4 + $0x2e8] sm:$0xf] %v5245
        %5638 = vst [vmem:[%s4 + $0x2ec] sm:$0xf] %v5246
        %5639 = vst [vmem:[%s4 + $0x2f0] sm:$0xf] %v5247
        %5640 = vst [vmem:[%s4 + $0x2f4] sm:$0xf] %v5248
        %5641 = vst [vmem:[%s4 + $0x2f8] sm:$0xf] %v5249
        %5642 = vst [vmem:[%s4 + $0x2fc] sm:$0xf] %v5250
        %5643 = vst [vmem:[%s4 + $0x300] sm:$0xf] %v5251
        %5644 = vst [vmem:[%s4 + $0x304] sm:$0xf] %v5252
        %5645 = vst [vmem:[%s4 + $0x308] sm:$0xf] %v5253
        %5646 = vst [vmem:[%s4 + $0x30c] sm:$0xf] %v5254
      $region44: #{generator_forward.6} parent=35 // pred_fallthru
        _
      // Predicated region
      $region45: #{generator_forward.6} parent=35 // pred_check
        %p5647 = pneg %p117
      $region46: #{generator_forward.6} parent=35 // pred_check_branch
        %5649 = sbr.rel (%p5647) target = $region48
      $region47: #{generator_forward.6} parent=35 // pred_region
        _
      $region48: #{generator_forward.6} parent=35 // pred_fallthru
        _
      // Predicated region
      $region49: #{generator_forward.6} parent=35 // pred_check
        %p5650 = pneg %p117
      $region50: #{generator_forward.6} parent=35 // pred_check_branch
        %5652 = sbr.rel (%p5650) target = $region52
      $region51: #{generator_forward.6} parent=35 // pred_region
        _
      $region52: #{generator_forward.6} parent=35 // pred_fallthru
        _
    $region36: #{generator_forward.6} parent=5 // pred_fallthru
      _
    %p5653 = scmp.le.s32.totalorder 2, %s10
    // Predicated region
    $region53: #{generator_forward.6} parent=5 // pred_check
      %p5654 = pneg %p5653
    $region54: #{generator_forward.6} parent=5 // pred_check_branch
      %5656 = sbr.rel (%p5654) target = $region56
    $region55: #{generator_forward.6} parent=5 // pred_region
      %s5657 = ssub.s32 %s10, 2
    $region56: #{generator_forward.6} parent=5 // pred_fallthru
      _
  $region6: #{generator_forward.6} parent=0 // loop_footer
    %s14 = sadd.s32 1, %s10
  $region7: #{generator_forward.6} parent=0 // loop_footer_branch
    %9 = sbr.rel target = $region3
  $region8: #{generator_forward.6} parent=0 // loop_exit
    _

// kernel: generator_forward.7
$region0: #{generator_forward.7}
  #allocation0 [shape = 'u32[]', space=smem, size = 0x4, offset = 0x4, fixed_abs, tag = 'smem constant byte address 0x4 - core index']
  #allocation1 [shape = 'u32[144,128]{1,0:T(1,128)}', space=vmem, size = 0x12000, scoped, tag = 'internal scratch']
  %s0 = inlined_call_operand.vmem [shape: bf16[1568,576], index: 0, kind: input, shape index: {}]
  %s1 = inlined_call_operand.vmem [shape: bf16[576,128], index: 1, kind: input, shape index: {}]
  %s2 = inlined_call_operand.vmem [shape: f32[1568,128], index: 2, kind: output, shape index: {}]
  %s3 = sld [smem:[#allocation0]]
  $region41: #{generator_forward.7} parent=0
    _
  %s5 = ssub.s32 1, %s3
  %s6 = scalar_select 0, %s5, %s3
  loop: start=0, step=1, limit=9
  $region2: #{generator_forward.7} parent=0 // loop_pre_header
    _
  $region3: #{generator_forward.7} parent=0 // loop_header
    %s8 = sphi 0, %s12
    %p9 = scmp.ge.s32.totalorder %s8, 9
    %s18 = sphi 0, %s20
    %s21 = sphi 0, %s18
    %s22 = sphi 0, %s21
    %s38 = sphi 0, %s22
    %s42 = sphi 0, %s42
    %s44 = sphi 0, %s42
    %s45 = sphi 0, %s44
    %s59 = sphi 0, %s45
    %s65 = sphi 0, %s67
    %s68 = sphi 0, %s65
    %s69 = sphi 0, %s68
    %s85 = sphi 0, %s69
  $region4: #{generator_forward.7} parent=0 // loop_header_branch
    %11 = sbr.rel (%p9) target = $region8
  $region5: #{generator_forward.7} parent=0 // loop_body
    %s13 = ssub.s32 %s8, 1
    %s14 = ssub.s32 %s8, 2
    %s15 = sadd.s32 %s8, 1
    %s16 = ssub.s32 %s8, %s15
    %p17 = scmp.eq.s32.totalorder %s16, 0
    %s19 = sadd.s32 %s18, 1
    %s20 = scalar_select %p17, %s18, %s19
    %p23 = pneg %p17
    %p24 = scmp.eq.s32.totalorder %s8, 6
    %p25 = por %p23, %p24
    %p26 = scmp.ne.s32.totalorder %s18, %s21
    %p27 = scmp.eq.s32.totalorder %s8, 0
    %p28 = por %p26, %p27
    %p29 = scmp.ne.s32.totalorder %s18, %s21
    %p30 = scmp.eq.s32.totalorder %s13, 6
    %p31 = por %p29, %p30
    %p32 = scmp.ne.s32.totalorder %s21, %s22
    %p33 = scmp.eq.s32.totalorder %s13, 0
    %p34 = por %p32, %p33
    %p35 = scmp.ne.s32.totalorder %s21, %s22
    %p36 = scmp.eq.s32.totalorder %s14, 6
    %p37 = por %p35, %p36
    %p39 = scmp.ne.s32.totalorder %s22, %s38
    %p40 = scmp.eq.s32.totalorder %s14, 0
    %p41 = por %p39, %p40
    %s43 = sadd.s32 %s42, 1
    %p46 = scmp.eq.s32.totalorder %s8, 6
    %p47 = scmp.ne.s32.totalorder %s42, %s44
    %p48 = scmp.eq.s32.totalorder %s8, 0
    %p49 = por %p47, %p48
    %p50 = scmp.ne.s32.totalorder %s42, %s44
    %p51 = scmp.eq.s32.totalorder %s13, 6
    %p52 = por %p50, %p51
    %p53 = scmp.ne.s32.totalorder %s44, %s45
    %p54 = scmp.eq.s32.totalorder %s13, 0
    %p55 = por %p53, %p54
    %p56 = scmp.ne.s32.totalorder %s44, %s45
    %p57 = scmp.eq.s32.totalorder %s14, 6
    %p58 = por %p56, %p57
    %p60 = scmp.ne.s32.totalorder %s45, %s59
    %p61 = scmp.eq.s32.totalorder %s14, 0
    %p62 = por %p60, %p61
    %s63 = ssub.s32 %s8, %s15
    %p64 = scmp.eq.s32.totalorder %s63, 0
    %s66 = sadd.s32 %s65, 1
    %s67 = scalar_select %p64, %s65, %s66
    %p70 = pneg %p64
    %p71 = scmp.eq.s32.totalorder %s8, 6
    %p72 = por %p70, %p71
    %p73 = scmp.ne.s32.totalorder %s65, %s68
    %p74 = scmp.eq.s32.totalorder %s8, 0
    %p75 = por %p73, %p74
    %p76 = scmp.ne.s32.totalorder %s65, %s68
    %p77 = scmp.eq.s32.totalorder %s13, 6
    %p78 = por %p76, %p77
    %p79 = scmp.ne.s32.totalorder %s68, %s69
    %p80 = scmp.eq.s32.totalorder %s13, 0
    %p81 = por %p79, %p80
    %p82 = scmp.ne.s32.totalorder %s68, %s69
    %p83 = scmp.eq.s32.totalorder %s14, 6
    %p84 = por %p82, %p83
    %p86 = scmp.ne.s32.totalorder %s69, %s85
    %p87 = scmp.eq.s32.totalorder %s14, 0
    %p88 = por %p86, %p87
    %p89 = scmp.le.s32.totalorder 1, %s8
    %p90 = scmp.lt.s32.totalorder %s8, 8
    %p91 = pnand %p89, %p90
    %p92 = pneg %p91
    // Predicated region
    $region9: #{generator_forward.7} parent=5 // pred_check
      _
    $region10: #{generator_forward.7} parent=5 // pred_check_branch
      %94 = sbr.rel (%p91) target = $region12
    $region11: #{generator_forward.7} parent=5 // pred_region
      %s95 = ssub.s32 %s8, 1
      // Predicated region
      $region13: #{generator_forward.7} parent=11 // pred_check
        %p96 = pneg %p55
      $region14: #{generator_forward.7} parent=11 // pred_check_branch
        %98 = sbr.rel (%p96) target = $region16
      $region15: #{generator_forward.7} parent=11 // pred_region
        _
      $region16: #{generator_forward.7} parent=11 // pred_fallthru
        _
    $region12: #{generator_forward.7} parent=5 // pred_fallthru
      _
    %p99 = scmp.lt.s32.totalorder %s8, 7
    // Predicated region
    $region17: #{generator_forward.7} parent=5 // pred_check
      %p100 = pneg %p99
    $region18: #{generator_forward.7} parent=5 // pred_check_branch
      %102 = sbr.rel (%p100) target = $region20
    $region19: #{generator_forward.7} parent=5 // pred_region
      // Predicated region
      $region21: #{generator_forward.7} parent=19 // pred_check
        %p103 = pneg %p28
      $region22: #{generator_forward.7} parent=19 // pred_check_branch
        %105 = sbr.rel (%p103) target = $region24
      $region23: #{generator_forward.7} parent=19 // pred_region
        %s106 = smul.u32 28, %s8
        %p107 = scmp.lt.s32.totalorder %s106, 195
        %s108 = scalar_select %p107, %s106, 195
        %s109 = smul.addr %s108, 5
        %s110 = smul.addr %s109, 4
        %s111 = scalar_lea.vmem %s0, %s110
        %s112 = smul.u32 28, %s8
      $region24: #{generator_forward.7} parent=19 // pred_fallthru
        _
    $region20: #{generator_forward.7} parent=5 // pred_fallthru
      _
    %p113 = scmp.le.s32.totalorder 1, %s8
    %p114 = scmp.lt.s32.totalorder %s8, 8
    %p115 = pnand %p113, %p114
    %p116 = pneg %p115
    // Predicated region
    $region25: #{generator_forward.7} parent=5 // pred_check
      _
    $region26: #{generator_forward.7} parent=5 // pred_check_branch
      %118 = sbr.rel (%p115) target = $region28
    $region27: #{generator_forward.7} parent=5 // pred_region
      %s119 = ssub.s32 %s8, 1
      %s120 = smul.u32 28, %s13
      %p121 = scmp.lt.s32.totalorder %s120, 195
      %s122 = scalar_select %p121, %s120, 195
      %s123 = smul.addr %s122, 5
      %s124 = smul.addr %s123, 4
      %s125 = scalar_lea.vmem %s0, %s124
      %p126 = pneg %p34
      %p127 = pneg %p31
      %p128 = pneg %p55
      %p129 = pneg %p52
      %p130 = pneg %p81
      %p131 = pneg %p78
      %s132 = smul.u32 28, %s13
      %p133 = scmp.lt.s32.totalorder %s132, 195
      %s134 = scalar_select %p133, %s132, 195
      %s135 = smul.addr %s134, 8
      %s136 = scalar_lea.vmem %s2, %s135
      %s137 = smul.u32 28, %s13
      %p138 = scmp.lt.s32.totalorder %s137, 195
      %s139 = scalar_select %p138, %s137, 195
      %s140 = smul.addr %s139, 5
      %s141 = smul.addr %s140, 4
      %s142 = scalar_lea.vmem %s0, %s141
      %s143 = smul.u32 28, %s13
      %s144 = smul.u32 28, %s13
      %p145 = scmp.lt.s32.totalorder %s144, 195
      %s146 = scalar_select %p145, %s144, 195
      %s147 = smul.addr %s146, 8
      %s148 = scalar_lea.vmem %s2, %s147
      %s149 = smul.u32 28, %s13
      %v151 = vld [vmem:[%s142] sm:$0xff]
      %v152 = vld [vmem:[%s142 + $0x8] sm:$0xff]
      %v153 = vld [vmem:[%s142 + $0x10] sm:$0xf]
      %v154 = vld [vmem:[%s142 + $0x14] sm:$0xff]
      %v155 = vld [vmem:[%s142 + $0x1c] sm:$0xff]
      %v156 = vld [vmem:[%s142 + $0x24] sm:$0xf]
      %v157 = vld [vmem:[%s142 + $0x28] sm:$0xff]
      %v158 = vld [vmem:[%s142 + $0x30] sm:$0xff]
      %v159 = vld [vmem:[%s142 + $0x38] sm:$0xf]
      %v160 = vld [vmem:[%s142 + $0x3c] sm:$0xff]
      %v161 = vld [vmem:[%s142 + $0x44] sm:$0xff]
      %v162 = vld [vmem:[%s142 + $0x4c] sm:$0xf]
      %v163 = vld [vmem:[%s142 + $0x50] sm:$0xff]
      %v164 = vld [vmem:[%s142 + $0x58] sm:$0xff]
      %v165 = vld [vmem:[%s142 + $0x60] sm:$0xf]
      %v166 = vld [vmem:[%s142 + $0x64] sm:$0xff]
      %v167 = vld [vmem:[%s142 + $0x6c] sm:$0xff]
      %v168 = vld [vmem:[%s142 + $0x74] sm:$0xf]
      %v169 = vld [vmem:[%s142 + $0x78] sm:$0xff]
      %v170 = vld [vmem:[%s142 + $0x80] sm:$0xff]
      %v171 = vld [vmem:[%s142 + $0x88] sm:$0xf]
      %v172 = vld [vmem:[%s142 + $0x8c] sm:$0xff]
      %v173 = vld [vmem:[%s142 + $0x94] sm:$0xff]
      %v174 = vld [vmem:[%s142 + $0x9c] sm:$0xf]
      %v175 = vld [vmem:[%s142 + $0xa0] sm:$0xff]
      %v176 = vld [vmem:[%s142 + $0xa8] sm:$0xff]
      %v177 = vld [vmem:[%s142 + $0xb0] sm:$0xf]
      %v178 = vld [vmem:[%s142 + $0xb4] sm:$0xff]
      %v179 = vld [vmem:[%s142 + $0xbc] sm:$0xff]
      %v180 = vld [vmem:[%s142 + $0xc4] sm:$0xf]
      %v181 = vld [vmem:[%s142 + $0xc8] sm:$0xff]
      %v182 = vld [vmem:[%s142 + $0xd0] sm:$0xff]
      %v183 = vld [vmem:[%s142 + $0xd8] sm:$0xf]
      %v184 = vld [vmem:[%s142 + $0xdc] sm:$0xff]
      %v185 = vld [vmem:[%s142 + $0xe4] sm:$0xff]
      %v186 = vld [vmem:[%s142 + $0xec] sm:$0xf]
      %v187 = vld [vmem:[%s142 + $0xf0] sm:$0xff]
      %v188 = vld [vmem:[%s142 + $0xf8] sm:$0xff]
      %v189 = vld [vmem:[%s142 + $0x100] sm:$0xf]
      %v190 = vld [vmem:[%s142 + $0x104] sm:$0xff]
      %v191 = vld [vmem:[%s142 + $0x10c] sm:$0xff]
      %v192 = vld [vmem:[%s142 + $0x114] sm:$0xf]
      %v193 = vld [vmem:[%s142 + $0x118] sm:$0xff]
      %v194 = vld [vmem:[%s142 + $0x120] sm:$0xff]
      %v195 = vld [vmem:[%s142 + $0x128] sm:$0xf]
      %v196 = vld [vmem:[%s142 + $0x12c] sm:$0xff]
      %v197 = vld [vmem:[%s142 + $0x134] sm:$0xff]
      %v198 = vld [vmem:[%s142 + $0x13c] sm:$0xf]
      %v199 = vld [vmem:[%s142 + $0x140] sm:$0xff]
      %v200 = vld [vmem:[%s142 + $0x148] sm:$0xff]
      %v201 = vld [vmem:[%s142 + $0x150] sm:$0xf]
      %v202 = vld [vmem:[%s142 + $0x154] sm:$0xff]
      %v203 = vld [vmem:[%s142 + $0x15c] sm:$0xff]
      %v204 = vld [vmem:[%s142 + $0x164] sm:$0xf]
      %v205 = vld [vmem:[%s142 + $0x168] sm:$0xff]
      %v206 = vld [vmem:[%s142 + $0x170] sm:$0xff]
      %v207 = vld [vmem:[%s142 + $0x178] sm:$0xf]
      %v208 = vld [vmem:[%s142 + $0x17c] sm:$0xff]
      %v209 = vld [vmem:[%s142 + $0x184] sm:$0xff]
      %v210 = vld [vmem:[%s142 + $0x18c] sm:$0xf]
      %v211 = vld [vmem:[%s142 + $0x190] sm:$0xff]
      %v212 = vld [vmem:[%s142 + $0x198] sm:$0xff]
      %v213 = vld [vmem:[%s142 + $0x1a0] sm:$0xf]
      %v214 = vld [vmem:[%s142 + $0x1a4] sm:$0xff]
      %v215 = vld [vmem:[%s142 + $0x1ac] sm:$0xff]
      %v216 = vld [vmem:[%s142 + $0x1b4] sm:$0xf]
      %v217 = vld [vmem:[%s142 + $0x1b8] sm:$0xff]
      %v218 = vld [vmem:[%s142 + $0x1c0] sm:$0xff]
      %v219 = vld [vmem:[%s142 + $0x1c8] sm:$0xf]
      %v220 = vld [vmem:[%s142 + $0x1cc] sm:$0xff]
      %v221 = vld [vmem:[%s142 + $0x1d4] sm:$0xff]
      %v222 = vld [vmem:[%s142 + $0x1dc] sm:$0xf]
      %v223 = vld [vmem:[%s142 + $0x1e0] sm:$0xff]
      %v224 = vld [vmem:[%s142 + $0x1e8] sm:$0xff]
      %v225 = vld [vmem:[%s142 + $0x1f0] sm:$0xf]
      %v226 = vld [vmem:[%s142 + $0x1f4] sm:$0xff]
      %v227 = vld [vmem:[%s142 + $0x1fc] sm:$0xff]
      %v228 = vld [vmem:[%s142 + $0x204] sm:$0xf]
      %v229 = vld [vmem:[%s142 + $0x208] sm:$0xff]
      %v230 = vld [vmem:[%s142 + $0x210] sm:$0xff]
      %v231 = vld [vmem:[%s142 + $0x218] sm:$0xf]
      %v232 = vld [vmem:[%s142 + $0x21c] sm:$0xff]
      %v233 = vld [vmem:[%s142 + $0x224] sm:$0xff]
      %v234 = vld [vmem:[%s142 + $0x22c] sm:$0xf]
      %v235 = vld [vmem:[%s1] sm:$0xf]
      %v236 = vld [vmem:[%s1 + $0x4] sm:$0xf]
      %v237 = vld [vmem:[%s1 + $0x8] sm:$0xf]
      %v238 = vld [vmem:[%s1 + $0xc] sm:$0xf]
      %v239 = vld [vmem:[%s1 + $0x10] sm:$0xf]
      %v240 = vld [vmem:[%s1 + $0x14] sm:$0xf]
      %v241 = vld [vmem:[%s1 + $0x18] sm:$0xf]
      %v242 = vld [vmem:[%s1 + $0x1c] sm:$0xf]
      %v243 = vld [vmem:[%s1 + $0x20] sm:$0xf]
      %v244 = vld [vmem:[%s1 + $0x24] sm:$0xf]
      %v245 = vld [vmem:[%s1 + $0x28] sm:$0xf]
      %v246 = vld [vmem:[%s1 + $0x2c] sm:$0xf]
      %v247 = vld [vmem:[%s1 + $0x30] sm:$0xf]
      %v248 = vld [vmem:[%s1 + $0x34] sm:$0xf]
      %v249 = vld [vmem:[%s1 + $0x38] sm:$0xf]
      %v250 = vld [vmem:[%s1 + $0x3c] sm:$0xf]
      %v251 = vld [vmem:[%s1 + $0x40] sm:$0xf]
      %v252 = vld [vmem:[%s1 + $0x44] sm:$0xf]
      %v253 = vld [vmem:[%s1 + $0x48] sm:$0xf]
      %v254 = vld [vmem:[%s1 + $0x4c] sm:$0xf]
      %v255 = vld [vmem:[%s1 + $0x50] sm:$0xf]
      %v256 = vld [vmem:[%s1 + $0x54] sm:$0xf]
      %v257 = vld [vmem:[%s1 + $0x58] sm:$0xf]
      %v258 = vld [vmem:[%s1 + $0x5c] sm:$0xf]
      %v259 = vld [vmem:[%s1 + $0x60] sm:$0xf]
      %v260 = vld [vmem:[%s1 + $0x64] sm:$0xf]
      %v261 = vld [vmem:[%s1 + $0x68] sm:$0xf]
      %v262 = vld [vmem:[%s1 + $0x6c] sm:$0xf]
      %v263 = vld [vmem:[%s1 + $0x70] sm:$0xf]
      %v264 = vld [vmem:[%s1 + $0x74] sm:$0xf]
      %v265 = vld [vmem:[%s1 + $0x78] sm:$0xf]
      %v266 = vld [vmem:[%s1 + $0x7c] sm:$0xf]
      %v267 = vld [vmem:[%s1 + $0x80] sm:$0xf]
      %v268 = vld [vmem:[%s1 + $0x84] sm:$0xf]
      %v269 = vld [vmem:[%s1 + $0x88] sm:$0xf]
      %v270 = vld [vmem:[%s1 + $0x8c] sm:$0xf]
      %v271 = vld [vmem:[%s1 + $0x90] sm:$0xf]
      %v272 = vld [vmem:[%s1 + $0x94] sm:$0xf]
      %v273 = vld [vmem:[%s1 + $0x98] sm:$0xf]
      %v274 = vld [vmem:[%s1 + $0x9c] sm:$0xf]
      %v275 = vld [vmem:[%s1 + $0xa0] sm:$0xf]
      %v276 = vld [vmem:[%s1 + $0xa4] sm:$0xf]
      %v277 = vld [vmem:[%s1 + $0xa8] sm:$0xf]
      %v278 = vld [vmem:[%s1 + $0xac] sm:$0xf]
      %v279 = vld [vmem:[%s1 + $0xb0] sm:$0xf]
      %v280 = vld [vmem:[%s1 + $0xb4] sm:$0xf]
      %v281 = vld [vmem:[%s1 + $0xb8] sm:$0xf]
      %v282 = vld [vmem:[%s1 + $0xbc] sm:$0xf]
      %v283 = vld [vmem:[%s1 + $0xc0] sm:$0xf]
      %v284 = vld [vmem:[%s1 + $0xc4] sm:$0xf]
      %v285 = vld [vmem:[%s1 + $0xc8] sm:$0xf]
      %v286 = vld [vmem:[%s1 + $0xcc] sm:$0xf]
      %v287 = vld [vmem:[%s1 + $0xd0] sm:$0xf]
      %v288 = vld [vmem:[%s1 + $0xd4] sm:$0xf]
      %v289 = vld [vmem:[%s1 + $0xd8] sm:$0xf]
      %v290 = vld [vmem:[%s1 + $0xdc] sm:$0xf]
      %v291 = vld [vmem:[%s1 + $0xe0] sm:$0xf]
      %v292 = vld [vmem:[%s1 + $0xe4] sm:$0xf]
      %v293 = vld [vmem:[%s1 + $0xe8] sm:$0xf]
      %v294 = vld [vmem:[%s1 + $0xec] sm:$0xf]
      %v295 = vld [vmem:[%s1 + $0xf0] sm:$0xf]
      %v296 = vld [vmem:[%s1 + $0xf4] sm:$0xf]
      %v297 = vld [vmem:[%s1 + $0xf8] sm:$0xf]
      %v298 = vld [vmem:[%s1 + $0xfc] sm:$0xf]
      %v299 = vld [vmem:[%s1 + $0x100] sm:$0xf]
      %v300 = vld [vmem:[%s1 + $0x104] sm:$0xf]
      %v301 = vld [vmem:[%s1 + $0x108] sm:$0xf]
      %v302 = vld [vmem:[%s1 + $0x10c] sm:$0xf]
      %v303 = vld [vmem:[%s1 + $0x110] sm:$0xf]
      %v304 = vld [vmem:[%s1 + $0x114] sm:$0xf]
      %v305 = vld [vmem:[%s1 + $0x118] sm:$0xf]
      %v306 = vld [vmem:[%s1 + $0x11c] sm:$0xf]
      %v391 = vunpack.c.l.b16 %v151
      %v392 = vunpack.c.h.b16 %v151
      %v393 = vunpack.c.l.b16 %v152
      %v394 = vunpack.c.h.b16 %v152
      %v395 = vunpack.c.l.b16 %v153
      %v396 = vunpack.c.l.b16 %v154
      %v397 = vunpack.c.h.b16 %v154
      %v398 = vunpack.c.l.b16 %v155
      %v399 = vunpack.c.h.b16 %v155
      %v400 = vunpack.c.l.b16 %v156
      %v401 = vunpack.c.l.b16 %v157
      %v402 = vunpack.c.h.b16 %v157
      %v403 = vunpack.c.l.b16 %v158
      %v404 = vunpack.c.h.b16 %v158
      %v405 = vunpack.c.l.b16 %v159
      %v406 = vunpack.c.l.b16 %v160
      %v407 = vunpack.c.h.b16 %v160
      %v408 = vunpack.c.l.b16 %v161
      %v409 = vunpack.c.h.b16 %v161
      %v410 = vunpack.c.l.b16 %v162
      %v411 = vunpack.c.l.b16 %v163
      %v412 = vunpack.c.h.b16 %v163
      %v413 = vunpack.c.l.b16 %v164
      %v414 = vunpack.c.h.b16 %v164
      %v415 = vunpack.c.l.b16 %v165
      %v416 = vunpack.c.l.b16 %v166
      %v417 = vunpack.c.h.b16 %v166
      %v418 = vunpack.c.l.b16 %v167
      %v419 = vunpack.c.h.b16 %v167
      %v420 = vunpack.c.l.b16 %v168
      %v421 = vunpack.c.l.b16 %v169
      %v422 = vunpack.c.h.b16 %v169
      %v423 = vunpack.c.l.b16 %v170
      %v424 = vunpack.c.h.b16 %v170
      %v425 = vunpack.c.l.b16 %v171
      %v426 = vunpack.c.l.b16 %v172
      %v427 = vunpack.c.h.b16 %v172
      %v428 = vunpack.c.l.b16 %v173
      %v429 = vunpack.c.h.b16 %v173
      %v430 = vunpack.c.l.b16 %v174
      %v431 = vunpack.c.l.b16 %v175
      %v432 = vunpack.c.h.b16 %v175
      %v433 = vunpack.c.l.b16 %v176
      %v434 = vunpack.c.h.b16 %v176
      %v435 = vunpack.c.l.b16 %v177
      %v436 = vunpack.c.l.b16 %v178
      %v437 = vunpack.c.h.b16 %v178
      %v438 = vunpack.c.l.b16 %v179
      %v439 = vunpack.c.h.b16 %v179
      %v440 = vunpack.c.l.b16 %v180
      %v441 = vunpack.c.l.b16 %v181
      %v442 = vunpack.c.h.b16 %v181
      %v443 = vunpack.c.l.b16 %v182
      %v444 = vunpack.c.h.b16 %v182
      %v445 = vunpack.c.l.b16 %v183
      %v446 = vunpack.c.l.b16 %v184
      %v447 = vunpack.c.h.b16 %v184
      %v448 = vunpack.c.l.b16 %v185
      %v449 = vunpack.c.h.b16 %v185
      %v450 = vunpack.c.l.b16 %v186
      %v451 = vunpack.c.l.b16 %v187
      %v452 = vunpack.c.h.b16 %v187
      %v453 = vunpack.c.l.b16 %v188
      %v454 = vunpack.c.h.b16 %v188
      %v455 = vunpack.c.l.b16 %v189
      %v456 = vunpack.c.l.b16 %v190
      %v457 = vunpack.c.h.b16 %v190
      %v458 = vunpack.c.l.b16 %v191
      %v459 = vunpack.c.h.b16 %v191
      %v460 = vunpack.c.l.b16 %v192
      %v461 = vunpack.c.l.b16 %v193
      %v462 = vunpack.c.h.b16 %v193
      %v463 = vunpack.c.l.b16 %v194
      %v464 = vunpack.c.h.b16 %v194
      %v465 = vunpack.c.l.b16 %v195
      %v466 = vunpack.c.l.b16 %v196
      %v467 = vunpack.c.h.b16 %v196
      %v468 = vunpack.c.l.b16 %v197
      %v469 = vunpack.c.h.b16 %v197
      %v470 = vunpack.c.l.b16 %v198
      %v471 = vunpack.c.l.b16 %v199
      %v472 = vunpack.c.h.b16 %v199
      %v473 = vunpack.c.l.b16 %v200
      %v474 = vunpack.c.h.b16 %v200
      %v475 = vunpack.c.l.b16 %v201
      %v476 = vunpack.c.l.b16 %v202
      %v477 = vunpack.c.h.b16 %v202
      %v478 = vunpack.c.l.b16 %v203
      %v479 = vunpack.c.h.b16 %v203
      %v480 = vunpack.c.l.b16 %v204
      %v481 = vunpack.c.l.b16 %v205
      %v482 = vunpack.c.h.b16 %v205
      %v483 = vunpack.c.l.b16 %v206
      %v484 = vunpack.c.h.b16 %v206
      %v485 = vunpack.c.l.b16 %v207
      %v486 = vunpack.c.l.b16 %v208
      %v487 = vunpack.c.h.b16 %v208
      %v488 = vunpack.c.l.b16 %v209
      %v489 = vunpack.c.h.b16 %v209
      %v490 = vunpack.c.l.b16 %v210
      %v491 = vunpack.c.l.b16 %v211
      %v492 = vunpack.c.h.b16 %v211
      %v493 = vunpack.c.l.b16 %v212
      %v494 = vunpack.c.h.b16 %v212
      %v495 = vunpack.c.l.b16 %v213
      %v496 = vunpack.c.l.b16 %v214
      %v497 = vunpack.c.h.b16 %v214
      %v498 = vunpack.c.l.b16 %v215
      %v499 = vunpack.c.h.b16 %v215
      %v500 = vunpack.c.l.b16 %v216
      %v501 = vunpack.c.l.b16 %v217
      %v502 = vunpack.c.h.b16 %v217
      %v503 = vunpack.c.l.b16 %v218
      %v504 = vunpack.c.h.b16 %v218
      %v505 = vunpack.c.l.b16 %v219
      %v506 = vunpack.c.l.b16 %v220
      %v507 = vunpack.c.h.b16 %v220
      %v508 = vunpack.c.l.b16 %v221
      %v509 = vunpack.c.h.b16 %v221
      %v510 = vunpack.c.l.b16 %v222
      %v511 = vunpack.c.l.b16 %v223
      %v512 = vunpack.c.h.b16 %v223
      %v513 = vunpack.c.l.b16 %v224
      %v514 = vunpack.c.h.b16 %v224
      %v515 = vunpack.c.l.b16 %v225
      %v516 = vunpack.c.l.b16 %v226
      %v517 = vunpack.c.h.b16 %v226
      %v518 = vunpack.c.l.b16 %v227
      %v519 = vunpack.c.h.b16 %v227
      %v520 = vunpack.c.l.b16 %v228
      %v521 = vunpack.c.l.b16 %v229
      %v522 = vunpack.c.h.b16 %v229
      %v523 = vunpack.c.l.b16 %v230
      %v524 = vunpack.c.h.b16 %v230
      %v525 = vunpack.c.l.b16 %v231
      %v526 = vunpack.c.l.b16 %v232
      %v527 = vunpack.c.h.b16 %v232
      %v528 = vunpack.c.l.b16 %v233
      %v529 = vunpack.c.h.b16 %v233
      %v530 = vunpack.c.l.b16 %v234
      %v531 = vpack.c.b16 %v396, %v391
      %v532 = vpack.c.b16 %v397, %v392
      %v533 = vpack.c.b16 %v398, %v393
      %v534 = vpack.c.b16 %v399, %v394
      %v535 = vpack.c.b16 %v400, %v395
      %v536 = vpack.c.b16 %v406, %v401
      %v537 = vpack.c.b16 %v407, %v402
      %v538 = vpack.c.b16 %v408, %v403
      %v539 = vpack.c.b16 %v409, %v404
      %v540 = vpack.c.b16 %v410, %v405
      %v541 = vpack.c.b16 %v416, %v411
      %v542 = vpack.c.b16 %v417, %v412
      %v543 = vpack.c.b16 %v418, %v413
      %v544 = vpack.c.b16 %v419, %v414
      %v545 = vpack.c.b16 %v420, %v415
      %v546 = vpack.c.b16 %v426, %v421
      %v547 = vpack.c.b16 %v427, %v422
      %v548 = vpack.c.b16 %v428, %v423
      %v549 = vpack.c.b16 %v429, %v424
      %v550 = vpack.c.b16 %v430, %v425
      %v551 = vpack.c.b16 %v436, %v431
      %v552 = vpack.c.b16 %v437, %v432
      %v553 = vpack.c.b16 %v438, %v433
      %v554 = vpack.c.b16 %v439, %v434
      %v555 = vpack.c.b16 %v440, %v435
      %v556 = vpack.c.b16 %v446, %v441
      %v557 = vpack.c.b16 %v447, %v442
      %v558 = vpack.c.b16 %v448, %v443
      %v559 = vpack.c.b16 %v449, %v444
      %v560 = vpack.c.b16 %v450, %v445
      %v561 = vpack.c.b16 %v456, %v451
      %v562 = vpack.c.b16 %v457, %v452
      %v563 = vpack.c.b16 %v458, %v453
      %v564 = vpack.c.b16 %v459, %v454
      %v565 = vpack.c.b16 %v460, %v455
      %v566 = vpack.c.b16 %v466, %v461
      %v567 = vpack.c.b16 %v467, %v462
      %v568 = vpack.c.b16 %v468, %v463
      %v569 = vpack.c.b16 %v469, %v464
      %v570 = vpack.c.b16 %v470, %v465
      %v571 = vpack.c.b16 %v476, %v471
      %v572 = vpack.c.b16 %v477, %v472
      %v573 = vpack.c.b16 %v478, %v473
      %v574 = vpack.c.b16 %v479, %v474
      %v575 = vpack.c.b16 %v480, %v475
      %v576 = vpack.c.b16 %v486, %v481
      %v577 = vpack.c.b16 %v487, %v482
      %v578 = vpack.c.b16 %v488, %v483
      %v579 = vpack.c.b16 %v489, %v484
      %v580 = vpack.c.b16 %v490, %v485
      %v581 = vpack.c.b16 %v496, %v491
      %v582 = vpack.c.b16 %v497, %v492
      %v583 = vpack.c.b16 %v498, %v493
      %v584 = vpack.c.b16 %v499, %v494
      %v585 = vpack.c.b16 %v500, %v495
      %v586 = vpack.c.b16 %v506, %v501
      %v587 = vpack.c.b16 %v507, %v502
      %v588 = vpack.c.b16 %v508, %v503
      %v589 = vpack.c.b16 %v509, %v504
      %v590 = vpack.c.b16 %v510, %v505
      %v591 = vpack.c.b16 %v516, %v511
      %v592 = vpack.c.b16 %v517, %v512
      %v593 = vpack.c.b16 %v518, %v513
      %v594 = vpack.c.b16 %v519, %v514
      %v595 = vpack.c.b16 %v520, %v515
      %v596 = vpack.c.b16 %v526, %v521
      %v597 = vpack.c.b16 %v527, %v522
      %v598 = vpack.c.b16 %v528, %v523
      %v599 = vpack.c.b16 %v529, %v524
      %v600 = vpack.c.b16 %v530, %v525
      %v729 = vunpack.c.l.b16 %v235
      %v730 = vunpack.c.l.b16 %v236
      %v731 = vunpack.c.l.b16 %v237
      %v732 = vunpack.c.l.b16 %v238
      %v733 = vunpack.c.l.b16 %v239
      %v734 = vunpack.c.l.b16 %v240
      %v735 = vunpack.c.l.b16 %v241
      %v736 = vunpack.c.l.b16 %v242
      %v737 = vunpack.c.l.b16 %v243
      %v738 = vunpack.c.l.b16 %v244
      %v739 = vunpack.c.l.b16 %v245
      %v740 = vunpack.c.l.b16 %v246
      %v741 = vunpack.c.l.b16 %v247
      %v742 = vunpack.c.l.b16 %v248
      %v743 = vunpack.c.l.b16 %v249
      %v744 = vunpack.c.l.b16 %v250
      %v745 = vunpack.c.l.b16 %v251
      %v746 = vunpack.c.l.b16 %v252
      %v747 = vunpack.c.l.b16 %v253
      %v748 = vunpack.c.l.b16 %v254
      %v749 = vunpack.c.l.b16 %v255
      %v750 = vunpack.c.l.b16 %v256
      %v751 = vunpack.c.l.b16 %v257
      %v752 = vunpack.c.l.b16 %v258
      %v753 = vunpack.c.l.b16 %v259
      %v754 = vunpack.c.l.b16 %v260
      %v755 = vunpack.c.l.b16 %v261
      %v756 = vunpack.c.l.b16 %v262
      %v757 = vunpack.c.l.b16 %v263
      %v758 = vunpack.c.l.b16 %v264
      %v759 = vunpack.c.l.b16 %v265
      %v760 = vunpack.c.l.b16 %v266
      %v761 = vunpack.c.l.b16 %v267
      %v762 = vunpack.c.l.b16 %v268
      %v763 = vunpack.c.l.b16 %v269
      %v764 = vunpack.c.l.b16 %v270
      %v765 = vunpack.c.l.b16 %v271
      %v766 = vunpack.c.l.b16 %v272
      %v767 = vunpack.c.l.b16 %v273
      %v768 = vunpack.c.l.b16 %v274
      %v769 = vunpack.c.l.b16 %v275
      %v770 = vunpack.c.l.b16 %v276
      %v771 = vunpack.c.l.b16 %v277
      %v772 = vunpack.c.l.b16 %v278
      %v773 = vunpack.c.l.b16 %v279
      %v774 = vunpack.c.l.b16 %v280
      %v775 = vunpack.c.l.b16 %v281
      %v776 = vunpack.c.l.b16 %v282
      %v777 = vunpack.c.l.b16 %v283
      %v778 = vunpack.c.l.b16 %v284
      %v779 = vunpack.c.l.b16 %v285
      %v780 = vunpack.c.l.b16 %v286
      %v781 = vunpack.c.l.b16 %v287
      %v782 = vunpack.c.l.b16 %v288
      %v783 = vunpack.c.l.b16 %v289
      %v784 = vunpack.c.l.b16 %v290
      %v785 = vunpack.c.l.b16 %v291
      %v786 = vunpack.c.l.b16 %v292
      %v787 = vunpack.c.l.b16 %v293
      %v788 = vunpack.c.l.b16 %v294
      %v789 = vunpack.c.l.b16 %v295
      %v790 = vunpack.c.l.b16 %v296
      %v791 = vunpack.c.l.b16 %v297
      %v792 = vunpack.c.l.b16 %v298
      %v793 = vunpack.c.l.b16 %v299
      %v794 = vunpack.c.l.b16 %v300
      %v795 = vunpack.c.l.b16 %v301
      %v796 = vunpack.c.l.b16 %v302
      %v797 = vunpack.c.l.b16 %v303
      %v798 = vunpack.c.l.b16 %v304
      %v799 = vunpack.c.l.b16 %v305
      %v800 = vunpack.c.l.b16 %v306
      %v801 = vpack.c.b16 %v730, %v729
      %v802 = vpack.c.b16 %v732, %v731
      %v803 = vpack.c.b16 %v734, %v733
      %v804 = vpack.c.b16 %v736, %v735
      %v805 = vpack.c.b16 %v738, %v737
      %v806 = vpack.c.b16 %v740, %v739
      %v807 = vpack.c.b16 %v742, %v741
      %v808 = vpack.c.b16 %v744, %v743
      %v809 = vpack.c.b16 %v746, %v745
      %v810 = vpack.c.b16 %v748, %v747
      %v811 = vpack.c.b16 %v750, %v749
      %v812 = vpack.c.b16 %v752, %v751
      %v813 = vpack.c.b16 %v754, %v753
      %v814 = vpack.c.b16 %v756, %v755
      %v815 = vpack.c.b16 %v758, %v757
      %v816 = vpack.c.b16 %v760, %v759
      %v817 = vpack.c.b16 %v762, %v761
      %v818 = vpack.c.b16 %v764, %v763
      %v819 = vpack.c.b16 %v766, %v765
      %v820 = vpack.c.b16 %v768, %v767
      %v821 = vpack.c.b16 %v770, %v769
      %v822 = vpack.c.b16 %v772, %v771
      %v823 = vpack.c.b16 %v774, %v773
      %v824 = vpack.c.b16 %v776, %v775
      %v825 = vpack.c.b16 %v778, %v777
      %v826 = vpack.c.b16 %v780, %v779
      %v827 = vpack.c.b16 %v782, %v781
      %v828 = vpack.c.b16 %v784, %v783
      %v829 = vpack.c.b16 %v786, %v785
      %v830 = vpack.c.b16 %v788, %v787
      %v831 = vpack.c.b16 %v790, %v789
      %v832 = vpack.c.b16 %v792, %v791
      %v833 = vpack.c.b16 %v794, %v793
      %v834 = vpack.c.b16 %v796, %v795
      %v835 = vpack.c.b16 %v798, %v797
      %v836 = vpack.c.b16 %v800, %v799
      %vm873 = vcmask 523264
      %v875 = vsel %vm873, %v535, 0
      %v878 = vsel %vm873, %v540, 0
      %v881 = vsel %vm873, %v545, 0
      %v884 = vsel %vm873, %v550, 0
      %v887 = vsel %vm873, %v555, 0
      %v890 = vsel %vm873, %v560, 0
      %v893 = vsel %vm873, %v565, 0
      %v896 = vsel %vm873, %v570, 0
      %v899 = vsel %vm873, %v575, 0
      %v902 = vsel %vm873, %v580, 0
      %v905 = vsel %vm873, %v585, 0
      %v908 = vsel %vm873, %v590, 0
      %v911 = vsel %vm873, %v595, 0
      %v914 = vsel %vm873, %v600, 0
      %916 = vmatprep.subr.bf16.mxu0 0
      %917 = vmatpush1.bf16.msra.mxu0 %v808
      %918 = vmatprep.subr.bf16.mxu0 0
      %919 = vmatpush1.bf16.msra.mxu0 %v807
      %920 = vmatprep.subr.bf16.mxu0 0
      %921 = vmatpush1.bf16.msra.mxu0 %v806
      %922 = vmatprep.subr.bf16.mxu0 0
      %923 = vmatpush1.bf16.msra.mxu0 %v805
      %924 = vmatprep.subr.bf16.mxu0 0
      %925 = vmatpush1.bf16.msra.mxu0 %v804
      %926 = vmatprep.subr.bf16.mxu0 0
      %927 = vmatpush1.bf16.msra.mxu0 %v803
      %928 = vmatprep.subr.bf16.mxu0 0
      %929 = vmatpush1.bf16.msra.mxu0 %v802
      %930 = vmatprep.subr.bf16.mxu0 0
      %931 = vmatpush1.bf16.msra.mxu0 %v801
      %932 = vmatprep.subr.bf16.mxu0 0
      %933 = vmatpush2.bf16.msra.mxu0 %v816
      %934 = vmatprep.subr.bf16.mxu0 0
      %935 = vmatpush2.bf16.msra.mxu0 %v815
      %936 = vmatprep.subr.bf16.mxu0 0
      %937 = vmatpush2.bf16.msra.mxu0 %v814
      %938 = vmatprep.subr.bf16.mxu0 0
      %939 = vmatpush2.bf16.msra.mxu0 %v813
      %940 = vmatprep.subr.bf16.mxu0 0
      %941 = vmatpush2.bf16.msra.mxu0 %v812
      %942 = vmatprep.subr.bf16.mxu0 0
      %943 = vmatpush2.bf16.msra.mxu0 %v811
      %944 = vmatprep.subr.bf16.mxu0 0
      %945 = vmatpush2.bf16.msra.mxu0 %v810
      %946 = vmatprep.subr.bf16.mxu0 0
      %947 = vmatpush2.bf16.msra.mxu0 %v809
      %948 = vmatprep.mubr.bf16.mxu0 %v532
      %949 = vmatmul.mubr.bf16.gmra.mxu0 %v531
      %v950 = vpop.f32.mrf.mxu0
      %v951 = vadd.f32 0.0, %v950
      %v952 = vpop.f32.mrf.mxu0
      %v953 = vpop.f32.mrf.mxu0
      %v954 = vadd.f32 0.0, %v953
      %v955 = vpop.f32.mrf.mxu0
      %956 = vmatprep.mubr.bf16.mxu0 %v537
      %957 = vmatmul.mubr.bf16.gmra.mxu0 %v536
      %v958 = vpop.f32.mrf.mxu0
      %v959 = vadd.f32 0.0, %v958
      %v960 = vpop.f32.mrf.mxu0
      %v961 = vpop.f32.mrf.mxu0
      %v962 = vadd.f32 0.0, %v961
      %v963 = vpop.f32.mrf.mxu0
      %964 = vmatprep.mubr.bf16.mxu0 %v542
      %965 = vmatmul.mubr.bf16.gmra.mxu0 %v541
      %v966 = vpop.f32.mrf.mxu0
      %v967 = vadd.f32 0.0, %v966
      %v968 = vpop.f32.mrf.mxu0
      %v969 = vpop.f32.mrf.mxu0
      %v970 = vadd.f32 0.0, %v969
      %v971 = vpop.f32.mrf.mxu0
      %972 = vmatprep.mubr.bf16.mxu0 %v547
      %973 = vmatmul.mubr.bf16.gmra.mxu0 %v546
      %v974 = vpop.f32.mrf.mxu0
      %v975 = vadd.f32 0.0, %v974
      %v976 = vpop.f32.mrf.mxu0
      %v977 = vpop.f32.mrf.mxu0
      %v978 = vadd.f32 0.0, %v977
      %v979 = vpop.f32.mrf.mxu0
      %980 = vmatprep.mubr.bf16.mxu0 %v552
      %981 = vmatmul.mubr.bf16.gmra.mxu0 %v551
      %v982 = vpop.f32.mrf.mxu0
      %v983 = vadd.f32 0.0, %v982
      %v984 = vpop.f32.mrf.mxu0
      %v985 = vpop.f32.mrf.mxu0
      %v986 = vadd.f32 0.0, %v985
      %v987 = vpop.f32.mrf.mxu0
      %988 = vmatprep.mubr.bf16.mxu0 %v557
      %989 = vmatmul.mubr.bf16.gmra.mxu0 %v556
      %v990 = vpop.f32.mrf.mxu0
      %v991 = vadd.f32 0.0, %v990
      %v992 = vpop.f32.mrf.mxu0
      %v993 = vpop.f32.mrf.mxu0
      %v994 = vadd.f32 0.0, %v993
      %v995 = vpop.f32.mrf.mxu0
      %996 = vmatprep.mubr.bf16.mxu0 %v562
      %997 = vmatmul.mubr.bf16.gmra.mxu0 %v561
      %v998 = vpop.f32.mrf.mxu0
      %v999 = vadd.f32 0.0, %v998
      %v1000 = vpop.f32.mrf.mxu0
      %v1001 = vpop.f32.mrf.mxu0
      %v1002 = vadd.f32 0.0, %v1001
      %v1003 = vpop.f32.mrf.mxu0
      %1004 = vmatprep.mubr.bf16.mxu0 %v567
      %1005 = vmatmul.mubr.bf16.gmra.mxu0 %v566
      %v1006 = vpop.f32.mrf.mxu0
      %v1007 = vadd.f32 0.0, %v1006
      %v1008 = vpop.f32.mrf.mxu0
      %v1009 = vpop.f32.mrf.mxu0
      %v1010 = vadd.f32 0.0, %v1009
      %v1011 = vpop.f32.mrf.mxu0
      %1012 = vmatprep.mubr.bf16.mxu0 %v572
      %1013 = vmatmul.mubr.bf16.gmra.mxu0 %v571
      %v1014 = vpop.f32.mrf.mxu0
      %v1015 = vadd.f32 0.0, %v1014
      %v1016 = vpop.f32.mrf.mxu0
      %v1017 = vpop.f32.mrf.mxu0
      %v1018 = vadd.f32 0.0, %v1017
      %v1019 = vpop.f32.mrf.mxu0
      %1020 = vmatprep.mubr.bf16.mxu0 %v577
      %1021 = vmatmul.mubr.bf16.gmra.mxu0 %v576
      %v1022 = vpop.f32.mrf.mxu0
      %v1023 = vadd.f32 0.0, %v1022
      %v1024 = vpop.f32.mrf.mxu0
      %v1025 = vpop.f32.mrf.mxu0
      %v1026 = vadd.f32 0.0, %v1025
      %v1027 = vpop.f32.mrf.mxu0
      %1028 = vmatprep.mubr.bf16.mxu0 %v582
      %1029 = vmatmul.mubr.bf16.gmra.mxu0 %v581
      %v1030 = vpop.f32.mrf.mxu0
      %v1031 = vadd.f32 0.0, %v1030
      %v1032 = vpop.f32.mrf.mxu0
      %v1033 = vpop.f32.mrf.mxu0
      %v1034 = vadd.f32 0.0, %v1033
      %v1035 = vpop.f32.mrf.mxu0
      %1036 = vmatprep.mubr.bf16.mxu0 %v587
      %1037 = vmatmul.mubr.bf16.gmra.mxu0 %v586
      %v1038 = vpop.f32.mrf.mxu0
      %v1039 = vadd.f32 0.0, %v1038
      %v1040 = vpop.f32.mrf.mxu0
      %v1041 = vpop.f32.mrf.mxu0
      %v1042 = vadd.f32 0.0, %v1041
      %v1043 = vpop.f32.mrf.mxu0
      %1044 = vmatprep.mubr.bf16.mxu0 %v592
      %1045 = vmatmul.mubr.bf16.gmra.mxu0 %v591
      %v1046 = vpop.f32.mrf.mxu0
      %v1047 = vadd.f32 0.0, %v1046
      %v1048 = vpop.f32.mrf.mxu0
      %v1049 = vpop.f32.mrf.mxu0
      %v1050 = vadd.f32 0.0, %v1049
      %v1051 = vpop.f32.mrf.mxu0
      %1052 = vmatprep.mubr.bf16.mxu0 %v597
      %1053 = vmatmul.mubr.bf16.gmra.mxu0 %v596
      %v1054 = vpop.f32.mrf.mxu0
      %v1055 = vadd.f32 0.0, %v1054
      %v1056 = vpop.f32.mrf.mxu0
      %v1057 = vpop.f32.mrf.mxu0
      %v1058 = vadd.f32 0.0, %v1057
      %v1059 = vpop.f32.mrf.mxu0
      %1060 = vdwg.mxu0
      %1061 = vmatprep.subr.bf16.mxu0 0
      %1062 = vmatpush1.bf16.msra.mxu0 %v824
      %1063 = vmatprep.subr.bf16.mxu0 0
      %1064 = vmatpush1.bf16.msra.mxu0 %v823
      %1065 = vmatprep.subr.bf16.mxu0 0
      %1066 = vmatpush1.bf16.msra.mxu0 %v822
      %1067 = vmatprep.subr.bf16.mxu0 0
      %1068 = vmatpush1.bf16.msra.mxu0 %v821
      %1069 = vmatprep.subr.bf16.mxu0 0
      %1070 = vmatpush1.bf16.msra.mxu0 %v820
      %1071 = vmatprep.subr.bf16.mxu0 0
      %1072 = vmatpush1.bf16.msra.mxu0 %v819
      %1073 = vmatprep.subr.bf16.mxu0 0
      %1074 = vmatpush1.bf16.msra.mxu0 %v818
      %1075 = vmatprep.subr.bf16.mxu0 0
      %1076 = vmatpush1.bf16.msra.mxu0 %v817
      %1077 = vmatprep.subr.bf16.mxu0 0
      %1078 = vmatpush2.bf16.msra.mxu0 %v832
      %1079 = vmatprep.subr.bf16.mxu0 0
      %1080 = vmatpush2.bf16.msra.mxu0 %v831
      %1081 = vmatprep.subr.bf16.mxu0 0
      %1082 = vmatpush2.bf16.msra.mxu0 %v830
      %1083 = vmatprep.subr.bf16.mxu0 0
      %1084 = vmatpush2.bf16.msra.mxu0 %v829
      %1085 = vmatprep.subr.bf16.mxu0 0
      %1086 = vmatpush2.bf16.msra.mxu0 %v828
      %1087 = vmatprep.subr.bf16.mxu0 0
      %1088 = vmatpush2.bf16.msra.mxu0 %v827
      %1089 = vmatprep.subr.bf16.mxu0 0
      %1090 = vmatpush2.bf16.msra.mxu0 %v826
      %1091 = vmatprep.subr.bf16.mxu0 0
      %1092 = vmatpush2.bf16.msra.mxu0 %v825
      %1093 = vmatprep.mubr.bf16.mxu0 %v534
      %1094 = vmatmul.mubr.bf16.gmra.mxu0 %v533
      %v1095 = vpop.f32.mrf.mxu0
      %v1096 = vadd.f32 %v951, %v1095
      %v1097 = vpop.f32.mrf.mxu0
      %v1098 = vpop.f32.mrf.mxu0
      %v1099 = vadd.f32 %v954, %v1098
      %v1100 = vpop.f32.mrf.mxu0
      %1101 = vmatprep.mubr.bf16.mxu0 %v539
      %1102 = vmatmul.mubr.bf16.gmra.mxu0 %v538
      %v1103 = vpop.f32.mrf.mxu0
      %v1104 = vadd.f32 %v959, %v1103
      %v1105 = vpop.f32.mrf.mxu0
      %v1106 = vpop.f32.mrf.mxu0
      %v1107 = vadd.f32 %v962, %v1106
      %v1108 = vpop.f32.mrf.mxu0
      %1109 = vmatprep.mubr.bf16.mxu0 %v544
      %1110 = vmatmul.mubr.bf16.gmra.mxu0 %v543
      %v1111 = vpop.f32.mrf.mxu0
      %v1112 = vadd.f32 %v967, %v1111
      %v1113 = vpop.f32.mrf.mxu0
      %v1114 = vpop.f32.mrf.mxu0
      %v1115 = vadd.f32 %v970, %v1114
      %v1116 = vpop.f32.mrf.mxu0
      %1117 = vmatprep.mubr.bf16.mxu0 %v549
      %1118 = vmatmul.mubr.bf16.gmra.mxu0 %v548
      %v1119 = vpop.f32.mrf.mxu0
      %v1120 = vadd.f32 %v975, %v1119
      %v1121 = vpop.f32.mrf.mxu0
      %v1122 = vpop.f32.mrf.mxu0
      %v1123 = vadd.f32 %v978, %v1122
      %v1124 = vpop.f32.mrf.mxu0
      %1125 = vmatprep.mubr.bf16.mxu0 %v554
      %1126 = vmatmul.mubr.bf16.gmra.mxu0 %v553
      %v1127 = vpop.f32.mrf.mxu0
      %v1128 = vadd.f32 %v983, %v1127
      %v1129 = vpop.f32.mrf.mxu0
      %v1130 = vpop.f32.mrf.mxu0
      %v1131 = vadd.f32 %v986, %v1130
      %v1132 = vpop.f32.mrf.mxu0
      %1133 = vmatprep.mubr.bf16.mxu0 %v559
      %1134 = vmatmul.mubr.bf16.gmra.mxu0 %v558
      %v1135 = vpop.f32.mrf.mxu0
      %v1136 = vadd.f32 %v991, %v1135
      %v1137 = vpop.f32.mrf.mxu0
      %v1138 = vpop.f32.mrf.mxu0
      %v1139 = vadd.f32 %v994, %v1138
      %v1140 = vpop.f32.mrf.mxu0
      %1141 = vmatprep.mubr.bf16.mxu0 %v564
      %1142 = vmatmul.mubr.bf16.gmra.mxu0 %v563
      %v1143 = vpop.f32.mrf.mxu0
      %v1144 = vadd.f32 %v999, %v1143
      %v1145 = vpop.f32.mrf.mxu0
      %v1146 = vpop.f32.mrf.mxu0
      %v1147 = vadd.f32 %v1002, %v1146
      %v1148 = vpop.f32.mrf.mxu0
      %1149 = vmatprep.mubr.bf16.mxu0 %v569
      %1150 = vmatmul.mubr.bf16.gmra.mxu0 %v568
      %v1151 = vpop.f32.mrf.mxu0
      %v1152 = vadd.f32 %v1007, %v1151
      %v1153 = vpop.f32.mrf.mxu0
      %v1154 = vpop.f32.mrf.mxu0
      %v1155 = vadd.f32 %v1010, %v1154
      %v1156 = vpop.f32.mrf.mxu0
      %1157 = vmatprep.mubr.bf16.mxu0 %v574
      %1158 = vmatmul.mubr.bf16.gmra.mxu0 %v573
      %v1159 = vpop.f32.mrf.mxu0
      %v1160 = vadd.f32 %v1015, %v1159
      %v1161 = vpop.f32.mrf.mxu0
      %v1162 = vpop.f32.mrf.mxu0
      %v1163 = vadd.f32 %v1018, %v1162
      %v1164 = vpop.f32.mrf.mxu0
      %1165 = vmatprep.mubr.bf16.mxu0 %v579
      %1166 = vmatmul.mubr.bf16.gmra.mxu0 %v578
      %v1167 = vpop.f32.mrf.mxu0
      %v1168 = vadd.f32 %v1023, %v1167
      %v1169 = vpop.f32.mrf.mxu0
      %v1170 = vpop.f32.mrf.mxu0
      %v1171 = vadd.f32 %v1026, %v1170
      %v1172 = vpop.f32.mrf.mxu0
      %1173 = vmatprep.mubr.bf16.mxu0 %v584
      %1174 = vmatmul.mubr.bf16.gmra.mxu0 %v583
      %v1175 = vpop.f32.mrf.mxu0
      %v1176 = vadd.f32 %v1031, %v1175
      %v1177 = vpop.f32.mrf.mxu0
      %v1178 = vpop.f32.mrf.mxu0
      %v1179 = vadd.f32 %v1034, %v1178
      %v1180 = vpop.f32.mrf.mxu0
      %1181 = vmatprep.mubr.bf16.mxu0 %v589
      %1182 = vmatmul.mubr.bf16.gmra.mxu0 %v588
      %v1183 = vpop.f32.mrf.mxu0
      %v1184 = vadd.f32 %v1039, %v1183
      %v1185 = vpop.f32.mrf.mxu0
      %v1186 = vpop.f32.mrf.mxu0
      %v1187 = vadd.f32 %v1042, %v1186
      %v1188 = vpop.f32.mrf.mxu0
      %1189 = vmatprep.mubr.bf16.mxu0 %v594
      %1190 = vmatmul.mubr.bf16.gmra.mxu0 %v593
      %v1191 = vpop.f32.mrf.mxu0
      %v1192 = vadd.f32 %v1047, %v1191
      %v1193 = vpop.f32.mrf.mxu0
      %v1194 = vpop.f32.mrf.mxu0
      %v1195 = vadd.f32 %v1050, %v1194
      %v1196 = vpop.f32.mrf.mxu0
      %1197 = vmatprep.mubr.bf16.mxu0 %v599
      %1198 = vmatmul.mubr.bf16.gmra.mxu0 %v598
      %v1199 = vpop.f32.mrf.mxu0
      %v1200 = vadd.f32 %v1055, %v1199
      %v1201 = vpop.f32.mrf.mxu0
      %v1202 = vpop.f32.mrf.mxu0
      %v1203 = vadd.f32 %v1058, %v1202
      %v1204 = vpop.f32.mrf.mxu0
      %1205 = vdwg.mxu0
      %1206 = vmatprep.subr.bf16.mxu0 0
      %1207 = vmatpush1.bf16.msra.mxu0 0
      %1208 = vmatprep.subr.bf16.mxu0 0
      %1209 = vmatpush1.bf16.msra.mxu0 0
      %1210 = vmatprep.subr.bf16.mxu0 0
      %1211 = vmatpush1.bf16.msra.mxu0 0
      %1212 = vmatprep.subr.bf16.mxu0 0
      %1213 = vmatpush1.bf16.msra.mxu0 0
      %1214 = vmatprep.subr.bf16.mxu0 0
      %1215 = vmatpush1.bf16.msra.mxu0 %v836
      %1216 = vmatprep.subr.bf16.mxu0 0
      %1217 = vmatpush1.bf16.msra.mxu0 %v835
      %1218 = vmatprep.subr.bf16.mxu0 0
      %1219 = vmatpush1.bf16.msra.mxu0 %v834
      %1220 = vmatprep.subr.bf16.mxu0 0
      %1221 = vmatpush1.bf16.msra.mxu0 %v833
      %1222 = vmatprep.subr.bf16.mxu0 0
      %1223 = vmatpush2.bf16.msra.mxu0 0
      %1224 = vmatprep.subr.bf16.mxu0 0
      %1225 = vmatpush2.bf16.msra.mxu0 0
      %1226 = vmatprep.subr.bf16.mxu0 0
      %1227 = vmatpush2.bf16.msra.mxu0 0
      %1228 = vmatprep.subr.bf16.mxu0 0
      %1229 = vmatpush2.bf16.msra.mxu0 0
      %1230 = vmatprep.subr.bf16.mxu0 0
      %1231 = vmatpush2.bf16.msra.mxu0 0
      %1232 = vmatprep.subr.bf16.mxu0 0
      %1233 = vmatpush2.bf16.msra.mxu0 0
      %1234 = vmatprep.subr.bf16.mxu0 0
      %1235 = vmatpush2.bf16.msra.mxu0 0
      %1236 = vmatprep.subr.bf16.mxu0 0
      %1237 = vmatpush2.bf16.msra.mxu0 0
      %1238 = vmatprep.mubr.bf16.mxu0 0
      %1239 = vmatmul.mubr.bf16.gmra.mxu0 %v875
      %v1240 = vpop.f32.mrf.mxu0
      %v1241 = vadd.f32 %v1096, %v1240
      %v1242 = vpop.f32.mrf.mxu0
      %v1243 = vpop.f32.mrf.mxu0
      %v1244 = vadd.f32 %v1099, %v1243
      %v1245 = vpop.f32.mrf.mxu0
      %1246 = vmatprep.mubr.bf16.mxu0 0
      %1247 = vmatmul.mubr.bf16.gmra.mxu0 %v878
      %v1248 = vpop.f32.mrf.mxu0
      %v1249 = vadd.f32 %v1104, %v1248
      %v1250 = vpop.f32.mrf.mxu0
      %v1251 = vpop.f32.mrf.mxu0
      %v1252 = vadd.f32 %v1107, %v1251
      %v1253 = vpop.f32.mrf.mxu0
      %1254 = vmatprep.mubr.bf16.mxu0 0
      %1255 = vmatmul.mubr.bf16.gmra.mxu0 %v881
      %v1256 = vpop.f32.mrf.mxu0
      %v1257 = vadd.f32 %v1112, %v1256
      %v1258 = vpop.f32.mrf.mxu0
      %v1259 = vpop.f32.mrf.mxu0
      %v1260 = vadd.f32 %v1115, %v1259
      %v1261 = vpop.f32.mrf.mxu0
      %1262 = vmatprep.mubr.bf16.mxu0 0
      %1263 = vmatmul.mubr.bf16.gmra.mxu0 %v884
      %v1264 = vpop.f32.mrf.mxu0
      %v1265 = vadd.f32 %v1120, %v1264
      %v1266 = vpop.f32.mrf.mxu0
      %v1267 = vpop.f32.mrf.mxu0
      %v1268 = vadd.f32 %v1123, %v1267
      %v1269 = vpop.f32.mrf.mxu0
      %1270 = vmatprep.mubr.bf16.mxu0 0
      %1271 = vmatmul.mubr.bf16.gmra.mxu0 %v887
      %v1272 = vpop.f32.mrf.mxu0
      %v1273 = vadd.f32 %v1128, %v1272
      %v1274 = vpop.f32.mrf.mxu0
      %v1275 = vpop.f32.mrf.mxu0
      %v1276 = vadd.f32 %v1131, %v1275
      %v1277 = vpop.f32.mrf.mxu0
      %1278 = vmatprep.mubr.bf16.mxu0 0
      %1279 = vmatmul.mubr.bf16.gmra.mxu0 %v890
      %v1280 = vpop.f32.mrf.mxu0
      %v1281 = vadd.f32 %v1136, %v1280
      %v1282 = vpop.f32.mrf.mxu0
      %v1283 = vpop.f32.mrf.mxu0
      %v1284 = vadd.f32 %v1139, %v1283
      %v1285 = vpop.f32.mrf.mxu0
      %1286 = vmatprep.mubr.bf16.mxu0 0
      %1287 = vmatmul.mubr.bf16.gmra.mxu0 %v893
      %v1288 = vpop.f32.mrf.mxu0
      %v1289 = vadd.f32 %v1144, %v1288
      %v1290 = vpop.f32.mrf.mxu0
      %v1291 = vpop.f32.mrf.mxu0
      %v1292 = vadd.f32 %v1147, %v1291
      %v1293 = vpop.f32.mrf.mxu0
      %1294 = vmatprep.mubr.bf16.mxu0 0
      %1295 = vmatmul.mubr.bf16.gmra.mxu0 %v896
      %v1296 = vpop.f32.mrf.mxu0
      %v1297 = vadd.f32 %v1152, %v1296
      %v1298 = vpop.f32.mrf.mxu0
      %v1299 = vpop.f32.mrf.mxu0
      %v1300 = vadd.f32 %v1155, %v1299
      %v1301 = vpop.f32.mrf.mxu0
      %1302 = vmatprep.mubr.bf16.mxu0 0
      %1303 = vmatmul.mubr.bf16.gmra.mxu0 %v899
      %v1304 = vpop.f32.mrf.mxu0
      %v1305 = vadd.f32 %v1160, %v1304
      %v1306 = vpop.f32.mrf.mxu0
      %v1307 = vpop.f32.mrf.mxu0
      %v1308 = vadd.f32 %v1163, %v1307
      %v1309 = vpop.f32.mrf.mxu0
      %1310 = vmatprep.mubr.bf16.mxu0 0
      %1311 = vmatmul.mubr.bf16.gmra.mxu0 %v902
      %v1312 = vpop.f32.mrf.mxu0
      %v1313 = vadd.f32 %v1168, %v1312
      %v1314 = vpop.f32.mrf.mxu0
      %v1315 = vpop.f32.mrf.mxu0
      %v1316 = vadd.f32 %v1171, %v1315
      %v1317 = vpop.f32.mrf.mxu0
      %1318 = vmatprep.mubr.bf16.mxu0 0
      %1319 = vmatmul.mubr.bf16.gmra.mxu0 %v905
      %v1320 = vpop.f32.mrf.mxu0
      %v1321 = vadd.f32 %v1176, %v1320
      %v1322 = vpop.f32.mrf.mxu0
      %v1323 = vpop.f32.mrf.mxu0
      %v1324 = vadd.f32 %v1179, %v1323
      %v1325 = vpop.f32.mrf.mxu0
      %1326 = vmatprep.mubr.bf16.mxu0 0
      %1327 = vmatmul.mubr.bf16.gmra.mxu0 %v908
      %v1328 = vpop.f32.mrf.mxu0
      %v1329 = vadd.f32 %v1184, %v1328
      %v1330 = vpop.f32.mrf.mxu0
      %v1331 = vpop.f32.mrf.mxu0
      %v1332 = vadd.f32 %v1187, %v1331
      %v1333 = vpop.f32.mrf.mxu0
      %1334 = vmatprep.mubr.bf16.mxu0 0
      %1335 = vmatmul.mubr.bf16.gmra.mxu0 %v911
      %v1336 = vpop.f32.mrf.mxu0
      %v1337 = vadd.f32 %v1192, %v1336
      %v1338 = vpop.f32.mrf.mxu0
      %v1339 = vpop.f32.mrf.mxu0
      %v1340 = vadd.f32 %v1195, %v1339
      %v1341 = vpop.f32.mrf.mxu0
      %1342 = vmatprep.mubr.bf16.mxu0 0
      %1343 = vmatmul.mubr.bf16.gmra.mxu0 %v914
      %v1344 = vpop.f32.mrf.mxu0
      %v1345 = vadd.f32 %v1200, %v1344
      %v1346 = vpop.f32.mrf.mxu0
      %v1347 = vpop.f32.mrf.mxu0
      %v1348 = vadd.f32 %v1203, %v1347
      %v1349 = vpop.f32.mrf.mxu0
      %1350 = vdwg.mxu0
      %v1351 = vtanh.pop %v1241
      %v1352 = vtanh.pop %v1244
      %v1353 = vtanh.pop %v1249
      %v1354 = vtanh.pop %v1252
      %v1355 = vtanh.pop %v1257
      %v1356 = vtanh.pop %v1260
      %v1357 = vtanh.pop %v1265
      %v1358 = vtanh.pop %v1268
      %v1359 = vtanh.pop %v1273
      %v1360 = vtanh.pop %v1276
      %v1361 = vtanh.pop %v1281
      %v1362 = vtanh.pop %v1284
      %v1363 = vtanh.pop %v1289
      %v1364 = vtanh.pop %v1292
      %v1365 = vtanh.pop %v1297
      %v1366 = vtanh.pop %v1300
      %v1367 = vtanh.pop %v1305
      %v1368 = vtanh.pop %v1308
      %v1369 = vtanh.pop %v1313
      %v1370 = vtanh.pop %v1316
      %v1371 = vtanh.pop %v1321
      %v1372 = vtanh.pop %v1324
      %v1373 = vtanh.pop %v1329
      %v1374 = vtanh.pop %v1332
      %v1375 = vtanh.pop %v1337
      %v1376 = vtanh.pop %v1340
      %v1377 = vtanh.pop %v1345
      %v1378 = vtanh.pop %v1348
      %1379 = vst [vmem:[%s148] sm:$0xff] %v1351
      %1380 = vst [vmem:[%s148 + $0x8] sm:$0xff] %v1352
      %1381 = vst [vmem:[%s148 + $0x10] sm:$0xff] %v1353
      %1382 = vst [vmem:[%s148 + $0x18] sm:$0xff] %v1354
      %1383 = vst [vmem:[%s148 + $0x20] sm:$0xff] %v1355
      %1384 = vst [vmem:[%s148 + $0x28] sm:$0xff] %v1356
      %1385 = vst [vmem:[%s148 + $0x30] sm:$0xff] %v1357
      %1386 = vst [vmem:[%s148 + $0x38] sm:$0xff] %v1358
      %1387 = vst [vmem:[%s148 + $0x40] sm:$0xff] %v1359
      %1388 = vst [vmem:[%s148 + $0x48] sm:$0xff] %v1360
      %1389 = vst [vmem:[%s148 + $0x50] sm:$0xff] %v1361
      %1390 = vst [vmem:[%s148 + $0x58] sm:$0xff] %v1362
      %1391 = vst [vmem:[%s148 + $0x60] sm:$0xff] %v1363
      %1392 = vst [vmem:[%s148 + $0x68] sm:$0xff] %v1364
      %1393 = vst [vmem:[%s148 + $0x70] sm:$0xff] %v1365
      %1394 = vst [vmem:[%s148 + $0x78] sm:$0xff] %v1366
      %1395 = vst [vmem:[%s148 + $0x80] sm:$0xff] %v1367
      %1396 = vst [vmem:[%s148 + $0x88] sm:$0xff] %v1368
      %1397 = vst [vmem:[%s148 + $0x90] sm:$0xff] %v1369
      %1398 = vst [vmem:[%s148 + $0x98] sm:$0xff] %v1370
      %1399 = vst [vmem:[%s148 + $0xa0] sm:$0xff] %v1371
      %1400 = vst [vmem:[%s148 + $0xa8] sm:$0xff] %v1372
      %1401 = vst [vmem:[%s148 + $0xb0] sm:$0xff] %v1373
      %1402 = vst [vmem:[%s148 + $0xb8] sm:$0xff] %v1374
      %1403 = vst [vmem:[%s148 + $0xc0] sm:$0xff] %v1375
      %1404 = vst [vmem:[%s148 + $0xc8] sm:$0xff] %v1376
      %1405 = vst [vmem:[%s148 + $0xd0] sm:$0xff] %v1377
      %1406 = vst [vmem:[%s148 + $0xd8] sm:$0xff] %v1378
      %s1407 = smul.u32 28, %s13
      %p1408 = scmp.lt.s32.totalorder %s1407, 195
      %s1409 = scalar_select %p1408, %s1407, 195
      %s1410 = smul.addr %s1409, 8
      %s1411 = scalar_lea.vmem %s2, %s1410
      // Predicated region
      $region29: #{generator_forward.7} parent=27 // pred_check
        %p1412 = pneg %p78
      $region30: #{generator_forward.7} parent=27 // pred_check_branch
        %1414 = sbr.rel (%p1412) target = $region32
      $region31: #{generator_forward.7} parent=27 // pred_region
        %s1415 = smul.u32 28, %s13
      $region32: #{generator_forward.7} parent=27 // pred_fallthru
        _
    $region28: #{generator_forward.7} parent=5 // pred_fallthru
      _
    %p1416 = scmp.le.s32.totalorder 2, %s8
    // Predicated region
    $region33: #{generator_forward.7} parent=5 // pred_check
      %p1417 = pneg %p1416
    $region34: #{generator_forward.7} parent=5 // pred_check_branch
      %1419 = sbr.rel (%p1417) target = $region36
    $region35: #{generator_forward.7} parent=5 // pred_region
      %s1420 = ssub.s32 %s8, 2
      // Predicated region
      $region37: #{generator_forward.7} parent=35 // pred_check
        %p1421 = pneg %p84
      $region38: #{generator_forward.7} parent=35 // pred_check_branch
        %1423 = sbr.rel (%p1421) target = $region40
      $region39: #{generator_forward.7} parent=35 // pred_region
        %s1424 = smul.u32 28, %s14
        %p1425 = scmp.lt.s32.totalorder %s1424, 195
        %s1426 = scalar_select %p1425, %s1424, 195
        %s1427 = smul.addr %s1426, 8
        %s1428 = scalar_lea.vmem %s2, %s1427
      $region40: #{generator_forward.7} parent=35 // pred_fallthru
        _
    $region36: #{generator_forward.7} parent=5 // pred_fallthru
      _
  $region6: #{generator_forward.7} parent=0 // loop_footer
    %s12 = sadd.s32 1, %s8
  $region7: #{generator_forward.7} parent=0 // loop_footer_branch
    %7 = sbr.rel target = $region3
  $region8: #{generator_forward.7} parent=0 // loop_exit
    _

</llo_original>
